<compile_context>
chip_gen: v6e
topology: v6e:2x2x1
jax: 0.10.0
libtpu: 0.0.40
codegen_flags: <defaults>
</compile_context>

<pallas_src>
import functools

import numpy as np
import jax
import jax.numpy as jnp
from jax.experimental import pallas as pl
from jax.experimental.pallas import tpu as pltpu

NUM_CLASSES = 5
CP = 8          # classes padded 5 -> 8 so the output lane dim (Wout*CP) is a multiple of 128


def _round_up(x, m):
    return ((x + m - 1) // m) * m


def _interp_matrix(in_size, out_size):
    """PyTorch bilinear (align_corners=False) 1-D interpolation matrix (out, in)."""
    scale = in_size / out_size
    m = np.zeros((out_size, in_size), np.float32)
    for o in range(out_size):
        src = max((o + 0.5) * scale - 0.5, 0.0)
        i0 = min(int(np.floor(src)), in_size - 1)
        i1 = min(i0 + 1, in_size - 1)
        lam = src - i0
        m[o, i0] += 1.0 - lam
        m[o, i1] += lam
    return m


# ---------------------------------------------------------------------------
# The single fused kernel (one grid step == one image).
# ---------------------------------------------------------------------------
def _fused_kernel(*refs, geo):
    (patches, mstem, wstem, tstem, p2, maskb,
     w11, t11, w21, t21, w31, t31, wd1, td1,
     p3, w12, t12, w22, t22, w32, t32, wd2, td2,
     g2, wbr, tbr, gpool, wpl, tpl, wproj, tproj,
     p4, whd, thd, wf, bf, gh, mh, bmat,
     out_ref, s_stem, s_padb, s_h1a, s_padc, s_h1b, s_padd) = refs

    def dot(a, b):
        return jnp.dot(a, b, preferred_element_type=jnp.float32)

    # ---- stem: 7x7/s2 conv as ONE im2col matmul + folded BN + ReLU ----------
    # `patches` already carries the zero ring for the maxpool padding; the mask
    # keeps that ring exactly zero after the BN shift / ReLU.
    nsr = geo['n_stem_rows']
    h = jnp.maximum(dot(patches[0:nsr, :], wstem[...]) + tstem[...], 0.0)
    s_stem[...] = h * mstem[...]

    # ---- maxpool 3x3/s2/p1: stride-1 window max + subsample/re-pad matmul ---
    # Zero padding is exact here because the input is post-ReLU (>= 0).
    mp = None
    for off in geo['mp_offs']:
        v = s_stem[off:off + geo['L_mp'], :]
        mp = v if mp is None else jnp.maximum(mp, v)
    s_padb[...] = dot(p2[...], mp)

    # ---- fused ResNet bottleneck (1x1 -> 3x3 -> 1x1 + projection shortcut) --
    # Stride-2 blocks are computed at stride 1 (the pointwise tail is
    # stride-agnostic) and subsampled by the following selection matmul.
    L, offs, ioff = geo['L_b'], geo['b_offs'], geo['idn_off']

    def bottleneck(pad_ref, h1_ref, w1, t1, w2, t2, w3, t3, wd, td):
        h1_ref[...] = (jnp.maximum(dot(pad_ref[...], w1[...]) + t1[...], 0.0)
                       * maskb[...])
        # 9 row-windows concatenated along lanes -> one fat K=9*C contraction
        win = jnp.concatenate([h1_ref[o:o + L, :] for o in offs], axis=-1)
        h2 = jnp.maximum(dot(win, w2[...]) + t2[...], 0.0)
        h3 = dot(h2, w3[...]) + t3[...]
        idn = dot(pad_ref[ioff:ioff + L, :], wd[...]) + td[...]
        return jnp.maximum(h3 + idn, 0.0)

    out1 = bottleneck(s_padb, s_h1a, w11, t11, w21, t21, w31, t31, wd1, td1)
    s_padc[...] = dot(p3[...], out1)
    out2 = bottleneck(s_padc, s_h1b, w12, t12, w22, t22, w32, t32, wd2, td2)

    # ---- ASPP: 4 conv branches (reduced to 1x1 at this feature size) fused
    #      into one matmul, image-pooling branch, single K=160 projection -----
    feat = dot(g2[...], out2)                                   # (H3*W3, 64)
    br = jnp.maximum(dot(feat, wbr[...]) + tbr[...], 0.0)       # (H3*W3, 128)
    pooled = dot(gpool[...], feat)                              # (1, 64)  GAP
    pb = jnp.maximum(dot(pooled, wpl[...]) + tpl[...], 0.0)     # (1, 32)
    nb = geo['nbr_ch']
    ntot = wproj.shape[0]
    proj = dot(br, wproj[0:nb, :]) + dot(pb, wproj[nb:ntot, :]) + tproj[...]
    proj = jnp.maximum(proj, 0.0)                               # (H3*W3, 32)

    # ---- head: 3x3 conv + BN + ReLU (Dropout = identity in eval), 1x1 conv --
    s_padd[...] = dot(p4[...], proj)
    Lh = geo['L_h']
    winh = jnp.concatenate([s_padd[o:o + Lh, :] for o in geo['h_offs']], axis=-1)
    hh = jnp.maximum(dot(winh, whd[...]) + thd[...], 0.0)
    logits = dot(hh, wf[...]) + bf[...]                         # (L_h, CP)

    # ---- bilinear upsample (align_corners=False) as two interp matmuls,
    #      lane-dense (Hout, Wout*CP) output slab -----------------------------
    lin = jnp.concatenate([dot(gh[w], logits) for w in range(geo['W3'])],
                          axis=-1)                              # (H3, W3*CP)
    out_ref[...] = dot(dot(mh[...], lin), bmat[...])            # (Hout, Wout*CP)


# ---------------------------------------------------------------------------
# One-time parameter / constant-matrix preparation (hoisted out of forward()).
# ---------------------------------------------------------------------------
def _prepare(params, N, Hin, Win):
    p = params
    # ---- spatial geometry through the backbone ----
    H1 = (Hin + 2 * 3 - 7) // 2 + 1          # stem conv 7x7 s2 p3
    W1 = (Win + 2 * 3 - 7) // 2 + 1
    HP1, WP1 = H1 + 2, W1 + 2                # +1 zero ring (maxpool pad)
    H2 = (H1 - 1) // 2 + 1                   # maxpool 3x3 s2 p1
    W2 = (W1 - 1) // 2 + 1
    HP2, WP2 = H2 + 2, W2 + 2                # +1 zero ring (3x3 convs pad 1)
    H3 = (H2 - 1) // 2 + 1                   # layer2 3x3 s2 p1
    W3 = (W2 - 1) // 2 + 1
    HP3, WP3 = H3 + 2, W3 + 2
    assert all(d >= max(H3, W3) for d in (12, 24, 36)), (
        "TODO(synk): general dilated-ASPP path (dilation < feature extent) not implemented")

    mp_offs = tuple(i * WP1 + j for i in range(3) for j in range(3))
    L_mp = 2 * (H2 - 1) * WP1 + 2 * (W2 - 1) + 1
    b_offs = tuple(i * WP2 + j for i in range(3) for j in range(3))
    L_b = (H2 - 1) * WP2 + W2
    idn_off = WP2 + 1
    h_offs = tuple(i * WP3 + j for i in range(3) for j in range(3))
    L_h = (H3 - 1) * WP3 + W3
    # Static OOB guards (VMEM reads are not bounds-checked on TPU).
    assert max(mp_offs) + L_mp <= HP1 * WP1
    assert max(b_offs) + L_b <= HP2 * WP2 and idn_off + L_b <= HP2 * WP2
    assert max(h_offs) + L_h <= HP3 * WP3

    # ---- constant gather / scatter / pool / interp matrices ----------------
    def interior_mask(HP, WP, Hv, Wv):
        m = np.zeros((HP * WP, 1), np.float32)
        for h in range(Hv):
            m[(h + 1) * WP + 1:(h + 1) * WP + 1 + Wv, 0] = 1.0
        return m

    mask_stem = interior_mask(HP1, WP1, H1, W1)
    mask_b = interior_mask(HP2, WP2, H2, W2)

    P2 = np.zeros((HP2 * WP2, L_mp), np.float32)     # maxpool subsample + re-pad
    P3 = np.zeros((HP2 * WP2, L_b), np.float32)      # layer1 out -> re-pad for layer2
    for h in range(H2):
        for w in range(W2):
            P2[(h + 1) * WP2 + (w + 1), 2 * h * WP1 + 2 * w] = 1.0
            P3[(h + 1) * WP2 + (w + 1), h * WP2 + w] = 1.0
    G2 = np.zeros((H3 * W3, L_b), np.float32)        # stride-2 subsample of layer2
    for h in range(H3):
        for w in range(W3):
            G2[h * W3 + w, 2 * h * WP2 + 2 * w] = 1.0
    Gpool = np.full((1, H3 * W3), 1.0 / (H3 * W3), np.float32)   # global average pool
    P4 = np.zeros((HP3 * WP3, H3 * W3), np.float32)  # re-pad for head 3x3
    for h in range(H3):
        for w in range(W3):
            P4[(h + 1) * WP3 + (w + 1), h * W3 + w] = 1.0
    Gh = np.zeros((W3, H3, L_h), np.float32)         # move w from rows to lanes
    for w in range(W3):
        for h in range(H3):
            Gh[w, h, h * WP3 + w] = 1.0
    Mh = _interp_matrix(H3, Hin)                     # (Hout, H3)
    Mw = _interp_matrix(W3, Win)                     # (Wout, W3)
    Bmat = np.kron(Mw.T, np.eye(CP, dtype=np.float32))   # (W3*CP, Wout*CP)

    # ---- weight re-layout with eval-mode BN folded into the matrices -------
    def fold(w_mat, bn):
        scale, shift = bn
        return w_mat * scale[None, :], shift.reshape(1, -1)

    def w1x1(w):        # (OC, IC, 1, 1) -> (IC, OC)
        return w[:, :, 0, 0].T

    def w3x3(w):        # (OC, IC, 3, 3) -> (9*IC, OC), tap-major (matches window concat)
        return jnp.concatenate([w[:, :, i, j].T for i in range(3) for j in range(3)],
                               axis=0)

    oc_stem = p['conv1_w'].shape[0]
    wstem, tstem = fold(jnp.transpose(p['conv1_w'], (2, 3, 1, 0)).reshape(-1, oc_stem),
                        p['conv1_bn'])
    w11, t11 = fold(w1x1(p['l1_c1_w']), p['l1_c1_bn'])
    w21, t21 = fold(w3x3(p['l1_c2_w']), p['l1_c2_bn'])
    w31, t31 = fold(w1x1(p['l1_c3_w']), p['l1_c3_bn'])
    wd1, td1 = fold(w1x1(p['l1_ds_w']), p['l1_ds_bn'])
    w12, t12 = fold(w1x1(p['l2_c1_w']), p['l2_c1_bn'])
    w22, t22 = fold(w3x3(p['l2_c2_w']), p['l2_c2_bn'])
    w32, t32 = fold(w1x1(p['l2_c3_w']), p['l2_c3_bn'])
    wd2, td2 = fold(w1x1(p['l2_ds_w']), p['l2_ds_bn'])

    # ASPP: dilation >= feature extent -> dilated 3x3 branches reduce exactly to
    # their centre tap, i.e. 1x1 convs; fuse all 4 conv branches into one matmul.
    brs = [fold(w1x1(p['aspp0_w']), p['aspp0_bn'])]
    brs += [fold(p[f'aspp_d{d}_w'][:, :, 1, 1].T, p[f'aspp_d{d}_bn'])
            for d in (12, 24, 36)]
    wbr = jnp.concatenate([w for (w, _) in brs], axis=1)
    tbr = jnp.concatenate([t for (_, t) in brs], axis=1)
    wpl, tpl = fold(w1x1(p['aspp_pool_w']), p['aspp_pool_bn'])
    wproj, tproj = fold(w1x1(p['proj_w']), p['proj_bn'])
    whd, thd = fold(w3x3(p['head_w']), p['head_bn'])
    wf = jnp.pad(w1x1(p['final_w']), ((0, 0), (0, CP - NUM_CLASSES)))
    bf = jnp.pad(p['final_b'], (0, CP - NUM_CLASSES)).reshape(1, CP)

    j = jnp.asarray
    ops = [
        j(mask_stem), wstem, tstem, j(P2), j(mask_b),
        w11, t11, w21, t21, w31, t31, wd1, td1,
        j(P3), w12, t12, w22, t22, w32, t32, wd2, td2,
        j(G2), wbr, tbr, j(Gpool), wpl, tpl, wproj, tproj,
        j(P4), whd, thd, wf, bf, j(Gh), j(Mh), j(Bmat),
    ]

    geo = dict(n_stem_rows=HP1 * WP1, HP2=HP2, WP2=WP2, HP3=HP3, WP3=WP3, W3=W3,
               mp_offs=mp_offs, L_mp=L_mp, b_offs=b_offs, L_b=L_b,
               idn_off=idn_off, h_offs=h_offs, L_h=L_h,
               nbr_ch=int(wbr.shape[1]))
    return ops, geo


def _stem_patches(x_nchw, k=7, stride=2, pad=3):
    """im2col for the stem conv, laid out on the maxpool-padded (H1+2, W1+2) grid.

    Row (per image): (oh+1)*(W1+2) + (ow+1); ring rows are zero.  Lane order per
    patch: (kh, kw, c) with c fastest (matches the stem weight re-layout)."""
    N, C, H, W = x_nchw.shape
    OH = (H + 2 * pad - k) // stride + 1
    OW = (W + 2 * pad - k) // stride + 1
    x = jnp.transpose(x_nchw, (0, 2, 3, 1))
    xp = jnp.pad(x, ((0, 0), (pad, pad), (pad, pad), (0, 0)))
    cols = [xp[:, i:i + stride * (OH - 1) + 1:stride,
               j:j + stride * (OW - 1) + 1:stride, :]
            for i in range(k) for j in range(k)]
    pat = jnp.concatenate(cols, axis=-1)                   # (N, OH, OW, k*k*C)
    pat = jnp.pad(pat, ((0, 0), (1, 1), (1, 1), (0, 0)))   # zero ring for maxpool pad
    rows = (OH + 2) * (OW + 2)
    rows_pad = _round_up(rows, 8)
    pat = pat.reshape(N, rows, k * k * C)
    pat = jnp.pad(pat, ((0, 0), (0, rows_pad - rows), (0, 0)))
    return pat.reshape(N * rows_pad, k * k * C)


def make_forward(params, input_shape):
    """Builds the fused forward pass (single pallas_call) for a fixed input shape."""
    N, Cin, Hin, Win = input_shape
    assert Cin == params['conv1_w'].shape[1]
    ops, geo = _prepare(params, N, Hin, Win)

    c_stem = params['conv1_w'].shape[0]
    c_mid1 = params['l1_c1_w'].shape[0]
    c_out1 = params['l1_c3_w'].shape[0]
    c_mid2 = params['l2_c1_w'].shape[0]
    c_proj = params['proj_w'].shape[0]
    n_pad2 = geo['HP2'] * geo['WP2']
    n_pad3 = geo['HP3'] * geo['WP3']
    R1 = _round_up(geo['n_stem_rows'], 8)
    kkc = 7 * 7 * Cin

    def const_spec(shape):
        zeros = (0,) * len(shape)
        return pl.BlockSpec(shape, lambda n, _z=zeros: _z)

    fused = pl.pallas_call(
        functools.partial(_fused_kernel, geo=geo),
        out_shape=jax.ShapeDtypeStruct((N * Hin, Win * CP), jnp.float32),
        grid=(N,),                                    # one image per grid step
        in_specs=[pl.BlockSpec((R1, kkc), lambda n: (n, 0))]
                 + [const_spec(tuple(op.shape)) for op in ops],
        out_specs=pl.BlockSpec((Hin, Win * CP), lambda n: (n, 0)),
        scratch_shapes=[
            pltpu.VMEM((geo['n_stem_rows'], c_stem), jnp.float32),  # padded stem out
            pltpu.VMEM((n_pad2, c_stem), jnp.float32),              # padded maxpool out
            pltpu.VMEM((n_pad2, c_mid1), jnp.float32),              # layer1 mid
            pltpu.VMEM((n_pad2, c_out1), jnp.float32),              # padded layer1 out
            pltpu.VMEM((n_pad2, c_mid2), jnp.float32),              # layer2 mid
            pltpu.VMEM((n_pad3, c_proj), jnp.float32),              # padded ASPP proj
        ],
        compiler_params=pltpu.CompilerParams(
            dimension_semantics=("parallel",)),       # v7x: batch over both cores
    )

    def forward(x):
        patches = _stem_patches(x)                    # (N*R1, 147)  (one-time glue)
        flat = fused(patches, *ops)                   # (N*Hout, Wout*CP), lane-dense
        out = flat.reshape(N, Hin, Win, CP)[..., :NUM_CLASSES]
        return {'out': jnp.transpose(out, (0, 3, 1, 2))}

    return forward


# ---------------------------------------------------------------------------
# Deterministic parameter construction (synthetic, no checkpoint)
# ---------------------------------------------------------------------------
class _ParamGen:
    def __init__(self, key):
        self._key, self._i = key, 0

    def _next(self):
        k = jax.random.fold_in(self._key, self._i)
        self._i += 1
        return k

    def conv(self, oc, ic, kh, kw):
        fan = ic * kh * kw
        return (jax.random.normal(self._next(), (oc, ic, kh, kw), jnp.float32)
                / np.sqrt(fan))

    def bn(self, c):
        k1, k2, k3 = jax.random.split(self._next(), 3)
        gamma = 1.0 + 0.1 * jax.random.normal(k1, (c,), jnp.float32)
        beta = 0.05 * jax.random.normal(k2, (c,), jnp.float32)
        mean = 0.05 * jax.random.normal(k3, (c,), jnp.float32)
        var = jnp.ones((c,), jnp.float32)
        scale = gamma / jnp.sqrt(var + 1e-5)   # eval-mode BN folded
        shift = beta - mean * scale
        return scale, shift

    def bias(self, c):
        return 0.05 * jax.random.normal(self._next(), (c,), jnp.float32)


def init_params(key):
    g = _ParamGen(key)
    p = {}
    # ---- backbone stem ----
    p['conv1_w'], p['conv1_bn'] = g.conv(16, 3, 7, 7), g.bn(16)
    # ---- layer1 bottleneck: 16 -> (8,8) -> 32, downsample 1x1 ----
    p['l1_c1_w'], p['l1_c1_bn'] = g.conv(8, 16, 1, 1), g.bn(8)
    p['l1_c2_w'], p['l1_c2_bn'] = g.conv(8, 8, 3, 3), g.bn(8)
    p['l1_c3_w'], p['l1_c3_bn'] = g.conv(32, 8, 1, 1), g.bn(32)
    p['l1_ds_w'], p['l1_ds_bn'] = g.conv(32, 16, 1, 1), g.bn(32)
    # ---- layer2 bottleneck (stride 2): 32 -> (16,16) -> 64 ----
    p['l2_c1_w'], p['l2_c1_bn'] = g.conv(16, 32, 1, 1), g.bn(16)
    p['l2_c2_w'], p['l2_c2_bn'] = g.conv(16, 16, 3, 3), g.bn(16)
    p['l2_c3_w'], p['l2_c3_bn'] = g.conv(64, 16, 1, 1), g.bn(64)
    p['l2_ds_w'], p['l2_ds_bn'] = g.conv(64, 32, 1, 1), g.bn(64)
    # ---- DeepLabHead / ASPP (feature channels 64 -> 32) ----
    p['aspp0_w'], p['aspp0_bn'] = g.conv(32, 64, 1, 1), g.bn(32)
    for d in (12, 24, 36):
        p[f'aspp_d{d}_w'], p[f'aspp_d{d}_bn'] = g.conv(32, 64, 3, 3), g.bn(32)
    p['aspp_pool_w'], p['aspp_pool_bn'] = g.conv(32, 64, 1, 1), g.bn(32)
    p['proj_w'], p['proj_bn'] = g.conv(32, 5 * 32, 1, 1), g.bn(32)
    p['head_w'], p['head_bn'] = g.conv(32, 32, 3, 3), g.bn(32)
    p['final_w'], p['final_b'] = g.conv(NUM_CLASSES, 32, 1, 1), g.bias(NUM_CLASSES)
    return p


if __name__ == "__main__":
    key = jax.random.PRNGKey(0)
    params = init_params(jax.random.fold_in(key, 1))
    x = jax.random.normal(jax.random.fold_in(key, 2), (2, 3, 32, 32), jnp.float32)

    fwd = jax.jit(make_forward(params, x.shape))
    result = fwd(x)
    jax.block_until_ready(result)

    assert result['out'].shape == (2, NUM_CLASSES, 32, 32)
    assert result['out'].dtype == jnp.float32
    assert bool(jnp.all(jnp.isfinite(result['out'])))
    print("KERNEL_OK")
</pallas_src>

<mosaic_0001>
module attributes {stable_mosaic.version = 11 : i64} {
  func.func @_fused_kernel(%arg0: i32, %arg1: memref<328x147xf32, #tpu.memory_space<vmem>>, %arg2: memref<324x1xf32, #tpu.memory_space<vmem>>, %arg3: memref<147x16xf32, #tpu.memory_space<vmem>>, %arg4: memref<1x16xf32, #tpu.memory_space<vmem>>, %arg5: memref<100x267xf32, #tpu.memory_space<vmem>>, %arg6: memref<100x1xf32, #tpu.memory_space<vmem>>, %arg7: memref<16x8xf32, #tpu.memory_space<vmem>>, %arg8: memref<1x8xf32, #tpu.memory_space<vmem>>, %arg9: memref<72x8xf32, #tpu.memory_space<vmem>>, %arg10: memref<1x8xf32, #tpu.memory_space<vmem>>, %arg11: memref<8x32xf32, #tpu.memory_space<vmem>>, %arg12: memref<1x32xf32, #tpu.memory_space<vmem>>, %arg13: memref<16x32xf32, #tpu.memory_space<vmem>>, %arg14: memref<1x32xf32, #tpu.memory_space<vmem>>, %arg15: memref<100x78xf32, #tpu.memory_space<vmem>>, %arg16: memref<32x16xf32, #tpu.memory_space<vmem>>, %arg17: memref<1x16xf32, #tpu.memory_space<vmem>>, %arg18: memref<144x16xf32, #tpu.memory_space<vmem>>, %arg19: memref<1x16xf32, #tpu.memory_space<vmem>>, %arg20: memref<16x64xf32, #tpu.memory_space<vmem>>, %arg21: memref<1x64xf32, #tpu.memory_space<vmem>>, %arg22: memref<32x64xf32, #tpu.memory_space<vmem>>, %arg23: memref<1x64xf32, #tpu.memory_space<vmem>>, %arg24: memref<16x78xf32, #tpu.memory_space<vmem>>, %arg25: memref<64x128xf32, #tpu.memory_space<vmem>>, %arg26: memref<1x128xf32, #tpu.memory_space<vmem>>, %arg27: memref<1x16xf32, #tpu.memory_space<vmem>>, %arg28: memref<64x32xf32, #tpu.memory_space<vmem>>, %arg29: memref<1x32xf32, #tpu.memory_space<vmem>>, %arg30: memref<160x32xf32, #tpu.memory_space<vmem>>, %arg31: memref<1x32xf32, #tpu.memory_space<vmem>>, %arg32: memref<36x16xf32, #tpu.memory_space<vmem>>, %arg33: memref<288x32xf32, #tpu.memory_space<vmem>>, %arg34: memref<1x32xf32, #tpu.memory_space<vmem>>, %arg35: memref<32x8xf32, #tpu.memory_space<vmem>>, %arg36: memref<1x8xf32, #tpu.memory_space<vmem>>, %arg37: memref<4x4x22xf32, #tpu.memory_space<vmem>>, %arg38: memref<32x4xf32, #tpu.memory_space<vmem>>, %arg39: memref<32x256xf32, #tpu.memory_space<vmem>>, %arg40: memref<32x256xf32, #tpu.memory_space<vmem>>, %arg41: memref<324x16xf32, #tpu.memory_space<vmem>>, %arg42: memref<100x16xf32, #tpu.memory_space<vmem>>, %arg43: memref<100x8xf32, #tpu.memory_space<vmem>>, %arg44: memref<100x32xf32, #tpu.memory_space<vmem>>, %arg45: memref<100x16xf32, #tpu.memory_space<vmem>>, %arg46: memref<36x32xf32, #tpu.memory_space<vmem>>) attributes {dimension_semantics = [#tpu.dimension_semantics<parallel>], iteration_bounds = array<i64: 2>, scalar_prefetch = 0 : i64, scratch_operands = 6 : i64, tpu.core_type = #tpu.core_type<tc>, window_params = [{transform_indices = @transform_0, window_bounds = array<i64: 328, 147>}, {pipeline_mode = #tpu.pipeline_mode<synchronous>, transform_indices = @transform_1, window_bounds = array<i64: 324, 1>}, {pipeline_mode = #tpu.pipeline_mode<synchronous>, transform_indices = @transform_2, window_bounds = array<i64: 147, 16>}, {pipeline_mode = #tpu.pipeline_mode<synchronous>, transform_indices = @transform_3, window_bounds = array<i64: 1, 16>}, {pipeline_mode = #tpu.pipeline_mode<synchronous>, transform_indices = @transform_4, window_bounds = array<i64: 100, 267>}, {pipeline_mode = #tpu.pipeline_mode<synchronous>, transform_indices = @transform_5, window_bounds = array<i64: 100, 1>}, {pipeline_mode = #tpu.pipeline_mode<synchronous>, transform_indices = @transform_6, window_bounds = array<i64: 16, 8>}, {pipeline_mode = #tpu.pipeline_mode<synchronous>, transform_indices = @transform_7, window_bounds = array<i64: 1, 8>}, {pipeline_mode = #tpu.pipeline_mode<synchronous>, transform_indices = @transform_8, window_bounds = array<i64: 72, 8>}, {pipeline_mode = #tpu.pipeline_mode<synchronous>, transform_indices = @transform_9, window_bounds = array<i64: 1, 8>}, {pipeline_mode = #tpu.pipeline_mode<synchronous>, transform_indices = @transform_10, window_bounds = array<i64: 8, 32>}, {pipeline_mode = #tpu.pipeline_mode<synchronous>, transform_indices = @transform_11, window_bounds = array<i64: 1, 32>}, {pipeline_mode = #tpu.pipeline_mode<synchronous>, transform_indices = @transform_12, window_bounds = array<i64: 16, 32>}, {pipeline_mode = #tpu.pipeline_mode<synchronous>, transform_indices = @transform_13, window_bounds = array<i64: 1, 32>}, {pipeline_mode = #tpu.pipeline_mode<synchronous>, transform_indices = @transform_14, window_bounds = array<i64: 100, 78>}, {pipeline_mode = #tpu.pipeline_mode<synchronous>, transform_indices = @transform_15, window_bounds = array<i64: 32, 16>}, {pipeline_mode = #tpu.pipeline_mode<synchronous>, transform_indices = @transform_16, window_bounds = array<i64: 1, 16>}, {pipeline_mode = #tpu.pipeline_mode<synchronous>, transform_indices = @transform_17, window_bounds = array<i64: 144, 16>}, {pipeline_mode = #tpu.pipeline_mode<synchronous>, transform_indices = @transform_18, window_bounds = array<i64: 1, 16>}, {pipeline_mode = #tpu.pipeline_mode<synchronous>, transform_indices = @transform_19, window_bounds = array<i64: 16, 64>}, {pipeline_mode = #tpu.pipeline_mode<synchronous>, transform_indices = @transform_20, window_bounds = array<i64: 1, 64>}, {pipeline_mode = #tpu.pipeline_mode<synchronous>, transform_indices = @transform_21, window_bounds = array<i64: 32, 64>}, {pipeline_mode = #tpu.pipeline_mode<synchronous>, transform_indices = @transform_22, window_bounds = array<i64: 1, 64>}, {pipeline_mode = #tpu.pipeline_mode<synchronous>, transform_indices = @transform_23, window_bounds = array<i64: 16, 78>}, {pipeline_mode = #tpu.pipeline_mode<synchronous>, transform_indices = @transform_24, window_bounds = array<i64: 64, 128>}, {pipeline_mode = #tpu.pipeline_mode<synchronous>, transform_indices = @transform_25, window_bounds = array<i64: 1, 128>}, {pipeline_mode = #tpu.pipeline_mode<synchronous>, transform_indices = @transform_26, window_bounds = array<i64: 1, 16>}, {pipeline_mode = #tpu.pipeline_mode<synchronous>, transform_indices = @transform_27, window_bounds = array<i64: 64, 32>}, {pipeline_mode = #tpu.pipeline_mode<synchronous>, transform_indices = @transform_28, window_bounds = array<i64: 1, 32>}, {pipeline_mode = #tpu.pipeline_mode<synchronous>, transform_indices = @transform_29, window_bounds = array<i64: 160, 32>}, {pipeline_mode = #tpu.pipeline_mode<synchronous>, transform_indices = @transform_30, window_bounds = array<i64: 1, 32>}, {pipeline_mode = #tpu.pipeline_mode<synchronous>, transform_indices = @transform_31, window_bounds = array<i64: 36, 16>}, {pipeline_mode = #tpu.pipeline_mode<synchronous>, transform_indices = @transform_32, window_bounds = array<i64: 288, 32>}, {pipeline_mode = #tpu.pipeline_mode<synchronous>, transform_indices = @transform_33, window_bounds = array<i64: 1, 32>}, {pipeline_mode = #tpu.pipeline_mode<synchronous>, transform_indices = @transform_34, window_bounds = array<i64: 32, 8>}, {pipeline_mode = #tpu.pipeline_mode<synchronous>, transform_indices = @transform_35, window_bounds = array<i64: 1, 8>}, {pipeline_mode = #tpu.pipeline_mode<synchronous>, transform_indices = @transform_36, window_bounds = array<i64: 4, 4, 22>}, {pipeline_mode = #tpu.pipeline_mode<synchronous>, transform_indices = @transform_37, window_bounds = array<i64: 32, 4>}, {pipeline_mode = #tpu.pipeline_mode<synchronous>, transform_indices = @transform_38, window_bounds = array<i64: 32, 256>}, {transform_indices = @transform_39, window_bounds = array<i64: 32, 256>}]} {
    %c0 = arith.constant 0 : index
    %c0_0 = arith.constant 0 : index
    %0 = vector.load %arg1[%c0, %c0_0] : memref<328x147xf32, #tpu.memory_space<vmem>>, vector<324x147xf32>
    %c0_1 = arith.constant 0 : index
    %c0_2 = arith.constant 0 : index
    %1 = vector.load %arg3[%c0_1, %c0_2] : memref<147x16xf32, #tpu.memory_space<vmem>>, vector<147x16xf32>
    %cst = arith.constant dense<0.000000e+00> : vector<324x16xf32>
    %2 = tpu.matmul %0, %1, %cst {dimension_numbers = #tpu.dot_dimension_numbers<[1], [0], [0], [1], [0, 0, 1, 1], [], []>} : vector<324x147xf32>, vector<147x16xf32>, vector<324x16xf32> -> vector<324x16xf32>
    %c0_3 = arith.constant 0 : index
    %c0_4 = arith.constant 0 : index
    %3 = vector.load %arg4[%c0_3, %c0_4] : memref<1x16xf32, #tpu.memory_space<vmem>>, vector<1x16xf32>
    %4 = vector.broadcast %3 : vector<1x16xf32> to vector<324x16xf32>
    %5 = arith.addf %2, %4 : vector<324x16xf32>
    %cst_5 = arith.constant 0.000000e+00 : f32
    %6 = vector.broadcast %cst_5 : f32 to vector<324x16xf32>
    %7 = arith.maximumf %5, %6 : vector<324x16xf32>
    %c0_6 = arith.constant 0 : index
    %c0_7 = arith.constant 0 : index
    %8 = vector.load %arg2[%c0_6, %c0_7] : memref<324x1xf32, #tpu.memory_space<vmem>>, vector<324x1xf32>
    %9 = vector.broadcast %8 : vector<324x1xf32> to vector<324x16xf32>
    %10 = arith.mulf %7, %9 : vector<324x16xf32>
    %c0_8 = arith.constant 0 : index
    %c0_9 = arith.constant 0 : index
    %11 = vector.load %arg41[%c0_8, %c0_9] : memref<324x16xf32, #tpu.memory_space<vmem>>, vector<324x16xf32>
    tpu.vector_store %arg41[%c0_8, %c0_9], %10 {strides = array<i32>} : memref<324x16xf32, #tpu.memory_space<vmem>>, vector<324x16xf32>,
    %c0_10 = arith.constant 0 : index
    %c0_11 = arith.constant 0 : index
    %12 = vector.load %arg41[%c0_10, %c0_11] : memref<324x16xf32, #tpu.memory_space<vmem>>, vector<267x16xf32>
    %c1 = arith.constant 1 : index
    %c0_12 = arith.constant 0 : index
    %13 = vector.load %arg41[%c1, %c0_12] : memref<324x16xf32, #tpu.memory_space<vmem>>, vector<267x16xf32>
    %14 = arith.maximumf %12, %13 : vector<267x16xf32>
    %c2 = arith.constant 2 : index
    %c0_13 = arith.constant 0 : index
    %15 = vector.load %arg41[%c2, %c0_13] : memref<324x16xf32, #tpu.memory_space<vmem>>, vector<267x16xf32>
    %16 = arith.maximumf %14, %15 : vector<267x16xf32>
    %c18 = arith.constant 18 : index
    %c0_14 = arith.constant 0 : index
    %17 = vector.load %arg41[%c18, %c0_14] : memref<324x16xf32, #tpu.memory_space<vmem>>, vector<267x16xf32>
    %18 = arith.maximumf %16, %17 : vector<267x16xf32>
    %c19 = arith.constant 19 : index
    %c0_15 = arith.constant 0 : index
    %19 = vector.load %arg41[%c19, %c0_15] : memref<324x16xf32, #tpu.memory_space<vmem>>, vector<267x16xf32>
    %20 = arith.maximumf %18, %19 : vector<267x16xf32>
    %c20 = arith.constant 20 : index
    %c0_16 = arith.constant 0 : index
    %21 = vector.load %arg41[%c20, %c0_16] : memref<324x16xf32, #tpu.memory_space<vmem>>, vector<267x16xf32>
    %22 = arith.maximumf %20, %21 : vector<267x16xf32>
    %c36 = arith.constant 36 : index
    %c0_17 = arith.constant 0 : index
    %23 = vector.load %arg41[%c36, %c0_17] : memref<324x16xf32, #tpu.memory_space<vmem>>, vector<267x16xf32>
    %24 = arith.maximumf %22, %23 : vector<267x16xf32>
    %c37 = arith.constant 37 : index
    %c0_18 = arith.constant 0 : index
    %25 = vector.load %arg41[%c37, %c0_18] : memref<324x16xf32, #tpu.memory_space<vmem>>, vector<267x16xf32>
    %26 = arith.maximumf %24, %25 : vector<267x16xf32>
    %c38 = arith.constant 38 : index
    %c0_19 = arith.constant 0 : index
    %27 = vector.load %arg41[%c38, %c0_19] : memref<324x16xf32, #tpu.memory_space<vmem>>, vector<267x16xf32>
    %28 = arith.maximumf %26, %27 : vector<267x16xf32>
    %c0_20 = arith.constant 0 : index
    %c0_21 = arith.constant 0 : index
    %29 = vector.load %arg5[%c0_20, %c0_21] : memref<100x267xf32, #tpu.memory_space<vmem>>, vector<100x267xf32>
    %cst_22 = arith.constant dense<0.000000e+00> : vector<100x16xf32>
    %30 = tpu.matmul %29, %28, %cst_22 {dimension_numbers = #tpu.dot_dimension_numbers<[1], [0], [0], [1], [0, 0, 1, 1], [], []>} : vector<100x267xf32>, vector<267x16xf32>, vector<100x16xf32> -> vector<100x16xf32>
    %c0_23 = arith.constant 0 : index
    %c0_24 = arith.constant 0 : index
    %31 = vector.load %arg42[%c0_23, %c0_24] : memref<100x16xf32, #tpu.memory_space<vmem>>, vector<100x16xf32>
    tpu.vector_store %arg42[%c0_23, %c0_24], %30 {strides = array<i32>} : memref<100x16xf32, #tpu.memory_space<vmem>>, vector<100x16xf32>,
    %c0_25 = arith.constant 0 : index
    %c0_26 = arith.constant 0 : index
    %32 = vector.load %arg42[%c0_25, %c0_26] : memref<100x16xf32, #tpu.memory_space<vmem>>, vector<100x16xf32>
    %c0_27 = arith.constant 0 : index
    %c0_28 = arith.constant 0 : index
    %33 = vector.load %arg7[%c0_27, %c0_28] : memref<16x8xf32, #tpu.memory_space<vmem>>, vector<16x8xf32>
    %cst_29 = arith.constant dense<0.000000e+00> : vector<100x8xf32>
    %34 = tpu.matmul %32, %33, %cst_29 {dimension_numbers = #tpu.dot_dimension_numbers<[1], [0], [0], [1], [0, 0, 1, 1], [], []>} : vector<100x16xf32>, vector<16x8xf32>, vector<100x8xf32> -> vector<100x8xf32>
    %c0_30 = arith.constant 0 : index
    %c0_31 = arith.constant 0 : index
    %35 = vector.load %arg8[%c0_30, %c0_31] : memref<1x8xf32, #tpu.memory_space<vmem>>, vector<1x8xf32>
    %36 = vector.broadcast %35 : vector<1x8xf32> to vector<100x8xf32>
    %37 = arith.addf %34, %36 : vector<100x8xf32>
    %cst_32 = arith.constant 0.000000e+00 : f32
    %38 = vector.broadcast %cst_32 : f32 to vector<100x8xf32>
    %39 = arith.maximumf %37, %38 : vector<100x8xf32>
    %c0_33 = arith.constant 0 : index
    %c0_34 = arith.constant 0 : index
    %40 = vector.load %arg6[%c0_33, %c0_34] : memref<100x1xf32, #tpu.memory_space<vmem>>, vector<100x1xf32>
    %41 = vector.broadcast %40 : vector<100x1xf32> to vector<100x8xf32>
    %42 = arith.mulf %39, %41 : vector<100x8xf32>
    %c0_35 = arith.constant 0 : index
    %c0_36 = arith.constant 0 : index
    %43 = vector.load %arg43[%c0_35, %c0_36] : memref<100x8xf32, #tpu.memory_space<vmem>>, vector<100x8xf32>
    tpu.vector_store %arg43[%c0_35, %c0_36], %42 {strides = array<i32>} : memref<100x8xf32, #tpu.memory_space<vmem>>, vector<100x8xf32>,
    %c0_37 = arith.constant 0 : index
    %c0_38 = arith.constant 0 : index
    %44 = vector.load %arg43[%c0_37, %c0_38] : memref<100x8xf32, #tpu.memory_space<vmem>>, vector<78x8xf32>
    %c1_39 = arith.constant 1 : index
    %c0_40 = arith.constant 0 : index
    %45 = vector.load %arg43[%c1_39, %c0_40] : memref<100x8xf32, #tpu.memory_space<vmem>>, vector<78x8xf32>
    %c2_41 = arith.constant 2 : index
    %c0_42 = arith.constant 0 : index
    %46 = vector.load %arg43[%c2_41, %c0_42] : memref<100x8xf32, #tpu.memory_space<vmem>>, vector<78x8xf32>
    %c10 = arith.constant 10 : index
    %c0_43 = arith.constant 0 : index
    %47 = vector.load %arg43[%c10, %c0_43] : memref<100x8xf32, #tpu.memory_space<vmem>>, vector<78x8xf32>
    %c11 = arith.constant 11 : index
    %c0_44 = arith.constant 0 : index
    %48 = vector.load %arg43[%c11, %c0_44] : memref<100x8xf32, #tpu.memory_space<vmem>>, vector<78x8xf32>
    %c12 = arith.constant 12 : index
    %c0_45 = arith.constant 0 : index
    %49 = vector.load %arg43[%c12, %c0_45] : memref<100x8xf32, #tpu.memory_space<vmem>>, vector<78x8xf32>
    %c20_46 = arith.constant 20 : index
    %c0_47 = arith.constant 0 : index
    %50 = vector.load %arg43[%c20_46, %c0_47] : memref<100x8xf32, #tpu.memory_space<vmem>>, vector<78x8xf32>
    %c21 = arith.constant 21 : index
    %c0_48 = arith.constant 0 : index
    %51 = vector.load %arg43[%c21, %c0_48] : memref<100x8xf32, #tpu.memory_space<vmem>>, vector<78x8xf32>
    %c22 = arith.constant 22 : index
    %c0_49 = arith.constant 0 : index
    %52 = vector.load %arg43[%c22, %c0_49] : memref<100x8xf32, #tpu.memory_space<vmem>>, vector<78x8xf32>
    %53 = tpu.concatenate %44, %45, %46, %47, %48, %49, %50, %51, %52 in 1 : vector<78x8xf32>, vector<78x8xf32>, vector<78x8xf32>, vector<78x8xf32>, vector<78x8xf32>, vector<78x8xf32>, vector<78x8xf32>, vector<78x8xf32>, vector<78x8xf32> -> vector<78x72xf32>
    %c0_50 = arith.constant 0 : index
    %c0_51 = arith.constant 0 : index
    %54 = vector.load %arg9[%c0_50, %c0_51] : memref<72x8xf32, #tpu.memory_space<vmem>>, vector<72x8xf32>
    %cst_52 = arith.constant dense<0.000000e+00> : vector<78x8xf32>
    %55 = tpu.matmul %53, %54, %cst_52 {dimension_numbers = #tpu.dot_dimension_numbers<[1], [0], [0], [1], [0, 0, 1, 1], [], []>} : vector<78x72xf32>, vector<72x8xf32>, vector<78x8xf32> -> vector<78x8xf32>
    %c0_53 = arith.constant 0 : index
    %c0_54 = arith.constant 0 : index
    %56 = vector.load %arg10[%c0_53, %c0_54] : memref<1x8xf32, #tpu.memory_space<vmem>>, vector<1x8xf32>
    %57 = vector.broadcast %56 : vector<1x8xf32> to vector<78x8xf32>
    %58 = arith.addf %55, %57 : vector<78x8xf32>
    %cst_55 = arith.constant 0.000000e+00 : f32
    %59 = vector.broadcast %cst_55 : f32 to vector<78x8xf32>
    %60 = arith.maximumf %58, %59 : vector<78x8xf32>
    %c0_56 = arith.constant 0 : index
    %c0_57 = arith.constant 0 : index
    %61 = vector.load %arg11[%c0_56, %c0_57] : memref<8x32xf32, #tpu.memory_space<vmem>>, vector<8x32xf32>
    %cst_58 = arith.constant dense<0.000000e+00> : vector<78x32xf32>
    %62 = tpu.matmul %60, %61, %cst_58 {dimension_numbers = #tpu.dot_dimension_numbers<[1], [0], [0], [1], [0, 0, 1, 1], [], []>} : vector<78x8xf32>, vector<8x32xf32>, vector<78x32xf32> -> vector<78x32xf32>
    %c0_59 = arith.constant 0 : index
    %c0_60 = arith.constant 0 : index
    %63 = vector.load %arg12[%c0_59, %c0_60] : memref<1x32xf32, #tpu.memory_space<vmem>>, vector<1x32xf32>
    %64 = vector.broadcast %63 : vector<1x32xf32> to vector<78x32xf32>
    %65 = arith.addf %62, %64 : vector<78x32xf32>
    %c11_61 = arith.constant 11 : index
    %c0_62 = arith.constant 0 : index
    %66 = vector.load %arg42[%c11_61, %c0_62] : memref<100x16xf32, #tpu.memory_space<vmem>>, vector<78x16xf32>
    %c0_63 = arith.constant 0 : index
    %c0_64 = arith.constant 0 : index
    %67 = vector.load %arg13[%c0_63, %c0_64] : memref<16x32xf32, #tpu.memory_space<vmem>>, vector<16x32xf32>
    %cst_65 = arith.constant dense<0.000000e+00> : vector<78x32xf32>
    %68 = tpu.matmul %66, %67, %cst_65 {dimension_numbers = #tpu.dot_dimension_numbers<[1], [0], [0], [1], [0, 0, 1, 1], [], []>} : vector<78x16xf32>, vector<16x32xf32>, vector<78x32xf32> -> vector<78x32xf32>
    %c0_66 = arith.constant 0 : index
    %c0_67 = arith.constant 0 : index
    %69 = vector.load %arg14[%c0_66, %c0_67] : memref<1x32xf32, #tpu.memory_space<vmem>>, vector<1x32xf32>
    %70 = vector.broadcast %69 : vector<1x32xf32> to vector<78x32xf32>
    %71 = arith.addf %68, %70 : vector<78x32xf32>
    %72 = arith.addf %65, %71 : vector<78x32xf32>
    %cst_68 = arith.constant 0.000000e+00 : f32
    %73 = vector.broadcast %cst_68 : f32 to vector<78x32xf32>
    %74 = arith.maximumf %72, %73 : vector<78x32xf32>
    %c0_69 = arith.constant 0 : index
    %c0_70 = arith.constant 0 : index
    %75 = vector.load %arg15[%c0_69, %c0_70] : memref<100x78xf32, #tpu.memory_space<vmem>>, vector<100x78xf32>
    %cst_71 = arith.constant dense<0.000000e+00> : vector<100x32xf32>
    %76 = tpu.matmul %75, %74, %cst_71 {dimension_numbers = #tpu.dot_dimension_numbers<[1], [0], [0], [1], [0, 0, 1, 1], [], []>} : vector<100x78xf32>, vector<78x32xf32>, vector<100x32xf32> -> vector<100x32xf32>
    %c0_72 = arith.constant 0 : index
    %c0_73 = arith.constant 0 : index
    %77 = vector.load %arg44[%c0_72, %c0_73] : memref<100x32xf32, #tpu.memory_space<vmem>>, vector<100x32xf32>
    tpu.vector_store %arg44[%c0_72, %c0_73], %76 {strides = array<i32>} : memref<100x32xf32, #tpu.memory_space<vmem>>, vector<100x32xf32>,
    %c0_74 = arith.constant 0 : index
    %c0_75 = arith.constant 0 : index
    %78 = vector.load %arg44[%c0_74, %c0_75] : memref<100x32xf32, #tpu.memory_space<vmem>>, vector<100x32xf32>
    %c0_76 = arith.constant 0 : index
    %c0_77 = arith.constant 0 : index
    %79 = vector.load %arg16[%c0_76, %c0_77] : memref<32x16xf32, #tpu.memory_space<vmem>>, vector<32x16xf32>
    %cst_78 = arith.constant dense<0.000000e+00> : vector<100x16xf32>
    %80 = tpu.matmul %78, %79, %cst_78 {dimension_numbers = #tpu.dot_dimension_numbers<[1], [0], [0], [1], [0, 0, 1, 1], [], []>} : vector<100x32xf32>, vector<32x16xf32>, vector<100x16xf32> -> vector<100x16xf32>
    %c0_79 = arith.constant 0 : index
    %c0_80 = arith.constant 0 : index
    %81 = vector.load %arg17[%c0_79, %c0_80] : memref<1x16xf32, #tpu.memory_space<vmem>>, vector<1x16xf32>
    %82 = vector.broadcast %81 : vector<1x16xf32> to vector<100x16xf32>
    %83 = arith.addf %80, %82 : vector<100x16xf32>
    %cst_81 = arith.constant 0.000000e+00 : f32
    %84 = vector.broadcast %cst_81 : f32 to vector<100x16xf32>
    %85 = arith.maximumf %83, %84 : vector<100x16xf32>
    %c0_82 = arith.constant 0 : index
    %c0_83 = arith.constant 0 : index
    %86 = vector.load %arg6[%c0_82, %c0_83] : memref<100x1xf32, #tpu.memory_space<vmem>>, vector<100x1xf32>
    %87 = vector.broadcast %86 : vector<100x1xf32> to vector<100x16xf32>
    %88 = arith.mulf %85, %87 : vector<100x16xf32>
    %c0_84 = arith.constant 0 : index
    %c0_85 = arith.constant 0 : index
    %89 = vector.load %arg45[%c0_84, %c0_85] : memref<100x16xf32, #tpu.memory_space<vmem>>, vector<100x16xf32>
    tpu.vector_store %arg45[%c0_84, %c0_85], %88 {strides = array<i32>} : memref<100x16xf32, #tpu.memory_space<vmem>>, vector<100x16xf32>,
    %c0_86 = arith.constant 0 : index
    %c0_87 = arith.constant 0 : index
    %90 = vector.load %arg45[%c0_86, %c0_87] : memref<100x16xf32, #tpu.memory_space<vmem>>, vector<78x16xf32>
    %c1_88 = arith.constant 1 : index
    %c0_89 = arith.constant 0 : index
    %91 = vector.load %arg45[%c1_88, %c0_89] : memref<100x16xf32, #tpu.memory_space<vmem>>, vector<78x16xf32>
    %c2_90 = arith.constant 2 : index
    %c0_91 = arith.constant 0 : index
    %92 = vector.load %arg45[%c2_90, %c0_91] : memref<100x16xf32, #tpu.memory_space<vmem>>, vector<78x16xf32>
    %c10_92 = arith.constant 10 : index
    %c0_93 = arith.constant 0 : index
    %93 = vector.load %arg45[%c10_92, %c0_93] : memref<100x16xf32, #tpu.memory_space<vmem>>, vector<78x16xf32>
    %c11_94 = arith.constant 11 : index
    %c0_95 = arith.constant 0 : index
    %94 = vector.load %arg45[%c11_94, %c0_95] : memref<100x16xf32, #tpu.memory_space<vmem>>, vector<78x16xf32>
    %c12_96 = arith.constant 12 : index
    %c0_97 = arith.constant 0 : index
    %95 = vector.load %arg45[%c12_96, %c0_97] : memref<100x16xf32, #tpu.memory_space<vmem>>, vector<78x16xf32>
    %c20_98 = arith.constant 20 : index
    %c0_99 = arith.constant 0 : index
    %96 = vector.load %arg45[%c20_98, %c0_99] : memref<100x16xf32, #tpu.memory_space<vmem>>, vector<78x16xf32>
    %c21_100 = arith.constant 21 : index
    %c0_101 = arith.constant 0 : index
    %97 = vector.load %arg45[%c21_100, %c0_101] : memref<100x16xf32, #tpu.memory_space<vmem>>, vector<78x16xf32>
    %c22_102 = arith.constant 22 : index
    %c0_103 = arith.constant 0 : index
    %98 = vector.load %arg45[%c22_102, %c0_103] : memref<100x16xf32, #tpu.memory_space<vmem>>, vector<78x16xf32>
    %99 = tpu.concatenate %90, %91, %92, %93, %94, %95, %96, %97, %98 in 1 : vector<78x16xf32>, vector<78x16xf32>, vector<78x16xf32>, vector<78x16xf32>, vector<78x16xf32>, vector<78x16xf32>, vector<78x16xf32>, vector<78x16xf32>, vector<78x16xf32> -> vector<78x144xf32>
    %c0_104 = arith.constant 0 : index
    %c0_105 = arith.constant 0 : index
    %100 = vector.load %arg18[%c0_104, %c0_105] : memref<144x16xf32, #tpu.memory_space<vmem>>, vector<144x16xf32>
    %cst_106 = arith.constant dense<0.000000e+00> : vector<78x16xf32>
    %101 = tpu.matmul %99, %100, %cst_106 {dimension_numbers = #tpu.dot_dimension_numbers<[1], [0], [0], [1], [0, 0, 1, 1], [], []>} : vector<78x144xf32>, vector<144x16xf32>, vector<78x16xf32> -> vector<78x16xf32>
    %c0_107 = arith.constant 0 : index
    %c0_108 = arith.constant 0 : index
    %102 = vector.load %arg19[%c0_107, %c0_108] : memref<1x16xf32, #tpu.memory_space<vmem>>, vector<1x16xf32>
    %103 = vector.broadcast %102 : vector<1x16xf32> to vector<78x16xf32>
    %104 = arith.addf %101, %103 : vector<78x16xf32>
    %cst_109 = arith.constant 0.000000e+00 : f32
    %105 = vector.broadcast %cst_109 : f32 to vector<78x16xf32>
    %106 = arith.maximumf %104, %105 : vector<78x16xf32>
    %c0_110 = arith.constant 0 : index
    %c0_111 = arith.constant 0 : index
    %107 = vector.load %arg20[%c0_110, %c0_111] : memref<16x64xf32, #tpu.memory_space<vmem>>, vector<16x64xf32>
    %cst_112 = arith.constant dense<0.000000e+00> : vector<78x64xf32>
    %108 = tpu.matmul %106, %107, %cst_112 {dimension_numbers = #tpu.dot_dimension_numbers<[1], [0], [0], [1], [0, 0, 1, 1], [], []>} : vector<78x16xf32>, vector<16x64xf32>, vector<78x64xf32> -> vector<78x64xf32>
    %c0_113 = arith.constant 0 : index
    %c0_114 = arith.constant 0 : index
    %109 = vector.load %arg21[%c0_113, %c0_114] : memref<1x64xf32, #tpu.memory_space<vmem>>, vector<1x64xf32>
    %110 = vector.broadcast %109 : vector<1x64xf32> to vector<78x64xf32>
    %111 = arith.addf %108, %110 : vector<78x64xf32>
    %c11_115 = arith.constant 11 : index
    %c0_116 = arith.constant 0 : index
    %112 = vector.load %arg44[%c11_115, %c0_116] : memref<100x32xf32, #tpu.memory_space<vmem>>, vector<78x32xf32>
    %c0_117 = arith.constant 0 : index
    %c0_118 = arith.constant 0 : index
    %113 = vector.load %arg22[%c0_117, %c0_118] : memref<32x64xf32, #tpu.memory_space<vmem>>, vector<32x64xf32>
    %cst_119 = arith.constant dense<0.000000e+00> : vector<78x64xf32>
    %114 = tpu.matmul %112, %113, %cst_119 {dimension_numbers = #tpu.dot_dimension_numbers<[1], [0], [0], [1], [0, 0, 1, 1], [], []>} : vector<78x32xf32>, vector<32x64xf32>, vector<78x64xf32> -> vector<78x64xf32>
    %c0_120 = arith.constant 0 : index
    %c0_121 = arith.constant 0 : index
    %115 = vector.load %arg23[%c0_120, %c0_121] : memref<1x64xf32, #tpu.memory_space<vmem>>, vector<1x64xf32>
    %116 = vector.broadcast %115 : vector<1x64xf32> to vector<78x64xf32>
    %117 = arith.addf %114, %116 : vector<78x64xf32>
    %118 = arith.addf %111, %117 : vector<78x64xf32>
    %cst_122 = arith.constant 0.000000e+00 : f32
    %119 = vector.broadcast %cst_122 : f32 to vector<78x64xf32>
    %120 = arith.maximumf %118, %119 : vector<78x64xf32>
    %c0_123 = arith.constant 0 : index
    %c0_124 = arith.constant 0 : index
    %121 = vector.load %arg24[%c0_123, %c0_124] : memref<16x78xf32, #tpu.memory_space<vmem>>, vector<16x78xf32>
    %cst_125 = arith.constant dense<0.000000e+00> : vector<16x64xf32>
    %122 = tpu.matmul %121, %120, %cst_125 {dimension_numbers = #tpu.dot_dimension_numbers<[1], [0], [0], [1], [0, 0, 1, 1], [], []>} : vector<16x78xf32>, vector<78x64xf32>, vector<16x64xf32> -> vector<16x64xf32>
    %c0_126 = arith.constant 0 : index
    %c0_127 = arith.constant 0 : index
    %123 = vector.load %arg25[%c0_126, %c0_127] : memref<64x128xf32, #tpu.memory_space<vmem>>, vector<64x128xf32>
    %cst_128 = arith.constant dense<0.000000e+00> : vector<16x128xf32>
    %124 = tpu.matmul %122, %123, %cst_128 {dimension_numbers = #tpu.dot_dimension_numbers<[1], [0], [0], [1], [0, 0, 1, 1], [], []>} : vector<16x64xf32>, vector<64x128xf32>, vector<16x128xf32> -> vector<16x128xf32>
    %c0_129 = arith.constant 0 : index
    %c0_130 = arith.constant 0 : index
    %125 = vector.load %arg26[%c0_129, %c0_130] : memref<1x128xf32, #tpu.memory_space<vmem>>, vector<1x128xf32>
    %126 = vector.broadcast %125 : vector<1x128xf32> to vector<16x128xf32>
    %127 = arith.addf %124, %126 : vector<16x128xf32>
    %cst_131 = arith.constant 0.000000e+00 : f32
    %128 = vector.broadcast %cst_131 : f32 to vector<16x128xf32>
    %129 = arith.maximumf %127, %128 : vector<16x128xf32>
    %c0_132 = arith.constant 0 : index
    %c0_133 = arith.constant 0 : index
    %130 = vector.load %arg27[%c0_132, %c0_133] : memref<1x16xf32, #tpu.memory_space<vmem>>, vector<1x16xf32>
    %cst_134 = arith.constant dense<0.000000e+00> : vector<1x64xf32>
    %131 = tpu.matmul %130, %122, %cst_134 {dimension_numbers = #tpu.dot_dimension_numbers<[1], [0], [0], [1], [0, 0, 1, 1], [], []>} : vector<1x16xf32>, vector<16x64xf32>, vector<1x64xf32> -> vector<1x64xf32>
    %c0_135 = arith.constant 0 : index
    %c0_136 = arith.constant 0 : index
    %132 = vector.load %arg28[%c0_135, %c0_136] : memref<64x32xf32, #tpu.memory_space<vmem>>, vector<64x32xf32>
    %cst_137 = arith.constant dense<0.000000e+00> : vector<1x32xf32>
    %133 = tpu.matmul %131, %132, %cst_137 {dimension_numbers = #tpu.dot_dimension_numbers<[1], [0], [0], [1], [0, 0, 1, 1], [], []>} : vector<1x64xf32>, vector<64x32xf32>, vector<1x32xf32> -> vector<1x32xf32>
    %c0_138 = arith.constant 0 : index
    %c0_139 = arith.constant 0 : index
    %134 = vector.load %arg29[%c0_138, %c0_139] : memref<1x32xf32, #tpu.memory_space<vmem>>, vector<1x32xf32>
    %135 = arith.addf %133, %134 : vector<1x32xf32>
    %cst_140 = arith.constant 0.000000e+00 : f32
    %136 = vector.broadcast %cst_140 : f32 to vector<1x32xf32>
    %137 = arith.maximumf %135, %136 : vector<1x32xf32>
    %c0_141 = arith.constant 0 : index
    %c0_142 = arith.constant 0 : index
    %138 = vector.load %arg30[%c0_141, %c0_142] : memref<160x32xf32, #tpu.memory_space<vmem>>, vector<128x32xf32>
    %cst_143 = arith.constant dense<0.000000e+00> : vector<16x32xf32>
    %139 = tpu.matmul %129, %138, %cst_143 {dimension_numbers = #tpu.dot_dimension_numbers<[1], [0], [0], [1], [0, 0, 1, 1], [], []>} : vector<16x128xf32>, vector<128x32xf32>, vector<16x32xf32> -> vector<16x32xf32>
    %c128 = arith.constant 128 : index
    %c0_144 = arith.constant 0 : index
    %140 = vector.load %arg30[%c128, %c0_144] : memref<160x32xf32, #tpu.memory_space<vmem>>, vector<32x32xf32>
    %cst_145 = arith.constant dense<0.000000e+00> : vector<1x32xf32>
    %141 = tpu.matmul %137, %140, %cst_145 {dimension_numbers = #tpu.dot_dimension_numbers<[1], [0], [0], [1], [0, 0, 1, 1], [], []>} : vector<1x32xf32>, vector<32x32xf32>, vector<1x32xf32> -> vector<1x32xf32>
    %142 = vector.broadcast %141 : vector<1x32xf32> to vector<16x32xf32>
    %143 = arith.addf %139, %142 : vector<16x32xf32>
    %c0_146 = arith.constant 0 : index
    %c0_147 = arith.constant 0 : index
    %144 = vector.load %arg31[%c0_146, %c0_147] : memref<1x32xf32, #tpu.memory_space<vmem>>, vector<1x32xf32>
    %145 = vector.broadcast %144 : vector<1x32xf32> to vector<16x32xf32>
    %146 = arith.addf %143, %145 : vector<16x32xf32>
    %cst_148 = arith.constant 0.000000e+00 : f32
    %147 = vector.broadcast %cst_148 : f32 to vector<16x32xf32>
    %148 = arith.maximumf %146, %147 : vector<16x32xf32>
    %c0_149 = arith.constant 0 : index
    %c0_150 = arith.constant 0 : index
    %149 = vector.load %arg32[%c0_149, %c0_150] : memref<36x16xf32, #tpu.memory_space<vmem>>, vector<36x16xf32>
    %cst_151 = arith.constant dense<0.000000e+00> : vector<36x32xf32>
    %150 = tpu.matmul %149, %148, %cst_151 {dimension_numbers = #tpu.dot_dimension_numbers<[1], [0], [0], [1], [0, 0, 1, 1], [], []>} : vector<36x16xf32>, vector<16x32xf32>, vector<36x32xf32> -> vector<36x32xf32>
    %c0_152 = arith.constant 0 : index
    %c0_153 = arith.constant 0 : index
    %151 = vector.load %arg46[%c0_152, %c0_153] : memref<36x32xf32, #tpu.memory_space<vmem>>, vector<36x32xf32>
    tpu.vector_store %arg46[%c0_152, %c0_153], %150 {strides = array<i32>} : memref<36x32xf32, #tpu.memory_space<vmem>>, vector<36x32xf32>,
    %c0_154 = arith.constant 0 : index
    %c0_155 = arith.constant 0 : index
    %152 = vector.load %arg46[%c0_154, %c0_155] : memref<36x32xf32, #tpu.memory_space<vmem>>, vector<22x32xf32>
    %c1_156 = arith.constant 1 : index
    %c0_157 = arith.constant 0 : index
    %153 = vector.load %arg46[%c1_156, %c0_157] : memref<36x32xf32, #tpu.memory_space<vmem>>, vector<22x32xf32>
    %c2_158 = arith.constant 2 : index
    %c0_159 = arith.constant 0 : index
    %154 = vector.load %arg46[%c2_158, %c0_159] : memref<36x32xf32, #tpu.memory_space<vmem>>, vector<22x32xf32>
    %c6 = arith.constant 6 : index
    %c0_160 = arith.constant 0 : index
    %155 = vector.load %arg46[%c6, %c0_160] : memref<36x32xf32, #tpu.memory_space<vmem>>, vector<22x32xf32>
    %c7 = arith.constant 7 : index
    %c0_161 = arith.constant 0 : index
    %156 = vector.load %arg46[%c7, %c0_161] : memref<36x32xf32, #tpu.memory_space<vmem>>, vector<22x32xf32>
    %c8 = arith.constant 8 : index
    %c0_162 = arith.constant 0 : index
    %157 = vector.load %arg46[%c8, %c0_162] : memref<36x32xf32, #tpu.memory_space<vmem>>, vector<22x32xf32>
    %c12_163 = arith.constant 12 : index
    %c0_164 = arith.constant 0 : index
    %158 = vector.load %arg46[%c12_163, %c0_164] : memref<36x32xf32, #tpu.memory_space<vmem>>, vector<22x32xf32>
    %c13 = arith.constant 13 : index
    %c0_165 = arith.constant 0 : index
    %159 = vector.load %arg46[%c13, %c0_165] : memref<36x32xf32, #tpu.memory_space<vmem>>, vector<22x32xf32>
    %c14 = arith.constant 14 : index
    %c0_166 = arith.constant 0 : index
    %160 = vector.load %arg46[%c14, %c0_166] : memref<36x32xf32, #tpu.memory_space<vmem>>, vector<22x32xf32>
    %161 = tpu.concatenate %152, %153, %154, %155, %156, %157, %158, %159, %160 in 1 : vector<22x32xf32>, vector<22x32xf32>, vector<22x32xf32>, vector<22x32xf32>, vector<22x32xf32>, vector<22x32xf32>, vector<22x32xf32>, vector<22x32xf32>, vector<22x32xf32> -> vector<22x288xf32>
    %c0_167 = arith.constant 0 : index
    %c0_168 = arith.constant 0 : index
    %162 = vector.load %arg33[%c0_167, %c0_168] : memref<288x32xf32, #tpu.memory_space<vmem>>, vector<288x32xf32>
    %cst_169 = arith.constant dense<0.000000e+00> : vector<22x32xf32>
    %163 = tpu.matmul %161, %162, %cst_169 {dimension_numbers = #tpu.dot_dimension_numbers<[1], [0], [0], [1], [0, 0, 1, 1], [], []>} : vector<22x288xf32>, vector<288x32xf32>, vector<22x32xf32> -> vector<22x32xf32>
    %c0_170 = arith.constant 0 : index
    %c0_171 = arith.constant 0 : index
    %164 = vector.load %arg34[%c0_170, %c0_171] : memref<1x32xf32, #tpu.memory_space<vmem>>, vector<1x32xf32>
    %165 = vector.broadcast %164 : vector<1x32xf32> to vector<22x32xf32>
    %166 = arith.addf %163, %165 : vector<22x32xf32>
    %cst_172 = arith.constant 0.000000e+00 : f32
    %167 = vector.broadcast %cst_172 : f32 to vector<22x32xf32>
    %168 = arith.maximumf %166, %167 : vector<22x32xf32>
    %c0_173 = arith.constant 0 : index
    %c0_174 = arith.constant 0 : index
    %169 = vector.load %arg35[%c0_173, %c0_174] : memref<32x8xf32, #tpu.memory_space<vmem>>, vector<32x8xf32>
    %cst_175 = arith.constant dense<0.000000e+00> : vector<22x8xf32>
    %170 = tpu.matmul %168, %169, %cst_175 {dimension_numbers = #tpu.dot_dimension_numbers<[1], [0], [0], [1], [0, 0, 1, 1], [], []>} : vector<22x32xf32>, vector<32x8xf32>, vector<22x8xf32> -> vector<22x8xf32>
    %c0_176 = arith.constant 0 : index
    %c0_177 = arith.constant 0 : index
    %171 = vector.load %arg36[%c0_176, %c0_177] : memref<1x8xf32, #tpu.memory_space<vmem>>, vector<1x8xf32>
    %172 = vector.broadcast %171 : vector<1x8xf32> to vector<22x8xf32>
    %173 = arith.addf %170, %172 : vector<22x8xf32>
    %c0_178 = arith.constant 0 : index
    %c0_179 = arith.constant 0 : index
    %c0_180 = arith.constant 0 : index
    %174 = vector.load %arg37[%c0_178, %c0_179, %c0_180] : memref<4x4x22xf32, #tpu.memory_space<vmem>>, vector<1x4x22xf32>
    %175 = vector.shape_cast %174 : vector<1x4x22xf32> to vector<4x22xf32>
    %cst_181 = arith.constant dense<0.000000e+00> : vector<4x8xf32>
    %176 = tpu.matmul %175, %173, %cst_181 {dimension_numbers = #tpu.dot_dimension_numbers<[1], [0], [0], [1], [0, 0, 1, 1], [], []>} : vector<4x22xf32>, vector<22x8xf32>, vector<4x8xf32> -> vector<4x8xf32>
    %c1_182 = arith.constant 1 : index
    %c0_183 = arith.constant 0 : index
    %c0_184 = arith.constant 0 : index
    %177 = vector.load %arg37[%c1_182, %c0_183, %c0_184] : memref<4x4x22xf32, #tpu.memory_space<vmem>>, vector<1x4x22xf32>
    %178 = vector.shape_cast %177 : vector<1x4x22xf32> to vector<4x22xf32>
    %cst_185 = arith.constant dense<0.000000e+00> : vector<4x8xf32>
    %179 = tpu.matmul %178, %173, %cst_185 {dimension_numbers = #tpu.dot_dimension_numbers<[1], [0], [0], [1], [0, 0, 1, 1], [], []>} : vector<4x22xf32>, vector<22x8xf32>, vector<4x8xf32> -> vector<4x8xf32>
    %c2_186 = arith.constant 2 : index
    %c0_187 = arith.constant 0 : index
    %c0_188 = arith.constant 0 : index
    %180 = vector.load %arg37[%c2_186, %c0_187, %c0_188] : memref<4x4x22xf32, #tpu.memory_space<vmem>>, vector<1x4x22xf32>
    %181 = vector.shape_cast %180 : vector<1x4x22xf32> to vector<4x22xf32>
    %cst_189 = arith.constant dense<0.000000e+00> : vector<4x8xf32>
    %182 = tpu.matmul %181, %173, %cst_189 {dimension_numbers = #tpu.dot_dimension_numbers<[1], [0], [0], [1], [0, 0, 1, 1], [], []>} : vector<4x22xf32>, vector<22x8xf32>, vector<4x8xf32> -> vector<4x8xf32>
    %c3 = arith.constant 3 : index
    %c0_190 = arith.constant 0 : index
    %c0_191 = arith.constant 0 : index
    %183 = vector.load %arg37[%c3, %c0_190, %c0_191] : memref<4x4x22xf32, #tpu.memory_space<vmem>>, vector<1x4x22xf32>
    %184 = vector.shape_cast %183 : vector<1x4x22xf32> to vector<4x22xf32>
    %cst_192 = arith.constant dense<0.000000e+00> : vector<4x8xf32>
    %185 = tpu.matmul %184, %173, %cst_192 {dimension_numbers = #tpu.dot_dimension_numbers<[1], [0], [0], [1], [0, 0, 1, 1], [], []>} : vector<4x22xf32>, vector<22x8xf32>, vector<4x8xf32> -> vector<4x8xf32>
    %186 = tpu.concatenate %176, %179, %182, %185 in 1 : vector<4x8xf32>, vector<4x8xf32>, vector<4x8xf32>, vector<4x8xf32> -> vector<4x32xf32>
    %c0_193 = arith.constant 0 : index
    %c0_194 = arith.constant 0 : index
    %187 = vector.load %arg38[%c0_193, %c0_194] : memref<32x4xf32, #tpu.memory_space<vmem>>, vector<32x4xf32>
    %cst_195 = arith.constant dense<0.000000e+00> : vector<32x32xf32>
    %188 = tpu.matmul %187, %186, %cst_195 {dimension_numbers = #tpu.dot_dimension_numbers<[1], [0], [0], [1], [0, 0, 1, 1], [], []>} : vector<32x4xf32>, vector<4x32xf32>, vector<32x32xf32> -> vector<32x32xf32>
    %c0_196 = arith.constant 0 : index
    %c0_197 = arith.constant 0 : index
    %189 = vector.load %arg39[%c0_196, %c0_197] : memref<32x256xf32, #tpu.memory_space<vmem>>, vector<32x256xf32>
    %cst_198 = arith.constant dense<0.000000e+00> : vector<32x256xf32>
    %190 = tpu.matmul %188, %189, %cst_198 {dimension_numbers = #tpu.dot_dimension_numbers<[1], [0], [0], [1], [0, 0, 1, 1], [], []>} : vector<32x32xf32>, vector<32x256xf32>, vector<32x256xf32> -> vector<32x256xf32>
    %c0_199 = arith.constant 0 : index
    %c0_200 = arith.constant 0 : index
    %191 = vector.load %arg40[%c0_199, %c0_200] : memref<32x256xf32, #tpu.memory_space<vmem>>, vector<32x256xf32>
    tpu.vector_store %arg40[%c0_199, %c0_200], %190 {strides = array<i32>} : memref<32x256xf32, #tpu.memory_space<vmem>>, vector<32x256xf32>,
    return
  }
  func.func @transform_0(%arg0: i32) -> (i32, i32) {
    %c0_i32 = arith.constant 0 : i32
    %c0_i32_0 = arith.constant 0 : i32
    return %arg0, %c0_i32 : i32, i32
  }
  func.func @transform_1(%arg0: i32) -> (i32, i32) {
    %c0_i32 = arith.constant 0 : i32
    %c0_i32_0 = arith.constant 0 : i32
    %c0_i32_1 = arith.constant 0 : i32
    return %c0_i32, %c0_i32_0 : i32, i32
  }
  func.func @transform_2(%arg0: i32) -> (i32, i32) {
    %c0_i32 = arith.constant 0 : i32
    %c0_i32_0 = arith.constant 0 : i32
    %c0_i32_1 = arith.constant 0 : i32
    return %c0_i32, %c0_i32_0 : i32, i32
  }
  func.func @transform_3(%arg0: i32) -> (i32, i32) {
    %c0_i32 = arith.constant 0 : i32
    %c0_i32_0 = arith.constant 0 : i32
    %c0_i32_1 = arith.constant 0 : i32
    return %c0_i32, %c0_i32_0 : i32, i32
  }
  func.func @transform_4(%arg0: i32) -> (i32, i32) {
    %c0_i32 = arith.constant 0 : i32
    %c0_i32_0 = arith.constant 0 : i32
    %c0_i32_1 = arith.constant 0 : i32
    return %c0_i32, %c0_i32_0 : i32, i32
  }
  func.func @transform_5(%arg0: i32) -> (i32, i32) {
    %c0_i32 = arith.constant 0 : i32
    %c0_i32_0 = arith.constant 0 : i32
    %c0_i32_1 = arith.constant 0 : i32
    return %c0_i32, %c0_i32_0 : i32, i32
  }
  func.func @transform_6(%arg0: i32) -> (i32, i32) {
    %c0_i32 = arith.constant 0 : i32
    %c0_i32_0 = arith.constant 0 : i32
    %c0_i32_1 = arith.constant 0 : i32
    return %c0_i32, %c0_i32_0 : i32, i32
  }
  func.func @transform_7(%arg0: i32) -> (i32, i32) {
    %c0_i32 = arith.constant 0 : i32
    %c0_i32_0 = arith.constant 0 : i32
    %c0_i32_1 = arith.constant 0 : i32
    return %c0_i32, %c0_i32_0 : i32, i32
  }
  func.func @transform_8(%arg0: i32) -> (i32, i32) {
    %c0_i32 = arith.constant 0 : i32
    %c0_i32_0 = arith.constant 0 : i32
    %c0_i32_1 = arith.constant 0 : i32
    return %c0_i32, %c0_i32_0 : i32, i32
  }
  func.func @transform_9(%arg0: i32) -> (i32, i32) {
    %c0_i32 = arith.constant 0 : i32
    %c0_i32_0 = arith.constant 0 : i32
    %c0_i32_1 = arith.constant 0 : i32
    return %c0_i32, %c0_i32_0 : i32, i32
  }
  func.func @transform_10(%arg0: i32) -> (i32, i32) {
    %c0_i32 = arith.constant 0 : i32
    %c0_i32_0 = arith.constant 0 : i32
    %c0_i32_1 = arith.constant 0 : i32
    return %c0_i32, %c0_i32_0 : i32, i32
  }
  func.func @transform_11(%arg0: i32) -> (i32, i32) {
    %c0_i32 = arith.constant 0 : i32
    %c0_i32_0 = arith.constant 0 : i32
    %c0_i32_1 = arith.constant 0 : i32
    return %c0_i32, %c0_i32_0 : i32, i32
  }
  func.func @transform_12(%arg0: i32) -> (i32, i32) {
    %c0_i32 = arith.constant 0 : i32
    %c0_i32_0 = arith.constant 0 : i32
    %c0_i32_1 = arith.constant 0 : i32
    return %c0_i32, %c0_i32_0 : i32, i32
  }
  func.func @transform_13(%arg0: i32) -> (i32, i32) {
    %c0_i32 = arith.constant 0 : i32
    %c0_i32_0 = arith.constant 0 : i32
    %c0_i32_1 = arith.constant 0 : i32
    return %c0_i32, %c0_i32_0 : i32, i32
  }
  func.func @transform_14(%arg0: i32) -> (i32, i32) {
    %c0_i32 = arith.constant 0 : i32
    %c0_i32_0 = arith.constant 0 : i32
    %c0_i32_1 = arith.constant 0 : i32
    return %c0_i32, %c0_i32_0 : i32, i32
  }
  func.func @transform_15(%arg0: i32) -> (i32, i32) {
    %c0_i32 = arith.constant 0 : i32
    %c0_i32_0 = arith.constant 0 : i32
    %c0_i32_1 = arith.constant 0 : i32
    return %c0_i32, %c0_i32_0 : i32, i32
  }
  func.func @transform_16(%arg0: i32) -> (i32, i32) {
    %c0_i32 = arith.constant 0 : i32
    %c0_i32_0 = arith.constant 0 : i32
    %c0_i32_1 = arith.constant 0 : i32
    return %c0_i32, %c0_i32_0 : i32, i32
  }
  func.func @transform_17(%arg0: i32) -> (i32, i32) {
    %c0_i32 = arith.constant 0 : i32
    %c0_i32_0 = arith.constant 0 : i32
    %c0_i32_1 = arith.constant 0 : i32
    return %c0_i32, %c0_i32_0 : i32, i32
  }
  func.func @transform_18(%arg0: i32) -> (i32, i32) {
    %c0_i32 = arith.constant 0 : i32
    %c0_i32_0 = arith.constant 0 : i32
    %c0_i32_1 = arith.constant 0 : i32
    return %c0_i32, %c0_i32_0 : i32, i32
  }
  func.func @transform_19(%arg0: i32) -> (i32, i32) {
    %c0_i32 = arith.constant 0 : i32
    %c0_i32_0 = arith.constant 0 : i32
    %c0_i32_1 = arith.constant 0 : i32
    return %c0_i32, %c0_i32_0 : i32, i32
  }
  func.func @transform_20(%arg0: i32) -> (i32, i32) {
    %c0_i32 = arith.constant 0 : i32
    %c0_i32_0 = arith.constant 0 : i32
    %c0_i32_1 = arith.constant 0 : i32
    return %c0_i32, %c0_i32_0 : i32, i32
  }
  func.func @transform_21(%arg0: i32) -> (i32, i32) {
    %c0_i32 = arith.constant 0 : i32
    %c0_i32_0 = arith.constant 0 : i32
    %c0_i32_1 = arith.constant 0 : i32
    return %c0_i32, %c0_i32_0 : i32, i32
  }
  func.func @transform_22(%arg0: i32) -> (i32, i32) {
    %c0_i32 = arith.constant 0 : i32
    %c0_i32_0 = arith.constant 0 : i32
    %c0_i32_1 = arith.constant 0 : i32
    return %c0_i32, %c0_i32_0 : i32, i32
  }
  func.func @transform_23(%arg0: i32) -> (i32, i32) {
    %c0_i32 = arith.constant 0 : i32
    %c0_i32_0 = arith.constant 0 : i32
    %c0_i32_1 = arith.constant 0 : i32
    return %c0_i32, %c0_i32_0 : i32, i32
  }
  func.func @transform_24(%arg0: i32) -> (i32, i32) {
    %c0_i32 = arith.constant 0 : i32
    %c0_i32_0 = arith.constant 0 : i32
    %c0_i32_1 = arith.constant 0 : i32
    return %c0_i32, %c0_i32_0 : i32, i32
  }
  func.func @transform_25(%arg0: i32) -> (i32, i32) {
    %c0_i32 = arith.constant 0 : i32
    %c0_i32_0 = arith.constant 0 : i32
    %c0_i32_1 = arith.constant 0 : i32
    return %c0_i32, %c0_i32_0 : i32, i32
  }
  func.func @transform_26(%arg0: i32) -> (i32, i32) {
    %c0_i32 = arith.constant 0 : i32
    %c0_i32_0 = arith.constant 0 : i32
    %c0_i32_1 = arith.constant 0 : i32
    return %c0_i32, %c0_i32_0 : i32, i32
  }
  func.func @transform_27(%arg0: i32) -> (i32, i32) {
    %c0_i32 = arith.constant 0 : i32
    %c0_i32_0 = arith.constant 0 : i32
    %c0_i32_1 = arith.constant 0 : i32
    return %c0_i32, %c0_i32_0 : i32, i32
  }
  func.func @transform_28(%arg0: i32) -> (i32, i32) {
    %c0_i32 = arith.constant 0 : i32
    %c0_i32_0 = arith.constant 0 : i32
    %c0_i32_1 = arith.constant 0 : i32
    return %c0_i32, %c0_i32_0 : i32, i32
  }
  func.func @transform_29(%arg0: i32) -> (i32, i32) {
    %c0_i32 = arith.constant 0 : i32
    %c0_i32_0 = arith.constant 0 : i32
    %c0_i32_1 = arith.constant 0 : i32
    return %c0_i32, %c0_i32_0 : i32, i32
  }
  func.func @transform_30(%arg0: i32) -> (i32, i32) {
    %c0_i32 = arith.constant 0 : i32
    %c0_i32_0 = arith.constant 0 : i32
    %c0_i32_1 = arith.constant 0 : i32
    return %c0_i32, %c0_i32_0 : i32, i32
  }
  func.func @transform_31(%arg0: i32) -> (i32, i32) {
    %c0_i32 = arith.constant 0 : i32
    %c0_i32_0 = arith.constant 0 : i32
    %c0_i32_1 = arith.constant 0 : i32
    return %c0_i32, %c0_i32_0 : i32, i32
  }
  func.func @transform_32(%arg0: i32) -> (i32, i32) {
    %c0_i32 = arith.constant 0 : i32
    %c0_i32_0 = arith.constant 0 : i32
    %c0_i32_1 = arith.constant 0 : i32
    return %c0_i32, %c0_i32_0 : i32, i32
  }
  func.func @transform_33(%arg0: i32) -> (i32, i32) {
    %c0_i32 = arith.constant 0 : i32
    %c0_i32_0 = arith.constant 0 : i32
    %c0_i32_1 = arith.constant 0 : i32
    return %c0_i32, %c0_i32_0 : i32, i32
  }
  func.func @transform_34(%arg0: i32) -> (i32, i32) {
    %c0_i32 = arith.constant 0 : i32
    %c0_i32_0 = arith.constant 0 : i32
    %c0_i32_1 = arith.constant 0 : i32
    return %c0_i32, %c0_i32_0 : i32, i32
  }
  func.func @transform_35(%arg0: i32) -> (i32, i32) {
    %c0_i32 = arith.constant 0 : i32
    %c0_i32_0 = arith.constant 0 : i32
    %c0_i32_1 = arith.constant 0 : i32
    return %c0_i32, %c0_i32_0 : i32, i32
  }
  func.func @transform_36(%arg0: i32) -> (i32, i32, i32) {
    %c0_i32 = arith.constant 0 : i32
    %c0_i32_0 = arith.constant 0 : i32
    %c0_i32_1 = arith.constant 0 : i32
    %c0_i32_2 = arith.constant 0 : i32
    return %c0_i32, %c0_i32_0, %c0_i32_1 : i32, i32, i32
  }
  func.func @transform_37(%arg0: i32) -> (i32, i32) {
    %c0_i32 = arith.constant 0 : i32
    %c0_i32_0 = arith.constant 0 : i32
    %c0_i32_1 = arith.constant 0 : i32
    return %c0_i32, %c0_i32_0 : i32, i32
  }
  func.func @transform_38(%arg0: i32) -> (i32, i32) {
    %c0_i32 = arith.constant 0 : i32
    %c0_i32_0 = arith.constant 0 : i32
    %c0_i32_1 = arith.constant 0 : i32
    return %c0_i32, %c0_i32_0 : i32, i32
  }
  func.func @transform_39(%arg0: i32) -> (i32, i32) {
    %c0_i32 = arith.constant 0 : i32
    %c0_i32_0 = arith.constant 0 : i32
    return %arg0, %c0_i32 : i32, i32
  }
}

</mosaic_0001>

<llo_original>
// kernel: forward.1
$region0: #{forward.1}
  #allocation0 [shape = 'u32[]', space=smem, size = 0x4, offset = 0x4, fixed_abs, tag = 'smem constant byte address 0x4 - core index']
  #allocation1 [shape = 'u32[144,128]{1,0:T(1,128)}', space=vmem, size = 0x12000, scoped, tag = 'internal scratch']
  #allocation2 [shape = 'f32[324,16]{1,0:T(8,128)}', space=vmem, size = 0x29000, scoped, tag = 'scratch operand']
  #allocation3 [shape = 'f32[100,16]{1,0:T(8,128)}', space=vmem, size = 0xd000, scoped, tag = 'scratch operand']
  #allocation4 [shape = 'f32[100,8]{1,0:T(8,128)}', space=vmem, size = 0xd000, scoped, tag = 'scratch operand']
  #allocation5 [shape = 'f32[100,32]{1,0:T(8,128)}', space=vmem, size = 0xd000, scoped, tag = 'scratch operand']
  #allocation6 [shape = 'f32[100,16]{1,0:T(8,128)}', space=vmem, size = 0xd000, scoped, tag = 'scratch operand']
  #allocation7 [shape = 'f32[36,32]{1,0:T(8,128)}', space=vmem, size = 0x5000, scoped, tag = 'scratch operand']
  %s0 = inlined_call_operand.smem [shape: u32[40], index: -1, kind: input, shape index: {}]
  %s1 = sld [smem:[%s0]]
  %s2 = scalar_lea.smem %s0, 1
  %s3 = sld [smem:[%s2]]
  %s4 = scalar_lea.smem %s0, 2
  %s5 = sld [smem:[%s4]]
  %s6 = scalar_lea.smem %s0, 3
  %s7 = sld [smem:[%s6]]
  %s8 = scalar_lea.smem %s0, 4
  %s9 = sld [smem:[%s8]]
  %s10 = scalar_lea.smem %s0, 5
  %s11 = sld [smem:[%s10]]
  %s12 = scalar_lea.smem %s0, 6
  %s13 = sld [smem:[%s12]]
  %s14 = scalar_lea.smem %s0, 7
  %s15 = sld [smem:[%s14]]
  %s16 = scalar_lea.smem %s0, 8
  %s17 = sld [smem:[%s16]]
  %s18 = scalar_lea.smem %s0, 9
  %s19 = sld [smem:[%s18]]
  %s20 = scalar_lea.smem %s0, 10
  %s21 = sld [smem:[%s20]]
  %s22 = scalar_lea.smem %s0, 11
  %s23 = sld [smem:[%s22]]
  %s24 = scalar_lea.smem %s0, 12
  %s25 = sld [smem:[%s24]]
  %s26 = scalar_lea.smem %s0, 13
  %s27 = sld [smem:[%s26]]
  %s28 = scalar_lea.smem %s0, 14
  %s29 = sld [smem:[%s28]]
  %s30 = scalar_lea.smem %s0, 15
  %s31 = sld [smem:[%s30]]
  %s32 = scalar_lea.smem %s0, 16
  %s33 = sld [smem:[%s32]]
  %s34 = scalar_lea.smem %s0, 17
  %s35 = sld [smem:[%s34]]
  %s36 = scalar_lea.smem %s0, 18
  %s37 = sld [smem:[%s36]]
  %s38 = scalar_lea.smem %s0, 19
  %s39 = sld [smem:[%s38]]
  %s40 = scalar_lea.smem %s0, 20
  %s41 = sld [smem:[%s40]]
  %s42 = scalar_lea.smem %s0, 21
  %s43 = sld [smem:[%s42]]
  %s44 = scalar_lea.smem %s0, 22
  %s45 = sld [smem:[%s44]]
  %s46 = scalar_lea.smem %s0, 23
  %s47 = sld [smem:[%s46]]
  %s48 = scalar_lea.smem %s0, 24
  %s49 = sld [smem:[%s48]]
  %s50 = scalar_lea.smem %s0, 25
  %s51 = sld [smem:[%s50]]
  %s52 = scalar_lea.smem %s0, 26
  %s53 = sld [smem:[%s52]]
  %s54 = scalar_lea.smem %s0, 27
  %s55 = sld [smem:[%s54]]
  %s56 = scalar_lea.smem %s0, 28
  %s57 = sld [smem:[%s56]]
  %s58 = scalar_lea.smem %s0, 29
  %s59 = sld [smem:[%s58]]
  %s60 = scalar_lea.smem %s0, 30
  %s61 = sld [smem:[%s60]]
  %s62 = scalar_lea.smem %s0, 31
  %s63 = sld [smem:[%s62]]
  %s64 = scalar_lea.smem %s0, 32
  %s65 = sld [smem:[%s64]]
  %s66 = scalar_lea.smem %s0, 33
  %s67 = sld [smem:[%s66]]
  %s68 = scalar_lea.smem %s0, 34
  %s69 = sld [smem:[%s68]]
  %s70 = scalar_lea.smem %s0, 35
  %s71 = sld [smem:[%s70]]
  %s72 = scalar_lea.smem %s0, 36
  %s73 = sld [smem:[%s72]]
  %s74 = scalar_lea.smem %s0, 37
  %s75 = sld [smem:[%s74]]
  %s76 = scalar_lea.smem %s0, 38
  %s77 = sld [smem:[%s76]]
  %s78 = scalar_lea.smem %s0, 39
  %s79 = sld [smem:[%s78]]
  %s80 = sld [smem:[#allocation0]]
  $region189: #{forward.1} parent=0
    _
  %s82 = ssub.s32 1, %s80
  %s83 = scalar_select 0, %s82, %s80
  loop: start=0, step=1, limit=4
  $region2: #{forward.1} parent=0 // loop_pre_header
    _
  $region3: #{forward.1} parent=0 // loop_header
    %s85 = sphi 0, %s89
    %p86 = scmp.ge.s32.totalorder %s85, 4
    %s95 = sphi 0, %s97
    %s98 = sphi 0, %s95
    %s99 = sphi 0, %s98
    %s115 = sphi 0, %s99
    %s119 = sphi 0, %s119
    %s121 = sphi 0, %s119
    %s122 = sphi 0, %s121
    %s136 = sphi 0, %s122
    %s140 = sphi 0, %s140
    %s142 = sphi 0, %s140
    %s143 = sphi 0, %s142
    %s157 = sphi 0, %s143
    %s161 = sphi 0, %s161
    %s163 = sphi 0, %s161
    %s164 = sphi 0, %s163
    %s178 = sphi 0, %s164
    %s182 = sphi 0, %s182
    %s184 = sphi 0, %s182
    %s185 = sphi 0, %s184
    %s199 = sphi 0, %s185
    %s203 = sphi 0, %s203
    %s205 = sphi 0, %s203
    %s206 = sphi 0, %s205
    %s220 = sphi 0, %s206
    %s224 = sphi 0, %s224
    %s226 = sphi 0, %s224
    %s227 = sphi 0, %s226
    %s241 = sphi 0, %s227
    %s245 = sphi 0, %s245
    %s247 = sphi 0, %s245
    %s248 = sphi 0, %s247
    %s262 = sphi 0, %s248
    %s266 = sphi 0, %s266
    %s268 = sphi 0, %s266
    %s269 = sphi 0, %s268
    %s283 = sphi 0, %s269
    %s287 = sphi 0, %s287
    %s289 = sphi 0, %s287
    %s290 = sphi 0, %s289
    %s304 = sphi 0, %s290
    %s308 = sphi 0, %s308
    %s310 = sphi 0, %s308
    %s311 = sphi 0, %s310
    %s325 = sphi 0, %s311
    %s329 = sphi 0, %s329
    %s331 = sphi 0, %s329
    %s332 = sphi 0, %s331
    %s346 = sphi 0, %s332
    %s350 = sphi 0, %s350
    %s352 = sphi 0, %s350
    %s353 = sphi 0, %s352
    %s367 = sphi 0, %s353
    %s371 = sphi 0, %s371
    %s373 = sphi 0, %s371
    %s374 = sphi 0, %s373
    %s388 = sphi 0, %s374
    %s392 = sphi 0, %s392
    %s394 = sphi 0, %s392
    %s395 = sphi 0, %s394
    %s409 = sphi 0, %s395
    %s413 = sphi 0, %s413
    %s415 = sphi 0, %s413
    %s416 = sphi 0, %s415
    %s430 = sphi 0, %s416
    %s434 = sphi 0, %s434
    %s436 = sphi 0, %s434
    %s437 = sphi 0, %s436
    %s451 = sphi 0, %s437
    %s455 = sphi 0, %s455
    %s457 = sphi 0, %s455
    %s458 = sphi 0, %s457
    %s472 = sphi 0, %s458
    %s476 = sphi 0, %s476
    %s478 = sphi 0, %s476
    %s479 = sphi 0, %s478
    %s493 = sphi 0, %s479
    %s497 = sphi 0, %s497
    %s499 = sphi 0, %s497
    %s500 = sphi 0, %s499
    %s514 = sphi 0, %s500
    %s518 = sphi 0, %s518
    %s520 = sphi 0, %s518
    %s521 = sphi 0, %s520
    %s535 = sphi 0, %s521
    %s539 = sphi 0, %s539
    %s541 = sphi 0, %s539
    %s542 = sphi 0, %s541
    %s556 = sphi 0, %s542
    %s560 = sphi 0, %s560
    %s562 = sphi 0, %s560
    %s563 = sphi 0, %s562
    %s577 = sphi 0, %s563
    %s581 = sphi 0, %s581
    %s583 = sphi 0, %s581
    %s584 = sphi 0, %s583
    %s598 = sphi 0, %s584
    %s602 = sphi 0, %s602
    %s604 = sphi 0, %s602
    %s605 = sphi 0, %s604
    %s619 = sphi 0, %s605
    %s623 = sphi 0, %s623
    %s625 = sphi 0, %s623
    %s626 = sphi 0, %s625
    %s640 = sphi 0, %s626
    %s644 = sphi 0, %s644
    %s646 = sphi 0, %s644
    %s647 = sphi 0, %s646
    %s661 = sphi 0, %s647
    %s665 = sphi 0, %s665
    %s667 = sphi 0, %s665
    %s668 = sphi 0, %s667
    %s682 = sphi 0, %s668
    %s686 = sphi 0, %s686
    %s688 = sphi 0, %s686
    %s689 = sphi 0, %s688
    %s703 = sphi 0, %s689
    %s707 = sphi 0, %s707
    %s709 = sphi 0, %s707
    %s710 = sphi 0, %s709
    %s724 = sphi 0, %s710
    %s728 = sphi 0, %s728
    %s730 = sphi 0, %s728
    %s731 = sphi 0, %s730
    %s745 = sphi 0, %s731
    %s749 = sphi 0, %s749
    %s751 = sphi 0, %s749
    %s752 = sphi 0, %s751
    %s766 = sphi 0, %s752
    %s770 = sphi 0, %s770
    %s772 = sphi 0, %s770
    %s773 = sphi 0, %s772
    %s787 = sphi 0, %s773
    %s791 = sphi 0, %s791
    %s793 = sphi 0, %s791
    %s794 = sphi 0, %s793
    %s808 = sphi 0, %s794
    %s812 = sphi 0, %s812
    %s814 = sphi 0, %s812
    %s815 = sphi 0, %s814
    %s829 = sphi 0, %s815
    %s833 = sphi 0, %s833
    %s835 = sphi 0, %s833
    %s836 = sphi 0, %s835
    %s850 = sphi 0, %s836
    %s854 = sphi 0, %s854
    %s856 = sphi 0, %s854
    %s857 = sphi 0, %s856
    %s871 = sphi 0, %s857
    %s875 = sphi 0, %s875
    %s877 = sphi 0, %s875
    %s878 = sphi 0, %s877
    %s892 = sphi 0, %s878
    %s896 = sphi 0, %s896
    %s898 = sphi 0, %s896
    %s899 = sphi 0, %s898
    %s913 = sphi 0, %s899
    %s919 = sphi 0, %s921
    %s922 = sphi 0, %s919
    %s923 = sphi 0, %s922
    %s939 = sphi 0, %s923
  $region4: #{forward.1} parent=0 // loop_header_branch
    %88 = sbr.rel (%p86) target = $region8
  $region5: #{forward.1} parent=0 // loop_body
    %s90 = ssub.s32 %s85, 1
    %s91 = ssub.s32 %s85, 2
    %s92 = sadd.s32 %s85, 1
    %s93 = ssub.s32 %s85, %s92
    %p94 = scmp.eq.s32.totalorder %s93, 0
    %s96 = sadd.s32 %s95, 1
    %s97 = scalar_select %p94, %s95, %s96
    %p100 = pneg %p94
    %p101 = scmp.eq.s32.totalorder %s85, 1
    %p102 = por %p100, %p101
    %p103 = scmp.ne.s32.totalorder %s95, %s98
    %p104 = scmp.eq.s32.totalorder %s85, 0
    %p105 = por %p103, %p104
    %p106 = scmp.ne.s32.totalorder %s95, %s98
    %p107 = scmp.eq.s32.totalorder %s90, 1
    %p108 = por %p106, %p107
    %p109 = scmp.ne.s32.totalorder %s98, %s99
    %p110 = scmp.eq.s32.totalorder %s90, 0
    %p111 = por %p109, %p110
    %p112 = scmp.ne.s32.totalorder %s98, %s99
    %p113 = scmp.eq.s32.totalorder %s91, 1
    %p114 = por %p112, %p113
    %p116 = scmp.ne.s32.totalorder %s99, %s115
    %p117 = scmp.eq.s32.totalorder %s91, 0
    %p118 = por %p116, %p117
    %s120 = sadd.s32 %s119, 1
    %p123 = scmp.eq.s32.totalorder %s85, 1
    %p124 = scmp.ne.s32.totalorder %s119, %s121
    %p125 = scmp.eq.s32.totalorder %s85, 0
    %p126 = por %p124, %p125
    %p127 = scmp.ne.s32.totalorder %s119, %s121
    %p128 = scmp.eq.s32.totalorder %s90, 1
    %p129 = por %p127, %p128
    %p130 = scmp.ne.s32.totalorder %s121, %s122
    %p131 = scmp.eq.s32.totalorder %s90, 0
    %p132 = por %p130, %p131
    %p133 = scmp.ne.s32.totalorder %s121, %s122
    %p134 = scmp.eq.s32.totalorder %s91, 1
    %p135 = por %p133, %p134
    %p137 = scmp.ne.s32.totalorder %s122, %s136
    %p138 = scmp.eq.s32.totalorder %s91, 0
    %p139 = por %p137, %p138
    %s141 = sadd.s32 %s140, 1
    %p144 = scmp.eq.s32.totalorder %s85, 1
    %p145 = scmp.ne.s32.totalorder %s140, %s142
    %p146 = scmp.eq.s32.totalorder %s85, 0
    %p147 = por %p145, %p146
    %p148 = scmp.ne.s32.totalorder %s140, %s142
    %p149 = scmp.eq.s32.totalorder %s90, 1
    %p150 = por %p148, %p149
    %p151 = scmp.ne.s32.totalorder %s142, %s143
    %p152 = scmp.eq.s32.totalorder %s90, 0
    %p153 = por %p151, %p152
    %p154 = scmp.ne.s32.totalorder %s142, %s143
    %p155 = scmp.eq.s32.totalorder %s91, 1
    %p156 = por %p154, %p155
    %p158 = scmp.ne.s32.totalorder %s143, %s157
    %p159 = scmp.eq.s32.totalorder %s91, 0
    %p160 = por %p158, %p159
    %s162 = sadd.s32 %s161, 1
    %p165 = scmp.eq.s32.totalorder %s85, 1
    %p166 = scmp.ne.s32.totalorder %s161, %s163
    %p167 = scmp.eq.s32.totalorder %s85, 0
    %p168 = por %p166, %p167
    %p169 = scmp.ne.s32.totalorder %s161, %s163
    %p170 = scmp.eq.s32.totalorder %s90, 1
    %p171 = por %p169, %p170
    %p172 = scmp.ne.s32.totalorder %s163, %s164
    %p173 = scmp.eq.s32.totalorder %s90, 0
    %p174 = por %p172, %p173
    %p175 = scmp.ne.s32.totalorder %s163, %s164
    %p176 = scmp.eq.s32.totalorder %s91, 1
    %p177 = por %p175, %p176
    %p179 = scmp.ne.s32.totalorder %s164, %s178
    %p180 = scmp.eq.s32.totalorder %s91, 0
    %p181 = por %p179, %p180
    %s183 = sadd.s32 %s182, 1
    %p186 = scmp.eq.s32.totalorder %s85, 1
    %p187 = scmp.ne.s32.totalorder %s182, %s184
    %p188 = scmp.eq.s32.totalorder %s85, 0
    %p189 = por %p187, %p188
    %p190 = scmp.ne.s32.totalorder %s182, %s184
    %p191 = scmp.eq.s32.totalorder %s90, 1
    %p192 = por %p190, %p191
    %p193 = scmp.ne.s32.totalorder %s184, %s185
    %p194 = scmp.eq.s32.totalorder %s90, 0
    %p195 = por %p193, %p194
    %p196 = scmp.ne.s32.totalorder %s184, %s185
    %p197 = scmp.eq.s32.totalorder %s91, 1
    %p198 = por %p196, %p197
    %p200 = scmp.ne.s32.totalorder %s185, %s199
    %p201 = scmp.eq.s32.totalorder %s91, 0
    %p202 = por %p200, %p201
    %s204 = sadd.s32 %s203, 1
    %p207 = scmp.eq.s32.totalorder %s85, 1
    %p208 = scmp.ne.s32.totalorder %s203, %s205
    %p209 = scmp.eq.s32.totalorder %s85, 0
    %p210 = por %p208, %p209
    %p211 = scmp.ne.s32.totalorder %s203, %s205
    %p212 = scmp.eq.s32.totalorder %s90, 1
    %p213 = por %p211, %p212
    %p214 = scmp.ne.s32.totalorder %s205, %s206
    %p215 = scmp.eq.s32.totalorder %s90, 0
    %p216 = por %p214, %p215
    %p217 = scmp.ne.s32.totalorder %s205, %s206
    %p218 = scmp.eq.s32.totalorder %s91, 1
    %p219 = por %p217, %p218
    %p221 = scmp.ne.s32.totalorder %s206, %s220
    %p222 = scmp.eq.s32.totalorder %s91, 0
    %p223 = por %p221, %p222
    %s225 = sadd.s32 %s224, 1
    %p228 = scmp.eq.s32.totalorder %s85, 1
    %p229 = scmp.ne.s32.totalorder %s224, %s226
    %p230 = scmp.eq.s32.totalorder %s85, 0
    %p231 = por %p229, %p230
    %p232 = scmp.ne.s32.totalorder %s224, %s226
    %p233 = scmp.eq.s32.totalorder %s90, 1
    %p234 = por %p232, %p233
    %p235 = scmp.ne.s32.totalorder %s226, %s227
    %p236 = scmp.eq.s32.totalorder %s90, 0
    %p237 = por %p235, %p236
    %p238 = scmp.ne.s32.totalorder %s226, %s227
    %p239 = scmp.eq.s32.totalorder %s91, 1
    %p240 = por %p238, %p239
    %p242 = scmp.ne.s32.totalorder %s227, %s241
    %p243 = scmp.eq.s32.totalorder %s91, 0
    %p244 = por %p242, %p243
    %s246 = sadd.s32 %s245, 1
    %p249 = scmp.eq.s32.totalorder %s85, 1
    %p250 = scmp.ne.s32.totalorder %s245, %s247
    %p251 = scmp.eq.s32.totalorder %s85, 0
    %p252 = por %p250, %p251
    %p253 = scmp.ne.s32.totalorder %s245, %s247
    %p254 = scmp.eq.s32.totalorder %s90, 1
    %p255 = por %p253, %p254
    %p256 = scmp.ne.s32.totalorder %s247, %s248
    %p257 = scmp.eq.s32.totalorder %s90, 0
    %p258 = por %p256, %p257
    %p259 = scmp.ne.s32.totalorder %s247, %s248
    %p260 = scmp.eq.s32.totalorder %s91, 1
    %p261 = por %p259, %p260
    %p263 = scmp.ne.s32.totalorder %s248, %s262
    %p264 = scmp.eq.s32.totalorder %s91, 0
    %p265 = por %p263, %p264
    %s267 = sadd.s32 %s266, 1
    %p270 = scmp.eq.s32.totalorder %s85, 1
    %p271 = scmp.ne.s32.totalorder %s266, %s268
    %p272 = scmp.eq.s32.totalorder %s85, 0
    %p273 = por %p271, %p272
    %p274 = scmp.ne.s32.totalorder %s266, %s268
    %p275 = scmp.eq.s32.totalorder %s90, 1
    %p276 = por %p274, %p275
    %p277 = scmp.ne.s32.totalorder %s268, %s269
    %p278 = scmp.eq.s32.totalorder %s90, 0
    %p279 = por %p277, %p278
    %p280 = scmp.ne.s32.totalorder %s268, %s269
    %p281 = scmp.eq.s32.totalorder %s91, 1
    %p282 = por %p280, %p281
    %p284 = scmp.ne.s32.totalorder %s269, %s283
    %p285 = scmp.eq.s32.totalorder %s91, 0
    %p286 = por %p284, %p285
    %s288 = sadd.s32 %s287, 1
    %p291 = scmp.eq.s32.totalorder %s85, 1
    %p292 = scmp.ne.s32.totalorder %s287, %s289
    %p293 = scmp.eq.s32.totalorder %s85, 0
    %p294 = por %p292, %p293
    %p295 = scmp.ne.s32.totalorder %s287, %s289
    %p296 = scmp.eq.s32.totalorder %s90, 1
    %p297 = por %p295, %p296
    %p298 = scmp.ne.s32.totalorder %s289, %s290
    %p299 = scmp.eq.s32.totalorder %s90, 0
    %p300 = por %p298, %p299
    %p301 = scmp.ne.s32.totalorder %s289, %s290
    %p302 = scmp.eq.s32.totalorder %s91, 1
    %p303 = por %p301, %p302
    %p305 = scmp.ne.s32.totalorder %s290, %s304
    %p306 = scmp.eq.s32.totalorder %s91, 0
    %p307 = por %p305, %p306
    %s309 = sadd.s32 %s308, 1
    %p312 = scmp.eq.s32.totalorder %s85, 1
    %p313 = scmp.ne.s32.totalorder %s308, %s310
    %p314 = scmp.eq.s32.totalorder %s85, 0
    %p315 = por %p313, %p314
    %p316 = scmp.ne.s32.totalorder %s308, %s310
    %p317 = scmp.eq.s32.totalorder %s90, 1
    %p318 = por %p316, %p317
    %p319 = scmp.ne.s32.totalorder %s310, %s311
    %p320 = scmp.eq.s32.totalorder %s90, 0
    %p321 = por %p319, %p320
    %p322 = scmp.ne.s32.totalorder %s310, %s311
    %p323 = scmp.eq.s32.totalorder %s91, 1
    %p324 = por %p322, %p323
    %p326 = scmp.ne.s32.totalorder %s311, %s325
    %p327 = scmp.eq.s32.totalorder %s91, 0
    %p328 = por %p326, %p327
    %s330 = sadd.s32 %s329, 1
    %p333 = scmp.eq.s32.totalorder %s85, 1
    %p334 = scmp.ne.s32.totalorder %s329, %s331
    %p335 = scmp.eq.s32.totalorder %s85, 0
    %p336 = por %p334, %p335
    %p337 = scmp.ne.s32.totalorder %s329, %s331
    %p338 = scmp.eq.s32.totalorder %s90, 1
    %p339 = por %p337, %p338
    %p340 = scmp.ne.s32.totalorder %s331, %s332
    %p341 = scmp.eq.s32.totalorder %s90, 0
    %p342 = por %p340, %p341
    %p343 = scmp.ne.s32.totalorder %s331, %s332
    %p344 = scmp.eq.s32.totalorder %s91, 1
    %p345 = por %p343, %p344
    %p347 = scmp.ne.s32.totalorder %s332, %s346
    %p348 = scmp.eq.s32.totalorder %s91, 0
    %p349 = por %p347, %p348
    %s351 = sadd.s32 %s350, 1
    %p354 = scmp.eq.s32.totalorder %s85, 1
    %p355 = scmp.ne.s32.totalorder %s350, %s352
    %p356 = scmp.eq.s32.totalorder %s85, 0
    %p357 = por %p355, %p356
    %p358 = scmp.ne.s32.totalorder %s350, %s352
    %p359 = scmp.eq.s32.totalorder %s90, 1
    %p360 = por %p358, %p359
    %p361 = scmp.ne.s32.totalorder %s352, %s353
    %p362 = scmp.eq.s32.totalorder %s90, 0
    %p363 = por %p361, %p362
    %p364 = scmp.ne.s32.totalorder %s352, %s353
    %p365 = scmp.eq.s32.totalorder %s91, 1
    %p366 = por %p364, %p365
    %p368 = scmp.ne.s32.totalorder %s353, %s367
    %p369 = scmp.eq.s32.totalorder %s91, 0
    %p370 = por %p368, %p369
    %s372 = sadd.s32 %s371, 1
    %p375 = scmp.eq.s32.totalorder %s85, 1
    %p376 = scmp.ne.s32.totalorder %s371, %s373
    %p377 = scmp.eq.s32.totalorder %s85, 0
    %p378 = por %p376, %p377
    %p379 = scmp.ne.s32.totalorder %s371, %s373
    %p380 = scmp.eq.s32.totalorder %s90, 1
    %p381 = por %p379, %p380
    %p382 = scmp.ne.s32.totalorder %s373, %s374
    %p383 = scmp.eq.s32.totalorder %s90, 0
    %p384 = por %p382, %p383
    %p385 = scmp.ne.s32.totalorder %s373, %s374
    %p386 = scmp.eq.s32.totalorder %s91, 1
    %p387 = por %p385, %p386
    %p389 = scmp.ne.s32.totalorder %s374, %s388
    %p390 = scmp.eq.s32.totalorder %s91, 0
    %p391 = por %p389, %p390
    %s393 = sadd.s32 %s392, 1
    %p396 = scmp.eq.s32.totalorder %s85, 1
    %p397 = scmp.ne.s32.totalorder %s392, %s394
    %p398 = scmp.eq.s32.totalorder %s85, 0
    %p399 = por %p397, %p398
    %p400 = scmp.ne.s32.totalorder %s392, %s394
    %p401 = scmp.eq.s32.totalorder %s90, 1
    %p402 = por %p400, %p401
    %p403 = scmp.ne.s32.totalorder %s394, %s395
    %p404 = scmp.eq.s32.totalorder %s90, 0
    %p405 = por %p403, %p404
    %p406 = scmp.ne.s32.totalorder %s394, %s395
    %p407 = scmp.eq.s32.totalorder %s91, 1
    %p408 = por %p406, %p407
    %p410 = scmp.ne.s32.totalorder %s395, %s409
    %p411 = scmp.eq.s32.totalorder %s91, 0
    %p412 = por %p410, %p411
    %s414 = sadd.s32 %s413, 1
    %p417 = scmp.eq.s32.totalorder %s85, 1
    %p418 = scmp.ne.s32.totalorder %s413, %s415
    %p419 = scmp.eq.s32.totalorder %s85, 0
    %p420 = por %p418, %p419
    %p421 = scmp.ne.s32.totalorder %s413, %s415
    %p422 = scmp.eq.s32.totalorder %s90, 1
    %p423 = por %p421, %p422
    %p424 = scmp.ne.s32.totalorder %s415, %s416
    %p425 = scmp.eq.s32.totalorder %s90, 0
    %p426 = por %p424, %p425
    %p427 = scmp.ne.s32.totalorder %s415, %s416
    %p428 = scmp.eq.s32.totalorder %s91, 1
    %p429 = por %p427, %p428
    %p431 = scmp.ne.s32.totalorder %s416, %s430
    %p432 = scmp.eq.s32.totalorder %s91, 0
    %p433 = por %p431, %p432
    %s435 = sadd.s32 %s434, 1
    %p438 = scmp.eq.s32.totalorder %s85, 1
    %p439 = scmp.ne.s32.totalorder %s434, %s436
    %p440 = scmp.eq.s32.totalorder %s85, 0
    %p441 = por %p439, %p440
    %p442 = scmp.ne.s32.totalorder %s434, %s436
    %p443 = scmp.eq.s32.totalorder %s90, 1
    %p444 = por %p442, %p443
    %p445 = scmp.ne.s32.totalorder %s436, %s437
    %p446 = scmp.eq.s32.totalorder %s90, 0
    %p447 = por %p445, %p446
    %p448 = scmp.ne.s32.totalorder %s436, %s437
    %p449 = scmp.eq.s32.totalorder %s91, 1
    %p450 = por %p448, %p449
    %p452 = scmp.ne.s32.totalorder %s437, %s451
    %p453 = scmp.eq.s32.totalorder %s91, 0
    %p454 = por %p452, %p453
    %s456 = sadd.s32 %s455, 1
    %p459 = scmp.eq.s32.totalorder %s85, 1
    %p460 = scmp.ne.s32.totalorder %s455, %s457
    %p461 = scmp.eq.s32.totalorder %s85, 0
    %p462 = por %p460, %p461
    %p463 = scmp.ne.s32.totalorder %s455, %s457
    %p464 = scmp.eq.s32.totalorder %s90, 1
    %p465 = por %p463, %p464
    %p466 = scmp.ne.s32.totalorder %s457, %s458
    %p467 = scmp.eq.s32.totalorder %s90, 0
    %p468 = por %p466, %p467
    %p469 = scmp.ne.s32.totalorder %s457, %s458
    %p470 = scmp.eq.s32.totalorder %s91, 1
    %p471 = por %p469, %p470
    %p473 = scmp.ne.s32.totalorder %s458, %s472
    %p474 = scmp.eq.s32.totalorder %s91, 0
    %p475 = por %p473, %p474
    %s477 = sadd.s32 %s476, 1
    %p480 = scmp.eq.s32.totalorder %s85, 1
    %p481 = scmp.ne.s32.totalorder %s476, %s478
    %p482 = scmp.eq.s32.totalorder %s85, 0
    %p483 = por %p481, %p482
    %p484 = scmp.ne.s32.totalorder %s476, %s478
    %p485 = scmp.eq.s32.totalorder %s90, 1
    %p486 = por %p484, %p485
    %p487 = scmp.ne.s32.totalorder %s478, %s479
    %p488 = scmp.eq.s32.totalorder %s90, 0
    %p489 = por %p487, %p488
    %p490 = scmp.ne.s32.totalorder %s478, %s479
    %p491 = scmp.eq.s32.totalorder %s91, 1
    %p492 = por %p490, %p491
    %p494 = scmp.ne.s32.totalorder %s479, %s493
    %p495 = scmp.eq.s32.totalorder %s91, 0
    %p496 = por %p494, %p495
    %s498 = sadd.s32 %s497, 1
    %p501 = scmp.eq.s32.totalorder %s85, 1
    %p502 = scmp.ne.s32.totalorder %s497, %s499
    %p503 = scmp.eq.s32.totalorder %s85, 0
    %p504 = por %p502, %p503
    %p505 = scmp.ne.s32.totalorder %s497, %s499
    %p506 = scmp.eq.s32.totalorder %s90, 1
    %p507 = por %p505, %p506
    %p508 = scmp.ne.s32.totalorder %s499, %s500
    %p509 = scmp.eq.s32.totalorder %s90, 0
    %p510 = por %p508, %p509
    %p511 = scmp.ne.s32.totalorder %s499, %s500
    %p512 = scmp.eq.s32.totalorder %s91, 1
    %p513 = por %p511, %p512
    %p515 = scmp.ne.s32.totalorder %s500, %s514
    %p516 = scmp.eq.s32.totalorder %s91, 0
    %p517 = por %p515, %p516
    %s519 = sadd.s32 %s518, 1
    %p522 = scmp.eq.s32.totalorder %s85, 1
    %p523 = scmp.ne.s32.totalorder %s518, %s520
    %p524 = scmp.eq.s32.totalorder %s85, 0
    %p525 = por %p523, %p524
    %p526 = scmp.ne.s32.totalorder %s518, %s520
    %p527 = scmp.eq.s32.totalorder %s90, 1
    %p528 = por %p526, %p527
    %p529 = scmp.ne.s32.totalorder %s520, %s521
    %p530 = scmp.eq.s32.totalorder %s90, 0
    %p531 = por %p529, %p530
    %p532 = scmp.ne.s32.totalorder %s520, %s521
    %p533 = scmp.eq.s32.totalorder %s91, 1
    %p534 = por %p532, %p533
    %p536 = scmp.ne.s32.totalorder %s521, %s535
    %p537 = scmp.eq.s32.totalorder %s91, 0
    %p538 = por %p536, %p537
    %s540 = sadd.s32 %s539, 1
    %p543 = scmp.eq.s32.totalorder %s85, 1
    %p544 = scmp.ne.s32.totalorder %s539, %s541
    %p545 = scmp.eq.s32.totalorder %s85, 0
    %p546 = por %p544, %p545
    %p547 = scmp.ne.s32.totalorder %s539, %s541
    %p548 = scmp.eq.s32.totalorder %s90, 1
    %p549 = por %p547, %p548
    %p550 = scmp.ne.s32.totalorder %s541, %s542
    %p551 = scmp.eq.s32.totalorder %s90, 0
    %p552 = por %p550, %p551
    %p553 = scmp.ne.s32.totalorder %s541, %s542
    %p554 = scmp.eq.s32.totalorder %s91, 1
    %p555 = por %p553, %p554
    %p557 = scmp.ne.s32.totalorder %s542, %s556
    %p558 = scmp.eq.s32.totalorder %s91, 0
    %p559 = por %p557, %p558
    %s561 = sadd.s32 %s560, 1
    %p564 = scmp.eq.s32.totalorder %s85, 1
    %p565 = scmp.ne.s32.totalorder %s560, %s562
    %p566 = scmp.eq.s32.totalorder %s85, 0
    %p567 = por %p565, %p566
    %p568 = scmp.ne.s32.totalorder %s560, %s562
    %p569 = scmp.eq.s32.totalorder %s90, 1
    %p570 = por %p568, %p569
    %p571 = scmp.ne.s32.totalorder %s562, %s563
    %p572 = scmp.eq.s32.totalorder %s90, 0
    %p573 = por %p571, %p572
    %p574 = scmp.ne.s32.totalorder %s562, %s563
    %p575 = scmp.eq.s32.totalorder %s91, 1
    %p576 = por %p574, %p575
    %p578 = scmp.ne.s32.totalorder %s563, %s577
    %p579 = scmp.eq.s32.totalorder %s91, 0
    %p580 = por %p578, %p579
    %s582 = sadd.s32 %s581, 1
    %p585 = scmp.eq.s32.totalorder %s85, 1
    %p586 = scmp.ne.s32.totalorder %s581, %s583
    %p587 = scmp.eq.s32.totalorder %s85, 0
    %p588 = por %p586, %p587
    %p589 = scmp.ne.s32.totalorder %s581, %s583
    %p590 = scmp.eq.s32.totalorder %s90, 1
    %p591 = por %p589, %p590
    %p592 = scmp.ne.s32.totalorder %s583, %s584
    %p593 = scmp.eq.s32.totalorder %s90, 0
    %p594 = por %p592, %p593
    %p595 = scmp.ne.s32.totalorder %s583, %s584
    %p596 = scmp.eq.s32.totalorder %s91, 1
    %p597 = por %p595, %p596
    %p599 = scmp.ne.s32.totalorder %s584, %s598
    %p600 = scmp.eq.s32.totalorder %s91, 0
    %p601 = por %p599, %p600
    %s603 = sadd.s32 %s602, 1
    %p606 = scmp.eq.s32.totalorder %s85, 1
    %p607 = scmp.ne.s32.totalorder %s602, %s604
    %p608 = scmp.eq.s32.totalorder %s85, 0
    %p609 = por %p607, %p608
    %p610 = scmp.ne.s32.totalorder %s602, %s604
    %p611 = scmp.eq.s32.totalorder %s90, 1
    %p612 = por %p610, %p611
    %p613 = scmp.ne.s32.totalorder %s604, %s605
    %p614 = scmp.eq.s32.totalorder %s90, 0
    %p615 = por %p613, %p614
    %p616 = scmp.ne.s32.totalorder %s604, %s605
    %p617 = scmp.eq.s32.totalorder %s91, 1
    %p618 = por %p616, %p617
    %p620 = scmp.ne.s32.totalorder %s605, %s619
    %p621 = scmp.eq.s32.totalorder %s91, 0
    %p622 = por %p620, %p621
    %s624 = sadd.s32 %s623, 1
    %p627 = scmp.eq.s32.totalorder %s85, 1
    %p628 = scmp.ne.s32.totalorder %s623, %s625
    %p629 = scmp.eq.s32.totalorder %s85, 0
    %p630 = por %p628, %p629
    %p631 = scmp.ne.s32.totalorder %s623, %s625
    %p632 = scmp.eq.s32.totalorder %s90, 1
    %p633 = por %p631, %p632
    %p634 = scmp.ne.s32.totalorder %s625, %s626
    %p635 = scmp.eq.s32.totalorder %s90, 0
    %p636 = por %p634, %p635
    %p637 = scmp.ne.s32.totalorder %s625, %s626
    %p638 = scmp.eq.s32.totalorder %s91, 1
    %p639 = por %p637, %p638
    %p641 = scmp.ne.s32.totalorder %s626, %s640
    %p642 = scmp.eq.s32.totalorder %s91, 0
    %p643 = por %p641, %p642
    %s645 = sadd.s32 %s644, 1
    %p648 = scmp.eq.s32.totalorder %s85, 1
    %p649 = scmp.ne.s32.totalorder %s644, %s646
    %p650 = scmp.eq.s32.totalorder %s85, 0
    %p651 = por %p649, %p650
    %p652 = scmp.ne.s32.totalorder %s644, %s646
    %p653 = scmp.eq.s32.totalorder %s90, 1
    %p654 = por %p652, %p653
    %p655 = scmp.ne.s32.totalorder %s646, %s647
    %p656 = scmp.eq.s32.totalorder %s90, 0
    %p657 = por %p655, %p656
    %p658 = scmp.ne.s32.totalorder %s646, %s647
    %p659 = scmp.eq.s32.totalorder %s91, 1
    %p660 = por %p658, %p659
    %p662 = scmp.ne.s32.totalorder %s647, %s661
    %p663 = scmp.eq.s32.totalorder %s91, 0
    %p664 = por %p662, %p663
    %s666 = sadd.s32 %s665, 1
    %p669 = scmp.eq.s32.totalorder %s85, 1
    %p670 = scmp.ne.s32.totalorder %s665, %s667
    %p671 = scmp.eq.s32.totalorder %s85, 0
    %p672 = por %p670, %p671
    %p673 = scmp.ne.s32.totalorder %s665, %s667
    %p674 = scmp.eq.s32.totalorder %s90, 1
    %p675 = por %p673, %p674
    %p676 = scmp.ne.s32.totalorder %s667, %s668
    %p677 = scmp.eq.s32.totalorder %s90, 0
    %p678 = por %p676, %p677
    %p679 = scmp.ne.s32.totalorder %s667, %s668
    %p680 = scmp.eq.s32.totalorder %s91, 1
    %p681 = por %p679, %p680
    %p683 = scmp.ne.s32.totalorder %s668, %s682
    %p684 = scmp.eq.s32.totalorder %s91, 0
    %p685 = por %p683, %p684
    %s687 = sadd.s32 %s686, 1
    %p690 = scmp.eq.s32.totalorder %s85, 1
    %p691 = scmp.ne.s32.totalorder %s686, %s688
    %p692 = scmp.eq.s32.totalorder %s85, 0
    %p693 = por %p691, %p692
    %p694 = scmp.ne.s32.totalorder %s686, %s688
    %p695 = scmp.eq.s32.totalorder %s90, 1
    %p696 = por %p694, %p695
    %p697 = scmp.ne.s32.totalorder %s688, %s689
    %p698 = scmp.eq.s32.totalorder %s90, 0
    %p699 = por %p697, %p698
    %p700 = scmp.ne.s32.totalorder %s688, %s689
    %p701 = scmp.eq.s32.totalorder %s91, 1
    %p702 = por %p700, %p701
    %p704 = scmp.ne.s32.totalorder %s689, %s703
    %p705 = scmp.eq.s32.totalorder %s91, 0
    %p706 = por %p704, %p705
    %s708 = sadd.s32 %s707, 1
    %p711 = scmp.eq.s32.totalorder %s85, 1
    %p712 = scmp.ne.s32.totalorder %s707, %s709
    %p713 = scmp.eq.s32.totalorder %s85, 0
    %p714 = por %p712, %p713
    %p715 = scmp.ne.s32.totalorder %s707, %s709
    %p716 = scmp.eq.s32.totalorder %s90, 1
    %p717 = por %p715, %p716
    %p718 = scmp.ne.s32.totalorder %s709, %s710
    %p719 = scmp.eq.s32.totalorder %s90, 0
    %p720 = por %p718, %p719
    %p721 = scmp.ne.s32.totalorder %s709, %s710
    %p722 = scmp.eq.s32.totalorder %s91, 1
    %p723 = por %p721, %p722
    %p725 = scmp.ne.s32.totalorder %s710, %s724
    %p726 = scmp.eq.s32.totalorder %s91, 0
    %p727 = por %p725, %p726
    %s729 = sadd.s32 %s728, 1
    %p732 = scmp.eq.s32.totalorder %s85, 1
    %p733 = scmp.ne.s32.totalorder %s728, %s730
    %p734 = scmp.eq.s32.totalorder %s85, 0
    %p735 = por %p733, %p734
    %p736 = scmp.ne.s32.totalorder %s728, %s730
    %p737 = scmp.eq.s32.totalorder %s90, 1
    %p738 = por %p736, %p737
    %p739 = scmp.ne.s32.totalorder %s730, %s731
    %p740 = scmp.eq.s32.totalorder %s90, 0
    %p741 = por %p739, %p740
    %p742 = scmp.ne.s32.totalorder %s730, %s731
    %p743 = scmp.eq.s32.totalorder %s91, 1
    %p744 = por %p742, %p743
    %p746 = scmp.ne.s32.totalorder %s731, %s745
    %p747 = scmp.eq.s32.totalorder %s91, 0
    %p748 = por %p746, %p747
    %s750 = sadd.s32 %s749, 1
    %p753 = scmp.eq.s32.totalorder %s85, 1
    %p754 = scmp.ne.s32.totalorder %s749, %s751
    %p755 = scmp.eq.s32.totalorder %s85, 0
    %p756 = por %p754, %p755
    %p757 = scmp.ne.s32.totalorder %s749, %s751
    %p758 = scmp.eq.s32.totalorder %s90, 1
    %p759 = por %p757, %p758
    %p760 = scmp.ne.s32.totalorder %s751, %s752
    %p761 = scmp.eq.s32.totalorder %s90, 0
    %p762 = por %p760, %p761
    %p763 = scmp.ne.s32.totalorder %s751, %s752
    %p764 = scmp.eq.s32.totalorder %s91, 1
    %p765 = por %p763, %p764
    %p767 = scmp.ne.s32.totalorder %s752, %s766
    %p768 = scmp.eq.s32.totalorder %s91, 0
    %p769 = por %p767, %p768
    %s771 = sadd.s32 %s770, 1
    %p774 = scmp.eq.s32.totalorder %s85, 1
    %p775 = scmp.ne.s32.totalorder %s770, %s772
    %p776 = scmp.eq.s32.totalorder %s85, 0
    %p777 = por %p775, %p776
    %p778 = scmp.ne.s32.totalorder %s770, %s772
    %p779 = scmp.eq.s32.totalorder %s90, 1
    %p780 = por %p778, %p779
    %p781 = scmp.ne.s32.totalorder %s772, %s773
    %p782 = scmp.eq.s32.totalorder %s90, 0
    %p783 = por %p781, %p782
    %p784 = scmp.ne.s32.totalorder %s772, %s773
    %p785 = scmp.eq.s32.totalorder %s91, 1
    %p786 = por %p784, %p785
    %p788 = scmp.ne.s32.totalorder %s773, %s787
    %p789 = scmp.eq.s32.totalorder %s91, 0
    %p790 = por %p788, %p789
    %s792 = sadd.s32 %s791, 1
    %p795 = scmp.eq.s32.totalorder %s85, 1
    %p796 = scmp.ne.s32.totalorder %s791, %s793
    %p797 = scmp.eq.s32.totalorder %s85, 0
    %p798 = por %p796, %p797
    %p799 = scmp.ne.s32.totalorder %s791, %s793
    %p800 = scmp.eq.s32.totalorder %s90, 1
    %p801 = por %p799, %p800
    %p802 = scmp.ne.s32.totalorder %s793, %s794
    %p803 = scmp.eq.s32.totalorder %s90, 0
    %p804 = por %p802, %p803
    %p805 = scmp.ne.s32.totalorder %s793, %s794
    %p806 = scmp.eq.s32.totalorder %s91, 1
    %p807 = por %p805, %p806
    %p809 = scmp.ne.s32.totalorder %s794, %s808
    %p810 = scmp.eq.s32.totalorder %s91, 0
    %p811 = por %p809, %p810
    %s813 = sadd.s32 %s812, 1
    %p816 = scmp.eq.s32.totalorder %s85, 1
    %p817 = scmp.ne.s32.totalorder %s812, %s814
    %p818 = scmp.eq.s32.totalorder %s85, 0
    %p819 = por %p817, %p818
    %p820 = scmp.ne.s32.totalorder %s812, %s814
    %p821 = scmp.eq.s32.totalorder %s90, 1
    %p822 = por %p820, %p821
    %p823 = scmp.ne.s32.totalorder %s814, %s815
    %p824 = scmp.eq.s32.totalorder %s90, 0
    %p825 = por %p823, %p824
    %p826 = scmp.ne.s32.totalorder %s814, %s815
    %p827 = scmp.eq.s32.totalorder %s91, 1
    %p828 = por %p826, %p827
    %p830 = scmp.ne.s32.totalorder %s815, %s829
    %p831 = scmp.eq.s32.totalorder %s91, 0
    %p832 = por %p830, %p831
    %s834 = sadd.s32 %s833, 1
    %p837 = scmp.eq.s32.totalorder %s85, 1
    %p838 = scmp.ne.s32.totalorder %s833, %s835
    %p839 = scmp.eq.s32.totalorder %s85, 0
    %p840 = por %p838, %p839
    %p841 = scmp.ne.s32.totalorder %s833, %s835
    %p842 = scmp.eq.s32.totalorder %s90, 1
    %p843 = por %p841, %p842
    %p844 = scmp.ne.s32.totalorder %s835, %s836
    %p845 = scmp.eq.s32.totalorder %s90, 0
    %p846 = por %p844, %p845
    %p847 = scmp.ne.s32.totalorder %s835, %s836
    %p848 = scmp.eq.s32.totalorder %s91, 1
    %p849 = por %p847, %p848
    %p851 = scmp.ne.s32.totalorder %s836, %s850
    %p852 = scmp.eq.s32.totalorder %s91, 0
    %p853 = por %p851, %p852
    %s855 = sadd.s32 %s854, 1
    %p858 = scmp.eq.s32.totalorder %s85, 1
    %p859 = scmp.ne.s32.totalorder %s854, %s856
    %p860 = scmp.eq.s32.totalorder %s85, 0
    %p861 = por %p859, %p860
    %p862 = scmp.ne.s32.totalorder %s854, %s856
    %p863 = scmp.eq.s32.totalorder %s90, 1
    %p864 = por %p862, %p863
    %p865 = scmp.ne.s32.totalorder %s856, %s857
    %p866 = scmp.eq.s32.totalorder %s90, 0
    %p867 = por %p865, %p866
    %p868 = scmp.ne.s32.totalorder %s856, %s857
    %p869 = scmp.eq.s32.totalorder %s91, 1
    %p870 = por %p868, %p869
    %p872 = scmp.ne.s32.totalorder %s857, %s871
    %p873 = scmp.eq.s32.totalorder %s91, 0
    %p874 = por %p872, %p873
    %s876 = sadd.s32 %s875, 1
    %p879 = scmp.eq.s32.totalorder %s85, 1
    %p880 = scmp.ne.s32.totalorder %s875, %s877
    %p881 = scmp.eq.s32.totalorder %s85, 0
    %p882 = por %p880, %p881
    %p883 = scmp.ne.s32.totalorder %s875, %s877
    %p884 = scmp.eq.s32.totalorder %s90, 1
    %p885 = por %p883, %p884
    %p886 = scmp.ne.s32.totalorder %s877, %s878
    %p887 = scmp.eq.s32.totalorder %s90, 0
    %p888 = por %p886, %p887
    %p889 = scmp.ne.s32.totalorder %s877, %s878
    %p890 = scmp.eq.s32.totalorder %s91, 1
    %p891 = por %p889, %p890
    %p893 = scmp.ne.s32.totalorder %s878, %s892
    %p894 = scmp.eq.s32.totalorder %s91, 0
    %p895 = por %p893, %p894
    %s897 = sadd.s32 %s896, 1
    %p900 = scmp.eq.s32.totalorder %s85, 1
    %p901 = scmp.ne.s32.totalorder %s896, %s898
    %p902 = scmp.eq.s32.totalorder %s85, 0
    %p903 = por %p901, %p902
    %p904 = scmp.ne.s32.totalorder %s896, %s898
    %p905 = scmp.eq.s32.totalorder %s90, 1
    %p906 = por %p904, %p905
    %p907 = scmp.ne.s32.totalorder %s898, %s899
    %p908 = scmp.eq.s32.totalorder %s90, 0
    %p909 = por %p907, %p908
    %p910 = scmp.ne.s32.totalorder %s898, %s899
    %p911 = scmp.eq.s32.totalorder %s91, 1
    %p912 = por %p910, %p911
    %p914 = scmp.ne.s32.totalorder %s899, %s913
    %p915 = scmp.eq.s32.totalorder %s91, 0
    %p916 = por %p914, %p915
    %s917 = ssub.s32 %s85, %s92
    %p918 = scmp.eq.s32.totalorder %s917, 0
    %s920 = sadd.s32 %s919, 1
    %s921 = scalar_select %p918, %s919, %s920
    %p924 = pneg %p918
    %p925 = scmp.eq.s32.totalorder %s85, 1
    %p926 = por %p924, %p925
    %p927 = scmp.ne.s32.totalorder %s919, %s922
    %p928 = scmp.eq.s32.totalorder %s85, 0
    %p929 = por %p927, %p928
    %p930 = scmp.ne.s32.totalorder %s919, %s922
    %p931 = scmp.eq.s32.totalorder %s90, 1
    %p932 = por %p930, %p931
    %p933 = scmp.ne.s32.totalorder %s922, %s923
    %p934 = scmp.eq.s32.totalorder %s90, 0
    %p935 = por %p933, %p934
    %p936 = scmp.ne.s32.totalorder %s922, %s923
    %p937 = scmp.eq.s32.totalorder %s91, 1
    %p938 = por %p936, %p937
    %p940 = scmp.ne.s32.totalorder %s923, %s939
    %p941 = scmp.eq.s32.totalorder %s91, 0
    %p942 = por %p940, %p941
    %p943 = scmp.le.s32.totalorder 1, %s85
    %p944 = scmp.lt.s32.totalorder %s85, 3
    %p945 = pnand %p943, %p944
    %p946 = pneg %p945
    // Predicated region
    $region9: #{forward.1} parent=5 // pred_check
      _
    $region10: #{forward.1} parent=5 // pred_check_branch
      %948 = sbr.rel (%p945) target = $region12
    $region11: #{forward.1} parent=5 // pred_region
      %s949 = ssub.s32 %s85, 1
      // Predicated region
      $region13: #{forward.1} parent=11 // pred_check
        %p950 = pneg %p132
      $region14: #{forward.1} parent=11 // pred_check_branch
        %952 = sbr.rel (%p950) target = $region16
      $region15: #{forward.1} parent=11 // pred_region
        _
      $region16: #{forward.1} parent=11 // pred_fallthru
        _
      // Predicated region
      $region17: #{forward.1} parent=11 // pred_check
        %p953 = pneg %p153
      $region18: #{forward.1} parent=11 // pred_check_branch
        %955 = sbr.rel (%p953) target = $region20
      $region19: #{forward.1} parent=11 // pred_region
        _
      $region20: #{forward.1} parent=11 // pred_fallthru
        _
      // Predicated region
      $region21: #{forward.1} parent=11 // pred_check
        %p956 = pneg %p174
      $region22: #{forward.1} parent=11 // pred_check_branch
        %958 = sbr.rel (%p956) target = $region24
      $region23: #{forward.1} parent=11 // pred_region
        _
      $region24: #{forward.1} parent=11 // pred_fallthru
        _
      // Predicated region
      $region25: #{forward.1} parent=11 // pred_check
        %p959 = pneg %p195
      $region26: #{forward.1} parent=11 // pred_check_branch
        %961 = sbr.rel (%p959) target = $region28
      $region27: #{forward.1} parent=11 // pred_region
        _
      $region28: #{forward.1} parent=11 // pred_fallthru
        _
      // Predicated region
      $region29: #{forward.1} parent=11 // pred_check
        %p962 = pneg %p216
      $region30: #{forward.1} parent=11 // pred_check_branch
        %964 = sbr.rel (%p962) target = $region32
      $region31: #{forward.1} parent=11 // pred_region
        _
      $region32: #{forward.1} parent=11 // pred_fallthru
        _
      // Predicated region
      $region33: #{forward.1} parent=11 // pred_check
        %p965 = pneg %p237
      $region34: #{forward.1} parent=11 // pred_check_branch
        %967 = sbr.rel (%p965) target = $region36
      $region35: #{forward.1} parent=11 // pred_region
        _
      $region36: #{forward.1} parent=11 // pred_fallthru
        _
      // Predicated region
      $region37: #{forward.1} parent=11 // pred_check
        %p968 = pneg %p258
      $region38: #{forward.1} parent=11 // pred_check_branch
        %970 = sbr.rel (%p968) target = $region40
      $region39: #{forward.1} parent=11 // pred_region
        _
      $region40: #{forward.1} parent=11 // pred_fallthru
        _
      // Predicated region
      $region41: #{forward.1} parent=11 // pred_check
        %p971 = pneg %p279
      $region42: #{forward.1} parent=11 // pred_check_branch
        %973 = sbr.rel (%p971) target = $region44
      $region43: #{forward.1} parent=11 // pred_region
        _
      $region44: #{forward.1} parent=11 // pred_fallthru
        _
      // Predicated region
      $region45: #{forward.1} parent=11 // pred_check
        %p974 = pneg %p300
      $region46: #{forward.1} parent=11 // pred_check_branch
        %976 = sbr.rel (%p974) target = $region48
      $region47: #{forward.1} parent=11 // pred_region
        _
      $region48: #{forward.1} parent=11 // pred_fallthru
        _
      // Predicated region
      $region49: #{forward.1} parent=11 // pred_check
        %p977 = pneg %p321
      $region50: #{forward.1} parent=11 // pred_check_branch
        %979 = sbr.rel (%p977) target = $region52
      $region51: #{forward.1} parent=11 // pred_region
        _
      $region52: #{forward.1} parent=11 // pred_fallthru
        _
      // Predicated region
      $region53: #{forward.1} parent=11 // pred_check
        %p980 = pneg %p342
      $region54: #{forward.1} parent=11 // pred_check_branch
        %982 = sbr.rel (%p980) target = $region56
      $region55: #{forward.1} parent=11 // pred_region
        _
      $region56: #{forward.1} parent=11 // pred_fallthru
        _
      // Predicated region
      $region57: #{forward.1} parent=11 // pred_check
        %p983 = pneg %p363
      $region58: #{forward.1} parent=11 // pred_check_branch
        %985 = sbr.rel (%p983) target = $region60
      $region59: #{forward.1} parent=11 // pred_region
        _
      $region60: #{forward.1} parent=11 // pred_fallthru
        _
      // Predicated region
      $region61: #{forward.1} parent=11 // pred_check
        %p986 = pneg %p384
      $region62: #{forward.1} parent=11 // pred_check_branch
        %988 = sbr.rel (%p986) target = $region64
      $region63: #{forward.1} parent=11 // pred_region
        _
      $region64: #{forward.1} parent=11 // pred_fallthru
        _
      // Predicated region
      $region65: #{forward.1} parent=11 // pred_check
        %p989 = pneg %p405
      $region66: #{forward.1} parent=11 // pred_check_branch
        %991 = sbr.rel (%p989) target = $region68
      $region67: #{forward.1} parent=11 // pred_region
        _
      $region68: #{forward.1} parent=11 // pred_fallthru
        _
      // Predicated region
      $region69: #{forward.1} parent=11 // pred_check
        %p992 = pneg %p426
      $region70: #{forward.1} parent=11 // pred_check_branch
        %994 = sbr.rel (%p992) target = $region72
      $region71: #{forward.1} parent=11 // pred_region
        _
      $region72: #{forward.1} parent=11 // pred_fallthru
        _
      // Predicated region
      $region73: #{forward.1} parent=11 // pred_check
        %p995 = pneg %p447
      $region74: #{forward.1} parent=11 // pred_check_branch
        %997 = sbr.rel (%p995) target = $region76
      $region75: #{forward.1} parent=11 // pred_region
        _
      $region76: #{forward.1} parent=11 // pred_fallthru
        _
      // Predicated region
      $region77: #{forward.1} parent=11 // pred_check
        %p998 = pneg %p468
      $region78: #{forward.1} parent=11 // pred_check_branch
        %1000 = sbr.rel (%p998) target = $region80
      $region79: #{forward.1} parent=11 // pred_region
        _
      $region80: #{forward.1} parent=11 // pred_fallthru
        _
      // Predicated region
      $region81: #{forward.1} parent=11 // pred_check
        %p1001 = pneg %p489
      $region82: #{forward.1} parent=11 // pred_check_branch
        %1003 = sbr.rel (%p1001) target = $region84
      $region83: #{forward.1} parent=11 // pred_region
        _
      $region84: #{forward.1} parent=11 // pred_fallthru
        _
      // Predicated region
      $region85: #{forward.1} parent=11 // pred_check
        %p1004 = pneg %p510
      $region86: #{forward.1} parent=11 // pred_check_branch
        %1006 = sbr.rel (%p1004) target = $region88
      $region87: #{forward.1} parent=11 // pred_region
        _
      $region88: #{forward.1} parent=11 // pred_fallthru
        _
      // Predicated region
      $region89: #{forward.1} parent=11 // pred_check
        %p1007 = pneg %p531
      $region90: #{forward.1} parent=11 // pred_check_branch
        %1009 = sbr.rel (%p1007) target = $region92
      $region91: #{forward.1} parent=11 // pred_region
        _
      $region92: #{forward.1} parent=11 // pred_fallthru
        _
      // Predicated region
      $region93: #{forward.1} parent=11 // pred_check
        %p1010 = pneg %p552
      $region94: #{forward.1} parent=11 // pred_check_branch
        %1012 = sbr.rel (%p1010) target = $region96
      $region95: #{forward.1} parent=11 // pred_region
        _
      $region96: #{forward.1} parent=11 // pred_fallthru
        _
      // Predicated region
      $region97: #{forward.1} parent=11 // pred_check
        %p1013 = pneg %p573
      $region98: #{forward.1} parent=11 // pred_check_branch
        %1015 = sbr.rel (%p1013) target = $region100
      $region99: #{forward.1} parent=11 // pred_region
        _
      $region100: #{forward.1} parent=11 // pred_fallthru
        _
      // Predicated region
      $region101: #{forward.1} parent=11 // pred_check
        %p1016 = pneg %p594
      $region102: #{forward.1} parent=11 // pred_check_branch
        %1018 = sbr.rel (%p1016) target = $region104
      $region103: #{forward.1} parent=11 // pred_region
        _
      $region104: #{forward.1} parent=11 // pred_fallthru
        _
      // Predicated region
      $region105: #{forward.1} parent=11 // pred_check
        %p1019 = pneg %p615
      $region106: #{forward.1} parent=11 // pred_check_branch
        %1021 = sbr.rel (%p1019) target = $region108
      $region107: #{forward.1} parent=11 // pred_region
        _
      $region108: #{forward.1} parent=11 // pred_fallthru
        _
      // Predicated region
      $region109: #{forward.1} parent=11 // pred_check
        %p1022 = pneg %p636
      $region110: #{forward.1} parent=11 // pred_check_branch
        %1024 = sbr.rel (%p1022) target = $region112
      $region111: #{forward.1} parent=11 // pred_region
        _
      $region112: #{forward.1} parent=11 // pred_fallthru
        _
      // Predicated region
      $region113: #{forward.1} parent=11 // pred_check
        %p1025 = pneg %p657
      $region114: #{forward.1} parent=11 // pred_check_branch
        %1027 = sbr.rel (%p1025) target = $region116
      $region115: #{forward.1} parent=11 // pred_region
        _
      $region116: #{forward.1} parent=11 // pred_fallthru
        _
      // Predicated region
      $region117: #{forward.1} parent=11 // pred_check
        %p1028 = pneg %p678
      $region118: #{forward.1} parent=11 // pred_check_branch
        %1030 = sbr.rel (%p1028) target = $region120
      $region119: #{forward.1} parent=11 // pred_region
        _
      $region120: #{forward.1} parent=11 // pred_fallthru
        _
      // Predicated region
      $region121: #{forward.1} parent=11 // pred_check
        %p1031 = pneg %p699
      $region122: #{forward.1} parent=11 // pred_check_branch
        %1033 = sbr.rel (%p1031) target = $region124
      $region123: #{forward.1} parent=11 // pred_region
        _
      $region124: #{forward.1} parent=11 // pred_fallthru
        _
      // Predicated region
      $region125: #{forward.1} parent=11 // pred_check
        %p1034 = pneg %p720
      $region126: #{forward.1} parent=11 // pred_check_branch
        %1036 = sbr.rel (%p1034) target = $region128
      $region127: #{forward.1} parent=11 // pred_region
        _
      $region128: #{forward.1} parent=11 // pred_fallthru
        _
      // Predicated region
      $region129: #{forward.1} parent=11 // pred_check
        %p1037 = pneg %p741
      $region130: #{forward.1} parent=11 // pred_check_branch
        %1039 = sbr.rel (%p1037) target = $region132
      $region131: #{forward.1} parent=11 // pred_region
        _
      $region132: #{forward.1} parent=11 // pred_fallthru
        _
      // Predicated region
      $region133: #{forward.1} parent=11 // pred_check
        %p1040 = pneg %p762
      $region134: #{forward.1} parent=11 // pred_check_branch
        %1042 = sbr.rel (%p1040) target = $region136
      $region135: #{forward.1} parent=11 // pred_region
        _
      $region136: #{forward.1} parent=11 // pred_fallthru
        _
      // Predicated region
      $region137: #{forward.1} parent=11 // pred_check
        %p1043 = pneg %p783
      $region138: #{forward.1} parent=11 // pred_check_branch
        %1045 = sbr.rel (%p1043) target = $region140
      $region139: #{forward.1} parent=11 // pred_region
        _
      $region140: #{forward.1} parent=11 // pred_fallthru
        _
      // Predicated region
      $region141: #{forward.1} parent=11 // pred_check
        %p1046 = pneg %p804
      $region142: #{forward.1} parent=11 // pred_check_branch
        %1048 = sbr.rel (%p1046) target = $region144
      $region143: #{forward.1} parent=11 // pred_region
        _
      $region144: #{forward.1} parent=11 // pred_fallthru
        _
      // Predicated region
      $region145: #{forward.1} parent=11 // pred_check
        %p1049 = pneg %p825
      $region146: #{forward.1} parent=11 // pred_check_branch
        %1051 = sbr.rel (%p1049) target = $region148
      $region147: #{forward.1} parent=11 // pred_region
        _
      $region148: #{forward.1} parent=11 // pred_fallthru
        _
      // Predicated region
      $region149: #{forward.1} parent=11 // pred_check
        %p1052 = pneg %p846
      $region150: #{forward.1} parent=11 // pred_check_branch
        %1054 = sbr.rel (%p1052) target = $region152
      $region151: #{forward.1} parent=11 // pred_region
        _
      $region152: #{forward.1} parent=11 // pred_fallthru
        _
      // Predicated region
      $region153: #{forward.1} parent=11 // pred_check
        %p1055 = pneg %p867
      $region154: #{forward.1} parent=11 // pred_check_branch
        %1057 = sbr.rel (%p1055) target = $region156
      $region155: #{forward.1} parent=11 // pred_region
        _
      $region156: #{forward.1} parent=11 // pred_fallthru
        _
      // Predicated region
      $region157: #{forward.1} parent=11 // pred_check
        %p1058 = pneg %p888
      $region158: #{forward.1} parent=11 // pred_check_branch
        %1060 = sbr.rel (%p1058) target = $region160
      $region159: #{forward.1} parent=11 // pred_region
        _
      $region160: #{forward.1} parent=11 // pred_fallthru
        _
      // Predicated region
      $region161: #{forward.1} parent=11 // pred_check
        %p1061 = pneg %p909
      $region162: #{forward.1} parent=11 // pred_check_branch
        %1063 = sbr.rel (%p1061) target = $region164
      $region163: #{forward.1} parent=11 // pred_region
        _
      $region164: #{forward.1} parent=11 // pred_fallthru
        _
    $region12: #{forward.1} parent=5 // pred_fallthru
      _
    %p1064 = scmp.lt.s32.totalorder %s85, 2
    // Predicated region
    $region165: #{forward.1} parent=5 // pred_check
      %p1065 = pneg %p1064
    $region166: #{forward.1} parent=5 // pred_check_branch
      %1067 = sbr.rel (%p1065) target = $region168
    $region167: #{forward.1} parent=5 // pred_region
      // Predicated region
      $region169: #{forward.1} parent=167 // pred_check
        %p1068 = pneg %p105
      $region170: #{forward.1} parent=167 // pred_check_branch
        %1070 = sbr.rel (%p1068) target = $region172
      $region171: #{forward.1} parent=167 // pred_region
        %s1071 = smul.u32 41, %s85
        %p1072 = scmp.lt.s32.totalorder %s1071, 81
        %s1073 = scalar_select %p1072, %s1071, 81
        %s1074 = smul.addr %s1073, 2
        %s1075 = smul.addr %s1074, 8
        %s1076 = scalar_lea.vmem %s1, %s1075
        %s1077 = smul.u32 41, %s85
      $region172: #{forward.1} parent=167 // pred_fallthru
        _
    $region168: #{forward.1} parent=5 // pred_fallthru
      _
    %p1078 = scmp.le.s32.totalorder 1, %s85
    %p1079 = scmp.lt.s32.totalorder %s85, 3
    %p1080 = pnand %p1078, %p1079
    %p1081 = pneg %p1080
    // Predicated region
    $region173: #{forward.1} parent=5 // pred_check
      _
    $region174: #{forward.1} parent=5 // pred_check_branch
      %1083 = sbr.rel (%p1080) target = $region176
    $region175: #{forward.1} parent=5 // pred_region
      %s1084 = ssub.s32 %s85, 1
      %s1085 = smul.u32 41, %s90
      %p1086 = scmp.lt.s32.totalorder %s1085, 81
      %s1087 = scalar_select %p1086, %s1085, 81
      %s1088 = smul.addr %s1087, 2
      %s1089 = smul.addr %s1088, 8
      %s1090 = scalar_lea.vmem %s1, %s1089
      %p1091 = pneg %p111
      %p1092 = pneg %p108
      %p1093 = pneg %p132
      %p1094 = pneg %p129
      %p1095 = pneg %p153
      %p1096 = pneg %p150
      %p1097 = pneg %p174
      %p1098 = pneg %p171
      %p1099 = pneg %p195
      %p1100 = pneg %p192
      %p1101 = pneg %p216
      %p1102 = pneg %p213
      %p1103 = pneg %p237
      %p1104 = pneg %p234
      %p1105 = pneg %p258
      %p1106 = pneg %p255
      %p1107 = pneg %p279
      %p1108 = pneg %p276
      %p1109 = pneg %p300
      %p1110 = pneg %p297
      %p1111 = pneg %p321
      %p1112 = pneg %p318
      %p1113 = pneg %p342
      %p1114 = pneg %p339
      %p1115 = pneg %p363
      %p1116 = pneg %p360
      %p1117 = pneg %p384
      %p1118 = pneg %p381
      %p1119 = pneg %p405
      %p1120 = pneg %p402
      %p1121 = pneg %p426
      %p1122 = pneg %p423
      %p1123 = pneg %p447
      %p1124 = pneg %p444
      %p1125 = pneg %p468
      %p1126 = pneg %p465
      %p1127 = pneg %p489
      %p1128 = pneg %p486
      %p1129 = pneg %p510
      %p1130 = pneg %p507
      %p1131 = pneg %p531
      %p1132 = pneg %p528
      %p1133 = pneg %p552
      %p1134 = pneg %p549
      %p1135 = pneg %p573
      %p1136 = pneg %p570
      %p1137 = pneg %p594
      %p1138 = pneg %p591
      %p1139 = pneg %p615
      %p1140 = pneg %p612
      %p1141 = pneg %p636
      %p1142 = pneg %p633
      %p1143 = pneg %p657
      %p1144 = pneg %p654
      %p1145 = pneg %p678
      %p1146 = pneg %p675
      %p1147 = pneg %p699
      %p1148 = pneg %p696
      %p1149 = pneg %p720
      %p1150 = pneg %p717
      %p1151 = pneg %p741
      %p1152 = pneg %p738
      %p1153 = pneg %p762
      %p1154 = pneg %p759
      %p1155 = pneg %p783
      %p1156 = pneg %p780
      %p1157 = pneg %p804
      %p1158 = pneg %p801
      %p1159 = pneg %p825
      %p1160 = pneg %p822
      %p1161 = pneg %p846
      %p1162 = pneg %p843
      %p1163 = pneg %p867
      %p1164 = pneg %p864
      %p1165 = pneg %p888
      %p1166 = pneg %p885
      %p1167 = pneg %p909
      %p1168 = pneg %p906
      %p1169 = pneg %p935
      %p1170 = pneg %p932
      %s1171 = smul.u32 4, %s90
      %p1172 = scmp.lt.s32.totalorder %s1171, 7
      %s1173 = scalar_select %p1172, %s1171, 7
      %s1174 = smul.addr %s1173, 2
      %s1175 = smul.addr %s1174, 8
      %s1176 = scalar_lea.vmem %s79, %s1175
      %s1177 = smul.u32 41, %s90
      %p1178 = scmp.lt.s32.totalorder %s1177, 81
      %s1179 = scalar_select %p1178, %s1177, 81
      %s1180 = smul.addr %s1179, 2
      %s1181 = smul.addr %s1180, 8
      %s1182 = scalar_lea.vmem %s1, %s1181
      %s1183 = smul.u32 41, %s90
      %s1184 = smul.u32 4, %s90
      %p1185 = scmp.lt.s32.totalorder %s1184, 7
      %s1186 = scalar_select %p1185, %s1184, 7
      %s1187 = smul.addr %s1186, 2
      %s1188 = smul.addr %s1187, 8
      %s1189 = scalar_lea.vmem %s79, %s1188
      %s1190 = smul.u32 4, %s90
      %v1191 = vld [vmem:[%s1182] sm:$0xff]
      %v1192 = vld [vmem:[%s1182 + $0x8] sm:$0xff]
      %v1193 = vld [vmem:[%s1182 + $0x10] sm:$0xff]
      %v1194 = vld [vmem:[%s1182 + $0x18] sm:$0xff]
      %v1195 = vld [vmem:[%s1182 + $0x20] sm:$0xff]
      %v1196 = vld [vmem:[%s1182 + $0x28] sm:$0xff]
      %v1197 = vld [vmem:[%s1182 + $0x30] sm:$0xff]
      %v1198 = vld [vmem:[%s1182 + $0x38] sm:$0xff]
      %v1199 = vld [vmem:[%s1182 + $0x40] sm:$0xff]
      %v1200 = vld [vmem:[%s1182 + $0x48] sm:$0xff]
      %v1201 = vld [vmem:[%s1182 + $0x50] sm:$0xff]
      %v1202 = vld [vmem:[%s1182 + $0x58] sm:$0xff]
      %v1203 = vld [vmem:[%s1182 + $0x60] sm:$0xff]
      %v1204 = vld [vmem:[%s1182 + $0x68] sm:$0xff]
      %v1205 = vld [vmem:[%s1182 + $0x70] sm:$0xff]
      %v1206 = vld [vmem:[%s1182 + $0x78] sm:$0xff]
      %v1207 = vld [vmem:[%s1182 + $0x80] sm:$0xff]
      %v1208 = vld [vmem:[%s1182 + $0x88] sm:$0xff]
      %v1209 = vld [vmem:[%s1182 + $0x90] sm:$0xff]
      %v1210 = vld [vmem:[%s1182 + $0x98] sm:$0xff]
      %v1211 = vld [vmem:[%s1182 + $0xa0] sm:$0xff]
      %v1212 = vld [vmem:[%s1182 + $0xa8] sm:$0xff]
      %v1213 = vld [vmem:[%s1182 + $0xb0] sm:$0xff]
      %v1214 = vld [vmem:[%s1182 + $0xb8] sm:$0xff]
      %v1215 = vld [vmem:[%s1182 + $0xc0] sm:$0xff]
      %v1216 = vld [vmem:[%s1182 + $0xc8] sm:$0xff]
      %v1217 = vld [vmem:[%s1182 + $0xd0] sm:$0xff]
      %v1218 = vld [vmem:[%s1182 + $0xd8] sm:$0xff]
      %v1219 = vld [vmem:[%s1182 + $0xe0] sm:$0xff]
      %v1220 = vld [vmem:[%s1182 + $0xe8] sm:$0xff]
      %v1221 = vld [vmem:[%s1182 + $0xf0] sm:$0xff]
      %v1222 = vld [vmem:[%s1182 + $0xf8] sm:$0xff]
      %v1223 = vld [vmem:[%s1182 + $0x100] sm:$0xff]
      %v1224 = vld [vmem:[%s1182 + $0x108] sm:$0xff]
      %v1225 = vld [vmem:[%s1182 + $0x110] sm:$0xff]
      %v1226 = vld [vmem:[%s1182 + $0x118] sm:$0xff]
      %v1227 = vld [vmem:[%s1182 + $0x120] sm:$0xff]
      %v1228 = vld [vmem:[%s1182 + $0x128] sm:$0xff]
      %v1229 = vld [vmem:[%s1182 + $0x130] sm:$0xff]
      %v1230 = vld [vmem:[%s1182 + $0x138] sm:$0xff]
      %v1231 = vld [vmem:[%s1182 + $0x140] sm:$0xff]
      %v1232 = vld [vmem:[%s1182 + $0x148] sm:$0xff]
      %v1233 = vld [vmem:[%s1182 + $0x150] sm:$0xff]
      %v1234 = vld [vmem:[%s1182 + $0x158] sm:$0xff]
      %v1235 = vld [vmem:[%s1182 + $0x160] sm:$0xff]
      %v1236 = vld [vmem:[%s1182 + $0x168] sm:$0xff]
      %v1237 = vld [vmem:[%s1182 + $0x170] sm:$0xff]
      %v1238 = vld [vmem:[%s1182 + $0x178] sm:$0xff]
      %v1239 = vld [vmem:[%s1182 + $0x180] sm:$0xff]
      %v1240 = vld [vmem:[%s1182 + $0x188] sm:$0xff]
      %v1241 = vld [vmem:[%s1182 + $0x190] sm:$0xff]
      %v1242 = vld [vmem:[%s1182 + $0x198] sm:$0xff]
      %v1243 = vld [vmem:[%s1182 + $0x1a0] sm:$0xff]
      %v1244 = vld [vmem:[%s1182 + $0x1a8] sm:$0xff]
      %v1245 = vld [vmem:[%s1182 + $0x1b0] sm:$0xff]
      %v1246 = vld [vmem:[%s1182 + $0x1b8] sm:$0xff]
      %v1247 = vld [vmem:[%s1182 + $0x1c0] sm:$0xff]
      %v1248 = vld [vmem:[%s1182 + $0x1c8] sm:$0xff]
      %v1249 = vld [vmem:[%s1182 + $0x1d0] sm:$0xff]
      %v1250 = vld [vmem:[%s1182 + $0x1d8] sm:$0xff]
      %v1251 = vld [vmem:[%s1182 + $0x1e0] sm:$0xff]
      %v1252 = vld [vmem:[%s1182 + $0x1e8] sm:$0xff]
      %v1253 = vld [vmem:[%s1182 + $0x1f0] sm:$0xff]
      %v1254 = vld [vmem:[%s1182 + $0x1f8] sm:$0xff]
      %v1255 = vld [vmem:[%s1182 + $0x200] sm:$0xff]
      %v1256 = vld [vmem:[%s1182 + $0x208] sm:$0xff]
      %v1257 = vld [vmem:[%s1182 + $0x210] sm:$0xff]
      %v1258 = vld [vmem:[%s1182 + $0x218] sm:$0xff]
      %v1259 = vld [vmem:[%s1182 + $0x220] sm:$0xff]
      %v1260 = vld [vmem:[%s1182 + $0x228] sm:$0xff]
      %v1261 = vld [vmem:[%s1182 + $0x230] sm:$0xff]
      %v1262 = vld [vmem:[%s1182 + $0x238] sm:$0xff]
      %v1263 = vld [vmem:[%s1182 + $0x240] sm:$0xff]
      %v1264 = vld [vmem:[%s1182 + $0x248] sm:$0xff]
      %v1265 = vld [vmem:[%s1182 + $0x250] sm:$0xff]
      %v1266 = vld [vmem:[%s1182 + $0x258] sm:$0xff]
      %v1267 = vld [vmem:[%s1182 + $0x260] sm:$0xff]
      %v1268 = vld [vmem:[%s1182 + $0x268] sm:$0xff]
      %v1269 = vld [vmem:[%s1182 + $0x270] sm:$0xff]
      %v1270 = vld [vmem:[%s1182 + $0x278] sm:$0xff]
      %v1271 = vld [vmem:[%s1182 + $0x280] sm:$0xf]
      %v1272 = vld [vmem:[%s1182 + $0x288] sm:$0xf]
      %v1273 = vld [vmem:[%s5] sm:$0xff]
      %v1274 = vld [vmem:[%s5 + $0x8] sm:$0xff]
      %v1275 = vld [vmem:[%s5 + $0x10] sm:$0xff]
      %v1276 = vld [vmem:[%s5 + $0x18] sm:$0xff]
      %v1277 = vld [vmem:[%s5 + $0x20] sm:$0xff]
      %v1278 = vld [vmem:[%s5 + $0x28] sm:$0xff]
      %v1279 = vld [vmem:[%s5 + $0x30] sm:$0xff]
      %v1280 = vld [vmem:[%s5 + $0x38] sm:$0xff]
      %v1281 = vld [vmem:[%s5 + $0x40] sm:$0xff]
      %v1282 = vld [vmem:[%s5 + $0x48] sm:$0xff]
      %v1283 = vld [vmem:[%s5 + $0x50] sm:$0xff]
      %v1284 = vld [vmem:[%s5 + $0x58] sm:$0xff]
      %v1285 = vld [vmem:[%s5 + $0x60] sm:$0xff]
      %v1286 = vld [vmem:[%s5 + $0x68] sm:$0xff]
      %v1287 = vld [vmem:[%s5 + $0x70] sm:$0xff]
      %v1288 = vld [vmem:[%s5 + $0x78] sm:$0xff]
      %v1289 = vld [vmem:[%s5 + $0x80] sm:$0xff]
      %v1290 = vld [vmem:[%s5 + $0x88] sm:$0xff]
      %v1291 = vld [vmem:[%s5 + $0x90] sm:$0x7]
      %v1292 = vld [vmem:[%s7] sm:$0x1]
      %v1294 = vlaneseq
      %v1295 = vshrl.u32 %v1294, 7
      %v1296 = vsub.s32 0, %v1295
      %v1297 = vrot.slane %v1292, %v1296
      %vm1299 = vcmask 154624
      %v1301 = vsel %vm1299, %v1192, 0
      %v1304 = vsel %vm1299, %v1194, 0
      %v1307 = vsel %vm1299, %v1196, 0
      %v1310 = vsel %vm1299, %v1198, 0
      %v1313 = vsel %vm1299, %v1200, 0
      %v1316 = vsel %vm1299, %v1202, 0
      %v1319 = vsel %vm1299, %v1204, 0
      %v1322 = vsel %vm1299, %v1206, 0
      %v1325 = vsel %vm1299, %v1208, 0
      %v1328 = vsel %vm1299, %v1210, 0
      %v1331 = vsel %vm1299, %v1212, 0
      %v1334 = vsel %vm1299, %v1214, 0
      %v1337 = vsel %vm1299, %v1216, 0
      %v1340 = vsel %vm1299, %v1218, 0
      %v1343 = vsel %vm1299, %v1220, 0
      %v1346 = vsel %vm1299, %v1222, 0
      %v1349 = vsel %vm1299, %v1224, 0
      %v1352 = vsel %vm1299, %v1226, 0
      %v1355 = vsel %vm1299, %v1228, 0
      %v1358 = vsel %vm1299, %v1230, 0
      %v1361 = vsel %vm1299, %v1232, 0
      %v1364 = vsel %vm1299, %v1234, 0
      %v1367 = vsel %vm1299, %v1236, 0
      %v1370 = vsel %vm1299, %v1238, 0
      %v1373 = vsel %vm1299, %v1240, 0
      %v1376 = vsel %vm1299, %v1242, 0
      %v1379 = vsel %vm1299, %v1244, 0
      %v1382 = vsel %vm1299, %v1246, 0
      %v1385 = vsel %vm1299, %v1248, 0
      %v1388 = vsel %vm1299, %v1250, 0
      %v1391 = vsel %vm1299, %v1252, 0
      %v1394 = vsel %vm1299, %v1254, 0
      %v1397 = vsel %vm1299, %v1256, 0
      %v1400 = vsel %vm1299, %v1258, 0
      %v1403 = vsel %vm1299, %v1260, 0
      %v1406 = vsel %vm1299, %v1262, 0
      %v1409 = vsel %vm1299, %v1264, 0
      %v1412 = vsel %vm1299, %v1266, 0
      %v1415 = vsel %vm1299, %v1268, 0
      %v1418 = vsel %vm1299, %v1270, 0
      %v1421 = vsel %vm1299, %v1272, 0
      %vm1423 = vcmask 1042432
      %v1425 = vsel %vm1423, %v1291, 0
      %1427 = vmatprep.subr.mxu0 0.0
      %1428 = vmatpush1.msra.mxu0 %v1288
      %1429 = vmatprep.subr.mxu0 0.0
      %1430 = vmatpush1.msra.mxu0 %v1287
      %1431 = vmatprep.subr.mxu0 0.0
      %1432 = vmatpush1.msra.mxu0 %v1286
      %1433 = vmatprep.subr.mxu0 0.0
      %1434 = vmatpush1.msra.mxu0 %v1285
      %1435 = vmatprep.subr.mxu0 0.0
      %1436 = vmatpush1.msra.mxu0 %v1284
      %1437 = vmatprep.subr.mxu0 0.0
      %1438 = vmatpush1.msra.mxu0 %v1283
      %1439 = vmatprep.subr.mxu0 0.0
      %1440 = vmatpush1.msra.mxu0 %v1282
      %1441 = vmatprep.subr.mxu0 0.0
      %1442 = vmatpush1.msra.mxu0 %v1281
      %1443 = vmatprep.subr.mxu0 0.0
      %1444 = vmatpush1.msra.mxu0 %v1280
      %1445 = vmatprep.subr.mxu0 0.0
      %1446 = vmatpush1.msra.mxu0 %v1279
      %1447 = vmatprep.subr.mxu0 0.0
      %1448 = vmatpush1.msra.mxu0 %v1278
      %1449 = vmatprep.subr.mxu0 0.0
      %1450 = vmatpush1.msra.mxu0 %v1277
      %1451 = vmatprep.subr.mxu0 0.0
      %1452 = vmatpush1.msra.mxu0 %v1276
      %1453 = vmatprep.subr.mxu0 0.0
      %1454 = vmatpush1.msra.mxu0 %v1275
      %1455 = vmatprep.subr.mxu0 0.0
      %1456 = vmatpush1.msra.mxu0 %v1274
      %1457 = vmatprep.subr.mxu0 0.0
      %1458 = vmatpush1.msra.mxu0 %v1273
      %1459 = vmatprep.subr.mxu0 0.0
      %1460 = vmatpush2.msra.mxu0 0.0
      %1461 = vmatprep.subr.mxu0 0.0
      %1462 = vmatpush2.msra.mxu0 0.0
      %1463 = vmatprep.subr.mxu0 0.0
      %1464 = vmatpush2.msra.mxu0 0.0
      %1465 = vmatprep.subr.mxu0 0.0
      %1466 = vmatpush2.msra.mxu0 0.0
      %1467 = vmatprep.subr.mxu0 0.0
      %1468 = vmatpush2.msra.mxu0 0.0
      %1469 = vmatprep.subr.mxu0 0.0
      %1470 = vmatpush2.msra.mxu0 0.0
      %1471 = vmatprep.subr.mxu0 0.0
      %1472 = vmatpush2.msra.mxu0 0.0
      %1473 = vmatprep.subr.mxu0 0.0
      %1474 = vmatpush2.msra.mxu0 0.0
      %1475 = vmatprep.subr.mxu0 0.0
      %1476 = vmatpush2.msra.mxu0 0.0
      %1477 = vmatprep.subr.mxu0 0.0
      %1478 = vmatpush2.msra.mxu0 0.0
      %1479 = vmatprep.subr.mxu0 0.0
      %1480 = vmatpush2.msra.mxu0 0.0
      %1481 = vmatprep.subr.mxu0 0.0
      %1482 = vmatpush2.msra.mxu0 0.0
      %1483 = vmatprep.subr.mxu0 0.0
      %1484 = vmatpush2.msra.mxu0 0.0
      %1485 = vmatprep.subr.mxu0 0.0
      %1486 = vmatpush2.msra.mxu0 %v1425
      %1487 = vmatprep.subr.mxu0 0.0
      %1488 = vmatpush2.msra.mxu0 %v1290
      %1489 = vmatprep.subr.mxu0 0.0
      %1490 = vmatpush2.msra.mxu0 %v1289
      %1491 = vmatprep.mubr.f32.mxu0 %v1301
      %1492 = vmatmul.mubr.f32.gmra.mxu0 %v1191
      %v1493 = vpop.f32.mrf.mxu0
      %v1494 = vadd.f32 %v1297, %v1493
      %v1495 = vpop.f32.mrf.mxu0
      %1496 = vmatprep.mubr.f32.mxu0 %v1304
      %1497 = vmatmul.mubr.f32.gmra.mxu0 %v1193
      %v1498 = vpop.f32.mrf.mxu0
      %v1499 = vadd.f32 %v1297, %v1498
      %v1500 = vpop.f32.mrf.mxu0
      %1501 = vmatprep.mubr.f32.mxu0 %v1307
      %1502 = vmatmul.mubr.f32.gmra.mxu0 %v1195
      %v1503 = vpop.f32.mrf.mxu0
      %v1504 = vadd.f32 %v1297, %v1503
      %v1505 = vpop.f32.mrf.mxu0
      %1506 = vmatprep.mubr.f32.mxu0 %v1310
      %1507 = vmatmul.mubr.f32.gmra.mxu0 %v1197
      %v1508 = vpop.f32.mrf.mxu0
      %v1509 = vadd.f32 %v1297, %v1508
      %v1510 = vpop.f32.mrf.mxu0
      %1511 = vmatprep.mubr.f32.mxu0 %v1313
      %1512 = vmatmul.mubr.f32.gmra.mxu0 %v1199
      %v1513 = vpop.f32.mrf.mxu0
      %v1514 = vadd.f32 %v1297, %v1513
      %v1515 = vpop.f32.mrf.mxu0
      %1516 = vmatprep.mubr.f32.mxu0 %v1316
      %1517 = vmatmul.mubr.f32.gmra.mxu0 %v1201
      %v1518 = vpop.f32.mrf.mxu0
      %v1519 = vadd.f32 %v1297, %v1518
      %v1520 = vpop.f32.mrf.mxu0
      %1521 = vmatprep.mubr.f32.mxu0 %v1319
      %1522 = vmatmul.mubr.f32.gmra.mxu0 %v1203
      %v1523 = vpop.f32.mrf.mxu0
      %v1524 = vadd.f32 %v1297, %v1523
      %v1525 = vpop.f32.mrf.mxu0
      %1526 = vmatprep.mubr.f32.mxu0 %v1322
      %1527 = vmatmul.mubr.f32.gmra.mxu0 %v1205
      %v1528 = vpop.f32.mrf.mxu0
      %v1529 = vadd.f32 %v1297, %v1528
      %v1530 = vpop.f32.mrf.mxu0
      %1531 = vmatprep.mubr.f32.mxu0 %v1325
      %1532 = vmatmul.mubr.f32.gmra.mxu0 %v1207
      %v1533 = vpop.f32.mrf.mxu0
      %v1534 = vadd.f32 %v1297, %v1533
      %v1535 = vpop.f32.mrf.mxu0
      %1536 = vmatprep.mubr.f32.mxu0 %v1328
      %1537 = vmatmul.mubr.f32.gmra.mxu0 %v1209
      %v1538 = vpop.f32.mrf.mxu0
      %v1539 = vadd.f32 %v1297, %v1538
      %v1540 = vpop.f32.mrf.mxu0
      %1541 = vmatprep.mubr.f32.mxu0 %v1331
      %1542 = vmatmul.mubr.f32.gmra.mxu0 %v1211
      %v1543 = vpop.f32.mrf.mxu0
      %v1544 = vadd.f32 %v1297, %v1543
      %v1545 = vpop.f32.mrf.mxu0
      %1546 = vmatprep.mubr.f32.mxu0 %v1334
      %1547 = vmatmul.mubr.f32.gmra.mxu0 %v1213
      %v1548 = vpop.f32.mrf.mxu0
      %v1549 = vadd.f32 %v1297, %v1548
      %v1550 = vpop.f32.mrf.mxu0
      %1551 = vmatprep.mubr.f32.mxu0 %v1337
      %1552 = vmatmul.mubr.f32.gmra.mxu0 %v1215
      %v1553 = vpop.f32.mrf.mxu0
      %v1554 = vadd.f32 %v1297, %v1553
      %v1555 = vpop.f32.mrf.mxu0
      %1556 = vmatprep.mubr.f32.mxu0 %v1340
      %1557 = vmatmul.mubr.f32.gmra.mxu0 %v1217
      %v1558 = vpop.f32.mrf.mxu0
      %v1559 = vadd.f32 %v1297, %v1558
      %v1560 = vpop.f32.mrf.mxu0
      %1561 = vmatprep.mubr.f32.mxu0 %v1343
      %1562 = vmatmul.mubr.f32.gmra.mxu0 %v1219
      %v1563 = vpop.f32.mrf.mxu0
      %v1564 = vadd.f32 %v1297, %v1563
      %v1565 = vpop.f32.mrf.mxu0
      %1566 = vmatprep.mubr.f32.mxu0 %v1346
      %1567 = vmatmul.mubr.f32.gmra.mxu0 %v1221
      %v1568 = vpop.f32.mrf.mxu0
      %v1569 = vadd.f32 %v1297, %v1568
      %v1570 = vpop.f32.mrf.mxu0
      %1571 = vmatprep.mubr.f32.mxu0 %v1349
      %1572 = vmatmul.mubr.f32.gmra.mxu0 %v1223
      %v1573 = vpop.f32.mrf.mxu0
      %v1574 = vadd.f32 %v1297, %v1573
      %v1575 = vpop.f32.mrf.mxu0
      %1576 = vmatprep.mubr.f32.mxu0 %v1352
      %1577 = vmatmul.mubr.f32.gmra.mxu0 %v1225
      %v1578 = vpop.f32.mrf.mxu0
      %v1579 = vadd.f32 %v1297, %v1578
      %v1580 = vpop.f32.mrf.mxu0
      %1581 = vmatprep.mubr.f32.mxu0 %v1355
      %1582 = vmatmul.mubr.f32.gmra.mxu0 %v1227
      %v1583 = vpop.f32.mrf.mxu0
      %v1584 = vadd.f32 %v1297, %v1583
      %v1585 = vpop.f32.mrf.mxu0
      %1586 = vmatprep.mubr.f32.mxu0 %v1358
      %1587 = vmatmul.mubr.f32.gmra.mxu0 %v1229
      %v1588 = vpop.f32.mrf.mxu0
      %v1589 = vadd.f32 %v1297, %v1588
      %v1590 = vpop.f32.mrf.mxu0
      %1591 = vmatprep.mubr.f32.mxu0 %v1361
      %1592 = vmatmul.mubr.f32.gmra.mxu0 %v1231
      %v1593 = vpop.f32.mrf.mxu0
      %v1594 = vadd.f32 %v1297, %v1593
      %v1595 = vpop.f32.mrf.mxu0
      %1596 = vmatprep.mubr.f32.mxu0 %v1364
      %1597 = vmatmul.mubr.f32.gmra.mxu0 %v1233
      %v1598 = vpop.f32.mrf.mxu0
      %v1599 = vadd.f32 %v1297, %v1598
      %v1600 = vpop.f32.mrf.mxu0
      %1601 = vmatprep.mubr.f32.mxu0 %v1367
      %1602 = vmatmul.mubr.f32.gmra.mxu0 %v1235
      %v1603 = vpop.f32.mrf.mxu0
      %v1604 = vadd.f32 %v1297, %v1603
      %v1605 = vpop.f32.mrf.mxu0
      %1606 = vmatprep.mubr.f32.mxu0 %v1370
      %1607 = vmatmul.mubr.f32.gmra.mxu0 %v1237
      %v1608 = vpop.f32.mrf.mxu0
      %v1609 = vadd.f32 %v1297, %v1608
      %v1610 = vpop.f32.mrf.mxu0
      %1611 = vmatprep.mubr.f32.mxu0 %v1373
      %1612 = vmatmul.mubr.f32.gmra.mxu0 %v1239
      %v1613 = vpop.f32.mrf.mxu0
      %v1614 = vadd.f32 %v1297, %v1613
      %v1615 = vpop.f32.mrf.mxu0
      %1616 = vmatprep.mubr.f32.mxu0 %v1376
      %1617 = vmatmul.mubr.f32.gmra.mxu0 %v1241
      %v1618 = vpop.f32.mrf.mxu0
      %v1619 = vadd.f32 %v1297, %v1618
      %v1620 = vpop.f32.mrf.mxu0
      %1621 = vmatprep.mubr.f32.mxu0 %v1379
      %1622 = vmatmul.mubr.f32.gmra.mxu0 %v1243
      %v1623 = vpop.f32.mrf.mxu0
      %v1624 = vadd.f32 %v1297, %v1623
      %v1625 = vpop.f32.mrf.mxu0
      %1626 = vmatprep.mubr.f32.mxu0 %v1382
      %1627 = vmatmul.mubr.f32.gmra.mxu0 %v1245
      %v1628 = vpop.f32.mrf.mxu0
      %v1629 = vadd.f32 %v1297, %v1628
      %v1630 = vpop.f32.mrf.mxu0
      %1631 = vmatprep.mubr.f32.mxu0 %v1385
      %1632 = vmatmul.mubr.f32.gmra.mxu0 %v1247
      %v1633 = vpop.f32.mrf.mxu0
      %v1634 = vadd.f32 %v1297, %v1633
      %v1635 = vpop.f32.mrf.mxu0
      %1636 = vmatprep.mubr.f32.mxu0 %v1388
      %1637 = vmatmul.mubr.f32.gmra.mxu0 %v1249
      %v1638 = vpop.f32.mrf.mxu0
      %v1639 = vadd.f32 %v1297, %v1638
      %v1640 = vpop.f32.mrf.mxu0
      %1641 = vmatprep.mubr.f32.mxu0 %v1391
      %1642 = vmatmul.mubr.f32.gmra.mxu0 %v1251
      %v1643 = vpop.f32.mrf.mxu0
      %v1644 = vadd.f32 %v1297, %v1643
      %v1645 = vpop.f32.mrf.mxu0
      %1646 = vmatprep.mubr.f32.mxu0 %v1394
      %1647 = vmatmul.mubr.f32.gmra.mxu0 %v1253
      %v1648 = vpop.f32.mrf.mxu0
      %v1649 = vadd.f32 %v1297, %v1648
      %v1650 = vpop.f32.mrf.mxu0
      %1651 = vmatprep.mubr.f32.mxu0 %v1397
      %1652 = vmatmul.mubr.f32.gmra.mxu0 %v1255
      %v1653 = vpop.f32.mrf.mxu0
      %v1654 = vadd.f32 %v1297, %v1653
      %v1655 = vpop.f32.mrf.mxu0
      %1656 = vmatprep.mubr.f32.mxu0 %v1400
      %1657 = vmatmul.mubr.f32.gmra.mxu0 %v1257
      %v1658 = vpop.f32.mrf.mxu0
      %v1659 = vadd.f32 %v1297, %v1658
      %v1660 = vpop.f32.mrf.mxu0
      %1661 = vmatprep.mubr.f32.mxu0 %v1403
      %1662 = vmatmul.mubr.f32.gmra.mxu0 %v1259
      %v1663 = vpop.f32.mrf.mxu0
      %v1664 = vadd.f32 %v1297, %v1663
      %v1665 = vpop.f32.mrf.mxu0
      %1666 = vmatprep.mubr.f32.mxu0 %v1406
      %1667 = vmatmul.mubr.f32.gmra.mxu0 %v1261
      %v1668 = vpop.f32.mrf.mxu0
      %v1669 = vadd.f32 %v1297, %v1668
      %v1670 = vpop.f32.mrf.mxu0
      %1671 = vmatprep.mubr.f32.mxu0 %v1409
      %1672 = vmatmul.mubr.f32.gmra.mxu0 %v1263
      %v1673 = vpop.f32.mrf.mxu0
      %v1674 = vadd.f32 %v1297, %v1673
      %v1675 = vpop.f32.mrf.mxu0
      %1676 = vmatprep.mubr.f32.mxu0 %v1412
      %1677 = vmatmul.mubr.f32.gmra.mxu0 %v1265
      %v1678 = vpop.f32.mrf.mxu0
      %v1679 = vadd.f32 %v1297, %v1678
      %v1680 = vpop.f32.mrf.mxu0
      %1681 = vmatprep.mubr.f32.mxu0 %v1415
      %1682 = vmatmul.mubr.f32.gmra.mxu0 %v1267
      %v1683 = vpop.f32.mrf.mxu0
      %v1684 = vadd.f32 %v1297, %v1683
      %v1685 = vpop.f32.mrf.mxu0
      %1686 = vmatprep.mubr.f32.mxu0 %v1418
      %1687 = vmatmul.mubr.f32.gmra.mxu0 %v1269
      %v1688 = vpop.f32.mrf.mxu0
      %v1689 = vadd.f32 %v1297, %v1688
      %v1690 = vpop.f32.mrf.mxu0
      %1691 = vmatprep.mubr.f32.mxu0 %v1421
      %1692 = vmatmul.mubr.f32.gmra.mxu0 %v1271
      %v1693 = vpop.f32.mrf.mxu0
      %v1694 = vadd.f32 %v1297, %v1693
      %v1695 = vpop.f32.mrf.mxu0
      %1696 = vdwg.mxu0
      %v1697 = vmax.f32 %v1494, 0.0
      %v1698 = vmax.f32 %v1499, 0.0
      %v1699 = vmax.f32 %v1504, 0.0
      %v1700 = vmax.f32 %v1509, 0.0
      %v1701 = vmax.f32 %v1514, 0.0
      %v1702 = vmax.f32 %v1519, 0.0
      %v1703 = vmax.f32 %v1524, 0.0
      %v1704 = vmax.f32 %v1529, 0.0
      %v1705 = vmax.f32 %v1534, 0.0
      %v1706 = vmax.f32 %v1539, 0.0
      %v1707 = vmax.f32 %v1544, 0.0
      %v1708 = vmax.f32 %v1549, 0.0
      %v1709 = vmax.f32 %v1554, 0.0
      %v1710 = vmax.f32 %v1559, 0.0
      %v1711 = vmax.f32 %v1564, 0.0
      %v1712 = vmax.f32 %v1569, 0.0
      %v1713 = vmax.f32 %v1574, 0.0
      %v1714 = vmax.f32 %v1579, 0.0
      %v1715 = vmax.f32 %v1584, 0.0
      %v1716 = vmax.f32 %v1589, 0.0
      %v1717 = vmax.f32 %v1594, 0.0
      %v1718 = vmax.f32 %v1599, 0.0
      %v1719 = vmax.f32 %v1604, 0.0
      %v1720 = vmax.f32 %v1609, 0.0
      %v1721 = vmax.f32 %v1614, 0.0
      %v1722 = vmax.f32 %v1619, 0.0
      %v1723 = vmax.f32 %v1624, 0.0
      %v1724 = vmax.f32 %v1629, 0.0
      %v1725 = vmax.f32 %v1634, 0.0
      %v1726 = vmax.f32 %v1639, 0.0
      %v1727 = vmax.f32 %v1644, 0.0
      %v1728 = vmax.f32 %v1649, 0.0
      %v1729 = vmax.f32 %v1654, 0.0
      %v1730 = vmax.f32 %v1659, 0.0
      %v1731 = vmax.f32 %v1664, 0.0
      %v1732 = vmax.f32 %v1669, 0.0
      %v1733 = vmax.f32 %v1674, 0.0
      %v1734 = vmax.f32 %v1679, 0.0
      %v1735 = vmax.f32 %v1684, 0.0
      %v1736 = vmax.f32 %v1689, 0.0
      %v1737 = vmax.f32 %v1694, 0.0
      %v1738 = vld [vmem:[%s3] sm:$0xff]
      %v1739 = vld [vmem:[%s3 + $0x8] sm:$0xff]
      %v1740 = vld [vmem:[%s3 + $0x10] sm:$0xff]
      %v1741 = vld [vmem:[%s3 + $0x18] sm:$0xff]
      %v1742 = vld [vmem:[%s3 + $0x20] sm:$0xff]
      %v1743 = vld [vmem:[%s3 + $0x28] sm:$0xff]
      %v1744 = vld [vmem:[%s3 + $0x30] sm:$0xff]
      %v1745 = vld [vmem:[%s3 + $0x38] sm:$0xff]
      %v1746 = vld [vmem:[%s3 + $0x40] sm:$0xff]
      %v1747 = vld [vmem:[%s3 + $0x48] sm:$0xff]
      %v1748 = vld [vmem:[%s3 + $0x50] sm:$0xff]
      %v1749 = vld [vmem:[%s3 + $0x58] sm:$0xff]
      %v1750 = vld [vmem:[%s3 + $0x60] sm:$0xff]
      %v1751 = vld [vmem:[%s3 + $0x68] sm:$0xff]
      %v1752 = vld [vmem:[%s3 + $0x70] sm:$0xff]
      %v1753 = vld [vmem:[%s3 + $0x78] sm:$0xff]
      %v1754 = vld [vmem:[%s3 + $0x80] sm:$0xff]
      %v1755 = vld [vmem:[%s3 + $0x88] sm:$0xff]
      %v1756 = vld [vmem:[%s3 + $0x90] sm:$0xff]
      %v1757 = vld [vmem:[%s3 + $0x98] sm:$0xff]
      %v1758 = vld [vmem:[%s3 + $0xa0] sm:$0xff]
      %v1759 = vld [vmem:[%s3 + $0xa8] sm:$0xff]
      %v1760 = vld [vmem:[%s3 + $0xb0] sm:$0xff]
      %v1761 = vld [vmem:[%s3 + $0xb8] sm:$0xff]
      %v1762 = vld [vmem:[%s3 + $0xc0] sm:$0xff]
      %v1763 = vld [vmem:[%s3 + $0xc8] sm:$0xff]
      %v1764 = vld [vmem:[%s3 + $0xd0] sm:$0xff]
      %v1765 = vld [vmem:[%s3 + $0xd8] sm:$0xff]
      %v1766 = vld [vmem:[%s3 + $0xe0] sm:$0xff]
      %v1767 = vld [vmem:[%s3 + $0xe8] sm:$0xff]
      %v1768 = vld [vmem:[%s3 + $0xf0] sm:$0xff]
      %v1769 = vld [vmem:[%s3 + $0xf8] sm:$0xff]
      %v1770 = vld [vmem:[%s3 + $0x100] sm:$0xff]
      %v1771 = vld [vmem:[%s3 + $0x108] sm:$0xff]
      %v1772 = vld [vmem:[%s3 + $0x110] sm:$0xff]
      %v1773 = vld [vmem:[%s3 + $0x118] sm:$0xff]
      %v1774 = vld [vmem:[%s3 + $0x120] sm:$0xff]
      %v1775 = vld [vmem:[%s3 + $0x128] sm:$0xff]
      %v1776 = vld [vmem:[%s3 + $0x130] sm:$0xff]
      %v1777 = vld [vmem:[%s3 + $0x138] sm:$0xff]
      %v1778 = vld [vmem:[%s3 + $0x140] sm:$0xf]
      %1780 = vset.pattern.permute.xlu0 0
      %1781 = vperm.xlu0 %1780, %v1738
      %v1782 = vpop.permute.xlu0 %1781
      %1785 = vset.pattern.permute.xlu0 0
      %1786 = vperm.xlu0 %1785, %v1739
      %v1787 = vpop.permute.xlu0 %1786
      %1790 = vset.pattern.permute.xlu0 0
      %1791 = vperm.xlu0 %1790, %v1740
      %v1792 = vpop.permute.xlu0 %1791
      %1795 = vset.pattern.permute.xlu0 0
      %1796 = vperm.xlu0 %1795, %v1741
      %v1797 = vpop.permute.xlu0 %1796
      %1800 = vset.pattern.permute.xlu0 0
      %1801 = vperm.xlu0 %1800, %v1742
      %v1802 = vpop.permute.xlu0 %1801
      %1805 = vset.pattern.permute.xlu0 0
      %1806 = vperm.xlu0 %1805, %v1743
      %v1807 = vpop.permute.xlu0 %1806
      %1810 = vset.pattern.permute.xlu0 0
      %1811 = vperm.xlu0 %1810, %v1744
      %v1812 = vpop.permute.xlu0 %1811
      %1815 = vset.pattern.permute.xlu0 0
      %1816 = vperm.xlu0 %1815, %v1745
      %v1817 = vpop.permute.xlu0 %1816
      %1820 = vset.pattern.permute.xlu0 0
      %1821 = vperm.xlu0 %1820, %v1746
      %v1822 = vpop.permute.xlu0 %1821
      %1825 = vset.pattern.permute.xlu0 0
      %1826 = vperm.xlu0 %1825, %v1747
      %v1827 = vpop.permute.xlu0 %1826
      %1830 = vset.pattern.permute.xlu0 0
      %1831 = vperm.xlu0 %1830, %v1748
      %v1832 = vpop.permute.xlu0 %1831
      %1835 = vset.pattern.permute.xlu0 0
      %1836 = vperm.xlu0 %1835, %v1749
      %v1837 = vpop.permute.xlu0 %1836
      %1840 = vset.pattern.permute.xlu0 0
      %1841 = vperm.xlu0 %1840, %v1750
      %v1842 = vpop.permute.xlu0 %1841
      %1845 = vset.pattern.permute.xlu0 0
      %1846 = vperm.xlu0 %1845, %v1751
      %v1847 = vpop.permute.xlu0 %1846
      %1850 = vset.pattern.permute.xlu0 0
      %1851 = vperm.xlu0 %1850, %v1752
      %v1852 = vpop.permute.xlu0 %1851
      %1855 = vset.pattern.permute.xlu0 0
      %1856 = vperm.xlu0 %1855, %v1753
      %v1857 = vpop.permute.xlu0 %1856
      %1860 = vset.pattern.permute.xlu0 0
      %1861 = vperm.xlu0 %1860, %v1754
      %v1862 = vpop.permute.xlu0 %1861
      %1865 = vset.pattern.permute.xlu0 0
      %1866 = vperm.xlu0 %1865, %v1755
      %v1867 = vpop.permute.xlu0 %1866
      %1870 = vset.pattern.permute.xlu0 0
      %1871 = vperm.xlu0 %1870, %v1756
      %v1872 = vpop.permute.xlu0 %1871
      %1875 = vset.pattern.permute.xlu0 0
      %1876 = vperm.xlu0 %1875, %v1757
      %v1877 = vpop.permute.xlu0 %1876
      %1880 = vset.pattern.permute.xlu0 0
      %1881 = vperm.xlu0 %1880, %v1758
      %v1882 = vpop.permute.xlu0 %1881
      %1885 = vset.pattern.permute.xlu0 0
      %1886 = vperm.xlu0 %1885, %v1759
      %v1887 = vpop.permute.xlu0 %1886
      %1890 = vset.pattern.permute.xlu0 0
      %1891 = vperm.xlu0 %1890, %v1760
      %v1892 = vpop.permute.xlu0 %1891
      %1895 = vset.pattern.permute.xlu0 0
      %1896 = vperm.xlu0 %1895, %v1761
      %v1897 = vpop.permute.xlu0 %1896
      %1900 = vset.pattern.permute.xlu0 0
      %1901 = vperm.xlu0 %1900, %v1762
      %v1902 = vpop.permute.xlu0 %1901
      %1905 = vset.pattern.permute.xlu0 0
      %1906 = vperm.xlu0 %1905, %v1763
      %v1907 = vpop.permute.xlu0 %1906
      %1910 = vset.pattern.permute.xlu0 0
      %1911 = vperm.xlu0 %1910, %v1764
      %v1912 = vpop.permute.xlu0 %1911
      %1915 = vset.pattern.permute.xlu0 0
      %1916 = vperm.xlu0 %1915, %v1765
      %v1917 = vpop.permute.xlu0 %1916
      %1920 = vset.pattern.permute.xlu0 0
      %1921 = vperm.xlu0 %1920, %v1766
      %v1922 = vpop.permute.xlu0 %1921
      %1925 = vset.pattern.permute.xlu0 0
      %1926 = vperm.xlu0 %1925, %v1767
      %v1927 = vpop.permute.xlu0 %1926
      %1930 = vset.pattern.permute.xlu0 0
      %1931 = vperm.xlu0 %1930, %v1768
      %v1932 = vpop.permute.xlu0 %1931
      %1935 = vset.pattern.permute.xlu0 0
      %1936 = vperm.xlu0 %1935, %v1769
      %v1937 = vpop.permute.xlu0 %1936
      %1940 = vset.pattern.permute.xlu0 0
      %1941 = vperm.xlu0 %1940, %v1770
      %v1942 = vpop.permute.xlu0 %1941
      %1945 = vset.pattern.permute.xlu0 0
      %1946 = vperm.xlu0 %1945, %v1771
      %v1947 = vpop.permute.xlu0 %1946
      %1950 = vset.pattern.permute.xlu0 0
      %1951 = vperm.xlu0 %1950, %v1772
      %v1952 = vpop.permute.xlu0 %1951
      %1955 = vset.pattern.permute.xlu0 0
      %1956 = vperm.xlu0 %1955, %v1773
      %v1957 = vpop.permute.xlu0 %1956
      %1960 = vset.pattern.permute.xlu0 0
      %1961 = vperm.xlu0 %1960, %v1774
      %v1962 = vpop.permute.xlu0 %1961
      %1965 = vset.pattern.permute.xlu0 0
      %1966 = vperm.xlu0 %1965, %v1775
      %v1967 = vpop.permute.xlu0 %1966
      %1970 = vset.pattern.permute.xlu0 0
      %1971 = vperm.xlu0 %1970, %v1776
      %v1972 = vpop.permute.xlu0 %1971
      %1975 = vset.pattern.permute.xlu0 0
      %1976 = vperm.xlu0 %1975, %v1777
      %v1977 = vpop.permute.xlu0 %1976
      %1980 = vset.pattern.permute.xlu0 0
      %1981 = vperm.xlu0 %1980, %v1778
      %v1982 = vpop.permute.xlu0 %1981
      %v1984 = vmul.f32 %v1697, %v1782
      %v1985 = vmul.f32 %v1698, %v1787
      %v1986 = vmul.f32 %v1699, %v1792
      %v1987 = vmul.f32 %v1700, %v1797
      %v1988 = vmul.f32 %v1701, %v1802
      %v1989 = vmul.f32 %v1702, %v1807
      %v1990 = vmul.f32 %v1703, %v1812
      %v1991 = vmul.f32 %v1704, %v1817
      %v1992 = vmul.f32 %v1705, %v1822
      %v1993 = vmul.f32 %v1706, %v1827
      %v1994 = vmul.f32 %v1707, %v1832
      %v1995 = vmul.f32 %v1708, %v1837
      %v1996 = vmul.f32 %v1709, %v1842
      %v1997 = vmul.f32 %v1710, %v1847
      %v1998 = vmul.f32 %v1711, %v1852
      %v1999 = vmul.f32 %v1712, %v1857
      %v2000 = vmul.f32 %v1713, %v1862
      %v2001 = vmul.f32 %v1714, %v1867
      %v2002 = vmul.f32 %v1715, %v1872
      %v2003 = vmul.f32 %v1716, %v1877
      %v2004 = vmul.f32 %v1717, %v1882
      %v2005 = vmul.f32 %v1718, %v1887
      %v2006 = vmul.f32 %v1719, %v1892
      %v2007 = vmul.f32 %v1720, %v1897
      %v2008 = vmul.f32 %v1721, %v1902
      %v2009 = vmul.f32 %v1722, %v1907
      %v2010 = vmul.f32 %v1723, %v1912
      %v2011 = vmul.f32 %v1724, %v1917
      %v2012 = vmul.f32 %v1725, %v1922
      %v2013 = vmul.f32 %v1726, %v1927
      %v2014 = vmul.f32 %v1727, %v1932
      %v2015 = vmul.f32 %v1728, %v1937
      %v2016 = vmul.f32 %v1729, %v1942
      %v2017 = vmul.f32 %v1730, %v1947
      %v2018 = vmul.f32 %v1731, %v1952
      %v2019 = vmul.f32 %v1732, %v1957
      %v2020 = vmul.f32 %v1733, %v1962
      %v2021 = vmul.f32 %v1734, %v1967
      %v2022 = vmul.f32 %v1735, %v1972
      %v2023 = vmul.f32 %v1736, %v1977
      %v2024 = vmul.f32 %v1737, %v1982
      %vm2025 = vcmask 130048
      %2026 = vst.msk [vmem:[#allocation2] sm:$0xff] %vm2025, %v1984
      %2027 = vst.msk [vmem:[#allocation2 + $0x8] sm:$0xff] %vm2025, %v1985
      %2028 = vst.msk [vmem:[#allocation2 + $0x10] sm:$0xff] %vm2025, %v1986
      %2029 = vst.msk [vmem:[#allocation2 + $0x18] sm:$0xff] %vm2025, %v1987
      %2030 = vst.msk [vmem:[#allocation2 + $0x20] sm:$0xff] %vm2025, %v1988
      %2031 = vst.msk [vmem:[#allocation2 + $0x28] sm:$0xff] %vm2025, %v1989
      %2032 = vst.msk [vmem:[#allocation2 + $0x30] sm:$0xff] %vm2025, %v1990
      %2033 = vst.msk [vmem:[#allocation2 + $0x38] sm:$0xff] %vm2025, %v1991
      %2034 = vst.msk [vmem:[#allocation2 + $0x40] sm:$0xff] %vm2025, %v1992
      %2035 = vst.msk [vmem:[#allocation2 + $0x48] sm:$0xff] %vm2025, %v1993
      %2036 = vst.msk [vmem:[#allocation2 + $0x50] sm:$0xff] %vm2025, %v1994
      %2037 = vst.msk [vmem:[#allocation2 + $0x58] sm:$0xff] %vm2025, %v1995
      %2038 = vst.msk [vmem:[#allocation2 + $0x60] sm:$0xff] %vm2025, %v1996
      %2039 = vst.msk [vmem:[#allocation2 + $0x68] sm:$0xff] %vm2025, %v1997
      %2040 = vst.msk [vmem:[#allocation2 + $0x70] sm:$0xff] %vm2025, %v1998
      %2041 = vst.msk [vmem:[#allocation2 + $0x78] sm:$0xff] %vm2025, %v1999
      %2042 = vst.msk [vmem:[#allocation2 + $0x80] sm:$0xff] %vm2025, %v2000
      %2043 = vst.msk [vmem:[#allocation2 + $0x88] sm:$0xff] %vm2025, %v2001
      %2044 = vst.msk [vmem:[#allocation2 + $0x90] sm:$0xff] %vm2025, %v2002
      %2045 = vst.msk [vmem:[#allocation2 + $0x98] sm:$0xff] %vm2025, %v2003
      %2046 = vst.msk [vmem:[#allocation2 + $0xa0] sm:$0xff] %vm2025, %v2004
      %2047 = vst.msk [vmem:[#allocation2 + $0xa8] sm:$0xff] %vm2025, %v2005
      %2048 = vst.msk [vmem:[#allocation2 + $0xb0] sm:$0xff] %vm2025, %v2006
      %2049 = vst.msk [vmem:[#allocation2 + $0xb8] sm:$0xff] %vm2025, %v2007
      %2050 = vst.msk [vmem:[#allocation2 + $0xc0] sm:$0xff] %vm2025, %v2008
      %2051 = vst.msk [vmem:[#allocation2 + $0xc8] sm:$0xff] %vm2025, %v2009
      %2052 = vst.msk [vmem:[#allocation2 + $0xd0] sm:$0xff] %vm2025, %v2010
      %2053 = vst.msk [vmem:[#allocation2 + $0xd8] sm:$0xff] %vm2025, %v2011
      %2054 = vst.msk [vmem:[#allocation2 + $0xe0] sm:$0xff] %vm2025, %v2012
      %2055 = vst.msk [vmem:[#allocation2 + $0xe8] sm:$0xff] %vm2025, %v2013
      %2056 = vst.msk [vmem:[#allocation2 + $0xf0] sm:$0xff] %vm2025, %v2014
      %2057 = vst.msk [vmem:[#allocation2 + $0xf8] sm:$0xff] %vm2025, %v2015
      %2058 = vst.msk [vmem:[#allocation2 + $0x100] sm:$0xff] %vm2025, %v2016
      %2059 = vst.msk [vmem:[#allocation2 + $0x108] sm:$0xff] %vm2025, %v2017
      %2060 = vst.msk [vmem:[#allocation2 + $0x110] sm:$0xff] %vm2025, %v2018
      %2061 = vst.msk [vmem:[#allocation2 + $0x118] sm:$0xff] %vm2025, %v2019
      %2062 = vst.msk [vmem:[#allocation2 + $0x120] sm:$0xff] %vm2025, %v2020
      %2063 = vst.msk [vmem:[#allocation2 + $0x128] sm:$0xff] %vm2025, %v2021
      %2064 = vst.msk [vmem:[#allocation2 + $0x130] sm:$0xff] %vm2025, %v2022
      %2065 = vst.msk [vmem:[#allocation2 + $0x138] sm:$0xff] %vm2025, %v2023
      %vm2066 = vcmask 125952
      %2067 = vst.msk [vmem:[#allocation2 + $0x140] sm:$0xf] %vm2066, %v2024
      %v2068 = vld [vmem:[#allocation2] sm:$0xff]
      %v2069 = vld [vmem:[#allocation2 + $0x8] sm:$0xff]
      %v2070 = vld [vmem:[#allocation2 + $0x10] sm:$0xff]
      %v2071 = vld [vmem:[#allocation2 + $0x18] sm:$0xff]
      %v2072 = vld [vmem:[#allocation2 + $0x20] sm:$0xff]
      %v2073 = vld [vmem:[#allocation2 + $0x28] sm:$0xff]
      %v2074 = vld [vmem:[#allocation2 + $0x30] sm:$0xff]
      %v2075 = vld [vmem:[#allocation2 + $0x38] sm:$0xff]
      %v2076 = vld [vmem:[#allocation2 + $0x40] sm:$0xff]
      %v2077 = vld [vmem:[#allocation2 + $0x48] sm:$0xff]
      %v2078 = vld [vmem:[#allocation2 + $0x50] sm:$0xff]
      %v2079 = vld [vmem:[#allocation2 + $0x58] sm:$0xff]
      %v2080 = vld [vmem:[#allocation2 + $0x60] sm:$0xff]
      %v2081 = vld [vmem:[#allocation2 + $0x68] sm:$0xff]
      %v2082 = vld [vmem:[#allocation2 + $0x70] sm:$0xff]
      %v2083 = vld [vmem:[#allocation2 + $0x78] sm:$0xff]
      %v2084 = vld [vmem:[#allocation2 + $0x80] sm:$0xff]
      %v2085 = vld [vmem:[#allocation2 + $0x88] sm:$0xff]
      %v2086 = vld [vmem:[#allocation2 + $0x90] sm:$0xff]
      %v2087 = vld [vmem:[#allocation2 + $0x98] sm:$0xff]
      %v2088 = vld [vmem:[#allocation2 + $0xa0] sm:$0xff]
      %v2089 = vld [vmem:[#allocation2 + $0xa8] sm:$0xff]
      %v2090 = vld [vmem:[#allocation2 + $0xb0] sm:$0xff]
      %v2091 = vld [vmem:[#allocation2 + $0xb8] sm:$0xff]
      %v2092 = vld [vmem:[#allocation2 + $0xc0] sm:$0xff]
      %v2093 = vld [vmem:[#allocation2 + $0xc8] sm:$0xff]
      %v2094 = vld [vmem:[#allocation2 + $0xd0] sm:$0xff]
      %v2095 = vld [vmem:[#allocation2 + $0xd8] sm:$0xff]
      %v2096 = vld [vmem:[#allocation2 + $0xe0] sm:$0xff]
      %v2097 = vld [vmem:[#allocation2 + $0xe8] sm:$0xff]
      %v2098 = vld [vmem:[#allocation2 + $0xf0] sm:$0xff]
      %v2099 = vld [vmem:[#allocation2 + $0xf8] sm:$0xff]
      %v2100 = vld [vmem:[#allocation2 + $0x100] sm:$0xff]
      %v2101 = vld [vmem:[#allocation2 + $0x108] sm:$0x7]
      %v2102 = vld [vmem:[#allocation2 + $0x1] sm:$0xff]
      %v2103 = vld [vmem:[#allocation2 + $0x9] sm:$0xff]
      %v2104 = vld [vmem:[#allocation2 + $0x11] sm:$0xff]
      %v2105 = vld [vmem:[#allocation2 + $0x19] sm:$0xff]
      %v2106 = vld [vmem:[#allocation2 + $0x21] sm:$0xff]
      %v2107 = vld [vmem:[#allocation2 + $0x29] sm:$0xff]
      %v2108 = vld [vmem:[#allocation2 + $0x31] sm:$0xff]
      %v2109 = vld [vmem:[#allocation2 + $0x39] sm:$0xff]
      %v2110 = vld [vmem:[#allocation2 + $0x41] sm:$0xff]
      %v2111 = vld [vmem:[#allocation2 + $0x49] sm:$0xff]
      %v2112 = vld [vmem:[#allocation2 + $0x51] sm:$0xff]
      %v2113 = vld [vmem:[#allocation2 + $0x59] sm:$0xff]
      %v2114 = vld [vmem:[#allocation2 + $0x61] sm:$0xff]
      %v2115 = vld [vmem:[#allocation2 + $0x69] sm:$0xff]
      %v2116 = vld [vmem:[#allocation2 + $0x71] sm:$0xff]
      %v2117 = vld [vmem:[#allocation2 + $0x79] sm:$0xff]
      %v2118 = vld [vmem:[#allocation2 + $0x81] sm:$0xff]
      %v2119 = vld [vmem:[#allocation2 + $0x89] sm:$0xff]
      %v2120 = vld [vmem:[#allocation2 + $0x91] sm:$0xff]
      %v2121 = vld [vmem:[#allocation2 + $0x99] sm:$0xff]
      %v2122 = vld [vmem:[#allocation2 + $0xa1] sm:$0xff]
      %v2123 = vld [vmem:[#allocation2 + $0xa9] sm:$0xff]
      %v2124 = vld [vmem:[#allocation2 + $0xb1] sm:$0xff]
      %v2125 = vld [vmem:[#allocation2 + $0xb9] sm:$0xff]
      %v2126 = vld [vmem:[#allocation2 + $0xc1] sm:$0xff]
      %v2127 = vld [vmem:[#allocation2 + $0xc9] sm:$0xff]
      %v2128 = vld [vmem:[#allocation2 + $0xd1] sm:$0xff]
      %v2129 = vld [vmem:[#allocation2 + $0xd9] sm:$0xff]
      %v2130 = vld [vmem:[#allocation2 + $0xe1] sm:$0xff]
      %v2131 = vld [vmem:[#allocation2 + $0xe9] sm:$0xff]
      %v2132 = vld [vmem:[#allocation2 + $0xf1] sm:$0xff]
      %v2133 = vld [vmem:[#allocation2 + $0xf9] sm:$0xff]
      %v2134 = vld [vmem:[#allocation2 + $0x101] sm:$0xff]
      %v2135 = vld [vmem:[#allocation2 + $0x109] sm:$0x7]
      %v2136 = vmax.f32 %v2068, %v2102
      %v2137 = vmax.f32 %v2069, %v2103
      %v2138 = vmax.f32 %v2070, %v2104
      %v2139 = vmax.f32 %v2071, %v2105
      %v2140 = vmax.f32 %v2072, %v2106
      %v2141 = vmax.f32 %v2073, %v2107
      %v2142 = vmax.f32 %v2074, %v2108
      %v2143 = vmax.f32 %v2075, %v2109
      %v2144 = vmax.f32 %v2076, %v2110
      %v2145 = vmax.f32 %v2077, %v2111
      %v2146 = vmax.f32 %v2078, %v2112
      %v2147 = vmax.f32 %v2079, %v2113
      %v2148 = vmax.f32 %v2080, %v2114
      %v2149 = vmax.f32 %v2081, %v2115
      %v2150 = vmax.f32 %v2082, %v2116
      %v2151 = vmax.f32 %v2083, %v2117
      %v2152 = vmax.f32 %v2084, %v2118
      %v2153 = vmax.f32 %v2085, %v2119
      %v2154 = vmax.f32 %v2086, %v2120
      %v2155 = vmax.f32 %v2087, %v2121
      %v2156 = vmax.f32 %v2088, %v2122
      %v2157 = vmax.f32 %v2089, %v2123
      %v2158 = vmax.f32 %v2090, %v2124
      %v2159 = vmax.f32 %v2091, %v2125
      %v2160 = vmax.f32 %v2092, %v2126
      %v2161 = vmax.f32 %v2093, %v2127
      %v2162 = vmax.f32 %v2094, %v2128
      %v2163 = vmax.f32 %v2095, %v2129
      %v2164 = vmax.f32 %v2096, %v2130
      %v2165 = vmax.f32 %v2097, %v2131
      %v2166 = vmax.f32 %v2098, %v2132
      %v2167 = vmax.f32 %v2099, %v2133
      %v2168 = vmax.f32 %v2100, %v2134
      %v2169 = vmax.f32 %v2101, %v2135
      %v2170 = vld [vmem:[#allocation2 + $0x2] sm:$0xff]
      %v2171 = vld [vmem:[#allocation2 + $0xa] sm:$0xff]
      %v2172 = vld [vmem:[#allocation2 + $0x12] sm:$0xff]
      %v2173 = vld [vmem:[#allocation2 + $0x1a] sm:$0xff]
      %v2174 = vld [vmem:[#allocation2 + $0x22] sm:$0xff]
      %v2175 = vld [vmem:[#allocation2 + $0x2a] sm:$0xff]
      %v2176 = vld [vmem:[#allocation2 + $0x32] sm:$0xff]
      %v2177 = vld [vmem:[#allocation2 + $0x3a] sm:$0xff]
      %v2178 = vld [vmem:[#allocation2 + $0x42] sm:$0xff]
      %v2179 = vld [vmem:[#allocation2 + $0x4a] sm:$0xff]
      %v2180 = vld [vmem:[#allocation2 + $0x52] sm:$0xff]
      %v2181 = vld [vmem:[#allocation2 + $0x5a] sm:$0xff]
      %v2182 = vld [vmem:[#allocation2 + $0x62] sm:$0xff]
      %v2183 = vld [vmem:[#allocation2 + $0x6a] sm:$0xff]
      %v2184 = vld [vmem:[#allocation2 + $0x72] sm:$0xff]
      %v2185 = vld [vmem:[#allocation2 + $0x7a] sm:$0xff]
      %v2186 = vld [vmem:[#allocation2 + $0x82] sm:$0xff]
      %v2187 = vld [vmem:[#allocation2 + $0x8a] sm:$0xff]
      %v2188 = vld [vmem:[#allocation2 + $0x92] sm:$0xff]
      %v2189 = vld [vmem:[#allocation2 + $0x9a] sm:$0xff]
      %v2190 = vld [vmem:[#allocation2 + $0xa2] sm:$0xff]
      %v2191 = vld [vmem:[#allocation2 + $0xaa] sm:$0xff]
      %v2192 = vld [vmem:[#allocation2 + $0xb2] sm:$0xff]
      %v2193 = vld [vmem:[#allocation2 + $0xba] sm:$0xff]
      %v2194 = vld [vmem:[#allocation2 + $0xc2] sm:$0xff]
      %v2195 = vld [vmem:[#allocation2 + $0xca] sm:$0xff]
      %v2196 = vld [vmem:[#allocation2 + $0xd2] sm:$0xff]
      %v2197 = vld [vmem:[#allocation2 + $0xda] sm:$0xff]
      %v2198 = vld [vmem:[#allocation2 + $0xe2] sm:$0xff]
      %v2199 = vld [vmem:[#allocation2 + $0xea] sm:$0xff]
      %v2200 = vld [vmem:[#allocation2 + $0xf2] sm:$0xff]
      %v2201 = vld [vmem:[#allocation2 + $0xfa] sm:$0xff]
      %v2202 = vld [vmem:[#allocation2 + $0x102] sm:$0xff]
      %v2203 = vld [vmem:[#allocation2 + $0x10a] sm:$0x7]
      %v2204 = vmax.f32 %v2136, %v2170
      %v2205 = vmax.f32 %v2137, %v2171
      %v2206 = vmax.f32 %v2138, %v2172
      %v2207 = vmax.f32 %v2139, %v2173
      %v2208 = vmax.f32 %v2140, %v2174
      %v2209 = vmax.f32 %v2141, %v2175
      %v2210 = vmax.f32 %v2142, %v2176
      %v2211 = vmax.f32 %v2143, %v2177
      %v2212 = vmax.f32 %v2144, %v2178
      %v2213 = vmax.f32 %v2145, %v2179
      %v2214 = vmax.f32 %v2146, %v2180
      %v2215 = vmax.f32 %v2147, %v2181
      %v2216 = vmax.f32 %v2148, %v2182
      %v2217 = vmax.f32 %v2149, %v2183
      %v2218 = vmax.f32 %v2150, %v2184
      %v2219 = vmax.f32 %v2151, %v2185
      %v2220 = vmax.f32 %v2152, %v2186
      %v2221 = vmax.f32 %v2153, %v2187
      %v2222 = vmax.f32 %v2154, %v2188
      %v2223 = vmax.f32 %v2155, %v2189
      %v2224 = vmax.f32 %v2156, %v2190
      %v2225 = vmax.f32 %v2157, %v2191
      %v2226 = vmax.f32 %v2158, %v2192
      %v2227 = vmax.f32 %v2159, %v2193
      %v2228 = vmax.f32 %v2160, %v2194
      %v2229 = vmax.f32 %v2161, %v2195
      %v2230 = vmax.f32 %v2162, %v2196
      %v2231 = vmax.f32 %v2163, %v2197
      %v2232 = vmax.f32 %v2164, %v2198
      %v2233 = vmax.f32 %v2165, %v2199
      %v2234 = vmax.f32 %v2166, %v2200
      %v2235 = vmax.f32 %v2167, %v2201
      %v2236 = vmax.f32 %v2168, %v2202
      %v2237 = vmax.f32 %v2169, %v2203
      %v2238 = vld [vmem:[#allocation2 + $0x10a] sm:$0xff]
      %v2239 = vld [vmem:[#allocation2 + $0x112] sm:$0xff]
      %v2240 = vld [vmem:[#allocation2 + $0x11a] sm:$0x7]
      %v2241 = vmax.f32 %v2204, %v2172
      %v2242 = vmax.f32 %v2205, %v2173
      %v2243 = vmax.f32 %v2206, %v2174
      %v2244 = vmax.f32 %v2207, %v2175
      %v2245 = vmax.f32 %v2208, %v2176
      %v2246 = vmax.f32 %v2209, %v2177
      %v2247 = vmax.f32 %v2210, %v2178
      %v2248 = vmax.f32 %v2211, %v2179
      %v2249 = vmax.f32 %v2212, %v2180
      %v2250 = vmax.f32 %v2213, %v2181
      %v2251 = vmax.f32 %v2214, %v2182
      %v2252 = vmax.f32 %v2215, %v2183
      %v2253 = vmax.f32 %v2216, %v2184
      %v2254 = vmax.f32 %v2217, %v2185
      %v2255 = vmax.f32 %v2218, %v2186
      %v2256 = vmax.f32 %v2219, %v2187
      %v2257 = vmax.f32 %v2220, %v2188
      %v2258 = vmax.f32 %v2221, %v2189
      %v2259 = vmax.f32 %v2222, %v2190
      %v2260 = vmax.f32 %v2223, %v2191
      %v2261 = vmax.f32 %v2224, %v2192
      %v2262 = vmax.f32 %v2225, %v2193
      %v2263 = vmax.f32 %v2226, %v2194
      %v2264 = vmax.f32 %v2227, %v2195
      %v2265 = vmax.f32 %v2228, %v2196
      %v2266 = vmax.f32 %v2229, %v2197
      %v2267 = vmax.f32 %v2230, %v2198
      %v2268 = vmax.f32 %v2231, %v2199
      %v2269 = vmax.f32 %v2232, %v2200
      %v2270 = vmax.f32 %v2233, %v2201
      %v2271 = vmax.f32 %v2234, %v2202
      %v2272 = vmax.f32 %v2235, %v2238
      %v2273 = vmax.f32 %v2236, %v2239
      %v2274 = vmax.f32 %v2237, %v2240
      %v2275 = vld [vmem:[#allocation2 + $0x13] sm:$0xff]
      %v2276 = vld [vmem:[#allocation2 + $0x1b] sm:$0xff]
      %v2277 = vld [vmem:[#allocation2 + $0x23] sm:$0xff]
      %v2278 = vld [vmem:[#allocation2 + $0x2b] sm:$0xff]
      %v2279 = vld [vmem:[#allocation2 + $0x33] sm:$0xff]
      %v2280 = vld [vmem:[#allocation2 + $0x3b] sm:$0xff]
      %v2281 = vld [vmem:[#allocation2 + $0x43] sm:$0xff]
      %v2282 = vld [vmem:[#allocation2 + $0x4b] sm:$0xff]
      %v2283 = vld [vmem:[#allocation2 + $0x53] sm:$0xff]
      %v2284 = vld [vmem:[#allocation2 + $0x5b] sm:$0xff]
      %v2285 = vld [vmem:[#allocation2 + $0x63] sm:$0xff]
      %v2286 = vld [vmem:[#allocation2 + $0x6b] sm:$0xff]
      %v2287 = vld [vmem:[#allocation2 + $0x73] sm:$0xff]
      %v2288 = vld [vmem:[#allocation2 + $0x7b] sm:$0xff]
      %v2289 = vld [vmem:[#allocation2 + $0x83] sm:$0xff]
      %v2290 = vld [vmem:[#allocation2 + $0x8b] sm:$0xff]
      %v2291 = vld [vmem:[#allocation2 + $0x93] sm:$0xff]
      %v2292 = vld [vmem:[#allocation2 + $0x9b] sm:$0xff]
      %v2293 = vld [vmem:[#allocation2 + $0xa3] sm:$0xff]
      %v2294 = vld [vmem:[#allocation2 + $0xab] sm:$0xff]
      %v2295 = vld [vmem:[#allocation2 + $0xb3] sm:$0xff]
      %v2296 = vld [vmem:[#allocation2 + $0xbb] sm:$0xff]
      %v2297 = vld [vmem:[#allocation2 + $0xc3] sm:$0xff]
      %v2298 = vld [vmem:[#allocation2 + $0xcb] sm:$0xff]
      %v2299 = vld [vmem:[#allocation2 + $0xd3] sm:$0xff]
      %v2300 = vld [vmem:[#allocation2 + $0xdb] sm:$0xff]
      %v2301 = vld [vmem:[#allocation2 + $0xe3] sm:$0xff]
      %v2302 = vld [vmem:[#allocation2 + $0xeb] sm:$0xff]
      %v2303 = vld [vmem:[#allocation2 + $0xf3] sm:$0xff]
      %v2304 = vld [vmem:[#allocation2 + $0xfb] sm:$0xff]
      %v2305 = vld [vmem:[#allocation2 + $0x103] sm:$0xff]
      %v2306 = vld [vmem:[#allocation2 + $0x10b] sm:$0xff]
      %v2307 = vld [vmem:[#allocation2 + $0x113] sm:$0xff]
      %v2308 = vld [vmem:[#allocation2 + $0x11b] sm:$0x7]
      %v2309 = vmax.f32 %v2241, %v2275
      %v2310 = vmax.f32 %v2242, %v2276
      %v2311 = vmax.f32 %v2243, %v2277
      %v2312 = vmax.f32 %v2244, %v2278
      %v2313 = vmax.f32 %v2245, %v2279
      %v2314 = vmax.f32 %v2246, %v2280
      %v2315 = vmax.f32 %v2247, %v2281
      %v2316 = vmax.f32 %v2248, %v2282
      %v2317 = vmax.f32 %v2249, %v2283
      %v2318 = vmax.f32 %v2250, %v2284
      %v2319 = vmax.f32 %v2251, %v2285
      %v2320 = vmax.f32 %v2252, %v2286
      %v2321 = vmax.f32 %v2253, %v2287
      %v2322 = vmax.f32 %v2254, %v2288
      %v2323 = vmax.f32 %v2255, %v2289
      %v2324 = vmax.f32 %v2256, %v2290
      %v2325 = vmax.f32 %v2257, %v2291
      %v2326 = vmax.f32 %v2258, %v2292
      %v2327 = vmax.f32 %v2259, %v2293
      %v2328 = vmax.f32 %v2260, %v2294
      %v2329 = vmax.f32 %v2261, %v2295
      %v2330 = vmax.f32 %v2262, %v2296
      %v2331 = vmax.f32 %v2263, %v2297
      %v2332 = vmax.f32 %v2264, %v2298
      %v2333 = vmax.f32 %v2265, %v2299
      %v2334 = vmax.f32 %v2266, %v2300
      %v2335 = vmax.f32 %v2267, %v2301
      %v2336 = vmax.f32 %v2268, %v2302
      %v2337 = vmax.f32 %v2269, %v2303
      %v2338 = vmax.f32 %v2270, %v2304
      %v2339 = vmax.f32 %v2271, %v2305
      %v2340 = vmax.f32 %v2272, %v2306
      %v2341 = vmax.f32 %v2273, %v2307
      %v2342 = vmax.f32 %v2274, %v2308
      %v2343 = vld [vmem:[#allocation2 + $0x14] sm:$0xff]
      %v2344 = vld [vmem:[#allocation2 + $0x1c] sm:$0xff]
      %v2345 = vld [vmem:[#allocation2 + $0x24] sm:$0xff]
      %v2346 = vld [vmem:[#allocation2 + $0x2c] sm:$0xff]
      %v2347 = vld [vmem:[#allocation2 + $0x34] sm:$0xff]
      %v2348 = vld [vmem:[#allocation2 + $0x3c] sm:$0xff]
      %v2349 = vld [vmem:[#allocation2 + $0x44] sm:$0xff]
      %v2350 = vld [vmem:[#allocation2 + $0x4c] sm:$0xff]
      %v2351 = vld [vmem:[#allocation2 + $0x54] sm:$0xff]
      %v2352 = vld [vmem:[#allocation2 + $0x5c] sm:$0xff]
      %v2353 = vld [vmem:[#allocation2 + $0x64] sm:$0xff]
      %v2354 = vld [vmem:[#allocation2 + $0x6c] sm:$0xff]
      %v2355 = vld [vmem:[#allocation2 + $0x74] sm:$0xff]
      %v2356 = vld [vmem:[#allocation2 + $0x7c] sm:$0xff]
      %v2357 = vld [vmem:[#allocation2 + $0x84] sm:$0xff]
      %v2358 = vld [vmem:[#allocation2 + $0x8c] sm:$0xff]
      %v2359 = vld [vmem:[#allocation2 + $0x94] sm:$0xff]
      %v2360 = vld [vmem:[#allocation2 + $0x9c] sm:$0xff]
      %v2361 = vld [vmem:[#allocation2 + $0xa4] sm:$0xff]
      %v2362 = vld [vmem:[#allocation2 + $0xac] sm:$0xff]
      %v2363 = vld [vmem:[#allocation2 + $0xb4] sm:$0xff]
      %v2364 = vld [vmem:[#allocation2 + $0xbc] sm:$0xff]
      %v2365 = vld [vmem:[#allocation2 + $0xc4] sm:$0xff]
      %v2366 = vld [vmem:[#allocation2 + $0xcc] sm:$0xff]
      %v2367 = vld [vmem:[#allocation2 + $0xd4] sm:$0xff]
      %v2368 = vld [vmem:[#allocation2 + $0xdc] sm:$0xff]
      %v2369 = vld [vmem:[#allocation2 + $0xe4] sm:$0xff]
      %v2370 = vld [vmem:[#allocation2 + $0xec] sm:$0xff]
      %v2371 = vld [vmem:[#allocation2 + $0xf4] sm:$0xff]
      %v2372 = vld [vmem:[#allocation2 + $0xfc] sm:$0xff]
      %v2373 = vld [vmem:[#allocation2 + $0x104] sm:$0xff]
      %v2374 = vld [vmem:[#allocation2 + $0x10c] sm:$0xff]
      %v2375 = vld [vmem:[#allocation2 + $0x114] sm:$0xff]
      %v2376 = vld [vmem:[#allocation2 + $0x11c] sm:$0x7]
      %v2377 = vmax.f32 %v2309, %v2343
      %v2378 = vmax.f32 %v2310, %v2344
      %v2379 = vmax.f32 %v2311, %v2345
      %v2380 = vmax.f32 %v2312, %v2346
      %v2381 = vmax.f32 %v2313, %v2347
      %v2382 = vmax.f32 %v2314, %v2348
      %v2383 = vmax.f32 %v2315, %v2349
      %v2384 = vmax.f32 %v2316, %v2350
      %v2385 = vmax.f32 %v2317, %v2351
      %v2386 = vmax.f32 %v2318, %v2352
      %v2387 = vmax.f32 %v2319, %v2353
      %v2388 = vmax.f32 %v2320, %v2354
      %v2389 = vmax.f32 %v2321, %v2355
      %v2390 = vmax.f32 %v2322, %v2356
      %v2391 = vmax.f32 %v2323, %v2357
      %v2392 = vmax.f32 %v2324, %v2358
      %v2393 = vmax.f32 %v2325, %v2359
      %v2394 = vmax.f32 %v2326, %v2360
      %v2395 = vmax.f32 %v2327, %v2361
      %v2396 = vmax.f32 %v2328, %v2362
      %v2397 = vmax.f32 %v2329, %v2363
      %v2398 = vmax.f32 %v2330, %v2364
      %v2399 = vmax.f32 %v2331, %v2365
      %v2400 = vmax.f32 %v2332, %v2366
      %v2401 = vmax.f32 %v2333, %v2367
      %v2402 = vmax.f32 %v2334, %v2368
      %v2403 = vmax.f32 %v2335, %v2369
      %v2404 = vmax.f32 %v2336, %v2370
      %v2405 = vmax.f32 %v2337, %v2371
      %v2406 = vmax.f32 %v2338, %v2372
      %v2407 = vmax.f32 %v2339, %v2373
      %v2408 = vmax.f32 %v2340, %v2374
      %v2409 = vmax.f32 %v2341, %v2375
      %v2410 = vmax.f32 %v2342, %v2376
      %v2411 = vld [vmem:[#allocation2 + $0x11c] sm:$0xff]
      %v2412 = vld [vmem:[#allocation2 + $0x124] sm:$0xff]
      %v2413 = vld [vmem:[#allocation2 + $0x12c] sm:$0x7]
      %v2414 = vmax.f32 %v2377, %v2345
      %v2415 = vmax.f32 %v2378, %v2346
      %v2416 = vmax.f32 %v2379, %v2347
      %v2417 = vmax.f32 %v2380, %v2348
      %v2418 = vmax.f32 %v2381, %v2349
      %v2419 = vmax.f32 %v2382, %v2350
      %v2420 = vmax.f32 %v2383, %v2351
      %v2421 = vmax.f32 %v2384, %v2352
      %v2422 = vmax.f32 %v2385, %v2353
      %v2423 = vmax.f32 %v2386, %v2354
      %v2424 = vmax.f32 %v2387, %v2355
      %v2425 = vmax.f32 %v2388, %v2356
      %v2426 = vmax.f32 %v2389, %v2357
      %v2427 = vmax.f32 %v2390, %v2358
      %v2428 = vmax.f32 %v2391, %v2359
      %v2429 = vmax.f32 %v2392, %v2360
      %v2430 = vmax.f32 %v2393, %v2361
      %v2431 = vmax.f32 %v2394, %v2362
      %v2432 = vmax.f32 %v2395, %v2363
      %v2433 = vmax.f32 %v2396, %v2364
      %v2434 = vmax.f32 %v2397, %v2365
      %v2435 = vmax.f32 %v2398, %v2366
      %v2436 = vmax.f32 %v2399, %v2367
      %v2437 = vmax.f32 %v2400, %v2368
      %v2438 = vmax.f32 %v2401, %v2369
      %v2439 = vmax.f32 %v2402, %v2370
      %v2440 = vmax.f32 %v2403, %v2371
      %v2441 = vmax.f32 %v2404, %v2372
      %v2442 = vmax.f32 %v2405, %v2373
      %v2443 = vmax.f32 %v2406, %v2374
      %v2444 = vmax.f32 %v2407, %v2375
      %v2445 = vmax.f32 %v2408, %v2411
      %v2446 = vmax.f32 %v2409, %v2412
      %v2447 = vmax.f32 %v2410, %v2413
      %v2448 = vld [vmem:[#allocation2 + $0x25] sm:$0xff]
      %v2449 = vld [vmem:[#allocation2 + $0x2d] sm:$0xff]
      %v2450 = vld [vmem:[#allocation2 + $0x35] sm:$0xff]
      %v2451 = vld [vmem:[#allocation2 + $0x3d] sm:$0xff]
      %v2452 = vld [vmem:[#allocation2 + $0x45] sm:$0xff]
      %v2453 = vld [vmem:[#allocation2 + $0x4d] sm:$0xff]
      %v2454 = vld [vmem:[#allocation2 + $0x55] sm:$0xff]
      %v2455 = vld [vmem:[#allocation2 + $0x5d] sm:$0xff]
      %v2456 = vld [vmem:[#allocation2 + $0x65] sm:$0xff]
      %v2457 = vld [vmem:[#allocation2 + $0x6d] sm:$0xff]
      %v2458 = vld [vmem:[#allocation2 + $0x75] sm:$0xff]
      %v2459 = vld [vmem:[#allocation2 + $0x7d] sm:$0xff]
      %v2460 = vld [vmem:[#allocation2 + $0x85] sm:$0xff]
      %v2461 = vld [vmem:[#allocation2 + $0x8d] sm:$0xff]
      %v2462 = vld [vmem:[#allocation2 + $0x95] sm:$0xff]
      %v2463 = vld [vmem:[#allocation2 + $0x9d] sm:$0xff]
      %v2464 = vld [vmem:[#allocation2 + $0xa5] sm:$0xff]
      %v2465 = vld [vmem:[#allocation2 + $0xad] sm:$0xff]
      %v2466 = vld [vmem:[#allocation2 + $0xb5] sm:$0xff]
      %v2467 = vld [vmem:[#allocation2 + $0xbd] sm:$0xff]
      %v2468 = vld [vmem:[#allocation2 + $0xc5] sm:$0xff]
      %v2469 = vld [vmem:[#allocation2 + $0xcd] sm:$0xff]
      %v2470 = vld [vmem:[#allocation2 + $0xd5] sm:$0xff]
      %v2471 = vld [vmem:[#allocation2 + $0xdd] sm:$0xff]
      %v2472 = vld [vmem:[#allocation2 + $0xe5] sm:$0xff]
      %v2473 = vld [vmem:[#allocation2 + $0xed] sm:$0xff]
      %v2474 = vld [vmem:[#allocation2 + $0xf5] sm:$0xff]
      %v2475 = vld [vmem:[#allocation2 + $0xfd] sm:$0xff]
      %v2476 = vld [vmem:[#allocation2 + $0x105] sm:$0xff]
      %v2477 = vld [vmem:[#allocation2 + $0x10d] sm:$0xff]
      %v2478 = vld [vmem:[#allocation2 + $0x115] sm:$0xff]
      %v2479 = vld [vmem:[#allocation2 + $0x11d] sm:$0xff]
      %v2480 = vld [vmem:[#allocation2 + $0x125] sm:$0xff]
      %v2481 = vld [vmem:[#allocation2 + $0x12d] sm:$0x7]
      %v2482 = vmax.f32 %v2414, %v2448
      %v2483 = vmax.f32 %v2415, %v2449
      %v2484 = vmax.f32 %v2416, %v2450
      %v2485 = vmax.f32 %v2417, %v2451
      %v2486 = vmax.f32 %v2418, %v2452
      %v2487 = vmax.f32 %v2419, %v2453
      %v2488 = vmax.f32 %v2420, %v2454
      %v2489 = vmax.f32 %v2421, %v2455
      %v2490 = vmax.f32 %v2422, %v2456
      %v2491 = vmax.f32 %v2423, %v2457
      %v2492 = vmax.f32 %v2424, %v2458
      %v2493 = vmax.f32 %v2425, %v2459
      %v2494 = vmax.f32 %v2426, %v2460
      %v2495 = vmax.f32 %v2427, %v2461
      %v2496 = vmax.f32 %v2428, %v2462
      %v2497 = vmax.f32 %v2429, %v2463
      %v2498 = vmax.f32 %v2430, %v2464
      %v2499 = vmax.f32 %v2431, %v2465
      %v2500 = vmax.f32 %v2432, %v2466
      %v2501 = vmax.f32 %v2433, %v2467
      %v2502 = vmax.f32 %v2434, %v2468
      %v2503 = vmax.f32 %v2435, %v2469
      %v2504 = vmax.f32 %v2436, %v2470
      %v2505 = vmax.f32 %v2437, %v2471
      %v2506 = vmax.f32 %v2438, %v2472
      %v2507 = vmax.f32 %v2439, %v2473
      %v2508 = vmax.f32 %v2440, %v2474
      %v2509 = vmax.f32 %v2441, %v2475
      %v2510 = vmax.f32 %v2442, %v2476
      %v2511 = vmax.f32 %v2443, %v2477
      %v2512 = vmax.f32 %v2444, %v2478
      %v2513 = vmax.f32 %v2445, %v2479
      %v2514 = vmax.f32 %v2446, %v2480
      %v2515 = vmax.f32 %v2447, %v2481
      %v2516 = vld [vmem:[#allocation2 + $0x26] sm:$0xff]
      %v2517 = vld [vmem:[#allocation2 + $0x2e] sm:$0xff]
      %v2518 = vld [vmem:[#allocation2 + $0x36] sm:$0xff]
      %v2519 = vld [vmem:[#allocation2 + $0x3e] sm:$0xff]
      %v2520 = vld [vmem:[#allocation2 + $0x46] sm:$0xff]
      %v2521 = vld [vmem:[#allocation2 + $0x4e] sm:$0xff]
      %v2522 = vld [vmem:[#allocation2 + $0x56] sm:$0xff]
      %v2523 = vld [vmem:[#allocation2 + $0x5e] sm:$0xff]
      %v2524 = vld [vmem:[#allocation2 + $0x66] sm:$0xff]
      %v2525 = vld [vmem:[#allocation2 + $0x6e] sm:$0xff]
      %v2526 = vld [vmem:[#allocation2 + $0x76] sm:$0xff]
      %v2527 = vld [vmem:[#allocation2 + $0x7e] sm:$0xff]
      %v2528 = vld [vmem:[#allocation2 + $0x86] sm:$0xff]
      %v2529 = vld [vmem:[#allocation2 + $0x8e] sm:$0xff]
      %v2530 = vld [vmem:[#allocation2 + $0x96] sm:$0xff]
      %v2531 = vld [vmem:[#allocation2 + $0x9e] sm:$0xff]
      %v2532 = vld [vmem:[#allocation2 + $0xa6] sm:$0xff]
      %v2533 = vld [vmem:[#allocation2 + $0xae] sm:$0xff]
      %v2534 = vld [vmem:[#allocation2 + $0xb6] sm:$0xff]
      %v2535 = vld [vmem:[#allocation2 + $0xbe] sm:$0xff]
      %v2536 = vld [vmem:[#allocation2 + $0xc6] sm:$0xff]
      %v2537 = vld [vmem:[#allocation2 + $0xce] sm:$0xff]
      %v2538 = vld [vmem:[#allocation2 + $0xd6] sm:$0xff]
      %v2539 = vld [vmem:[#allocation2 + $0xde] sm:$0xff]
      %v2540 = vld [vmem:[#allocation2 + $0xe6] sm:$0xff]
      %v2541 = vld [vmem:[#allocation2 + $0xee] sm:$0xff]
      %v2542 = vld [vmem:[#allocation2 + $0xf6] sm:$0xff]
      %v2543 = vld [vmem:[#allocation2 + $0xfe] sm:$0xff]
      %v2544 = vld [vmem:[#allocation2 + $0x106] sm:$0xff]
      %v2545 = vld [vmem:[#allocation2 + $0x10e] sm:$0xff]
      %v2546 = vld [vmem:[#allocation2 + $0x116] sm:$0xff]
      %v2547 = vld [vmem:[#allocation2 + $0x11e] sm:$0xff]
      %v2548 = vld [vmem:[#allocation2 + $0x126] sm:$0xff]
      %v2549 = vld [vmem:[#allocation2 + $0x12e] sm:$0x7]
      %v2550 = vmax.f32 %v2482, %v2516
      %v2551 = vmax.f32 %v2483, %v2517
      %v2552 = vmax.f32 %v2484, %v2518
      %v2553 = vmax.f32 %v2485, %v2519
      %v2554 = vmax.f32 %v2486, %v2520
      %v2555 = vmax.f32 %v2487, %v2521
      %v2556 = vmax.f32 %v2488, %v2522
      %v2557 = vmax.f32 %v2489, %v2523
      %v2558 = vmax.f32 %v2490, %v2524
      %v2559 = vmax.f32 %v2491, %v2525
      %v2560 = vmax.f32 %v2492, %v2526
      %v2561 = vmax.f32 %v2493, %v2527
      %v2562 = vmax.f32 %v2494, %v2528
      %v2563 = vmax.f32 %v2495, %v2529
      %v2564 = vmax.f32 %v2496, %v2530
      %v2565 = vmax.f32 %v2497, %v2531
      %v2566 = vmax.f32 %v2498, %v2532
      %v2567 = vmax.f32 %v2499, %v2533
      %v2568 = vmax.f32 %v2500, %v2534
      %v2569 = vmax.f32 %v2501, %v2535
      %v2570 = vmax.f32 %v2502, %v2536
      %v2571 = vmax.f32 %v2503, %v2537
      %v2572 = vmax.f32 %v2504, %v2538
      %v2573 = vmax.f32 %v2505, %v2539
      %v2574 = vmax.f32 %v2506, %v2540
      %v2575 = vmax.f32 %v2507, %v2541
      %v2576 = vmax.f32 %v2508, %v2542
      %v2577 = vmax.f32 %v2509, %v2543
      %v2578 = vmax.f32 %v2510, %v2544
      %v2579 = vmax.f32 %v2511, %v2545
      %v2580 = vmax.f32 %v2512, %v2546
      %v2581 = vmax.f32 %v2513, %v2547
      %v2582 = vmax.f32 %v2514, %v2548
      %v2583 = vmax.f32 %v2515, %v2549
      %v2584 = vld [vmem:[%s9] sm:$0xff]
      %v2585 = vld [vmem:[%s9 + $0x8] sm:$0xff]
      %v2586 = vld [vmem:[%s9 + $0x10] sm:$0xff]
      %v2587 = vld [vmem:[%s9 + $0x18] sm:$0xff]
      %v2588 = vld [vmem:[%s9 + $0x20] sm:$0xff]
      %v2589 = vld [vmem:[%s9 + $0x28] sm:$0xff]
      %v2590 = vld [vmem:[%s9 + $0x30] sm:$0xff]
      %v2591 = vld [vmem:[%s9 + $0x38] sm:$0xff]
      %v2592 = vld [vmem:[%s9 + $0x40] sm:$0xff]
      %v2593 = vld [vmem:[%s9 + $0x48] sm:$0xff]
      %v2594 = vld [vmem:[%s9 + $0x50] sm:$0xff]
      %v2595 = vld [vmem:[%s9 + $0x58] sm:$0xff]
      %v2596 = vld [vmem:[%s9 + $0x60] sm:$0xff]
      %v2597 = vld [vmem:[%s9 + $0x68] sm:$0xff]
      %v2598 = vld [vmem:[%s9 + $0x70] sm:$0xff]
      %v2599 = vld [vmem:[%s9 + $0x78] sm:$0xff]
      %v2600 = vld [vmem:[%s9 + $0x80] sm:$0xff]
      %v2601 = vld [vmem:[%s9 + $0x88] sm:$0xff]
      %v2602 = vld [vmem:[%s9 + $0x90] sm:$0xff]
      %v2603 = vld [vmem:[%s9 + $0x98] sm:$0xff]
      %v2604 = vld [vmem:[%s9 + $0xa0] sm:$0xff]
      %v2605 = vld [vmem:[%s9 + $0xa8] sm:$0xff]
      %v2606 = vld [vmem:[%s9 + $0xb0] sm:$0xff]
      %v2607 = vld [vmem:[%s9 + $0xb8] sm:$0xff]
      %v2608 = vld [vmem:[%s9 + $0xc0] sm:$0xff]
      %v2609 = vld [vmem:[%s9 + $0xc8] sm:$0xff]
      %v2610 = vld [vmem:[%s9 + $0xd0] sm:$0xff]
      %v2611 = vld [vmem:[%s9 + $0xd8] sm:$0xff]
      %v2612 = vld [vmem:[%s9 + $0xe0] sm:$0xff]
      %v2613 = vld [vmem:[%s9 + $0xe8] sm:$0xff]
      %v2614 = vld [vmem:[%s9 + $0xf0] sm:$0xff]
      %v2615 = vld [vmem:[%s9 + $0xf8] sm:$0xff]
      %v2616 = vld [vmem:[%s9 + $0x100] sm:$0xff]
      %v2617 = vld [vmem:[%s9 + $0x108] sm:$0xff]
      %v2618 = vld [vmem:[%s9 + $0x110] sm:$0xff]
      %v2619 = vld [vmem:[%s9 + $0x118] sm:$0xff]
      %v2620 = vld [vmem:[%s9 + $0x120] sm:$0xf]
      %v2621 = vld [vmem:[%s9 + $0x128] sm:$0xf]
      %v2622 = vld [vmem:[%s9 + $0x130] sm:$0xf]
      %vm2623 = vcmask 89088
      %v2625 = vsel %vm2623, %v2586, 0
      %v2628 = vsel %vm2623, %v2589, 0
      %v2631 = vsel %vm2623, %v2592, 0
      %v2634 = vsel %vm2623, %v2595, 0
      %v2637 = vsel %vm2623, %v2598, 0
      %v2640 = vsel %vm2623, %v2601, 0
      %v2643 = vsel %vm2623, %v2604, 0
      %v2646 = vsel %vm2623, %v2607, 0
      %v2649 = vsel %vm2623, %v2610, 0
      %v2652 = vsel %vm2623, %v2613, 0
      %v2655 = vsel %vm2623, %v2616, 0
      %v2658 = vsel %vm2623, %v2619, 0
      %v2661 = vsel %vm2623, %v2622, 0
      %v2664 = vsel %vm1423, %v2583, 0
      %2666 = vmatprep.subr.mxu0 0.0
      %2667 = vmatpush1.msra.mxu0 %v2565
      %2668 = vmatprep.subr.mxu0 0.0
      %2669 = vmatpush1.msra.mxu0 %v2564
      %2670 = vmatprep.subr.mxu0 0.0
      %2671 = vmatpush1.msra.mxu0 %v2563
      %2672 = vmatprep.subr.mxu0 0.0
      %2673 = vmatpush1.msra.mxu0 %v2562
      %2674 = vmatprep.subr.mxu0 0.0
      %2675 = vmatpush1.msra.mxu0 %v2561
      %2676 = vmatprep.subr.mxu0 0.0
      %2677 = vmatpush1.msra.mxu0 %v2560
      %2678 = vmatprep.subr.mxu0 0.0
      %2679 = vmatpush1.msra.mxu0 %v2559
      %2680 = vmatprep.subr.mxu0 0.0
      %2681 = vmatpush1.msra.mxu0 %v2558
      %2682 = vmatprep.subr.mxu0 0.0
      %2683 = vmatpush1.msra.mxu0 %v2557
      %2684 = vmatprep.subr.mxu0 0.0
      %2685 = vmatpush1.msra.mxu0 %v2556
      %2686 = vmatprep.subr.mxu0 0.0
      %2687 = vmatpush1.msra.mxu0 %v2555
      %2688 = vmatprep.subr.mxu0 0.0
      %2689 = vmatpush1.msra.mxu0 %v2554
      %2690 = vmatprep.subr.mxu0 0.0
      %2691 = vmatpush1.msra.mxu0 %v2553
      %2692 = vmatprep.subr.mxu0 0.0
      %2693 = vmatpush1.msra.mxu0 %v2552
      %2694 = vmatprep.subr.mxu0 0.0
      %2695 = vmatpush1.msra.mxu0 %v2551
      %2696 = vmatprep.subr.mxu0 0.0
      %2697 = vmatpush1.msra.mxu0 %v2550
      %2698 = vmatprep.subr.mxu0 0.0
      %2699 = vmatpush2.msra.mxu0 %v2581
      %2700 = vmatprep.subr.mxu0 0.0
      %2701 = vmatpush2.msra.mxu0 %v2580
      %2702 = vmatprep.subr.mxu0 0.0
      %2703 = vmatpush2.msra.mxu0 %v2579
      %2704 = vmatprep.subr.mxu0 0.0
      %2705 = vmatpush2.msra.mxu0 %v2578
      %2706 = vmatprep.subr.mxu0 0.0
      %2707 = vmatpush2.msra.mxu0 %v2577
      %2708 = vmatprep.subr.mxu0 0.0
      %2709 = vmatpush2.msra.mxu0 %v2576
      %2710 = vmatprep.subr.mxu0 0.0
      %2711 = vmatpush2.msra.mxu0 %v2575
      %2712 = vmatprep.subr.mxu0 0.0
      %2713 = vmatpush2.msra.mxu0 %v2574
      %2714 = vmatprep.subr.mxu0 0.0
      %2715 = vmatpush2.msra.mxu0 %v2573
      %2716 = vmatprep.subr.mxu0 0.0
      %2717 = vmatpush2.msra.mxu0 %v2572
      %2718 = vmatprep.subr.mxu0 0.0
      %2719 = vmatpush2.msra.mxu0 %v2571
      %2720 = vmatprep.subr.mxu0 0.0
      %2721 = vmatpush2.msra.mxu0 %v2570
      %2722 = vmatprep.subr.mxu0 0.0
      %2723 = vmatpush2.msra.mxu0 %v2569
      %2724 = vmatprep.subr.mxu0 0.0
      %2725 = vmatpush2.msra.mxu0 %v2568
      %2726 = vmatprep.subr.mxu0 0.0
      %2727 = vmatpush2.msra.mxu0 %v2567
      %2728 = vmatprep.subr.mxu0 0.0
      %2729 = vmatpush2.msra.mxu0 %v2566
      %2730 = vmatprep.mubr.f32.mxu0 %v2585
      %2731 = vmatmul.mubr.f32.gmra.mxu0 %v2584
      %v2732 = vpop.f32.mrf.mxu0
      %v2733 = vadd.f32 0.0, %v2732
      %v2734 = vpop.f32.mrf.mxu0
      %2735 = vmatprep.mubr.f32.mxu0 %v2588
      %2736 = vmatmul.mubr.f32.gmra.mxu0 %v2587
      %v2737 = vpop.f32.mrf.mxu0
      %v2738 = vadd.f32 0.0, %v2737
      %v2739 = vpop.f32.mrf.mxu0
      %2740 = vmatprep.mubr.f32.mxu0 %v2591
      %2741 = vmatmul.mubr.f32.gmra.mxu0 %v2590
      %v2742 = vpop.f32.mrf.mxu0
      %v2743 = vadd.f32 0.0, %v2742
      %v2744 = vpop.f32.mrf.mxu0
      %2745 = vmatprep.mubr.f32.mxu0 %v2594
      %2746 = vmatmul.mubr.f32.gmra.mxu0 %v2593
      %v2747 = vpop.f32.mrf.mxu0
      %v2748 = vadd.f32 0.0, %v2747
      %v2749 = vpop.f32.mrf.mxu0
      %2750 = vmatprep.mubr.f32.mxu0 %v2597
      %2751 = vmatmul.mubr.f32.gmra.mxu0 %v2596
      %v2752 = vpop.f32.mrf.mxu0
      %v2753 = vadd.f32 0.0, %v2752
      %v2754 = vpop.f32.mrf.mxu0
      %2755 = vmatprep.mubr.f32.mxu0 %v2600
      %2756 = vmatmul.mubr.f32.gmra.mxu0 %v2599
      %v2757 = vpop.f32.mrf.mxu0
      %v2758 = vadd.f32 0.0, %v2757
      %v2759 = vpop.f32.mrf.mxu0
      %2760 = vmatprep.mubr.f32.mxu0 %v2603
      %2761 = vmatmul.mubr.f32.gmra.mxu0 %v2602
      %v2762 = vpop.f32.mrf.mxu0
      %v2763 = vadd.f32 0.0, %v2762
      %v2764 = vpop.f32.mrf.mxu0
      %2765 = vmatprep.mubr.f32.mxu0 %v2606
      %2766 = vmatmul.mubr.f32.gmra.mxu0 %v2605
      %v2767 = vpop.f32.mrf.mxu0
      %v2768 = vadd.f32 0.0, %v2767
      %v2769 = vpop.f32.mrf.mxu0
      %2770 = vmatprep.mubr.f32.mxu0 %v2609
      %2771 = vmatmul.mubr.f32.gmra.mxu0 %v2608
      %v2772 = vpop.f32.mrf.mxu0
      %v2773 = vadd.f32 0.0, %v2772
      %v2774 = vpop.f32.mrf.mxu0
      %2775 = vmatprep.mubr.f32.mxu0 %v2612
      %2776 = vmatmul.mubr.f32.gmra.mxu0 %v2611
      %v2777 = vpop.f32.mrf.mxu0
      %v2778 = vadd.f32 0.0, %v2777
      %v2779 = vpop.f32.mrf.mxu0
      %2780 = vmatprep.mubr.f32.mxu0 %v2615
      %2781 = vmatmul.mubr.f32.gmra.mxu0 %v2614
      %v2782 = vpop.f32.mrf.mxu0
      %v2783 = vadd.f32 0.0, %v2782
      %v2784 = vpop.f32.mrf.mxu0
      %2785 = vmatprep.mubr.f32.mxu0 %v2618
      %2786 = vmatmul.mubr.f32.gmra.mxu0 %v2617
      %v2787 = vpop.f32.mrf.mxu0
      %v2788 = vadd.f32 0.0, %v2787
      %v2789 = vpop.f32.mrf.mxu0
      %2790 = vmatprep.mubr.f32.mxu0 %v2621
      %2791 = vmatmul.mubr.f32.gmra.mxu0 %v2620
      %v2792 = vpop.f32.mrf.mxu0
      %v2793 = vadd.f32 0.0, %v2792
      %v2794 = vpop.f32.mrf.mxu0
      %2795 = vdwg.mxu0
      %2796 = vmatprep.subr.mxu0 0.0
      %2797 = vmatpush1.msra.mxu0 0.0
      %2798 = vmatprep.subr.mxu0 0.0
      %2799 = vmatpush1.msra.mxu0 0.0
      %2800 = vmatprep.subr.mxu0 0.0
      %2801 = vmatpush1.msra.mxu0 0.0
      %2802 = vmatprep.subr.mxu0 0.0
      %2803 = vmatpush1.msra.mxu0 0.0
      %2804 = vmatprep.subr.mxu0 0.0
      %2805 = vmatpush1.msra.mxu0 0.0
      %2806 = vmatprep.subr.mxu0 0.0
      %2807 = vmatpush1.msra.mxu0 0.0
      %2808 = vmatprep.subr.mxu0 0.0
      %2809 = vmatpush1.msra.mxu0 0.0
      %2810 = vmatprep.subr.mxu0 0.0
      %2811 = vmatpush1.msra.mxu0 0.0
      %2812 = vmatprep.subr.mxu0 0.0
      %2813 = vmatpush1.msra.mxu0 0.0
      %2814 = vmatprep.subr.mxu0 0.0
      %2815 = vmatpush1.msra.mxu0 0.0
      %2816 = vmatprep.subr.mxu0 0.0
      %2817 = vmatpush1.msra.mxu0 0.0
      %2818 = vmatprep.subr.mxu0 0.0
      %2819 = vmatpush1.msra.mxu0 0.0
      %2820 = vmatprep.subr.mxu0 0.0
      %2821 = vmatpush1.msra.mxu0 0.0
      %2822 = vmatprep.subr.mxu0 0.0
      %2823 = vmatpush1.msra.mxu0 0.0
      %2824 = vmatprep.subr.mxu0 0.0
      %2825 = vmatpush1.msra.mxu0 %v2664
      %2826 = vmatprep.subr.mxu0 0.0
      %2827 = vmatpush1.msra.mxu0 %v2582
      %2828 = vmatprep.subr.mxu0 0.0
      %2829 = vmatpush2.msra.mxu0 0.0
      %2830 = vmatprep.subr.mxu0 0.0
      %2831 = vmatpush2.msra.mxu0 0.0
      %2832 = vmatprep.subr.mxu0 0.0
      %2833 = vmatpush2.msra.mxu0 0.0
      %2834 = vmatprep.subr.mxu0 0.0
      %2835 = vmatpush2.msra.mxu0 0.0
      %2836 = vmatprep.subr.mxu0 0.0
      %2837 = vmatpush2.msra.mxu0 0.0
      %2838 = vmatprep.subr.mxu0 0.0
      %2839 = vmatpush2.msra.mxu0 0.0
      %2840 = vmatprep.subr.mxu0 0.0
      %2841 = vmatpush2.msra.mxu0 0.0
      %2842 = vmatprep.subr.mxu0 0.0
      %2843 = vmatpush2.msra.mxu0 0.0
      %2844 = vmatprep.subr.mxu0 0.0
      %2845 = vmatpush2.msra.mxu0 0.0
      %2846 = vmatprep.subr.mxu0 0.0
      %2847 = vmatpush2.msra.mxu0 0.0
      %2848 = vmatprep.subr.mxu0 0.0
      %2849 = vmatpush2.msra.mxu0 0.0
      %2850 = vmatprep.subr.mxu0 0.0
      %2851 = vmatpush2.msra.mxu0 0.0
      %2852 = vmatprep.subr.mxu0 0.0
      %2853 = vmatpush2.msra.mxu0 0.0
      %2854 = vmatprep.subr.mxu0 0.0
      %2855 = vmatpush2.msra.mxu0 0.0
      %2856 = vmatprep.subr.mxu0 0.0
      %2857 = vmatpush2.msra.mxu0 0.0
      %2858 = vmatprep.subr.mxu0 0.0
      %2859 = vmatpush2.msra.mxu0 0.0
      %2860 = vmatprep.mubr.f32.mxu0 0.0
      %2861 = vmatmul.mubr.f32.gmra.mxu0 %v2625
      %v2862 = vpop.f32.mrf.mxu0
      %v2863 = vadd.f32 %v2733, %v2862
      %v2864 = vpop.f32.mrf.mxu0
      %2865 = vmatprep.mubr.f32.mxu0 0.0
      %2866 = vmatmul.mubr.f32.gmra.mxu0 %v2628
      %v2867 = vpop.f32.mrf.mxu0
      %v2868 = vadd.f32 %v2738, %v2867
      %v2869 = vpop.f32.mrf.mxu0
      %2870 = vmatprep.mubr.f32.mxu0 0.0
      %2871 = vmatmul.mubr.f32.gmra.mxu0 %v2631
      %v2872 = vpop.f32.mrf.mxu0
      %v2873 = vadd.f32 %v2743, %v2872
      %v2874 = vpop.f32.mrf.mxu0
      %2875 = vmatprep.mubr.f32.mxu0 0.0
      %2876 = vmatmul.mubr.f32.gmra.mxu0 %v2634
      %v2877 = vpop.f32.mrf.mxu0
      %v2878 = vadd.f32 %v2748, %v2877
      %v2879 = vpop.f32.mrf.mxu0
      %2880 = vmatprep.mubr.f32.mxu0 0.0
      %2881 = vmatmul.mubr.f32.gmra.mxu0 %v2637
      %v2882 = vpop.f32.mrf.mxu0
      %v2883 = vadd.f32 %v2753, %v2882
      %v2884 = vpop.f32.mrf.mxu0
      %2885 = vmatprep.mubr.f32.mxu0 0.0
      %2886 = vmatmul.mubr.f32.gmra.mxu0 %v2640
      %v2887 = vpop.f32.mrf.mxu0
      %v2888 = vadd.f32 %v2758, %v2887
      %v2889 = vpop.f32.mrf.mxu0
      %2890 = vmatprep.mubr.f32.mxu0 0.0
      %2891 = vmatmul.mubr.f32.gmra.mxu0 %v2643
      %v2892 = vpop.f32.mrf.mxu0
      %v2893 = vadd.f32 %v2763, %v2892
      %v2894 = vpop.f32.mrf.mxu0
      %2895 = vmatprep.mubr.f32.mxu0 0.0
      %2896 = vmatmul.mubr.f32.gmra.mxu0 %v2646
      %v2897 = vpop.f32.mrf.mxu0
      %v2898 = vadd.f32 %v2768, %v2897
      %v2899 = vpop.f32.mrf.mxu0
      %2900 = vmatprep.mubr.f32.mxu0 0.0
      %2901 = vmatmul.mubr.f32.gmra.mxu0 %v2649
      %v2902 = vpop.f32.mrf.mxu0
      %v2903 = vadd.f32 %v2773, %v2902
      %v2904 = vpop.f32.mrf.mxu0
      %2905 = vmatprep.mubr.f32.mxu0 0.0
      %2906 = vmatmul.mubr.f32.gmra.mxu0 %v2652
      %v2907 = vpop.f32.mrf.mxu0
      %v2908 = vadd.f32 %v2778, %v2907
      %v2909 = vpop.f32.mrf.mxu0
      %2910 = vmatprep.mubr.f32.mxu0 0.0
      %2911 = vmatmul.mubr.f32.gmra.mxu0 %v2655
      %v2912 = vpop.f32.mrf.mxu0
      %v2913 = vadd.f32 %v2783, %v2912
      %v2914 = vpop.f32.mrf.mxu0
      %2915 = vmatprep.mubr.f32.mxu0 0.0
      %2916 = vmatmul.mubr.f32.gmra.mxu0 %v2658
      %v2917 = vpop.f32.mrf.mxu0
      %v2918 = vadd.f32 %v2788, %v2917
      %v2919 = vpop.f32.mrf.mxu0
      %2920 = vmatprep.mubr.f32.mxu0 0.0
      %2921 = vmatmul.mubr.f32.gmra.mxu0 %v2661
      %v2922 = vpop.f32.mrf.mxu0
      %v2923 = vadd.f32 %v2793, %v2922
      %v2924 = vpop.f32.mrf.mxu0
      %2925 = vdwg.mxu0
      %2926 = vst.msk [vmem:[#allocation3] sm:$0xff] %vm2025, %v2863
      %2927 = vst.msk [vmem:[#allocation3 + $0x8] sm:$0xff] %vm2025, %v2868
      %2928 = vst.msk [vmem:[#allocation3 + $0x10] sm:$0xff] %vm2025, %v2873
      %2929 = vst.msk [vmem:[#allocation3 + $0x18] sm:$0xff] %vm2025, %v2878
      %2930 = vst.msk [vmem:[#allocation3 + $0x20] sm:$0xff] %vm2025, %v2883
      %2931 = vst.msk [vmem:[#allocation3 + $0x28] sm:$0xff] %vm2025, %v2888
      %2932 = vst.msk [vmem:[#allocation3 + $0x30] sm:$0xff] %vm2025, %v2893
      %2933 = vst.msk [vmem:[#allocation3 + $0x38] sm:$0xff] %vm2025, %v2898
      %2934 = vst.msk [vmem:[#allocation3 + $0x40] sm:$0xff] %vm2025, %v2903
      %2935 = vst.msk [vmem:[#allocation3 + $0x48] sm:$0xff] %vm2025, %v2908
      %2936 = vst.msk [vmem:[#allocation3 + $0x50] sm:$0xff] %vm2025, %v2913
      %2937 = vst.msk [vmem:[#allocation3 + $0x58] sm:$0xff] %vm2025, %v2918
      %2938 = vst.msk [vmem:[#allocation3 + $0x60] sm:$0xf] %vm2066, %v2923
      %v2939 = vld [vmem:[#allocation3] sm:$0xff]
      %v2940 = vld [vmem:[#allocation3 + $0x8] sm:$0xff]
      %v2941 = vld [vmem:[#allocation3 + $0x10] sm:$0xff]
      %v2942 = vld [vmem:[#allocation3 + $0x18] sm:$0xff]
      %v2943 = vld [vmem:[#allocation3 + $0x20] sm:$0xff]
      %v2944 = vld [vmem:[#allocation3 + $0x28] sm:$0xff]
      %v2945 = vld [vmem:[#allocation3 + $0x30] sm:$0xff]
      %v2946 = vld [vmem:[#allocation3 + $0x38] sm:$0xff]
      %v2947 = vld [vmem:[#allocation3 + $0x40] sm:$0xff]
      %v2948 = vld [vmem:[#allocation3 + $0x48] sm:$0xff]
      %v2949 = vld [vmem:[#allocation3 + $0x50] sm:$0xff]
      %v2950 = vld [vmem:[#allocation3 + $0x58] sm:$0xff]
      %v2951 = vld [vmem:[#allocation3 + $0x60] sm:$0xf]
      %v2952 = vld [vmem:[%s13] sm:$0xff]
      %v2953 = vld [vmem:[%s13 + $0x8] sm:$0xff]
      %v2954 = vld [vmem:[%s15] sm:$0x1]
      %v2956 = vlaneseq
      %v2957 = vshrl.u32 %v2956, 7
      %v2958 = vsub.s32 0, %v2957
      %v2959 = vrot.slane %v2954, %v2958
      %v2962 = vsel %vm2025, %v2939, 0
      %v2965 = vsel %vm2025, %v2940, 0
      %v2968 = vsel %vm2025, %v2941, 0
      %v2971 = vsel %vm2025, %v2942, 0
      %v2974 = vsel %vm2025, %v2943, 0
      %v2977 = vsel %vm2025, %v2944, 0
      %v2980 = vsel %vm2025, %v2945, 0
      %v2983 = vsel %vm2025, %v2946, 0
      %v2986 = vsel %vm2025, %v2947, 0
      %v2989 = vsel %vm2025, %v2948, 0
      %v2992 = vsel %vm2025, %v2949, 0
      %v2995 = vsel %vm2025, %v2950, 0
      %v2998 = vsel %vm2025, %v2951, 0
      %3000 = vmatprep.subr.mxu0 0.0
      %3001 = vmatpush1.msra.mxu0 0.0
      %3002 = vmatprep.subr.mxu0 0.0
      %3003 = vmatpush1.msra.mxu0 0.0
      %3004 = vmatprep.subr.mxu0 0.0
      %3005 = vmatpush1.msra.mxu0 0.0
      %3006 = vmatprep.subr.mxu0 0.0
      %3007 = vmatpush1.msra.mxu0 0.0
      %3008 = vmatprep.subr.mxu0 0.0
      %3009 = vmatpush1.msra.mxu0 0.0
      %3010 = vmatprep.subr.mxu0 0.0
      %3011 = vmatpush1.msra.mxu0 0.0
      %3012 = vmatprep.subr.mxu0 0.0
      %3013 = vmatpush1.msra.mxu0 0.0
      %3014 = vmatprep.subr.mxu0 0.0
      %3015 = vmatpush1.msra.mxu0 0.0
      %3016 = vmatprep.subr.mxu0 0.0
      %3017 = vmatpush1.msra.mxu0 0.0
      %3018 = vmatprep.subr.mxu0 0.0
      %3019 = vmatpush1.msra.mxu0 0.0
      %3020 = vmatprep.subr.mxu0 0.0
      %3021 = vmatpush1.msra.mxu0 0.0
      %3022 = vmatprep.subr.mxu0 0.0
      %3023 = vmatpush1.msra.mxu0 0.0
      %3024 = vmatprep.subr.mxu0 0.0
      %3025 = vmatpush1.msra.mxu0 0.0
      %3026 = vmatprep.subr.mxu0 0.0
      %3027 = vmatpush1.msra.mxu0 0.0
      %3028 = vmatprep.subr.mxu0 0.0
      %3029 = vmatpush1.msra.mxu0 %v2953
      %3030 = vmatprep.subr.mxu0 0.0
      %3031 = vmatpush1.msra.mxu0 %v2952
      %3032 = vmatprep.subr.mxu0 0.0
      %3033 = vmatpush2.msra.mxu0 0.0
      %3034 = vmatprep.subr.mxu0 0.0
      %3035 = vmatpush2.msra.mxu0 0.0
      %3036 = vmatprep.subr.mxu0 0.0
      %3037 = vmatpush2.msra.mxu0 0.0
      %3038 = vmatprep.subr.mxu0 0.0
      %3039 = vmatpush2.msra.mxu0 0.0
      %3040 = vmatprep.subr.mxu0 0.0
      %3041 = vmatpush2.msra.mxu0 0.0
      %3042 = vmatprep.subr.mxu0 0.0
      %3043 = vmatpush2.msra.mxu0 0.0
      %3044 = vmatprep.subr.mxu0 0.0
      %3045 = vmatpush2.msra.mxu0 0.0
      %3046 = vmatprep.subr.mxu0 0.0
      %3047 = vmatpush2.msra.mxu0 0.0
      %3048 = vmatprep.subr.mxu0 0.0
      %3049 = vmatpush2.msra.mxu0 0.0
      %3050 = vmatprep.subr.mxu0 0.0
      %3051 = vmatpush2.msra.mxu0 0.0
      %3052 = vmatprep.subr.mxu0 0.0
      %3053 = vmatpush2.msra.mxu0 0.0
      %3054 = vmatprep.subr.mxu0 0.0
      %3055 = vmatpush2.msra.mxu0 0.0
      %3056 = vmatprep.subr.mxu0 0.0
      %3057 = vmatpush2.msra.mxu0 0.0
      %3058 = vmatprep.subr.mxu0 0.0
      %3059 = vmatpush2.msra.mxu0 0.0
      %3060 = vmatprep.subr.mxu0 0.0
      %3061 = vmatpush2.msra.mxu0 0.0
      %3062 = vmatprep.subr.mxu0 0.0
      %3063 = vmatpush2.msra.mxu0 0.0
      %3064 = vmatprep.mubr.f32.mxu0 0.0
      %3065 = vmatmul.mubr.f32.gmra.mxu0 %v2962
      %v3066 = vpop.f32.mrf.mxu0
      %v3067 = vadd.f32 %v2959, %v3066
      %v3068 = vpop.f32.mrf.mxu0
      %3069 = vmatprep.mubr.f32.mxu0 0.0
      %3070 = vmatmul.mubr.f32.gmra.mxu0 %v2965
      %v3071 = vpop.f32.mrf.mxu0
      %v3072 = vadd.f32 %v2959, %v3071
      %v3073 = vpop.f32.mrf.mxu0
      %3074 = vmatprep.mubr.f32.mxu0 0.0
      %3075 = vmatmul.mubr.f32.gmra.mxu0 %v2968
      %v3076 = vpop.f32.mrf.mxu0
      %v3077 = vadd.f32 %v2959, %v3076
      %v3078 = vpop.f32.mrf.mxu0
      %3079 = vmatprep.mubr.f32.mxu0 0.0
      %3080 = vmatmul.mubr.f32.gmra.mxu0 %v2971
      %v3081 = vpop.f32.mrf.mxu0
      %v3082 = vadd.f32 %v2959, %v3081
      %v3083 = vpop.f32.mrf.mxu0
      %3084 = vmatprep.mubr.f32.mxu0 0.0
      %3085 = vmatmul.mubr.f32.gmra.mxu0 %v2974
      %v3086 = vpop.f32.mrf.mxu0
      %v3087 = vadd.f32 %v2959, %v3086
      %v3088 = vpop.f32.mrf.mxu0
      %3089 = vmatprep.mubr.f32.mxu0 0.0
      %3090 = vmatmul.mubr.f32.gmra.mxu0 %v2977
      %v3091 = vpop.f32.mrf.mxu0
      %v3092 = vadd.f32 %v2959, %v3091
      %v3093 = vpop.f32.mrf.mxu0
      %3094 = vmatprep.mubr.f32.mxu0 0.0
      %3095 = vmatmul.mubr.f32.gmra.mxu0 %v2980
      %v3096 = vpop.f32.mrf.mxu0
      %v3097 = vadd.f32 %v2959, %v3096
      %v3098 = vpop.f32.mrf.mxu0
      %3099 = vmatprep.mubr.f32.mxu0 0.0
      %3100 = vmatmul.mubr.f32.gmra.mxu0 %v2983
      %v3101 = vpop.f32.mrf.mxu0
      %v3102 = vadd.f32 %v2959, %v3101
      %v3103 = vpop.f32.mrf.mxu0
      %3104 = vmatprep.mubr.f32.mxu0 0.0
      %3105 = vmatmul.mubr.f32.gmra.mxu0 %v2986
      %v3106 = vpop.f32.mrf.mxu0
      %v3107 = vadd.f32 %v2959, %v3106
      %v3108 = vpop.f32.mrf.mxu0
      %3109 = vmatprep.mubr.f32.mxu0 0.0
      %3110 = vmatmul.mubr.f32.gmra.mxu0 %v2989
      %v3111 = vpop.f32.mrf.mxu0
      %v3112 = vadd.f32 %v2959, %v3111
      %v3113 = vpop.f32.mrf.mxu0
      %3114 = vmatprep.mubr.f32.mxu0 0.0
      %3115 = vmatmul.mubr.f32.gmra.mxu0 %v2992
      %v3116 = vpop.f32.mrf.mxu0
      %v3117 = vadd.f32 %v2959, %v3116
      %v3118 = vpop.f32.mrf.mxu0
      %3119 = vmatprep.mubr.f32.mxu0 0.0
      %3120 = vmatmul.mubr.f32.gmra.mxu0 %v2995
      %v3121 = vpop.f32.mrf.mxu0
      %v3122 = vadd.f32 %v2959, %v3121
      %v3123 = vpop.f32.mrf.mxu0
      %3124 = vmatprep.mubr.f32.mxu0 0.0
      %3125 = vmatmul.mubr.f32.gmra.mxu0 %v2998
      %v3126 = vpop.f32.mrf.mxu0
      %v3127 = vadd.f32 %v2959, %v3126
      %v3128 = vpop.f32.mrf.mxu0
      %3129 = vdwg.mxu0
      %v3130 = vmax.f32 %v3067, 0.0
      %v3131 = vmax.f32 %v3072, 0.0
      %v3132 = vmax.f32 %v3077, 0.0
      %v3133 = vmax.f32 %v3082, 0.0
      %v3134 = vmax.f32 %v3087, 0.0
      %v3135 = vmax.f32 %v3092, 0.0
      %v3136 = vmax.f32 %v3097, 0.0
      %v3137 = vmax.f32 %v3102, 0.0
      %v3138 = vmax.f32 %v3107, 0.0
      %v3139 = vmax.f32 %v3112, 0.0
      %v3140 = vmax.f32 %v3117, 0.0
      %v3141 = vmax.f32 %v3122, 0.0
      %v3142 = vmax.f32 %v3127, 0.0
      %v3143 = vld [vmem:[%s11] sm:$0xff]
      %v3144 = vld [vmem:[%s11 + $0x8] sm:$0xff]
      %v3145 = vld [vmem:[%s11 + $0x10] sm:$0xff]
      %v3146 = vld [vmem:[%s11 + $0x18] sm:$0xff]
      %v3147 = vld [vmem:[%s11 + $0x20] sm:$0xff]
      %v3148 = vld [vmem:[%s11 + $0x28] sm:$0xff]
      %v3149 = vld [vmem:[%s11 + $0x30] sm:$0xff]
      %v3150 = vld [vmem:[%s11 + $0x38] sm:$0xff]
      %v3151 = vld [vmem:[%s11 + $0x40] sm:$0xff]
      %v3152 = vld [vmem:[%s11 + $0x48] sm:$0xff]
      %v3153 = vld [vmem:[%s11 + $0x50] sm:$0xff]
      %v3154 = vld [vmem:[%s11 + $0x58] sm:$0xff]
      %v3155 = vld [vmem:[%s11 + $0x60] sm:$0xf]
      %3157 = vset.pattern.permute.xlu0 0
      %3158 = vperm.xlu0 %3157, %v3143
      %v3159 = vpop.permute.xlu0 %3158
      %3162 = vset.pattern.permute.xlu0 0
      %3163 = vperm.xlu0 %3162, %v3144
      %v3164 = vpop.permute.xlu0 %3163
      %3167 = vset.pattern.permute.xlu0 0
      %3168 = vperm.xlu0 %3167, %v3145
      %v3169 = vpop.permute.xlu0 %3168
      %3172 = vset.pattern.permute.xlu0 0
      %3173 = vperm.xlu0 %3172, %v3146
      %v3174 = vpop.permute.xlu0 %3173
      %3177 = vset.pattern.permute.xlu0 0
      %3178 = vperm.xlu0 %3177, %v3147
      %v3179 = vpop.permute.xlu0 %3178
      %3182 = vset.pattern.permute.xlu0 0
      %3183 = vperm.xlu0 %3182, %v3148
      %v3184 = vpop.permute.xlu0 %3183
      %3187 = vset.pattern.permute.xlu0 0
      %3188 = vperm.xlu0 %3187, %v3149
      %v3189 = vpop.permute.xlu0 %3188
      %3192 = vset.pattern.permute.xlu0 0
      %3193 = vperm.xlu0 %3192, %v3150
      %v3194 = vpop.permute.xlu0 %3193
      %3197 = vset.pattern.permute.xlu0 0
      %3198 = vperm.xlu0 %3197, %v3151
      %v3199 = vpop.permute.xlu0 %3198
      %3202 = vset.pattern.permute.xlu0 0
      %3203 = vperm.xlu0 %3202, %v3152
      %v3204 = vpop.permute.xlu0 %3203
      %3207 = vset.pattern.permute.xlu0 0
      %3208 = vperm.xlu0 %3207, %v3153
      %v3209 = vpop.permute.xlu0 %3208
      %3212 = vset.pattern.permute.xlu0 0
      %3213 = vperm.xlu0 %3212, %v3154
      %v3214 = vpop.permute.xlu0 %3213
      %3217 = vset.pattern.permute.xlu0 0
      %3218 = vperm.xlu0 %3217, %v3155
      %v3219 = vpop.permute.xlu0 %3218
      %v3221 = vmul.f32 %v3130, %v3159
      %v3222 = vmul.f32 %v3131, %v3164
      %v3223 = vmul.f32 %v3132, %v3169
      %v3224 = vmul.f32 %v3133, %v3174
      %v3225 = vmul.f32 %v3134, %v3179
      %v3226 = vmul.f32 %v3135, %v3184
      %v3227 = vmul.f32 %v3136, %v3189
      %v3228 = vmul.f32 %v3137, %v3194
      %v3229 = vmul.f32 %v3138, %v3199
      %v3230 = vmul.f32 %v3139, %v3204
      %v3231 = vmul.f32 %v3140, %v3209
      %v3232 = vmul.f32 %v3141, %v3214
      %v3233 = vmul.f32 %v3142, %v3219
      %vm3234 = vcmask 64512
      %3235 = vst.msk [vmem:[#allocation4] sm:$0xff] %vm3234, %v3221
      %3236 = vst.msk [vmem:[#allocation4 + $0x8] sm:$0xff] %vm3234, %v3222
      %3237 = vst.msk [vmem:[#allocation4 + $0x10] sm:$0xff] %vm3234, %v3223
      %3238 = vst.msk [vmem:[#allocation4 + $0x18] sm:$0xff] %vm3234, %v3224
      %3239 = vst.msk [vmem:[#allocation4 + $0x20] sm:$0xff] %vm3234, %v3225
      %3240 = vst.msk [vmem:[#allocation4 + $0x28] sm:$0xff] %vm3234, %v3226
      %3241 = vst.msk [vmem:[#allocation4 + $0x30] sm:$0xff] %vm3234, %v3227
      %3242 = vst.msk [vmem:[#allocation4 + $0x38] sm:$0xff] %vm3234, %v3228
      %3243 = vst.msk [vmem:[#allocation4 + $0x40] sm:$0xff] %vm3234, %v3229
      %3244 = vst.msk [vmem:[#allocation4 + $0x48] sm:$0xff] %vm3234, %v3230
      %3245 = vst.msk [vmem:[#allocation4 + $0x50] sm:$0xff] %vm3234, %v3231
      %3246 = vst.msk [vmem:[#allocation4 + $0x58] sm:$0xff] %vm3234, %v3232
      %vm3247 = vcmask 60416
      %3248 = vst.msk [vmem:[#allocation4 + $0x60] sm:$0xf] %vm3247, %v3233
      %v3249 = vld [vmem:[#allocation4] sm:$0xff]
      %v3250 = vld [vmem:[#allocation4 + $0x8] sm:$0xff]
      %v3251 = vld [vmem:[#allocation4 + $0x10] sm:$0xff]
      %v3252 = vld [vmem:[#allocation4 + $0x18] sm:$0xff]
      %v3253 = vld [vmem:[#allocation4 + $0x20] sm:$0xff]
      %v3254 = vld [vmem:[#allocation4 + $0x28] sm:$0xff]
      %v3255 = vld [vmem:[#allocation4 + $0x30] sm:$0xff]
      %v3256 = vld [vmem:[#allocation4 + $0x38] sm:$0xff]
      %v3257 = vld [vmem:[#allocation4 + $0x40] sm:$0xff]
      %v3258 = vld [vmem:[#allocation4 + $0x48] sm:$0x3f]
      %v3259 = vld [vmem:[#allocation4 + $0x1] sm:$0xff]
      %v3260 = vld [vmem:[#allocation4 + $0x9] sm:$0xff]
      %v3261 = vld [vmem:[#allocation4 + $0x11] sm:$0xff]
      %v3262 = vld [vmem:[#allocation4 + $0x19] sm:$0xff]
      %v3263 = vld [vmem:[#allocation4 + $0x21] sm:$0xff]
      %v3264 = vld [vmem:[#allocation4 + $0x29] sm:$0xff]
      %v3265 = vld [vmem:[#allocation4 + $0x31] sm:$0xff]
      %v3266 = vld [vmem:[#allocation4 + $0x39] sm:$0xff]
      %v3267 = vld [vmem:[#allocation4 + $0x41] sm:$0xff]
      %v3268 = vld [vmem:[#allocation4 + $0x49] sm:$0x3f]
      %v3269 = vld [vmem:[#allocation4 + $0x2] sm:$0xff]
      %v3270 = vld [vmem:[#allocation4 + $0xa] sm:$0xff]
      %v3271 = vld [vmem:[#allocation4 + $0x12] sm:$0xff]
      %v3272 = vld [vmem:[#allocation4 + $0x1a] sm:$0xff]
      %v3273 = vld [vmem:[#allocation4 + $0x22] sm:$0xff]
      %v3274 = vld [vmem:[#allocation4 + $0x2a] sm:$0xff]
      %v3275 = vld [vmem:[#allocation4 + $0x32] sm:$0xff]
      %v3276 = vld [vmem:[#allocation4 + $0x3a] sm:$0xff]
      %v3277 = vld [vmem:[#allocation4 + $0x42] sm:$0xff]
      %v3278 = vld [vmem:[#allocation4 + $0x4a] sm:$0x3f]
      %v3279 = vld [vmem:[#allocation4 + $0x4a] sm:$0xff]
      %v3280 = vld [vmem:[#allocation4 + $0x52] sm:$0x3f]
      %v3281 = vld [vmem:[#allocation4 + $0xb] sm:$0xff]
      %v3282 = vld [vmem:[#allocation4 + $0x13] sm:$0xff]
      %v3283 = vld [vmem:[#allocation4 + $0x1b] sm:$0xff]
      %v3284 = vld [vmem:[#allocation4 + $0x23] sm:$0xff]
      %v3285 = vld [vmem:[#allocation4 + $0x2b] sm:$0xff]
      %v3286 = vld [vmem:[#allocation4 + $0x33] sm:$0xff]
      %v3287 = vld [vmem:[#allocation4 + $0x3b] sm:$0xff]
      %v3288 = vld [vmem:[#allocation4 + $0x43] sm:$0xff]
      %v3289 = vld [vmem:[#allocation4 + $0x4b] sm:$0xff]
      %v3290 = vld [vmem:[#allocation4 + $0x53] sm:$0x3f]
      %v3291 = vld [vmem:[#allocation4 + $0xc] sm:$0xff]
      %v3292 = vld [vmem:[#allocation4 + $0x14] sm:$0xff]
      %v3293 = vld [vmem:[#allocation4 + $0x1c] sm:$0xff]
      %v3294 = vld [vmem:[#allocation4 + $0x24] sm:$0xff]
      %v3295 = vld [vmem:[#allocation4 + $0x2c] sm:$0xff]
      %v3296 = vld [vmem:[#allocation4 + $0x34] sm:$0xff]
      %v3297 = vld [vmem:[#allocation4 + $0x3c] sm:$0xff]
      %v3298 = vld [vmem:[#allocation4 + $0x44] sm:$0xff]
      %v3299 = vld [vmem:[#allocation4 + $0x4c] sm:$0xff]
      %v3300 = vld [vmem:[#allocation4 + $0x54] sm:$0x3f]
      %v3301 = vld [vmem:[#allocation4 + $0x54] sm:$0xff]
      %v3302 = vld [vmem:[#allocation4 + $0x5c] sm:$0x3f]
      %v3303 = vld [vmem:[#allocation4 + $0x15] sm:$0xff]
      %v3304 = vld [vmem:[#allocation4 + $0x1d] sm:$0xff]
      %v3305 = vld [vmem:[#allocation4 + $0x25] sm:$0xff]
      %v3306 = vld [vmem:[#allocation4 + $0x2d] sm:$0xff]
      %v3307 = vld [vmem:[#allocation4 + $0x35] sm:$0xff]
      %v3308 = vld [vmem:[#allocation4 + $0x3d] sm:$0xff]
      %v3309 = vld [vmem:[#allocation4 + $0x45] sm:$0xff]
      %v3310 = vld [vmem:[#allocation4 + $0x4d] sm:$0xff]
      %v3311 = vld [vmem:[#allocation4 + $0x55] sm:$0xff]
      %v3312 = vld [vmem:[#allocation4 + $0x5d] sm:$0x3f]
      %v3313 = vld [vmem:[#allocation4 + $0x16] sm:$0xff]
      %v3314 = vld [vmem:[#allocation4 + $0x1e] sm:$0xff]
      %v3315 = vld [vmem:[#allocation4 + $0x26] sm:$0xff]
      %v3316 = vld [vmem:[#allocation4 + $0x2e] sm:$0xff]
      %v3317 = vld [vmem:[#allocation4 + $0x36] sm:$0xff]
      %v3318 = vld [vmem:[#allocation4 + $0x3e] sm:$0xff]
      %v3319 = vld [vmem:[#allocation4 + $0x46] sm:$0xff]
      %v3320 = vld [vmem:[#allocation4 + $0x4e] sm:$0xff]
      %v3321 = vld [vmem:[#allocation4 + $0x56] sm:$0xff]
      %v3322 = vld [vmem:[#allocation4 + $0x5e] sm:$0x3f]
      %3333 = vrot.lane.b32.xlu0 %v3259, 8
      %v3334 = vpop.permute.xlu0 %3333
      %3335 = vrot.lane.b32.xlu0 %v3260, 8
      %v3336 = vpop.permute.xlu0 %3335
      %3337 = vrot.lane.b32.xlu0 %v3261, 8
      %v3338 = vpop.permute.xlu0 %3337
      %3339 = vrot.lane.b32.xlu0 %v3262, 8
      %v3340 = vpop.permute.xlu0 %3339
      %3341 = vrot.lane.b32.xlu0 %v3263, 8
      %v3342 = vpop.permute.xlu0 %3341
      %3343 = vrot.lane.b32.xlu0 %v3264, 8
      %v3344 = vpop.permute.xlu0 %3343
      %3345 = vrot.lane.b32.xlu0 %v3265, 8
      %v3346 = vpop.permute.xlu0 %3345
      %3347 = vrot.lane.b32.xlu0 %v3266, 8
      %v3348 = vpop.permute.xlu0 %3347
      %3349 = vrot.lane.b32.xlu0 %v3267, 8
      %v3350 = vpop.permute.xlu0 %3349
      %3351 = vrot.lane.b32.xlu0 %v3268, 8
      %v3352 = vpop.permute.xlu0 %3351
      %3373 = vrot.lane.b32.xlu0 %v3269, 16
      %v3374 = vpop.permute.xlu0 %3373
      %3375 = vrot.lane.b32.xlu0 %v3270, 16
      %v3376 = vpop.permute.xlu0 %3375
      %3377 = vrot.lane.b32.xlu0 %v3271, 16
      %v3378 = vpop.permute.xlu0 %3377
      %3379 = vrot.lane.b32.xlu0 %v3272, 16
      %v3380 = vpop.permute.xlu0 %3379
      %3381 = vrot.lane.b32.xlu0 %v3273, 16
      %v3382 = vpop.permute.xlu0 %3381
      %3383 = vrot.lane.b32.xlu0 %v3274, 16
      %v3384 = vpop.permute.xlu0 %3383
      %3385 = vrot.lane.b32.xlu0 %v3275, 16
      %v3386 = vpop.permute.xlu0 %3385
      %3387 = vrot.lane.b32.xlu0 %v3276, 16
      %v3388 = vpop.permute.xlu0 %3387
      %3389 = vrot.lane.b32.xlu0 %v3277, 16
      %v3390 = vpop.permute.xlu0 %3389
      %3391 = vrot.lane.b32.xlu0 %v3278, 16
      %v3392 = vpop.permute.xlu0 %3391
      %3405 = vrot.lane.b32.xlu0 %v3270, 24
      %v3406 = vpop.permute.xlu0 %3405
      %3407 = vrot.lane.b32.xlu0 %v3271, 24
      %v3408 = vpop.permute.xlu0 %3407
      %3409 = vrot.lane.b32.xlu0 %v3272, 24
      %v3410 = vpop.permute.xlu0 %3409
      %3411 = vrot.lane.b32.xlu0 %v3273, 24
      %v3412 = vpop.permute.xlu0 %3411
      %3413 = vrot.lane.b32.xlu0 %v3274, 24
      %v3414 = vpop.permute.xlu0 %3413
      %3415 = vrot.lane.b32.xlu0 %v3275, 24
      %v3416 = vpop.permute.xlu0 %3415
      %3417 = vrot.lane.b32.xlu0 %v3276, 24
      %v3418 = vpop.permute.xlu0 %3417
      %3419 = vrot.lane.b32.xlu0 %v3277, 24
      %v3420 = vpop.permute.xlu0 %3419
      %3421 = vrot.lane.b32.xlu0 %v3279, 24
      %v3422 = vpop.permute.xlu0 %3421
      %3423 = vrot.lane.b32.xlu0 %v3280, 24
      %v3424 = vpop.permute.xlu0 %3423
      %3445 = vrot.lane.b32.xlu0 %v3281, 32
      %v3446 = vpop.permute.xlu0 %3445
      %3447 = vrot.lane.b32.xlu0 %v3282, 32
      %v3448 = vpop.permute.xlu0 %3447
      %3449 = vrot.lane.b32.xlu0 %v3283, 32
      %v3450 = vpop.permute.xlu0 %3449
      %3451 = vrot.lane.b32.xlu0 %v3284, 32
      %v3452 = vpop.permute.xlu0 %3451
      %3453 = vrot.lane.b32.xlu0 %v3285, 32
      %v3454 = vpop.permute.xlu0 %3453
      %3455 = vrot.lane.b32.xlu0 %v3286, 32
      %v3456 = vpop.permute.xlu0 %3455
      %3457 = vrot.lane.b32.xlu0 %v3287, 32
      %v3458 = vpop.permute.xlu0 %3457
      %3459 = vrot.lane.b32.xlu0 %v3288, 32
      %v3460 = vpop.permute.xlu0 %3459
      %3461 = vrot.lane.b32.xlu0 %v3289, 32
      %v3462 = vpop.permute.xlu0 %3461
      %3463 = vrot.lane.b32.xlu0 %v3290, 32
      %v3464 = vpop.permute.xlu0 %3463
      %3485 = vrot.lane.b32.xlu0 %v3291, 40
      %v3486 = vpop.permute.xlu0 %3485
      %3487 = vrot.lane.b32.xlu0 %v3292, 40
      %v3488 = vpop.permute.xlu0 %3487
      %3489 = vrot.lane.b32.xlu0 %v3293, 40
      %v3490 = vpop.permute.xlu0 %3489
      %3491 = vrot.lane.b32.xlu0 %v3294, 40
      %v3492 = vpop.permute.xlu0 %3491
      %3493 = vrot.lane.b32.xlu0 %v3295, 40
      %v3494 = vpop.permute.xlu0 %3493
      %3495 = vrot.lane.b32.xlu0 %v3296, 40
      %v3496 = vpop.permute.xlu0 %3495
      %3497 = vrot.lane.b32.xlu0 %v3297, 40
      %v3498 = vpop.permute.xlu0 %3497
      %3499 = vrot.lane.b32.xlu0 %v3298, 40
      %v3500 = vpop.permute.xlu0 %3499
      %3501 = vrot.lane.b32.xlu0 %v3299, 40
      %v3502 = vpop.permute.xlu0 %3501
      %3503 = vrot.lane.b32.xlu0 %v3300, 40
      %v3504 = vpop.permute.xlu0 %3503
      %3517 = vrot.lane.b32.xlu0 %v3292, 48
      %v3518 = vpop.permute.xlu0 %3517
      %3519 = vrot.lane.b32.xlu0 %v3293, 48
      %v3520 = vpop.permute.xlu0 %3519
      %3521 = vrot.lane.b32.xlu0 %v3294, 48
      %v3522 = vpop.permute.xlu0 %3521
      %3523 = vrot.lane.b32.xlu0 %v3295, 48
      %v3524 = vpop.permute.xlu0 %3523
      %3525 = vrot.lane.b32.xlu0 %v3296, 48
      %v3526 = vpop.permute.xlu0 %3525
      %3527 = vrot.lane.b32.xlu0 %v3297, 48
      %v3528 = vpop.permute.xlu0 %3527
      %3529 = vrot.lane.b32.xlu0 %v3298, 48
      %v3530 = vpop.permute.xlu0 %3529
      %3531 = vrot.lane.b32.xlu0 %v3299, 48
      %v3532 = vpop.permute.xlu0 %3531
      %3533 = vrot.lane.b32.xlu0 %v3301, 48
      %v3534 = vpop.permute.xlu0 %3533
      %3535 = vrot.lane.b32.xlu0 %v3302, 48
      %v3536 = vpop.permute.xlu0 %3535
      %3557 = vrot.lane.b32.xlu0 %v3303, 56
      %v3558 = vpop.permute.xlu0 %3557
      %3559 = vrot.lane.b32.xlu0 %v3304, 56
      %v3560 = vpop.permute.xlu0 %3559
      %3561 = vrot.lane.b32.xlu0 %v3305, 56
      %v3562 = vpop.permute.xlu0 %3561
      %3563 = vrot.lane.b32.xlu0 %v3306, 56
      %v3564 = vpop.permute.xlu0 %3563
      %3565 = vrot.lane.b32.xlu0 %v3307, 56
      %v3566 = vpop.permute.xlu0 %3565
      %3567 = vrot.lane.b32.xlu0 %v3308, 56
      %v3568 = vpop.permute.xlu0 %3567
      %3569 = vrot.lane.b32.xlu0 %v3309, 56
      %v3570 = vpop.permute.xlu0 %3569
      %3571 = vrot.lane.b32.xlu0 %v3310, 56
      %v3572 = vpop.permute.xlu0 %3571
      %3573 = vrot.lane.b32.xlu0 %v3311, 56
      %v3574 = vpop.permute.xlu0 %3573
      %3575 = vrot.lane.b32.xlu0 %v3312, 56
      %v3576 = vpop.permute.xlu0 %3575
      %3597 = vrot.lane.b32.xlu0 %v3313, 64
      %v3598 = vpop.permute.xlu0 %3597
      %3599 = vrot.lane.b32.xlu0 %v3314, 64
      %v3600 = vpop.permute.xlu0 %3599
      %3601 = vrot.lane.b32.xlu0 %v3315, 64
      %v3602 = vpop.permute.xlu0 %3601
      %3603 = vrot.lane.b32.xlu0 %v3316, 64
      %v3604 = vpop.permute.xlu0 %3603
      %3605 = vrot.lane.b32.xlu0 %v3317, 64
      %v3606 = vpop.permute.xlu0 %3605
      %3607 = vrot.lane.b32.xlu0 %v3318, 64
      %v3608 = vpop.permute.xlu0 %3607
      %3609 = vrot.lane.b32.xlu0 %v3319, 64
      %v3610 = vpop.permute.xlu0 %3609
      %3611 = vrot.lane.b32.xlu0 %v3320, 64
      %v3612 = vpop.permute.xlu0 %3611
      %3613 = vrot.lane.b32.xlu0 %v3321, 64
      %v3614 = vpop.permute.xlu0 %3613
      %3615 = vrot.lane.b32.xlu0 %v3322, 64
      %v3616 = vpop.permute.xlu0 %3615
      %v3627 = vsel %vm3234, %v3249, %v3334
      %v3628 = vsel %vm3234, %v3250, %v3336
      %v3629 = vsel %vm3234, %v3251, %v3338
      %v3630 = vsel %vm3234, %v3252, %v3340
      %v3631 = vsel %vm3234, %v3253, %v3342
      %v3632 = vsel %vm3234, %v3254, %v3344
      %v3633 = vsel %vm3234, %v3255, %v3346
      %v3634 = vsel %vm3234, %v3256, %v3348
      %v3635 = vsel %vm3234, %v3257, %v3350
      %v3636 = vsel %vm3234, %v3258, %v3352
      %v3637 = vsel %vm2025, %v3627, %v3374
      %v3638 = vsel %vm2025, %v3628, %v3376
      %v3639 = vsel %vm2025, %v3629, %v3378
      %v3640 = vsel %vm2025, %v3630, %v3380
      %v3641 = vsel %vm2025, %v3631, %v3382
      %v3642 = vsel %vm2025, %v3632, %v3384
      %v3643 = vsel %vm2025, %v3633, %v3386
      %v3644 = vsel %vm2025, %v3634, %v3388
      %v3645 = vsel %vm2025, %v3635, %v3390
      %v3646 = vsel %vm2025, %v3636, %v3392
      %vm3647 = vcmask 195584
      %v3648 = vsel %vm3647, %v3637, %v3406
      %v3649 = vsel %vm3647, %v3638, %v3408
      %v3650 = vsel %vm3647, %v3639, %v3410
      %v3651 = vsel %vm3647, %v3640, %v3412
      %v3652 = vsel %vm3647, %v3641, %v3414
      %v3653 = vsel %vm3647, %v3642, %v3416
      %v3654 = vsel %vm3647, %v3643, %v3418
      %v3655 = vsel %vm3647, %v3644, %v3420
      %v3656 = vsel %vm3647, %v3645, %v3422
      %v3657 = vsel %vm3647, %v3646, %v3424
      %vm3658 = vcmask 261120
      %v3659 = vsel %vm3658, %v3648, %v3446
      %v3660 = vsel %vm3658, %v3649, %v3448
      %v3661 = vsel %vm3658, %v3650, %v3450
      %v3662 = vsel %vm3658, %v3651, %v3452
      %v3663 = vsel %vm3658, %v3652, %v3454
      %v3664 = vsel %vm3658, %v3653, %v3456
      %v3665 = vsel %vm3658, %v3654, %v3458
      %v3666 = vsel %vm3658, %v3655, %v3460
      %v3667 = vsel %vm3658, %v3656, %v3462
      %v3668 = vsel %vm3658, %v3657, %v3464
      %vm3669 = vcmask 326656
      %v3670 = vsel %vm3669, %v3659, %v3486
      %v3671 = vsel %vm3669, %v3660, %v3488
      %v3672 = vsel %vm3669, %v3661, %v3490
      %v3673 = vsel %vm3669, %v3662, %v3492
      %v3674 = vsel %vm3669, %v3663, %v3494
      %v3675 = vsel %vm3669, %v3664, %v3496
      %v3676 = vsel %vm3669, %v3665, %v3498
      %v3677 = vsel %vm3669, %v3666, %v3500
      %v3678 = vsel %vm3669, %v3667, %v3502
      %v3679 = vsel %vm3669, %v3668, %v3504
      %vm3680 = vcmask 392192
      %v3681 = vsel %vm3680, %v3670, %v3518
      %v3682 = vsel %vm3680, %v3671, %v3520
      %v3683 = vsel %vm3680, %v3672, %v3522
      %v3684 = vsel %vm3680, %v3673, %v3524
      %v3685 = vsel %vm3680, %v3674, %v3526
      %v3686 = vsel %vm3680, %v3675, %v3528
      %v3687 = vsel %vm3680, %v3676, %v3530
      %v3688 = vsel %vm3680, %v3677, %v3532
      %v3689 = vsel %vm3680, %v3678, %v3534
      %v3690 = vsel %vm3680, %v3679, %v3536
      %vm3691 = vcmask 457728
      %v3692 = vsel %vm3691, %v3681, %v3558
      %v3693 = vsel %vm3691, %v3682, %v3560
      %v3694 = vsel %vm3691, %v3683, %v3562
      %v3695 = vsel %vm3691, %v3684, %v3564
      %v3696 = vsel %vm3691, %v3685, %v3566
      %v3697 = vsel %vm3691, %v3686, %v3568
      %v3698 = vsel %vm3691, %v3687, %v3570
      %v3699 = vsel %vm3691, %v3688, %v3572
      %v3700 = vsel %vm3691, %v3689, %v3574
      %v3701 = vsel %vm3691, %v3690, %v3576
      %vm3702 = vcmask 523264
      %v3703 = vsel %vm3702, %v3692, %v3598
      %v3704 = vsel %vm3702, %v3693, %v3600
      %v3705 = vsel %vm3702, %v3694, %v3602
      %v3706 = vsel %vm3702, %v3695, %v3604
      %v3707 = vsel %vm3702, %v3696, %v3606
      %v3708 = vsel %vm3702, %v3697, %v3608
      %v3709 = vsel %vm3702, %v3698, %v3610
      %v3710 = vsel %vm3702, %v3699, %v3612
      %v3711 = vsel %vm3702, %v3700, %v3614
      %v3712 = vsel %vm3702, %v3701, %v3616
      %v3713 = vld [vmem:[%s17] sm:$0xff]
      %v3714 = vld [vmem:[%s17 + $0x8] sm:$0xff]
      %v3715 = vld [vmem:[%s17 + $0x10] sm:$0xff]
      %v3716 = vld [vmem:[%s17 + $0x18] sm:$0xff]
      %v3717 = vld [vmem:[%s17 + $0x20] sm:$0xff]
      %v3718 = vld [vmem:[%s17 + $0x28] sm:$0xff]
      %v3719 = vld [vmem:[%s17 + $0x30] sm:$0xff]
      %v3720 = vld [vmem:[%s17 + $0x38] sm:$0xff]
      %v3721 = vld [vmem:[%s17 + $0x40] sm:$0xff]
      %v3722 = vld [vmem:[%s19] sm:$0x1]
      %v3724 = vlaneseq
      %v3725 = vshrl.u32 %v3724, 7
      %v3726 = vsub.s32 0, %v3725
      %v3727 = vrot.slane %v3722, %v3726
      %vm3729 = vcmask 588800
      %v3731 = vsel %vm3729, %v3703, 0
      %v3734 = vsel %vm3729, %v3704, 0
      %v3737 = vsel %vm3729, %v3705, 0
      %v3740 = vsel %vm3729, %v3706, 0
      %v3743 = vsel %vm3729, %v3707, 0
      %v3746 = vsel %vm3729, %v3708, 0
      %v3749 = vsel %vm3729, %v3709, 0
      %v3752 = vsel %vm3729, %v3710, 0
      %v3755 = vsel %vm3729, %v3711, 0
      %v3758 = vsel %vm3729, %v3712, 0
      %3760 = vmatprep.subr.mxu0 0.0
      %3761 = vmatpush1.msra.mxu0 0.0
      %3762 = vmatprep.subr.mxu0 0.0
      %3763 = vmatpush1.msra.mxu0 0.0
      %3764 = vmatprep.subr.mxu0 0.0
      %3765 = vmatpush1.msra.mxu0 0.0
      %3766 = vmatprep.subr.mxu0 0.0
      %3767 = vmatpush1.msra.mxu0 0.0
      %3768 = vmatprep.subr.mxu0 0.0
      %3769 = vmatpush1.msra.mxu0 0.0
      %3770 = vmatprep.subr.mxu0 0.0
      %3771 = vmatpush1.msra.mxu0 0.0
      %3772 = vmatprep.subr.mxu0 0.0
      %3773 = vmatpush1.msra.mxu0 0.0
      %3774 = vmatprep.subr.mxu0 0.0
      %3775 = vmatpush1.msra.mxu0 %v3721
      %3776 = vmatprep.subr.mxu0 0.0
      %3777 = vmatpush1.msra.mxu0 %v3720
      %3778 = vmatprep.subr.mxu0 0.0
      %3779 = vmatpush1.msra.mxu0 %v3719
      %3780 = vmatprep.subr.mxu0 0.0
      %3781 = vmatpush1.msra.mxu0 %v3718
      %3782 = vmatprep.subr.mxu0 0.0
      %3783 = vmatpush1.msra.mxu0 %v3717
      %3784 = vmatprep.subr.mxu0 0.0
      %3785 = vmatpush1.msra.mxu0 %v3716
      %3786 = vmatprep.subr.mxu0 0.0
      %3787 = vmatpush1.msra.mxu0 %v3715
      %3788 = vmatprep.subr.mxu0 0.0
      %3789 = vmatpush1.msra.mxu0 %v3714
      %3790 = vmatprep.subr.mxu0 0.0
      %3791 = vmatpush1.msra.mxu0 %v3713
      %3792 = vmatprep.subr.mxu0 0.0
      %3793 = vmatpush2.msra.mxu0 0.0
      %3794 = vmatprep.subr.mxu0 0.0
      %3795 = vmatpush2.msra.mxu0 0.0
      %3796 = vmatprep.subr.mxu0 0.0
      %3797 = vmatpush2.msra.mxu0 0.0
      %3798 = vmatprep.subr.mxu0 0.0
      %3799 = vmatpush2.msra.mxu0 0.0
      %3800 = vmatprep.subr.mxu0 0.0
      %3801 = vmatpush2.msra.mxu0 0.0
      %3802 = vmatprep.subr.mxu0 0.0
      %3803 = vmatpush2.msra.mxu0 0.0
      %3804 = vmatprep.subr.mxu0 0.0
      %3805 = vmatpush2.msra.mxu0 0.0
      %3806 = vmatprep.subr.mxu0 0.0
      %3807 = vmatpush2.msra.mxu0 0.0
      %3808 = vmatprep.subr.mxu0 0.0
      %3809 = vmatpush2.msra.mxu0 0.0
      %3810 = vmatprep.subr.mxu0 0.0
      %3811 = vmatpush2.msra.mxu0 0.0
      %3812 = vmatprep.subr.mxu0 0.0
      %3813 = vmatpush2.msra.mxu0 0.0
      %3814 = vmatprep.subr.mxu0 0.0
      %3815 = vmatpush2.msra.mxu0 0.0
      %3816 = vmatprep.subr.mxu0 0.0
      %3817 = vmatpush2.msra.mxu0 0.0
      %3818 = vmatprep.subr.mxu0 0.0
      %3819 = vmatpush2.msra.mxu0 0.0
      %3820 = vmatprep.subr.mxu0 0.0
      %3821 = vmatpush2.msra.mxu0 0.0
      %3822 = vmatprep.subr.mxu0 0.0
      %3823 = vmatpush2.msra.mxu0 0.0
      %3824 = vmatprep.mubr.f32.mxu0 0.0
      %3825 = vmatmul.mubr.f32.gmra.mxu0 %v3731
      %v3826 = vpop.f32.mrf.mxu0
      %v3827 = vadd.f32 %v3727, %v3826
      %v3828 = vpop.f32.mrf.mxu0
      %3829 = vmatprep.mubr.f32.mxu0 0.0
      %3830 = vmatmul.mubr.f32.gmra.mxu0 %v3734
      %v3831 = vpop.f32.mrf.mxu0
      %v3832 = vadd.f32 %v3727, %v3831
      %v3833 = vpop.f32.mrf.mxu0
      %3834 = vmatprep.mubr.f32.mxu0 0.0
      %3835 = vmatmul.mubr.f32.gmra.mxu0 %v3737
      %v3836 = vpop.f32.mrf.mxu0
      %v3837 = vadd.f32 %v3727, %v3836
      %v3838 = vpop.f32.mrf.mxu0
      %3839 = vmatprep.mubr.f32.mxu0 0.0
      %3840 = vmatmul.mubr.f32.gmra.mxu0 %v3740
      %v3841 = vpop.f32.mrf.mxu0
      %v3842 = vadd.f32 %v3727, %v3841
      %v3843 = vpop.f32.mrf.mxu0
      %3844 = vmatprep.mubr.f32.mxu0 0.0
      %3845 = vmatmul.mubr.f32.gmra.mxu0 %v3743
      %v3846 = vpop.f32.mrf.mxu0
      %v3847 = vadd.f32 %v3727, %v3846
      %v3848 = vpop.f32.mrf.mxu0
      %3849 = vmatprep.mubr.f32.mxu0 0.0
      %3850 = vmatmul.mubr.f32.gmra.mxu0 %v3746
      %v3851 = vpop.f32.mrf.mxu0
      %v3852 = vadd.f32 %v3727, %v3851
      %v3853 = vpop.f32.mrf.mxu0
      %3854 = vmatprep.mubr.f32.mxu0 0.0
      %3855 = vmatmul.mubr.f32.gmra.mxu0 %v3749
      %v3856 = vpop.f32.mrf.mxu0
      %v3857 = vadd.f32 %v3727, %v3856
      %v3858 = vpop.f32.mrf.mxu0
      %3859 = vmatprep.mubr.f32.mxu0 0.0
      %3860 = vmatmul.mubr.f32.gmra.mxu0 %v3752
      %v3861 = vpop.f32.mrf.mxu0
      %v3862 = vadd.f32 %v3727, %v3861
      %v3863 = vpop.f32.mrf.mxu0
      %3864 = vmatprep.mubr.f32.mxu0 0.0
      %3865 = vmatmul.mubr.f32.gmra.mxu0 %v3755
      %v3866 = vpop.f32.mrf.mxu0
      %v3867 = vadd.f32 %v3727, %v3866
      %v3868 = vpop.f32.mrf.mxu0
      %3869 = vmatprep.mubr.f32.mxu0 0.0
      %3870 = vmatmul.mubr.f32.gmra.mxu0 %v3758
      %v3871 = vpop.f32.mrf.mxu0
      %v3872 = vadd.f32 %v3727, %v3871
      %v3873 = vpop.f32.mrf.mxu0
      %3874 = vdwg.mxu0
      %v3875 = vmax.f32 %v3827, 0.0
      %v3876 = vmax.f32 %v3832, 0.0
      %v3877 = vmax.f32 %v3837, 0.0
      %v3878 = vmax.f32 %v3842, 0.0
      %v3879 = vmax.f32 %v3847, 0.0
      %v3880 = vmax.f32 %v3852, 0.0
      %v3881 = vmax.f32 %v3857, 0.0
      %v3882 = vmax.f32 %v3862, 0.0
      %v3883 = vmax.f32 %v3867, 0.0
      %v3884 = vmax.f32 %v3872, 0.0
      %v3885 = vld [vmem:[%s21] sm:$0xff]
      %v3886 = vld [vmem:[%s23] sm:$0x1]
      %v3888 = vlaneseq
      %v3889 = vshrl.u32 %v3888, 7
      %v3890 = vsub.s32 0, %v3889
      %v3891 = vrot.slane %v3886, %v3890
      %v3894 = vsel %vm3234, %v3875, 0
      %v3897 = vsel %vm3234, %v3876, 0
      %v3900 = vsel %vm3234, %v3877, 0
      %v3903 = vsel %vm3234, %v3878, 0
      %v3906 = vsel %vm3234, %v3879, 0
      %v3909 = vsel %vm3234, %v3880, 0
      %v3912 = vsel %vm3234, %v3881, 0
      %v3915 = vsel %vm3234, %v3882, 0
      %v3918 = vsel %vm3234, %v3883, 0
      %v3921 = vsel %vm3234, %v3884, 0
      %3923 = vmatprep.subr.mxu0 0.0
      %3924 = vmatpush1.msra.mxu0 0.0
      %3925 = vmatprep.subr.mxu0 0.0
      %3926 = vmatpush1.msra.mxu0 0.0
      %3927 = vmatprep.subr.mxu0 0.0
      %3928 = vmatpush1.msra.mxu0 0.0
      %3929 = vmatprep.subr.mxu0 0.0
      %3930 = vmatpush1.msra.mxu0 0.0
      %3931 = vmatprep.subr.mxu0 0.0
      %3932 = vmatpush1.msra.mxu0 0.0
      %3933 = vmatprep.subr.mxu0 0.0
      %3934 = vmatpush1.msra.mxu0 0.0
      %3935 = vmatprep.subr.mxu0 0.0
      %3936 = vmatpush1.msra.mxu0 0.0
      %3937 = vmatprep.subr.mxu0 0.0
      %3938 = vmatpush1.msra.mxu0 0.0
      %3939 = vmatprep.subr.mxu0 0.0
      %3940 = vmatpush1.msra.mxu0 0.0
      %3941 = vmatprep.subr.mxu0 0.0
      %3942 = vmatpush1.msra.mxu0 0.0
      %3943 = vmatprep.subr.mxu0 0.0
      %3944 = vmatpush1.msra.mxu0 0.0
      %3945 = vmatprep.subr.mxu0 0.0
      %3946 = vmatpush1.msra.mxu0 0.0
      %3947 = vmatprep.subr.mxu0 0.0
      %3948 = vmatpush1.msra.mxu0 0.0
      %3949 = vmatprep.subr.mxu0 0.0
      %3950 = vmatpush1.msra.mxu0 0.0
      %3951 = vmatprep.subr.mxu0 0.0
      %3952 = vmatpush1.msra.mxu0 0.0
      %3953 = vmatprep.subr.mxu0 0.0
      %3954 = vmatpush1.msra.mxu0 %v3885
      %3955 = vmatprep.subr.mxu0 0.0
      %3956 = vmatpush2.msra.mxu0 0.0
      %3957 = vmatprep.subr.mxu0 0.0
      %3958 = vmatpush2.msra.mxu0 0.0
      %3959 = vmatprep.subr.mxu0 0.0
      %3960 = vmatpush2.msra.mxu0 0.0
      %3961 = vmatprep.subr.mxu0 0.0
      %3962 = vmatpush2.msra.mxu0 0.0
      %3963 = vmatprep.subr.mxu0 0.0
      %3964 = vmatpush2.msra.mxu0 0.0
      %3965 = vmatprep.subr.mxu0 0.0
      %3966 = vmatpush2.msra.mxu0 0.0
      %3967 = vmatprep.subr.mxu0 0.0
      %3968 = vmatpush2.msra.mxu0 0.0
      %3969 = vmatprep.subr.mxu0 0.0
      %3970 = vmatpush2.msra.mxu0 0.0
      %3971 = vmatprep.subr.mxu0 0.0
      %3972 = vmatpush2.msra.mxu0 0.0
      %3973 = vmatprep.subr.mxu0 0.0
      %3974 = vmatpush2.msra.mxu0 0.0
      %3975 = vmatprep.subr.mxu0 0.0
      %3976 = vmatpush2.msra.mxu0 0.0
      %3977 = vmatprep.subr.mxu0 0.0
      %3978 = vmatpush2.msra.mxu0 0.0
      %3979 = vmatprep.subr.mxu0 0.0
      %3980 = vmatpush2.msra.mxu0 0.0
      %3981 = vmatprep.subr.mxu0 0.0
      %3982 = vmatpush2.msra.mxu0 0.0
      %3983 = vmatprep.subr.mxu0 0.0
      %3984 = vmatpush2.msra.mxu0 0.0
      %3985 = vmatprep.subr.mxu0 0.0
      %3986 = vmatpush2.msra.mxu0 0.0
      %3987 = vmatprep.mubr.f32.mxu0 0.0
      %3988 = vmatmul.mubr.f32.gmra.mxu0 %v3894
      %v3989 = vpop.f32.mrf.mxu0
      %v3990 = vadd.f32 %v3891, %v3989
      %v3991 = vpop.f32.mrf.mxu0
      %3992 = vmatprep.mubr.f32.mxu0 0.0
      %3993 = vmatmul.mubr.f32.gmra.mxu0 %v3897
      %v3994 = vpop.f32.mrf.mxu0
      %v3995 = vadd.f32 %v3891, %v3994
      %v3996 = vpop.f32.mrf.mxu0
      %3997 = vmatprep.mubr.f32.mxu0 0.0
      %3998 = vmatmul.mubr.f32.gmra.mxu0 %v3900
      %v3999 = vpop.f32.mrf.mxu0
      %v4000 = vadd.f32 %v3891, %v3999
      %v4001 = vpop.f32.mrf.mxu0
      %4002 = vmatprep.mubr.f32.mxu0 0.0
      %4003 = vmatmul.mubr.f32.gmra.mxu0 %v3903
      %v4004 = vpop.f32.mrf.mxu0
      %v4005 = vadd.f32 %v3891, %v4004
      %v4006 = vpop.f32.mrf.mxu0
      %4007 = vmatprep.mubr.f32.mxu0 0.0
      %4008 = vmatmul.mubr.f32.gmra.mxu0 %v3906
      %v4009 = vpop.f32.mrf.mxu0
      %v4010 = vadd.f32 %v3891, %v4009
      %v4011 = vpop.f32.mrf.mxu0
      %4012 = vmatprep.mubr.f32.mxu0 0.0
      %4013 = vmatmul.mubr.f32.gmra.mxu0 %v3909
      %v4014 = vpop.f32.mrf.mxu0
      %v4015 = vadd.f32 %v3891, %v4014
      %v4016 = vpop.f32.mrf.mxu0
      %4017 = vmatprep.mubr.f32.mxu0 0.0
      %4018 = vmatmul.mubr.f32.gmra.mxu0 %v3912
      %v4019 = vpop.f32.mrf.mxu0
      %v4020 = vadd.f32 %v3891, %v4019
      %v4021 = vpop.f32.mrf.mxu0
      %4022 = vmatprep.mubr.f32.mxu0 0.0
      %4023 = vmatmul.mubr.f32.gmra.mxu0 %v3915
      %v4024 = vpop.f32.mrf.mxu0
      %v4025 = vadd.f32 %v3891, %v4024
      %v4026 = vpop.f32.mrf.mxu0
      %4027 = vmatprep.mubr.f32.mxu0 0.0
      %4028 = vmatmul.mubr.f32.gmra.mxu0 %v3918
      %v4029 = vpop.f32.mrf.mxu0
      %v4030 = vadd.f32 %v3891, %v4029
      %v4031 = vpop.f32.mrf.mxu0
      %4032 = vmatprep.mubr.f32.mxu0 0.0
      %4033 = vmatmul.mubr.f32.gmra.mxu0 %v3921
      %v4034 = vpop.f32.mrf.mxu0
      %v4035 = vadd.f32 %v3891, %v4034
      %v4036 = vpop.f32.mrf.mxu0
      %4037 = vdwg.mxu0
      %v4038 = vld [vmem:[#allocation3 + $0xb] sm:$0xff]
      %v4039 = vld [vmem:[#allocation3 + $0x13] sm:$0xff]
      %v4040 = vld [vmem:[#allocation3 + $0x1b] sm:$0xff]
      %v4041 = vld [vmem:[#allocation3 + $0x23] sm:$0xff]
      %v4042 = vld [vmem:[#allocation3 + $0x2b] sm:$0xff]
      %v4043 = vld [vmem:[#allocation3 + $0x33] sm:$0xff]
      %v4044 = vld [vmem:[#allocation3 + $0x3b] sm:$0xff]
      %v4045 = vld [vmem:[#allocation3 + $0x43] sm:$0xff]
      %v4046 = vld [vmem:[#allocation3 + $0x4b] sm:$0xff]
      %v4047 = vld [vmem:[#allocation3 + $0x53] sm:$0x3f]
      %v4048 = vld [vmem:[%s25] sm:$0xff]
      %v4049 = vld [vmem:[%s25 + $0x8] sm:$0xff]
      %v4050 = vld [vmem:[%s27] sm:$0x1]
      %v4052 = vlaneseq
      %v4053 = vshrl.u32 %v4052, 7
      %v4054 = vsub.s32 0, %v4053
      %v4055 = vrot.slane %v4050, %v4054
      %v4058 = vsel %vm2025, %v4038, 0
      %v4061 = vsel %vm2025, %v4039, 0
      %v4064 = vsel %vm2025, %v4040, 0
      %v4067 = vsel %vm2025, %v4041, 0
      %v4070 = vsel %vm2025, %v4042, 0
      %v4073 = vsel %vm2025, %v4043, 0
      %v4076 = vsel %vm2025, %v4044, 0
      %v4079 = vsel %vm2025, %v4045, 0
      %v4082 = vsel %vm2025, %v4046, 0
      %v4085 = vsel %vm2025, %v4047, 0
      %4087 = vmatprep.subr.mxu0 0.0
      %4088 = vmatpush1.msra.mxu0 0.0
      %4089 = vmatprep.subr.mxu0 0.0
      %4090 = vmatpush1.msra.mxu0 0.0
      %4091 = vmatprep.subr.mxu0 0.0
      %4092 = vmatpush1.msra.mxu0 0.0
      %4093 = vmatprep.subr.mxu0 0.0
      %4094 = vmatpush1.msra.mxu0 0.0
      %4095 = vmatprep.subr.mxu0 0.0
      %4096 = vmatpush1.msra.mxu0 0.0
      %4097 = vmatprep.subr.mxu0 0.0
      %4098 = vmatpush1.msra.mxu0 0.0
      %4099 = vmatprep.subr.mxu0 0.0
      %4100 = vmatpush1.msra.mxu0 0.0
      %4101 = vmatprep.subr.mxu0 0.0
      %4102 = vmatpush1.msra.mxu0 0.0
      %4103 = vmatprep.subr.mxu0 0.0
      %4104 = vmatpush1.msra.mxu0 0.0
      %4105 = vmatprep.subr.mxu0 0.0
      %4106 = vmatpush1.msra.mxu0 0.0
      %4107 = vmatprep.subr.mxu0 0.0
      %4108 = vmatpush1.msra.mxu0 0.0
      %4109 = vmatprep.subr.mxu0 0.0
      %4110 = vmatpush1.msra.mxu0 0.0
      %4111 = vmatprep.subr.mxu0 0.0
      %4112 = vmatpush1.msra.mxu0 0.0
      %4113 = vmatprep.subr.mxu0 0.0
      %4114 = vmatpush1.msra.mxu0 0.0
      %4115 = vmatprep.subr.mxu0 0.0
      %4116 = vmatpush1.msra.mxu0 %v4049
      %4117 = vmatprep.subr.mxu0 0.0
      %4118 = vmatpush1.msra.mxu0 %v4048
      %4119 = vmatprep.subr.mxu0 0.0
      %4120 = vmatpush2.msra.mxu0 0.0
      %4121 = vmatprep.subr.mxu0 0.0
      %4122 = vmatpush2.msra.mxu0 0.0
      %4123 = vmatprep.subr.mxu0 0.0
      %4124 = vmatpush2.msra.mxu0 0.0
      %4125 = vmatprep.subr.mxu0 0.0
      %4126 = vmatpush2.msra.mxu0 0.0
      %4127 = vmatprep.subr.mxu0 0.0
      %4128 = vmatpush2.msra.mxu0 0.0
      %4129 = vmatprep.subr.mxu0 0.0
      %4130 = vmatpush2.msra.mxu0 0.0
      %4131 = vmatprep.subr.mxu0 0.0
      %4132 = vmatpush2.msra.mxu0 0.0
      %4133 = vmatprep.subr.mxu0 0.0
      %4134 = vmatpush2.msra.mxu0 0.0
      %4135 = vmatprep.subr.mxu0 0.0
      %4136 = vmatpush2.msra.mxu0 0.0
      %4137 = vmatprep.subr.mxu0 0.0
      %4138 = vmatpush2.msra.mxu0 0.0
      %4139 = vmatprep.subr.mxu0 0.0
      %4140 = vmatpush2.msra.mxu0 0.0
      %4141 = vmatprep.subr.mxu0 0.0
      %4142 = vmatpush2.msra.mxu0 0.0
      %4143 = vmatprep.subr.mxu0 0.0
      %4144 = vmatpush2.msra.mxu0 0.0
      %4145 = vmatprep.subr.mxu0 0.0
      %4146 = vmatpush2.msra.mxu0 0.0
      %4147 = vmatprep.subr.mxu0 0.0
      %4148 = vmatpush2.msra.mxu0 0.0
      %4149 = vmatprep.subr.mxu0 0.0
      %4150 = vmatpush2.msra.mxu0 0.0
      %4151 = vmatprep.mubr.f32.mxu0 0.0
      %4152 = vmatmul.mubr.f32.gmra.mxu0 %v4058
      %v4153 = vpop.f32.mrf.mxu0
      %v4154 = vadd.f32 %v4055, %v4153
      %v4155 = vpop.f32.mrf.mxu0
      %4156 = vmatprep.mubr.f32.mxu0 0.0
      %4157 = vmatmul.mubr.f32.gmra.mxu0 %v4061
      %v4158 = vpop.f32.mrf.mxu0
      %v4159 = vadd.f32 %v4055, %v4158
      %v4160 = vpop.f32.mrf.mxu0
      %4161 = vmatprep.mubr.f32.mxu0 0.0
      %4162 = vmatmul.mubr.f32.gmra.mxu0 %v4064
      %v4163 = vpop.f32.mrf.mxu0
      %v4164 = vadd.f32 %v4055, %v4163
      %v4165 = vpop.f32.mrf.mxu0
      %4166 = vmatprep.mubr.f32.mxu0 0.0
      %4167 = vmatmul.mubr.f32.gmra.mxu0 %v4067
      %v4168 = vpop.f32.mrf.mxu0
      %v4169 = vadd.f32 %v4055, %v4168
      %v4170 = vpop.f32.mrf.mxu0
      %4171 = vmatprep.mubr.f32.mxu0 0.0
      %4172 = vmatmul.mubr.f32.gmra.mxu0 %v4070
      %v4173 = vpop.f32.mrf.mxu0
      %v4174 = vadd.f32 %v4055, %v4173
      %v4175 = vpop.f32.mrf.mxu0
      %4176 = vmatprep.mubr.f32.mxu0 0.0
      %4177 = vmatmul.mubr.f32.gmra.mxu0 %v4073
      %v4178 = vpop.f32.mrf.mxu0
      %v4179 = vadd.f32 %v4055, %v4178
      %v4180 = vpop.f32.mrf.mxu0
      %4181 = vmatprep.mubr.f32.mxu0 0.0
      %4182 = vmatmul.mubr.f32.gmra.mxu0 %v4076
      %v4183 = vpop.f32.mrf.mxu0
      %v4184 = vadd.f32 %v4055, %v4183
      %v4185 = vpop.f32.mrf.mxu0
      %4186 = vmatprep.mubr.f32.mxu0 0.0
      %4187 = vmatmul.mubr.f32.gmra.mxu0 %v4079
      %v4188 = vpop.f32.mrf.mxu0
      %v4189 = vadd.f32 %v4055, %v4188
      %v4190 = vpop.f32.mrf.mxu0
      %4191 = vmatprep.mubr.f32.mxu0 0.0
      %4192 = vmatmul.mubr.f32.gmra.mxu0 %v4082
      %v4193 = vpop.f32.mrf.mxu0
      %v4194 = vadd.f32 %v4055, %v4193
      %v4195 = vpop.f32.mrf.mxu0
      %4196 = vmatprep.mubr.f32.mxu0 0.0
      %4197 = vmatmul.mubr.f32.gmra.mxu0 %v4085
      %v4198 = vpop.f32.mrf.mxu0
      %v4199 = vadd.f32 %v4055, %v4198
      %v4200 = vpop.f32.mrf.mxu0
      %4201 = vdwg.mxu0
      %v4202 = vadd.f32 %v3990, %v4154
      %v4203 = vadd.f32 %v3995, %v4159
      %v4204 = vadd.f32 %v4000, %v4164
      %v4205 = vadd.f32 %v4005, %v4169
      %v4206 = vadd.f32 %v4010, %v4174
      %v4207 = vadd.f32 %v4015, %v4179
      %v4208 = vadd.f32 %v4020, %v4184
      %v4209 = vadd.f32 %v4025, %v4189
      %v4210 = vadd.f32 %v4030, %v4194
      %v4211 = vadd.f32 %v4035, %v4199
      %v4212 = vmax.f32 %v4202, 0.0
      %v4213 = vmax.f32 %v4203, 0.0
      %v4214 = vmax.f32 %v4204, 0.0
      %v4215 = vmax.f32 %v4205, 0.0
      %v4216 = vmax.f32 %v4206, 0.0
      %v4217 = vmax.f32 %v4207, 0.0
      %v4218 = vmax.f32 %v4208, 0.0
      %v4219 = vmax.f32 %v4209, 0.0
      %v4220 = vmax.f32 %v4210, 0.0
      %v4221 = vmax.f32 %v4211, 0.0
      %v4222 = vld [vmem:[%s29] sm:$0xff]
      %v4223 = vld [vmem:[%s29 + $0x8] sm:$0xff]
      %v4224 = vld [vmem:[%s29 + $0x10] sm:$0xff]
      %v4225 = vld [vmem:[%s29 + $0x18] sm:$0xff]
      %v4226 = vld [vmem:[%s29 + $0x20] sm:$0xff]
      %v4227 = vld [vmem:[%s29 + $0x28] sm:$0xff]
      %v4228 = vld [vmem:[%s29 + $0x30] sm:$0xff]
      %v4229 = vld [vmem:[%s29 + $0x38] sm:$0xff]
      %v4230 = vld [vmem:[%s29 + $0x40] sm:$0xff]
      %v4231 = vld [vmem:[%s29 + $0x48] sm:$0xff]
      %v4232 = vld [vmem:[%s29 + $0x50] sm:$0xff]
      %v4233 = vld [vmem:[%s29 + $0x58] sm:$0xff]
      %v4234 = vld [vmem:[%s29 + $0x60] sm:$0xf]
      %vm4235 = vcmask 637952
      %v4237 = vsel %vm4235, %v4222, 0
      %v4240 = vsel %vm4235, %v4223, 0
      %v4243 = vsel %vm4235, %v4224, 0
      %v4246 = vsel %vm4235, %v4225, 0
      %v4249 = vsel %vm4235, %v4226, 0
      %v4252 = vsel %vm4235, %v4227, 0
      %v4255 = vsel %vm4235, %v4228, 0
      %v4258 = vsel %vm4235, %v4229, 0
      %v4261 = vsel %vm4235, %v4230, 0
      %v4264 = vsel %vm4235, %v4231, 0
      %v4267 = vsel %vm4235, %v4232, 0
      %v4270 = vsel %vm4235, %v4233, 0
      %v4273 = vsel %vm4235, %v4234, 0
      %vm4275 = vcmask 1045504
      %v4277 = vsel %vm4275, %v4221, 0
      %4279 = vmatprep.subr.mxu0 0.0
      %4280 = vmatpush1.msra.mxu0 0.0
      %4281 = vmatprep.subr.mxu0 0.0
      %4282 = vmatpush1.msra.mxu0 0.0
      %4283 = vmatprep.subr.mxu0 0.0
      %4284 = vmatpush1.msra.mxu0 0.0
      %4285 = vmatprep.subr.mxu0 0.0
      %4286 = vmatpush1.msra.mxu0 0.0
      %4287 = vmatprep.subr.mxu0 0.0
      %4288 = vmatpush1.msra.mxu0 0.0
      %4289 = vmatprep.subr.mxu0 0.0
      %4290 = vmatpush1.msra.mxu0 0.0
      %4291 = vmatprep.subr.mxu0 0.0
      %4292 = vmatpush1.msra.mxu0 %v4277
      %4293 = vmatprep.subr.mxu0 0.0
      %4294 = vmatpush1.msra.mxu0 %v4220
      %4295 = vmatprep.subr.mxu0 0.0
      %4296 = vmatpush1.msra.mxu0 %v4219
      %4297 = vmatprep.subr.mxu0 0.0
      %4298 = vmatpush1.msra.mxu0 %v4218
      %4299 = vmatprep.subr.mxu0 0.0
      %4300 = vmatpush1.msra.mxu0 %v4217
      %4301 = vmatprep.subr.mxu0 0.0
      %4302 = vmatpush1.msra.mxu0 %v4216
      %4303 = vmatprep.subr.mxu0 0.0
      %4304 = vmatpush1.msra.mxu0 %v4215
      %4305 = vmatprep.subr.mxu0 0.0
      %4306 = vmatpush1.msra.mxu0 %v4214
      %4307 = vmatprep.subr.mxu0 0.0
      %4308 = vmatpush1.msra.mxu0 %v4213
      %4309 = vmatprep.subr.mxu0 0.0
      %4310 = vmatpush1.msra.mxu0 %v4212
      %4311 = vmatprep.subr.mxu0 0.0
      %4312 = vmatpush2.msra.mxu0 0.0
      %4313 = vmatprep.subr.mxu0 0.0
      %4314 = vmatpush2.msra.mxu0 0.0
      %4315 = vmatprep.subr.mxu0 0.0
      %4316 = vmatpush2.msra.mxu0 0.0
      %4317 = vmatprep.subr.mxu0 0.0
      %4318 = vmatpush2.msra.mxu0 0.0
      %4319 = vmatprep.subr.mxu0 0.0
      %4320 = vmatpush2.msra.mxu0 0.0
      %4321 = vmatprep.subr.mxu0 0.0
      %4322 = vmatpush2.msra.mxu0 0.0
      %4323 = vmatprep.subr.mxu0 0.0
      %4324 = vmatpush2.msra.mxu0 0.0
      %4325 = vmatprep.subr.mxu0 0.0
      %4326 = vmatpush2.msra.mxu0 0.0
      %4327 = vmatprep.subr.mxu0 0.0
      %4328 = vmatpush2.msra.mxu0 0.0
      %4329 = vmatprep.subr.mxu0 0.0
      %4330 = vmatpush2.msra.mxu0 0.0
      %4331 = vmatprep.subr.mxu0 0.0
      %4332 = vmatpush2.msra.mxu0 0.0
      %4333 = vmatprep.subr.mxu0 0.0
      %4334 = vmatpush2.msra.mxu0 0.0
      %4335 = vmatprep.subr.mxu0 0.0
      %4336 = vmatpush2.msra.mxu0 0.0
      %4337 = vmatprep.subr.mxu0 0.0
      %4338 = vmatpush2.msra.mxu0 0.0
      %4339 = vmatprep.subr.mxu0 0.0
      %4340 = vmatpush2.msra.mxu0 0.0
      %4341 = vmatprep.subr.mxu0 0.0
      %4342 = vmatpush2.msra.mxu0 0.0
      %4343 = vmatprep.mubr.f32.mxu0 0.0
      %4344 = vmatmul.mubr.f32.gmra.mxu0 %v4237
      %v4345 = vpop.f32.mrf.mxu0
      %v4346 = vadd.f32 0.0, %v4345
      %v4347 = vpop.f32.mrf.mxu0
      %4348 = vmatprep.mubr.f32.mxu0 0.0
      %4349 = vmatmul.mubr.f32.gmra.mxu0 %v4240
      %v4350 = vpop.f32.mrf.mxu0
      %v4351 = vadd.f32 0.0, %v4350
      %v4352 = vpop.f32.mrf.mxu0
      %4353 = vmatprep.mubr.f32.mxu0 0.0
      %4354 = vmatmul.mubr.f32.gmra.mxu0 %v4243
      %v4355 = vpop.f32.mrf.mxu0
      %v4356 = vadd.f32 0.0, %v4355
      %v4357 = vpop.f32.mrf.mxu0
      %4358 = vmatprep.mubr.f32.mxu0 0.0
      %4359 = vmatmul.mubr.f32.gmra.mxu0 %v4246
      %v4360 = vpop.f32.mrf.mxu0
      %v4361 = vadd.f32 0.0, %v4360
      %v4362 = vpop.f32.mrf.mxu0
      %4363 = vmatprep.mubr.f32.mxu0 0.0
      %4364 = vmatmul.mubr.f32.gmra.mxu0 %v4249
      %v4365 = vpop.f32.mrf.mxu0
      %v4366 = vadd.f32 0.0, %v4365
      %v4367 = vpop.f32.mrf.mxu0
      %4368 = vmatprep.mubr.f32.mxu0 0.0
      %4369 = vmatmul.mubr.f32.gmra.mxu0 %v4252
      %v4370 = vpop.f32.mrf.mxu0
      %v4371 = vadd.f32 0.0, %v4370
      %v4372 = vpop.f32.mrf.mxu0
      %4373 = vmatprep.mubr.f32.mxu0 0.0
      %4374 = vmatmul.mubr.f32.gmra.mxu0 %v4255
      %v4375 = vpop.f32.mrf.mxu0
      %v4376 = vadd.f32 0.0, %v4375
      %v4377 = vpop.f32.mrf.mxu0
      %4378 = vmatprep.mubr.f32.mxu0 0.0
      %4379 = vmatmul.mubr.f32.gmra.mxu0 %v4258
      %v4380 = vpop.f32.mrf.mxu0
      %v4381 = vadd.f32 0.0, %v4380
      %v4382 = vpop.f32.mrf.mxu0
      %4383 = vmatprep.mubr.f32.mxu0 0.0
      %4384 = vmatmul.mubr.f32.gmra.mxu0 %v4261
      %v4385 = vpop.f32.mrf.mxu0
      %v4386 = vadd.f32 0.0, %v4385
      %v4387 = vpop.f32.mrf.mxu0
      %4388 = vmatprep.mubr.f32.mxu0 0.0
      %4389 = vmatmul.mubr.f32.gmra.mxu0 %v4264
      %v4390 = vpop.f32.mrf.mxu0
      %v4391 = vadd.f32 0.0, %v4390
      %v4392 = vpop.f32.mrf.mxu0
      %4393 = vmatprep.mubr.f32.mxu0 0.0
      %4394 = vmatmul.mubr.f32.gmra.mxu0 %v4267
      %v4395 = vpop.f32.mrf.mxu0
      %v4396 = vadd.f32 0.0, %v4395
      %v4397 = vpop.f32.mrf.mxu0
      %4398 = vmatprep.mubr.f32.mxu0 0.0
      %4399 = vmatmul.mubr.f32.gmra.mxu0 %v4270
      %v4400 = vpop.f32.mrf.mxu0
      %v4401 = vadd.f32 0.0, %v4400
      %v4402 = vpop.f32.mrf.mxu0
      %4403 = vmatprep.mubr.f32.mxu0 0.0
      %4404 = vmatmul.mubr.f32.gmra.mxu0 %v4273
      %v4405 = vpop.f32.mrf.mxu0
      %v4406 = vadd.f32 0.0, %v4405
      %v4407 = vpop.f32.mrf.mxu0
      %4408 = vdwg.mxu0
      %4409 = vst.msk [vmem:[#allocation5] sm:$0xff] %vm3658, %v4346
      %4410 = vst.msk [vmem:[#allocation5 + $0x8] sm:$0xff] %vm3658, %v4351
      %4411 = vst.msk [vmem:[#allocation5 + $0x10] sm:$0xff] %vm3658, %v4356
      %4412 = vst.msk [vmem:[#allocation5 + $0x18] sm:$0xff] %vm3658, %v4361
      %4413 = vst.msk [vmem:[#allocation5 + $0x20] sm:$0xff] %vm3658, %v4366
      %4414 = vst.msk [vmem:[#allocation5 + $0x28] sm:$0xff] %vm3658, %v4371
      %4415 = vst.msk [vmem:[#allocation5 + $0x30] sm:$0xff] %vm3658, %v4376
      %4416 = vst.msk [vmem:[#allocation5 + $0x38] sm:$0xff] %vm3658, %v4381
      %4417 = vst.msk [vmem:[#allocation5 + $0x40] sm:$0xff] %vm3658, %v4386
      %4418 = vst.msk [vmem:[#allocation5 + $0x48] sm:$0xff] %vm3658, %v4391
      %4419 = vst.msk [vmem:[#allocation5 + $0x50] sm:$0xff] %vm3658, %v4396
      %4420 = vst.msk [vmem:[#allocation5 + $0x58] sm:$0xff] %vm3658, %v4401
      %vm4421 = vcmask 257024
      %4422 = vst.msk [vmem:[#allocation5 + $0x60] sm:$0xf] %vm4421, %v4406
      %v4423 = vld [vmem:[#allocation5] sm:$0xff]
      %v4424 = vld [vmem:[#allocation5 + $0x8] sm:$0xff]
      %v4425 = vld [vmem:[#allocation5 + $0x10] sm:$0xff]
      %v4426 = vld [vmem:[#allocation5 + $0x18] sm:$0xff]
      %v4427 = vld [vmem:[#allocation5 + $0x20] sm:$0xff]
      %v4428 = vld [vmem:[#allocation5 + $0x28] sm:$0xff]
      %v4429 = vld [vmem:[#allocation5 + $0x30] sm:$0xff]
      %v4430 = vld [vmem:[#allocation5 + $0x38] sm:$0xff]
      %v4431 = vld [vmem:[#allocation5 + $0x40] sm:$0xff]
      %v4432 = vld [vmem:[#allocation5 + $0x48] sm:$0xff]
      %v4433 = vld [vmem:[#allocation5 + $0x50] sm:$0xff]
      %v4434 = vld [vmem:[#allocation5 + $0x58] sm:$0xff]
      %v4435 = vld [vmem:[#allocation5 + $0x60] sm:$0xf]
      %v4436 = vld [vmem:[%s31] sm:$0xff]
      %v4437 = vld [vmem:[%s31 + $0x8] sm:$0xff]
      %v4438 = vld [vmem:[%s31 + $0x10] sm:$0xff]
      %v4439 = vld [vmem:[%s31 + $0x18] sm:$0xff]
      %v4440 = vld [vmem:[%s33] sm:$0x1]
      %v4442 = vlaneseq
      %v4443 = vshrl.u32 %v4442, 7
      %v4444 = vsub.s32 0, %v4443
      %v4445 = vrot.slane %v4440, %v4444
      %v4448 = vsel %vm3658, %v4423, 0
      %v4451 = vsel %vm3658, %v4424, 0
      %v4454 = vsel %vm3658, %v4425, 0
      %v4457 = vsel %vm3658, %v4426, 0
      %v4460 = vsel %vm3658, %v4427, 0
      %v4463 = vsel %vm3658, %v4428, 0
      %v4466 = vsel %vm3658, %v4429, 0
      %v4469 = vsel %vm3658, %v4430, 0
      %v4472 = vsel %vm3658, %v4431, 0
      %v4475 = vsel %vm3658, %v4432, 0
      %v4478 = vsel %vm3658, %v4433, 0
      %v4481 = vsel %vm3658, %v4434, 0
      %v4484 = vsel %vm3658, %v4435, 0
      %4486 = vmatprep.subr.mxu0 0.0
      %4487 = vmatpush1.msra.mxu0 0.0
      %4488 = vmatprep.subr.mxu0 0.0
      %4489 = vmatpush1.msra.mxu0 0.0
      %4490 = vmatprep.subr.mxu0 0.0
      %4491 = vmatpush1.msra.mxu0 0.0
      %4492 = vmatprep.subr.mxu0 0.0
      %4493 = vmatpush1.msra.mxu0 0.0
      %4494 = vmatprep.subr.mxu0 0.0
      %4495 = vmatpush1.msra.mxu0 0.0
      %4496 = vmatprep.subr.mxu0 0.0
      %4497 = vmatpush1.msra.mxu0 0.0
      %4498 = vmatprep.subr.mxu0 0.0
      %4499 = vmatpush1.msra.mxu0 0.0
      %4500 = vmatprep.subr.mxu0 0.0
      %4501 = vmatpush1.msra.mxu0 0.0
      %4502 = vmatprep.subr.mxu0 0.0
      %4503 = vmatpush1.msra.mxu0 0.0
      %4504 = vmatprep.subr.mxu0 0.0
      %4505 = vmatpush1.msra.mxu0 0.0
      %4506 = vmatprep.subr.mxu0 0.0
      %4507 = vmatpush1.msra.mxu0 0.0
      %4508 = vmatprep.subr.mxu0 0.0
      %4509 = vmatpush1.msra.mxu0 0.0
      %4510 = vmatprep.subr.mxu0 0.0
      %4511 = vmatpush1.msra.mxu0 %v4439
      %4512 = vmatprep.subr.mxu0 0.0
      %4513 = vmatpush1.msra.mxu0 %v4438
      %4514 = vmatprep.subr.mxu0 0.0
      %4515 = vmatpush1.msra.mxu0 %v4437
      %4516 = vmatprep.subr.mxu0 0.0
      %4517 = vmatpush1.msra.mxu0 %v4436
      %4518 = vmatprep.subr.mxu0 0.0
      %4519 = vmatpush2.msra.mxu0 0.0
      %4520 = vmatprep.subr.mxu0 0.0
      %4521 = vmatpush2.msra.mxu0 0.0
      %4522 = vmatprep.subr.mxu0 0.0
      %4523 = vmatpush2.msra.mxu0 0.0
      %4524 = vmatprep.subr.mxu0 0.0
      %4525 = vmatpush2.msra.mxu0 0.0
      %4526 = vmatprep.subr.mxu0 0.0
      %4527 = vmatpush2.msra.mxu0 0.0
      %4528 = vmatprep.subr.mxu0 0.0
      %4529 = vmatpush2.msra.mxu0 0.0
      %4530 = vmatprep.subr.mxu0 0.0
      %4531 = vmatpush2.msra.mxu0 0.0
      %4532 = vmatprep.subr.mxu0 0.0
      %4533 = vmatpush2.msra.mxu0 0.0
      %4534 = vmatprep.subr.mxu0 0.0
      %4535 = vmatpush2.msra.mxu0 0.0
      %4536 = vmatprep.subr.mxu0 0.0
      %4537 = vmatpush2.msra.mxu0 0.0
      %4538 = vmatprep.subr.mxu0 0.0
      %4539 = vmatpush2.msra.mxu0 0.0
      %4540 = vmatprep.subr.mxu0 0.0
      %4541 = vmatpush2.msra.mxu0 0.0
      %4542 = vmatprep.subr.mxu0 0.0
      %4543 = vmatpush2.msra.mxu0 0.0
      %4544 = vmatprep.subr.mxu0 0.0
      %4545 = vmatpush2.msra.mxu0 0.0
      %4546 = vmatprep.subr.mxu0 0.0
      %4547 = vmatpush2.msra.mxu0 0.0
      %4548 = vmatprep.subr.mxu0 0.0
      %4549 = vmatpush2.msra.mxu0 0.0
      %4550 = vmatprep.mubr.f32.mxu0 0.0
      %4551 = vmatmul.mubr.f32.gmra.mxu0 %v4448
      %v4552 = vpop.f32.mrf.mxu0
      %v4553 = vadd.f32 %v4445, %v4552
      %v4554 = vpop.f32.mrf.mxu0
      %4555 = vmatprep.mubr.f32.mxu0 0.0
      %4556 = vmatmul.mubr.f32.gmra.mxu0 %v4451
      %v4557 = vpop.f32.mrf.mxu0
      %v4558 = vadd.f32 %v4445, %v4557
      %v4559 = vpop.f32.mrf.mxu0
      %4560 = vmatprep.mubr.f32.mxu0 0.0
      %4561 = vmatmul.mubr.f32.gmra.mxu0 %v4454
      %v4562 = vpop.f32.mrf.mxu0
      %v4563 = vadd.f32 %v4445, %v4562
      %v4564 = vpop.f32.mrf.mxu0
      %4565 = vmatprep.mubr.f32.mxu0 0.0
      %4566 = vmatmul.mubr.f32.gmra.mxu0 %v4457
      %v4567 = vpop.f32.mrf.mxu0
      %v4568 = vadd.f32 %v4445, %v4567
      %v4569 = vpop.f32.mrf.mxu0
      %4570 = vmatprep.mubr.f32.mxu0 0.0
      %4571 = vmatmul.mubr.f32.gmra.mxu0 %v4460
      %v4572 = vpop.f32.mrf.mxu0
      %v4573 = vadd.f32 %v4445, %v4572
      %v4574 = vpop.f32.mrf.mxu0
      %4575 = vmatprep.mubr.f32.mxu0 0.0
      %4576 = vmatmul.mubr.f32.gmra.mxu0 %v4463
      %v4577 = vpop.f32.mrf.mxu0
      %v4578 = vadd.f32 %v4445, %v4577
      %v4579 = vpop.f32.mrf.mxu0
      %4580 = vmatprep.mubr.f32.mxu0 0.0
      %4581 = vmatmul.mubr.f32.gmra.mxu0 %v4466
      %v4582 = vpop.f32.mrf.mxu0
      %v4583 = vadd.f32 %v4445, %v4582
      %v4584 = vpop.f32.mrf.mxu0
      %4585 = vmatprep.mubr.f32.mxu0 0.0
      %4586 = vmatmul.mubr.f32.gmra.mxu0 %v4469
      %v4587 = vpop.f32.mrf.mxu0
      %v4588 = vadd.f32 %v4445, %v4587
      %v4589 = vpop.f32.mrf.mxu0
      %4590 = vmatprep.mubr.f32.mxu0 0.0
      %4591 = vmatmul.mubr.f32.gmra.mxu0 %v4472
      %v4592 = vpop.f32.mrf.mxu0
      %v4593 = vadd.f32 %v4445, %v4592
      %v4594 = vpop.f32.mrf.mxu0
      %4595 = vmatprep.mubr.f32.mxu0 0.0
      %4596 = vmatmul.mubr.f32.gmra.mxu0 %v4475
      %v4597 = vpop.f32.mrf.mxu0
      %v4598 = vadd.f32 %v4445, %v4597
      %v4599 = vpop.f32.mrf.mxu0
      %4600 = vmatprep.mubr.f32.mxu0 0.0
      %4601 = vmatmul.mubr.f32.gmra.mxu0 %v4478
      %v4602 = vpop.f32.mrf.mxu0
      %v4603 = vadd.f32 %v4445, %v4602
      %v4604 = vpop.f32.mrf.mxu0
      %4605 = vmatprep.mubr.f32.mxu0 0.0
      %4606 = vmatmul.mubr.f32.gmra.mxu0 %v4481
      %v4607 = vpop.f32.mrf.mxu0
      %v4608 = vadd.f32 %v4445, %v4607
      %v4609 = vpop.f32.mrf.mxu0
      %4610 = vmatprep.mubr.f32.mxu0 0.0
      %4611 = vmatmul.mubr.f32.gmra.mxu0 %v4484
      %v4612 = vpop.f32.mrf.mxu0
      %v4613 = vadd.f32 %v4445, %v4612
      %v4614 = vpop.f32.mrf.mxu0
      %4615 = vdwg.mxu0
      %v4616 = vmax.f32 %v4553, 0.0
      %v4617 = vmax.f32 %v4558, 0.0
      %v4618 = vmax.f32 %v4563, 0.0
      %v4619 = vmax.f32 %v4568, 0.0
      %v4620 = vmax.f32 %v4573, 0.0
      %v4621 = vmax.f32 %v4578, 0.0
      %v4622 = vmax.f32 %v4583, 0.0
      %v4623 = vmax.f32 %v4588, 0.0
      %v4624 = vmax.f32 %v4593, 0.0
      %v4625 = vmax.f32 %v4598, 0.0
      %v4626 = vmax.f32 %v4603, 0.0
      %v4627 = vmax.f32 %v4608, 0.0
      %v4628 = vmax.f32 %v4613, 0.0
      %v4629 = vld [vmem:[%s11] sm:$0xff]
      %v4630 = vld [vmem:[%s11 + $0x8] sm:$0xff]
      %v4631 = vld [vmem:[%s11 + $0x10] sm:$0xff]
      %v4632 = vld [vmem:[%s11 + $0x18] sm:$0xff]
      %v4633 = vld [vmem:[%s11 + $0x20] sm:$0xff]
      %v4634 = vld [vmem:[%s11 + $0x28] sm:$0xff]
      %v4635 = vld [vmem:[%s11 + $0x30] sm:$0xff]
      %v4636 = vld [vmem:[%s11 + $0x38] sm:$0xff]
      %v4637 = vld [vmem:[%s11 + $0x40] sm:$0xff]
      %v4638 = vld [vmem:[%s11 + $0x48] sm:$0xff]
      %v4639 = vld [vmem:[%s11 + $0x50] sm:$0xff]
      %v4640 = vld [vmem:[%s11 + $0x58] sm:$0xff]
      %v4641 = vld [vmem:[%s11 + $0x60] sm:$0xf]
      %4643 = vset.pattern.permute.xlu0 0
      %4644 = vperm.xlu0 %4643, %v4629
      %v4645 = vpop.permute.xlu0 %4644
      %4648 = vset.pattern.permute.xlu0 0
      %4649 = vperm.xlu0 %4648, %v4630
      %v4650 = vpop.permute.xlu0 %4649
      %4653 = vset.pattern.permute.xlu0 0
      %4654 = vperm.xlu0 %4653, %v4631
      %v4655 = vpop.permute.xlu0 %4654
      %4658 = vset.pattern.permute.xlu0 0
      %4659 = vperm.xlu0 %4658, %v4632
      %v4660 = vpop.permute.xlu0 %4659
      %4663 = vset.pattern.permute.xlu0 0
      %4664 = vperm.xlu0 %4663, %v4633
      %v4665 = vpop.permute.xlu0 %4664
      %4668 = vset.pattern.permute.xlu0 0
      %4669 = vperm.xlu0 %4668, %v4634
      %v4670 = vpop.permute.xlu0 %4669
      %4673 = vset.pattern.permute.xlu0 0
      %4674 = vperm.xlu0 %4673, %v4635
      %v4675 = vpop.permute.xlu0 %4674
      %4678 = vset.pattern.permute.xlu0 0
      %4679 = vperm.xlu0 %4678, %v4636
      %v4680 = vpop.permute.xlu0 %4679
      %4683 = vset.pattern.permute.xlu0 0
      %4684 = vperm.xlu0 %4683, %v4637
      %v4685 = vpop.permute.xlu0 %4684
      %4688 = vset.pattern.permute.xlu0 0
      %4689 = vperm.xlu0 %4688, %v4638
      %v4690 = vpop.permute.xlu0 %4689
      %4693 = vset.pattern.permute.xlu0 0
      %4694 = vperm.xlu0 %4693, %v4639
      %v4695 = vpop.permute.xlu0 %4694
      %4698 = vset.pattern.permute.xlu0 0
      %4699 = vperm.xlu0 %4698, %v4640
      %v4700 = vpop.permute.xlu0 %4699
      %4703 = vset.pattern.permute.xlu0 0
      %4704 = vperm.xlu0 %4703, %v4641
      %v4705 = vpop.permute.xlu0 %4704
      %v4707 = vmul.f32 %v4616, %v4645
      %v4708 = vmul.f32 %v4617, %v4650
      %v4709 = vmul.f32 %v4618, %v4655
      %v4710 = vmul.f32 %v4619, %v4660
      %v4711 = vmul.f32 %v4620, %v4665
      %v4712 = vmul.f32 %v4621, %v4670
      %v4713 = vmul.f32 %v4622, %v4675
      %v4714 = vmul.f32 %v4623, %v4680
      %v4715 = vmul.f32 %v4624, %v4685
      %v4716 = vmul.f32 %v4625, %v4690
      %v4717 = vmul.f32 %v4626, %v4695
      %v4718 = vmul.f32 %v4627, %v4700
      %v4719 = vmul.f32 %v4628, %v4705
      %4720 = vst.msk [vmem:[#allocation6] sm:$0xff] %vm2025, %v4707
      %4721 = vst.msk [vmem:[#allocation6 + $0x8] sm:$0xff] %vm2025, %v4708
      %4722 = vst.msk [vmem:[#allocation6 + $0x10] sm:$0xff] %vm2025, %v4709
      %4723 = vst.msk [vmem:[#allocation6 + $0x18] sm:$0xff] %vm2025, %v4710
      %4724 = vst.msk [vmem:[#allocation6 + $0x20] sm:$0xff] %vm2025, %v4711
      %4725 = vst.msk [vmem:[#allocation6 + $0x28] sm:$0xff] %vm2025, %v4712
      %4726 = vst.msk [vmem:[#allocation6 + $0x30] sm:$0xff] %vm2025, %v4713
      %4727 = vst.msk [vmem:[#allocation6 + $0x38] sm:$0xff] %vm2025, %v4714
      %4728 = vst.msk [vmem:[#allocation6 + $0x40] sm:$0xff] %vm2025, %v4715
      %4729 = vst.msk [vmem:[#allocation6 + $0x48] sm:$0xff] %vm2025, %v4716
      %4730 = vst.msk [vmem:[#allocation6 + $0x50] sm:$0xff] %vm2025, %v4717
      %4731 = vst.msk [vmem:[#allocation6 + $0x58] sm:$0xff] %vm2025, %v4718
      %4732 = vst.msk [vmem:[#allocation6 + $0x60] sm:$0xf] %vm2066, %v4719
      %v4733 = vld [vmem:[#allocation6] sm:$0xff]
      %v4734 = vld [vmem:[#allocation6 + $0x8] sm:$0xff]
      %v4735 = vld [vmem:[#allocation6 + $0x10] sm:$0xff]
      %v4736 = vld [vmem:[#allocation6 + $0x18] sm:$0xff]
      %v4737 = vld [vmem:[#allocation6 + $0x20] sm:$0xff]
      %v4738 = vld [vmem:[#allocation6 + $0x28] sm:$0xff]
      %v4739 = vld [vmem:[#allocation6 + $0x30] sm:$0xff]
      %v4740 = vld [vmem:[#allocation6 + $0x38] sm:$0xff]
      %v4741 = vld [vmem:[#allocation6 + $0x40] sm:$0xff]
      %v4742 = vld [vmem:[#allocation6 + $0x48] sm:$0x3f]
      %v4743 = vld [vmem:[#allocation6 + $0x1] sm:$0xff]
      %v4744 = vld [vmem:[#allocation6 + $0x9] sm:$0xff]
      %v4745 = vld [vmem:[#allocation6 + $0x11] sm:$0xff]
      %v4746 = vld [vmem:[#allocation6 + $0x19] sm:$0xff]
      %v4747 = vld [vmem:[#allocation6 + $0x21] sm:$0xff]
      %v4748 = vld [vmem:[#allocation6 + $0x29] sm:$0xff]
      %v4749 = vld [vmem:[#allocation6 + $0x31] sm:$0xff]
      %v4750 = vld [vmem:[#allocation6 + $0x39] sm:$0xff]
      %v4751 = vld [vmem:[#allocation6 + $0x41] sm:$0xff]
      %v4752 = vld [vmem:[#allocation6 + $0x49] sm:$0x3f]
      %v4753 = vld [vmem:[#allocation6 + $0x2] sm:$0xff]
      %v4754 = vld [vmem:[#allocation6 + $0xa] sm:$0xff]
      %v4755 = vld [vmem:[#allocation6 + $0x12] sm:$0xff]
      %v4756 = vld [vmem:[#allocation6 + $0x1a] sm:$0xff]
      %v4757 = vld [vmem:[#allocation6 + $0x22] sm:$0xff]
      %v4758 = vld [vmem:[#allocation6 + $0x2a] sm:$0xff]
      %v4759 = vld [vmem:[#allocation6 + $0x32] sm:$0xff]
      %v4760 = vld [vmem:[#allocation6 + $0x3a] sm:$0xff]
      %v4761 = vld [vmem:[#allocation6 + $0x42] sm:$0xff]
      %v4762 = vld [vmem:[#allocation6 + $0x4a] sm:$0x3f]
      %v4763 = vld [vmem:[#allocation6 + $0x4a] sm:$0xff]
      %v4764 = vld [vmem:[#allocation6 + $0x52] sm:$0x3f]
      %v4765 = vld [vmem:[#allocation6 + $0xb] sm:$0xff]
      %v4766 = vld [vmem:[#allocation6 + $0x13] sm:$0xff]
      %v4767 = vld [vmem:[#allocation6 + $0x1b] sm:$0xff]
      %v4768 = vld [vmem:[#allocation6 + $0x23] sm:$0xff]
      %v4769 = vld [vmem:[#allocation6 + $0x2b] sm:$0xff]
      %v4770 = vld [vmem:[#allocation6 + $0x33] sm:$0xff]
      %v4771 = vld [vmem:[#allocation6 + $0x3b] sm:$0xff]
      %v4772 = vld [vmem:[#allocation6 + $0x43] sm:$0xff]
      %v4773 = vld [vmem:[#allocation6 + $0x4b] sm:$0xff]
      %v4774 = vld [vmem:[#allocation6 + $0x53] sm:$0x3f]
      %v4775 = vld [vmem:[#allocation6 + $0xc] sm:$0xff]
      %v4776 = vld [vmem:[#allocation6 + $0x14] sm:$0xff]
      %v4777 = vld [vmem:[#allocation6 + $0x1c] sm:$0xff]
      %v4778 = vld [vmem:[#allocation6 + $0x24] sm:$0xff]
      %v4779 = vld [vmem:[#allocation6 + $0x2c] sm:$0xff]
      %v4780 = vld [vmem:[#allocation6 + $0x34] sm:$0xff]
      %v4781 = vld [vmem:[#allocation6 + $0x3c] sm:$0xff]
      %v4782 = vld [vmem:[#allocation6 + $0x44] sm:$0xff]
      %v4783 = vld [vmem:[#allocation6 + $0x4c] sm:$0xff]
      %v4784 = vld [vmem:[#allocation6 + $0x54] sm:$0x3f]
      %v4785 = vld [vmem:[#allocation6 + $0x54] sm:$0xff]
      %v4786 = vld [vmem:[#allocation6 + $0x5c] sm:$0x3f]
      %v4787 = vld [vmem:[#allocation6 + $0x15] sm:$0xff]
      %v4788 = vld [vmem:[#allocation6 + $0x1d] sm:$0xff]
      %v4789 = vld [vmem:[#allocation6 + $0x25] sm:$0xff]
      %v4790 = vld [vmem:[#allocation6 + $0x2d] sm:$0xff]
      %v4791 = vld [vmem:[#allocation6 + $0x35] sm:$0xff]
      %v4792 = vld [vmem:[#allocation6 + $0x3d] sm:$0xff]
      %v4793 = vld [vmem:[#allocation6 + $0x45] sm:$0xff]
      %v4794 = vld [vmem:[#allocation6 + $0x4d] sm:$0xff]
      %v4795 = vld [vmem:[#allocation6 + $0x55] sm:$0xff]
      %v4796 = vld [vmem:[#allocation6 + $0x5d] sm:$0x3f]
      %v4797 = vld [vmem:[#allocation6 + $0x16] sm:$0xff]
      %v4798 = vld [vmem:[#allocation6 + $0x1e] sm:$0xff]
      %v4799 = vld [vmem:[#allocation6 + $0x26] sm:$0xff]
      %v4800 = vld [vmem:[#allocation6 + $0x2e] sm:$0xff]
      %v4801 = vld [vmem:[#allocation6 + $0x36] sm:$0xff]
      %v4802 = vld [vmem:[#allocation6 + $0x3e] sm:$0xff]
      %v4803 = vld [vmem:[#allocation6 + $0x46] sm:$0xff]
      %v4804 = vld [vmem:[#allocation6 + $0x4e] sm:$0xff]
      %v4805 = vld [vmem:[#allocation6 + $0x56] sm:$0xff]
      %v4806 = vld [vmem:[#allocation6 + $0x5e] sm:$0x3f]
      %4817 = vrot.lane.b32.xlu0 %v4743, 16
      %v4818 = vpop.permute.xlu0 %4817
      %4819 = vrot.lane.b32.xlu0 %v4744, 16
      %v4820 = vpop.permute.xlu0 %4819
      %4821 = vrot.lane.b32.xlu0 %v4745, 16
      %v4822 = vpop.permute.xlu0 %4821
      %4823 = vrot.lane.b32.xlu0 %v4746, 16
      %v4824 = vpop.permute.xlu0 %4823
      %4825 = vrot.lane.b32.xlu0 %v4747, 16
      %v4826 = vpop.permute.xlu0 %4825
      %4827 = vrot.lane.b32.xlu0 %v4748, 16
      %v4828 = vpop.permute.xlu0 %4827
      %4829 = vrot.lane.b32.xlu0 %v4749, 16
      %v4830 = vpop.permute.xlu0 %4829
      %4831 = vrot.lane.b32.xlu0 %v4750, 16
      %v4832 = vpop.permute.xlu0 %4831
      %4833 = vrot.lane.b32.xlu0 %v4751, 16
      %v4834 = vpop.permute.xlu0 %4833
      %4835 = vrot.lane.b32.xlu0 %v4752, 16
      %v4836 = vpop.permute.xlu0 %4835
      %4857 = vrot.lane.b32.xlu0 %v4753, 32
      %v4858 = vpop.permute.xlu0 %4857
      %4859 = vrot.lane.b32.xlu0 %v4754, 32
      %v4860 = vpop.permute.xlu0 %4859
      %4861 = vrot.lane.b32.xlu0 %v4755, 32
      %v4862 = vpop.permute.xlu0 %4861
      %4863 = vrot.lane.b32.xlu0 %v4756, 32
      %v4864 = vpop.permute.xlu0 %4863
      %4865 = vrot.lane.b32.xlu0 %v4757, 32
      %v4866 = vpop.permute.xlu0 %4865
      %4867 = vrot.lane.b32.xlu0 %v4758, 32
      %v4868 = vpop.permute.xlu0 %4867
      %4869 = vrot.lane.b32.xlu0 %v4759, 32
      %v4870 = vpop.permute.xlu0 %4869
      %4871 = vrot.lane.b32.xlu0 %v4760, 32
      %v4872 = vpop.permute.xlu0 %4871
      %4873 = vrot.lane.b32.xlu0 %v4761, 32
      %v4874 = vpop.permute.xlu0 %4873
      %4875 = vrot.lane.b32.xlu0 %v4762, 32
      %v4876 = vpop.permute.xlu0 %4875
      %4889 = vrot.lane.b32.xlu0 %v4754, 48
      %v4890 = vpop.permute.xlu0 %4889
      %4891 = vrot.lane.b32.xlu0 %v4755, 48
      %v4892 = vpop.permute.xlu0 %4891
      %4893 = vrot.lane.b32.xlu0 %v4756, 48
      %v4894 = vpop.permute.xlu0 %4893
      %4895 = vrot.lane.b32.xlu0 %v4757, 48
      %v4896 = vpop.permute.xlu0 %4895
      %4897 = vrot.lane.b32.xlu0 %v4758, 48
      %v4898 = vpop.permute.xlu0 %4897
      %4899 = vrot.lane.b32.xlu0 %v4759, 48
      %v4900 = vpop.permute.xlu0 %4899
      %4901 = vrot.lane.b32.xlu0 %v4760, 48
      %v4902 = vpop.permute.xlu0 %4901
      %4903 = vrot.lane.b32.xlu0 %v4761, 48
      %v4904 = vpop.permute.xlu0 %4903
      %4905 = vrot.lane.b32.xlu0 %v4763, 48
      %v4906 = vpop.permute.xlu0 %4905
      %4907 = vrot.lane.b32.xlu0 %v4764, 48
      %v4908 = vpop.permute.xlu0 %4907
      %4929 = vrot.lane.b32.xlu0 %v4765, 64
      %v4930 = vpop.permute.xlu0 %4929
      %4931 = vrot.lane.b32.xlu0 %v4766, 64
      %v4932 = vpop.permute.xlu0 %4931
      %4933 = vrot.lane.b32.xlu0 %v4767, 64
      %v4934 = vpop.permute.xlu0 %4933
      %4935 = vrot.lane.b32.xlu0 %v4768, 64
      %v4936 = vpop.permute.xlu0 %4935
      %4937 = vrot.lane.b32.xlu0 %v4769, 64
      %v4938 = vpop.permute.xlu0 %4937
      %4939 = vrot.lane.b32.xlu0 %v4770, 64
      %v4940 = vpop.permute.xlu0 %4939
      %4941 = vrot.lane.b32.xlu0 %v4771, 64
      %v4942 = vpop.permute.xlu0 %4941
      %4943 = vrot.lane.b32.xlu0 %v4772, 64
      %v4944 = vpop.permute.xlu0 %4943
      %4945 = vrot.lane.b32.xlu0 %v4773, 64
      %v4946 = vpop.permute.xlu0 %4945
      %4947 = vrot.lane.b32.xlu0 %v4774, 64
      %v4948 = vpop.permute.xlu0 %4947
      %4969 = vrot.lane.b32.xlu0 %v4775, 80
      %v4970 = vpop.permute.xlu0 %4969
      %4971 = vrot.lane.b32.xlu0 %v4776, 80
      %v4972 = vpop.permute.xlu0 %4971
      %4973 = vrot.lane.b32.xlu0 %v4777, 80
      %v4974 = vpop.permute.xlu0 %4973
      %4975 = vrot.lane.b32.xlu0 %v4778, 80
      %v4976 = vpop.permute.xlu0 %4975
      %4977 = vrot.lane.b32.xlu0 %v4779, 80
      %v4978 = vpop.permute.xlu0 %4977
      %4979 = vrot.lane.b32.xlu0 %v4780, 80
      %v4980 = vpop.permute.xlu0 %4979
      %4981 = vrot.lane.b32.xlu0 %v4781, 80
      %v4982 = vpop.permute.xlu0 %4981
      %4983 = vrot.lane.b32.xlu0 %v4782, 80
      %v4984 = vpop.permute.xlu0 %4983
      %4985 = vrot.lane.b32.xlu0 %v4783, 80
      %v4986 = vpop.permute.xlu0 %4985
      %4987 = vrot.lane.b32.xlu0 %v4784, 80
      %v4988 = vpop.permute.xlu0 %4987
      %5001 = vrot.lane.b32.xlu0 %v4776, 96
      %v5002 = vpop.permute.xlu0 %5001
      %5003 = vrot.lane.b32.xlu0 %v4777, 96
      %v5004 = vpop.permute.xlu0 %5003
      %5005 = vrot.lane.b32.xlu0 %v4778, 96
      %v5006 = vpop.permute.xlu0 %5005
      %5007 = vrot.lane.b32.xlu0 %v4779, 96
      %v5008 = vpop.permute.xlu0 %5007
      %5009 = vrot.lane.b32.xlu0 %v4780, 96
      %v5010 = vpop.permute.xlu0 %5009
      %5011 = vrot.lane.b32.xlu0 %v4781, 96
      %v5012 = vpop.permute.xlu0 %5011
      %5013 = vrot.lane.b32.xlu0 %v4782, 96
      %v5014 = vpop.permute.xlu0 %5013
      %5015 = vrot.lane.b32.xlu0 %v4783, 96
      %v5016 = vpop.permute.xlu0 %5015
      %5017 = vrot.lane.b32.xlu0 %v4785, 96
      %v5018 = vpop.permute.xlu0 %5017
      %5019 = vrot.lane.b32.xlu0 %v4786, 96
      %v5020 = vpop.permute.xlu0 %5019
      %5041 = vrot.lane.b32.xlu0 %v4787, 112
      %v5042 = vpop.permute.xlu0 %5041
      %5043 = vrot.lane.b32.xlu0 %v4788, 112
      %v5044 = vpop.permute.xlu0 %5043
      %5045 = vrot.lane.b32.xlu0 %v4789, 112
      %v5046 = vpop.permute.xlu0 %5045
      %5047 = vrot.lane.b32.xlu0 %v4790, 112
      %v5048 = vpop.permute.xlu0 %5047
      %5049 = vrot.lane.b32.xlu0 %v4791, 112
      %v5050 = vpop.permute.xlu0 %5049
      %5051 = vrot.lane.b32.xlu0 %v4792, 112
      %v5052 = vpop.permute.xlu0 %5051
      %5053 = vrot.lane.b32.xlu0 %v4793, 112
      %v5054 = vpop.permute.xlu0 %5053
      %5055 = vrot.lane.b32.xlu0 %v4794, 112
      %v5056 = vpop.permute.xlu0 %5055
      %5057 = vrot.lane.b32.xlu0 %v4795, 112
      %v5058 = vpop.permute.xlu0 %5057
      %5059 = vrot.lane.b32.xlu0 %v4796, 112
      %v5060 = vpop.permute.xlu0 %5059
      %v5071 = vsel %vm2025, %v4733, %v4818
      %v5072 = vsel %vm2025, %v4734, %v4820
      %v5073 = vsel %vm2025, %v4735, %v4822
      %v5074 = vsel %vm2025, %v4736, %v4824
      %v5075 = vsel %vm2025, %v4737, %v4826
      %v5076 = vsel %vm2025, %v4738, %v4828
      %v5077 = vsel %vm2025, %v4739, %v4830
      %v5078 = vsel %vm2025, %v4740, %v4832
      %v5079 = vsel %vm2025, %v4741, %v4834
      %v5080 = vsel %vm2025, %v4742, %v4836
      %v5081 = vsel %vm3658, %v5071, %v4858
      %v5082 = vsel %vm3658, %v5072, %v4860
      %v5083 = vsel %vm3658, %v5073, %v4862
      %v5084 = vsel %vm3658, %v5074, %v4864
      %v5085 = vsel %vm3658, %v5075, %v4866
      %v5086 = vsel %vm3658, %v5076, %v4868
      %v5087 = vsel %vm3658, %v5077, %v4870
      %v5088 = vsel %vm3658, %v5078, %v4872
      %v5089 = vsel %vm3658, %v5079, %v4874
      %v5090 = vsel %vm3658, %v5080, %v4876
      %v5091 = vsel %vm3680, %v5081, %v4890
      %v5092 = vsel %vm3680, %v5082, %v4892
      %v5093 = vsel %vm3680, %v5083, %v4894
      %v5094 = vsel %vm3680, %v5084, %v4896
      %v5095 = vsel %vm3680, %v5085, %v4898
      %v5096 = vsel %vm3680, %v5086, %v4900
      %v5097 = vsel %vm3680, %v5087, %v4902
      %v5098 = vsel %vm3680, %v5088, %v4904
      %v5099 = vsel %vm3680, %v5089, %v4906
      %v5100 = vsel %vm3680, %v5090, %v4908
      %v5101 = vsel %vm3702, %v5091, %v4930
      %v5102 = vsel %vm3702, %v5092, %v4932
      %v5103 = vsel %vm3702, %v5093, %v4934
      %v5104 = vsel %vm3702, %v5094, %v4936
      %v5105 = vsel %vm3702, %v5095, %v4938
      %v5106 = vsel %vm3702, %v5096, %v4940
      %v5107 = vsel %vm3702, %v5097, %v4942
      %v5108 = vsel %vm3702, %v5098, %v4944
      %v5109 = vsel %vm3702, %v5099, %v4946
      %v5110 = vsel %vm3702, %v5100, %v4948
      %vm5111 = vcmask 654336
      %v5112 = vsel %vm5111, %v5101, %v4970
      %v5113 = vsel %vm5111, %v5102, %v4972
      %v5114 = vsel %vm5111, %v5103, %v4974
      %v5115 = vsel %vm5111, %v5104, %v4976
      %v5116 = vsel %vm5111, %v5105, %v4978
      %v5117 = vsel %vm5111, %v5106, %v4980
      %v5118 = vsel %vm5111, %v5107, %v4982
      %v5119 = vsel %vm5111, %v5108, %v4984
      %v5120 = vsel %vm5111, %v5109, %v4986
      %v5121 = vsel %vm5111, %v5110, %v4988
      %vm5122 = vcmask 785408
      %v5123 = vsel %vm5122, %v5112, %v5002
      %v5124 = vsel %vm5122, %v5113, %v5004
      %v5125 = vsel %vm5122, %v5114, %v5006
      %v5126 = vsel %vm5122, %v5115, %v5008
      %v5127 = vsel %vm5122, %v5116, %v5010
      %v5128 = vsel %vm5122, %v5117, %v5012
      %v5129 = vsel %vm5122, %v5118, %v5014
      %v5130 = vsel %vm5122, %v5119, %v5016
      %v5131 = vsel %vm5122, %v5120, %v5018
      %v5132 = vsel %vm5122, %v5121, %v5020
      %vm5133 = vcmask 916480
      %v5134 = vsel %vm5133, %v5123, %v5042
      %v5135 = vsel %vm5133, %v5124, %v5044
      %v5136 = vsel %vm5133, %v5125, %v5046
      %v5137 = vsel %vm5133, %v5126, %v5048
      %v5138 = vsel %vm5133, %v5127, %v5050
      %v5139 = vsel %vm5133, %v5128, %v5052
      %v5140 = vsel %vm5133, %v5129, %v5054
      %v5141 = vsel %vm5133, %v5130, %v5056
      %v5142 = vsel %vm5133, %v5131, %v5058
      %v5143 = vsel %vm5133, %v5132, %v5060
      %v5144 = vld [vmem:[%s35] sm:$0xff]
      %v5145 = vld [vmem:[%s35 + $0x8] sm:$0xff]
      %v5146 = vld [vmem:[%s35 + $0x10] sm:$0xff]
      %v5147 = vld [vmem:[%s35 + $0x18] sm:$0xff]
      %v5148 = vld [vmem:[%s35 + $0x20] sm:$0xff]
      %v5149 = vld [vmem:[%s35 + $0x28] sm:$0xff]
      %v5150 = vld [vmem:[%s35 + $0x30] sm:$0xff]
      %v5151 = vld [vmem:[%s35 + $0x38] sm:$0xff]
      %v5152 = vld [vmem:[%s35 + $0x40] sm:$0xff]
      %v5153 = vld [vmem:[%s35 + $0x48] sm:$0xff]
      %v5154 = vld [vmem:[%s35 + $0x50] sm:$0xff]
      %v5155 = vld [vmem:[%s35 + $0x58] sm:$0xff]
      %v5156 = vld [vmem:[%s35 + $0x60] sm:$0xff]
      %v5157 = vld [vmem:[%s35 + $0x68] sm:$0xff]
      %v5158 = vld [vmem:[%s35 + $0x70] sm:$0xff]
      %v5159 = vld [vmem:[%s35 + $0x78] sm:$0xff]
      %v5160 = vld [vmem:[%s35 + $0x80] sm:$0xff]
      %v5161 = vld [vmem:[%s35 + $0x88] sm:$0xff]
      %v5162 = vld [vmem:[%s37] sm:$0x1]
      %v5164 = vlaneseq
      %v5165 = vshrl.u32 %v5164, 7
      %v5166 = vsub.s32 0, %v5165
      %v5167 = vrot.slane %v5162, %v5166
      %v5170 = vsel %vm2025, %v4797, 0
      %v5173 = vsel %vm2025, %v4798, 0
      %v5176 = vsel %vm2025, %v4799, 0
      %v5179 = vsel %vm2025, %v4800, 0
      %v5182 = vsel %vm2025, %v4801, 0
      %v5185 = vsel %vm2025, %v4802, 0
      %v5188 = vsel %vm2025, %v4803, 0
      %v5191 = vsel %vm2025, %v4804, 0
      %v5194 = vsel %vm2025, %v4805, 0
      %v5197 = vsel %vm2025, %v4806, 0
      %5199 = vmatprep.subr.mxu0 0.0
      %5200 = vmatpush1.msra.mxu0 %v5159
      %5201 = vmatprep.subr.mxu0 0.0
      %5202 = vmatpush1.msra.mxu0 %v5158
      %5203 = vmatprep.subr.mxu0 0.0
      %5204 = vmatpush1.msra.mxu0 %v5157
      %5205 = vmatprep.subr.mxu0 0.0
      %5206 = vmatpush1.msra.mxu0 %v5156
      %5207 = vmatprep.subr.mxu0 0.0
      %5208 = vmatpush1.msra.mxu0 %v5155
      %5209 = vmatprep.subr.mxu0 0.0
      %5210 = vmatpush1.msra.mxu0 %v5154
      %5211 = vmatprep.subr.mxu0 0.0
      %5212 = vmatpush1.msra.mxu0 %v5153
      %5213 = vmatprep.subr.mxu0 0.0
      %5214 = vmatpush1.msra.mxu0 %v5152
      %5215 = vmatprep.subr.mxu0 0.0
      %5216 = vmatpush1.msra.mxu0 %v5151
      %5217 = vmatprep.subr.mxu0 0.0
      %5218 = vmatpush1.msra.mxu0 %v5150
      %5219 = vmatprep.subr.mxu0 0.0
      %5220 = vmatpush1.msra.mxu0 %v5149
      %5221 = vmatprep.subr.mxu0 0.0
      %5222 = vmatpush1.msra.mxu0 %v5148
      %5223 = vmatprep.subr.mxu0 0.0
      %5224 = vmatpush1.msra.mxu0 %v5147
      %5225 = vmatprep.subr.mxu0 0.0
      %5226 = vmatpush1.msra.mxu0 %v5146
      %5227 = vmatprep.subr.mxu0 0.0
      %5228 = vmatpush1.msra.mxu0 %v5145
      %5229 = vmatprep.subr.mxu0 0.0
      %5230 = vmatpush1.msra.mxu0 %v5144
      %5231 = vmatprep.subr.mxu0 0.0
      %5232 = vmatpush2.msra.mxu0 0.0
      %5233 = vmatprep.subr.mxu0 0.0
      %5234 = vmatpush2.msra.mxu0 0.0
      %5235 = vmatprep.subr.mxu0 0.0
      %5236 = vmatpush2.msra.mxu0 0.0
      %5237 = vmatprep.subr.mxu0 0.0
      %5238 = vmatpush2.msra.mxu0 0.0
      %5239 = vmatprep.subr.mxu0 0.0
      %5240 = vmatpush2.msra.mxu0 0.0
      %5241 = vmatprep.subr.mxu0 0.0
      %5242 = vmatpush2.msra.mxu0 0.0
      %5243 = vmatprep.subr.mxu0 0.0
      %5244 = vmatpush2.msra.mxu0 0.0
      %5245 = vmatprep.subr.mxu0 0.0
      %5246 = vmatpush2.msra.mxu0 0.0
      %5247 = vmatprep.subr.mxu0 0.0
      %5248 = vmatpush2.msra.mxu0 0.0
      %5249 = vmatprep.subr.mxu0 0.0
      %5250 = vmatpush2.msra.mxu0 0.0
      %5251 = vmatprep.subr.mxu0 0.0
      %5252 = vmatpush2.msra.mxu0 0.0
      %5253 = vmatprep.subr.mxu0 0.0
      %5254 = vmatpush2.msra.mxu0 0.0
      %5255 = vmatprep.subr.mxu0 0.0
      %5256 = vmatpush2.msra.mxu0 0.0
      %5257 = vmatprep.subr.mxu0 0.0
      %5258 = vmatpush2.msra.mxu0 0.0
      %5259 = vmatprep.subr.mxu0 0.0
      %5260 = vmatpush2.msra.mxu0 %v5161
      %5261 = vmatprep.subr.mxu0 0.0
      %5262 = vmatpush2.msra.mxu0 %v5160
      %5263 = vmatprep.mubr.f32.mxu0 %v5170
      %5264 = vmatmul.mubr.f32.gmra.mxu0 %v5134
      %v5265 = vpop.f32.mrf.mxu0
      %v5266 = vadd.f32 %v5167, %v5265
      %v5267 = vpop.f32.mrf.mxu0
      %5268 = vmatprep.mubr.f32.mxu0 %v5173
      %5269 = vmatmul.mubr.f32.gmra.mxu0 %v5135
      %v5270 = vpop.f32.mrf.mxu0
      %v5271 = vadd.f32 %v5167, %v5270
      %v5272 = vpop.f32.mrf.mxu0
      %5273 = vmatprep.mubr.f32.mxu0 %v5176
      %5274 = vmatmul.mubr.f32.gmra.mxu0 %v5136
      %v5275 = vpop.f32.mrf.mxu0
      %v5276 = vadd.f32 %v5167, %v5275
      %v5277 = vpop.f32.mrf.mxu0
      %5278 = vmatprep.mubr.f32.mxu0 %v5179
      %5279 = vmatmul.mubr.f32.gmra.mxu0 %v5137
      %v5280 = vpop.f32.mrf.mxu0
      %v5281 = vadd.f32 %v5167, %v5280
      %v5282 = vpop.f32.mrf.mxu0
      %5283 = vmatprep.mubr.f32.mxu0 %v5182
      %5284 = vmatmul.mubr.f32.gmra.mxu0 %v5138
      %v5285 = vpop.f32.mrf.mxu0
      %v5286 = vadd.f32 %v5167, %v5285
      %v5287 = vpop.f32.mrf.mxu0
      %5288 = vmatprep.mubr.f32.mxu0 %v5185
      %5289 = vmatmul.mubr.f32.gmra.mxu0 %v5139
      %v5290 = vpop.f32.mrf.mxu0
      %v5291 = vadd.f32 %v5167, %v5290
      %v5292 = vpop.f32.mrf.mxu0
      %5293 = vmatprep.mubr.f32.mxu0 %v5188
      %5294 = vmatmul.mubr.f32.gmra.mxu0 %v5140
      %v5295 = vpop.f32.mrf.mxu0
      %v5296 = vadd.f32 %v5167, %v5295
      %v5297 = vpop.f32.mrf.mxu0
      %5298 = vmatprep.mubr.f32.mxu0 %v5191
      %5299 = vmatmul.mubr.f32.gmra.mxu0 %v5141
      %v5300 = vpop.f32.mrf.mxu0
      %v5301 = vadd.f32 %v5167, %v5300
      %v5302 = vpop.f32.mrf.mxu0
      %5303 = vmatprep.mubr.f32.mxu0 %v5194
      %5304 = vmatmul.mubr.f32.gmra.mxu0 %v5142
      %v5305 = vpop.f32.mrf.mxu0
      %v5306 = vadd.f32 %v5167, %v5305
      %v5307 = vpop.f32.mrf.mxu0
      %5308 = vmatprep.mubr.f32.mxu0 %v5197
      %5309 = vmatmul.mubr.f32.gmra.mxu0 %v5143
      %v5310 = vpop.f32.mrf.mxu0
      %v5311 = vadd.f32 %v5167, %v5310
      %v5312 = vpop.f32.mrf.mxu0
      %5313 = vdwg.mxu0
      %v5314 = vmax.f32 %v5266, 0.0
      %v5315 = vmax.f32 %v5271, 0.0
      %v5316 = vmax.f32 %v5276, 0.0
      %v5317 = vmax.f32 %v5281, 0.0
      %v5318 = vmax.f32 %v5286, 0.0
      %v5319 = vmax.f32 %v5291, 0.0
      %v5320 = vmax.f32 %v5296, 0.0
      %v5321 = vmax.f32 %v5301, 0.0
      %v5322 = vmax.f32 %v5306, 0.0
      %v5323 = vmax.f32 %v5311, 0.0
      %v5324 = vld [vmem:[%s39] sm:$0xff]
      %v5325 = vld [vmem:[%s39 + $0x8] sm:$0xff]
      %v5326 = vld [vmem:[%s41] sm:$0x1]
      %v5328 = vlaneseq
      %v5329 = vshrl.u32 %v5328, 7
      %v5330 = vsub.s32 0, %v5329
      %v5331 = vrot.slane %v5326, %v5330
      %v5334 = vsel %vm2025, %v5314, 0
      %v5337 = vsel %vm2025, %v5315, 0
      %v5340 = vsel %vm2025, %v5316, 0
      %v5343 = vsel %vm2025, %v5317, 0
      %v5346 = vsel %vm2025, %v5318, 0
      %v5349 = vsel %vm2025, %v5319, 0
      %v5352 = vsel %vm2025, %v5320, 0
      %v5355 = vsel %vm2025, %v5321, 0
      %v5358 = vsel %vm2025, %v5322, 0
      %v5361 = vsel %vm2025, %v5323, 0
      %5363 = vmatprep.subr.mxu0 0.0
      %5364 = vmatpush1.msra.mxu0 0.0
      %5365 = vmatprep.subr.mxu0 0.0
      %5366 = vmatpush1.msra.mxu0 0.0
      %5367 = vmatprep.subr.mxu0 0.0
      %5368 = vmatpush1.msra.mxu0 0.0
      %5369 = vmatprep.subr.mxu0 0.0
      %5370 = vmatpush1.msra.mxu0 0.0
      %5371 = vmatprep.subr.mxu0 0.0
      %5372 = vmatpush1.msra.mxu0 0.0
      %5373 = vmatprep.subr.mxu0 0.0
      %5374 = vmatpush1.msra.mxu0 0.0
      %5375 = vmatprep.subr.mxu0 0.0
      %5376 = vmatpush1.msra.mxu0 0.0
      %5377 = vmatprep.subr.mxu0 0.0
      %5378 = vmatpush1.msra.mxu0 0.0
      %5379 = vmatprep.subr.mxu0 0.0
      %5380 = vmatpush1.msra.mxu0 0.0
      %5381 = vmatprep.subr.mxu0 0.0
      %5382 = vmatpush1.msra.mxu0 0.0
      %5383 = vmatprep.subr.mxu0 0.0
      %5384 = vmatpush1.msra.mxu0 0.0
      %5385 = vmatprep.subr.mxu0 0.0
      %5386 = vmatpush1.msra.mxu0 0.0
      %5387 = vmatprep.subr.mxu0 0.0
      %5388 = vmatpush1.msra.mxu0 0.0
      %5389 = vmatprep.subr.mxu0 0.0
      %5390 = vmatpush1.msra.mxu0 0.0
      %5391 = vmatprep.subr.mxu0 0.0
      %5392 = vmatpush1.msra.mxu0 %v5325
      %5393 = vmatprep.subr.mxu0 0.0
      %5394 = vmatpush1.msra.mxu0 %v5324
      %5395 = vmatprep.subr.mxu0 0.0
      %5396 = vmatpush2.msra.mxu0 0.0
      %5397 = vmatprep.subr.mxu0 0.0
      %5398 = vmatpush2.msra.mxu0 0.0
      %5399 = vmatprep.subr.mxu0 0.0
      %5400 = vmatpush2.msra.mxu0 0.0
      %5401 = vmatprep.subr.mxu0 0.0
      %5402 = vmatpush2.msra.mxu0 0.0
      %5403 = vmatprep.subr.mxu0 0.0
      %5404 = vmatpush2.msra.mxu0 0.0
      %5405 = vmatprep.subr.mxu0 0.0
      %5406 = vmatpush2.msra.mxu0 0.0
      %5407 = vmatprep.subr.mxu0 0.0
      %5408 = vmatpush2.msra.mxu0 0.0
      %5409 = vmatprep.subr.mxu0 0.0
      %5410 = vmatpush2.msra.mxu0 0.0
      %5411 = vmatprep.subr.mxu0 0.0
      %5412 = vmatpush2.msra.mxu0 0.0
      %5413 = vmatprep.subr.mxu0 0.0
      %5414 = vmatpush2.msra.mxu0 0.0
      %5415 = vmatprep.subr.mxu0 0.0
      %5416 = vmatpush2.msra.mxu0 0.0
      %5417 = vmatprep.subr.mxu0 0.0
      %5418 = vmatpush2.msra.mxu0 0.0
      %5419 = vmatprep.subr.mxu0 0.0
      %5420 = vmatpush2.msra.mxu0 0.0
      %5421 = vmatprep.subr.mxu0 0.0
      %5422 = vmatpush2.msra.mxu0 0.0
      %5423 = vmatprep.subr.mxu0 0.0
      %5424 = vmatpush2.msra.mxu0 0.0
      %5425 = vmatprep.subr.mxu0 0.0
      %5426 = vmatpush2.msra.mxu0 0.0
      %5427 = vmatprep.mubr.f32.mxu0 0.0
      %5428 = vmatmul.mubr.f32.gmra.mxu0 %v5334
      %v5429 = vpop.f32.mrf.mxu0
      %v5430 = vadd.f32 %v5331, %v5429
      %v5431 = vpop.f32.mrf.mxu0
      %5432 = vmatprep.mubr.f32.mxu0 0.0
      %5433 = vmatmul.mubr.f32.gmra.mxu0 %v5337
      %v5434 = vpop.f32.mrf.mxu0
      %v5435 = vadd.f32 %v5331, %v5434
      %v5436 = vpop.f32.mrf.mxu0
      %5437 = vmatprep.mubr.f32.mxu0 0.0
      %5438 = vmatmul.mubr.f32.gmra.mxu0 %v5340
      %v5439 = vpop.f32.mrf.mxu0
      %v5440 = vadd.f32 %v5331, %v5439
      %v5441 = vpop.f32.mrf.mxu0
      %5442 = vmatprep.mubr.f32.mxu0 0.0
      %5443 = vmatmul.mubr.f32.gmra.mxu0 %v5343
      %v5444 = vpop.f32.mrf.mxu0
      %v5445 = vadd.f32 %v5331, %v5444
      %v5446 = vpop.f32.mrf.mxu0
      %5447 = vmatprep.mubr.f32.mxu0 0.0
      %5448 = vmatmul.mubr.f32.gmra.mxu0 %v5346
      %v5449 = vpop.f32.mrf.mxu0
      %v5450 = vadd.f32 %v5331, %v5449
      %v5451 = vpop.f32.mrf.mxu0
      %5452 = vmatprep.mubr.f32.mxu0 0.0
      %5453 = vmatmul.mubr.f32.gmra.mxu0 %v5349
      %v5454 = vpop.f32.mrf.mxu0
      %v5455 = vadd.f32 %v5331, %v5454
      %v5456 = vpop.f32.mrf.mxu0
      %5457 = vmatprep.mubr.f32.mxu0 0.0
      %5458 = vmatmul.mubr.f32.gmra.mxu0 %v5352
      %v5459 = vpop.f32.mrf.mxu0
      %v5460 = vadd.f32 %v5331, %v5459
      %v5461 = vpop.f32.mrf.mxu0
      %5462 = vmatprep.mubr.f32.mxu0 0.0
      %5463 = vmatmul.mubr.f32.gmra.mxu0 %v5355
      %v5464 = vpop.f32.mrf.mxu0
      %v5465 = vadd.f32 %v5331, %v5464
      %v5466 = vpop.f32.mrf.mxu0
      %5467 = vmatprep.mubr.f32.mxu0 0.0
      %5468 = vmatmul.mubr.f32.gmra.mxu0 %v5358
      %v5469 = vpop.f32.mrf.mxu0
      %v5470 = vadd.f32 %v5331, %v5469
      %v5471 = vpop.f32.mrf.mxu0
      %5472 = vmatprep.mubr.f32.mxu0 0.0
      %5473 = vmatmul.mubr.f32.gmra.mxu0 %v5361
      %v5474 = vpop.f32.mrf.mxu0
      %v5475 = vadd.f32 %v5331, %v5474
      %v5476 = vpop.f32.mrf.mxu0
      %5477 = vdwg.mxu0
      %v5478 = vld [vmem:[#allocation5 + $0xb] sm:$0xff]
      %v5479 = vld [vmem:[#allocation5 + $0x13] sm:$0xff]
      %v5480 = vld [vmem:[#allocation5 + $0x1b] sm:$0xff]
      %v5481 = vld [vmem:[#allocation5 + $0x23] sm:$0xff]
      %v5482 = vld [vmem:[#allocation5 + $0x2b] sm:$0xff]
      %v5483 = vld [vmem:[#allocation5 + $0x33] sm:$0xff]
      %v5484 = vld [vmem:[#allocation5 + $0x3b] sm:$0xff]
      %v5485 = vld [vmem:[#allocation5 + $0x43] sm:$0xff]
      %v5486 = vld [vmem:[#allocation5 + $0x4b] sm:$0xff]
      %v5487 = vld [vmem:[#allocation5 + $0x53] sm:$0x3f]
      %v5488 = vld [vmem:[%s43] sm:$0xff]
      %v5489 = vld [vmem:[%s43 + $0x8] sm:$0xff]
      %v5490 = vld [vmem:[%s43 + $0x10] sm:$0xff]
      %v5491 = vld [vmem:[%s43 + $0x18] sm:$0xff]
      %v5492 = vld [vmem:[%s45] sm:$0x1]
      %v5494 = vlaneseq
      %v5495 = vshrl.u32 %v5494, 7
      %v5496 = vsub.s32 0, %v5495
      %v5497 = vrot.slane %v5492, %v5496
      %v5500 = vsel %vm3658, %v5478, 0
      %v5503 = vsel %vm3658, %v5479, 0
      %v5506 = vsel %vm3658, %v5480, 0
      %v5509 = vsel %vm3658, %v5481, 0
      %v5512 = vsel %vm3658, %v5482, 0
      %v5515 = vsel %vm3658, %v5483, 0
      %v5518 = vsel %vm3658, %v5484, 0
      %v5521 = vsel %vm3658, %v5485, 0
      %v5524 = vsel %vm3658, %v5486, 0
      %v5527 = vsel %vm3658, %v5487, 0
      %5529 = vmatprep.subr.mxu0 0.0
      %5530 = vmatpush1.msra.mxu0 0.0
      %5531 = vmatprep.subr.mxu0 0.0
      %5532 = vmatpush1.msra.mxu0 0.0
      %5533 = vmatprep.subr.mxu0 0.0
      %5534 = vmatpush1.msra.mxu0 0.0
      %5535 = vmatprep.subr.mxu0 0.0
      %5536 = vmatpush1.msra.mxu0 0.0
      %5537 = vmatprep.subr.mxu0 0.0
      %5538 = vmatpush1.msra.mxu0 0.0
      %5539 = vmatprep.subr.mxu0 0.0
      %5540 = vmatpush1.msra.mxu0 0.0
      %5541 = vmatprep.subr.mxu0 0.0
      %5542 = vmatpush1.msra.mxu0 0.0
      %5543 = vmatprep.subr.mxu0 0.0
      %5544 = vmatpush1.msra.mxu0 0.0
      %5545 = vmatprep.subr.mxu0 0.0
      %5546 = vmatpush1.msra.mxu0 0.0
      %5547 = vmatprep.subr.mxu0 0.0
      %5548 = vmatpush1.msra.mxu0 0.0
      %5549 = vmatprep.subr.mxu0 0.0
      %5550 = vmatpush1.msra.mxu0 0.0
      %5551 = vmatprep.subr.mxu0 0.0
      %5552 = vmatpush1.msra.mxu0 0.0
      %5553 = vmatprep.subr.mxu0 0.0
      %5554 = vmatpush1.msra.mxu0 %v5491
      %5555 = vmatprep.subr.mxu0 0.0
      %5556 = vmatpush1.msra.mxu0 %v5490
      %5557 = vmatprep.subr.mxu0 0.0
      %5558 = vmatpush1.msra.mxu0 %v5489
      %5559 = vmatprep.subr.mxu0 0.0
      %5560 = vmatpush1.msra.mxu0 %v5488
      %5561 = vmatprep.subr.mxu0 0.0
      %5562 = vmatpush2.msra.mxu0 0.0
      %5563 = vmatprep.subr.mxu0 0.0
      %5564 = vmatpush2.msra.mxu0 0.0
      %5565 = vmatprep.subr.mxu0 0.0
      %5566 = vmatpush2.msra.mxu0 0.0
      %5567 = vmatprep.subr.mxu0 0.0
      %5568 = vmatpush2.msra.mxu0 0.0
      %5569 = vmatprep.subr.mxu0 0.0
      %5570 = vmatpush2.msra.mxu0 0.0
      %5571 = vmatprep.subr.mxu0 0.0
      %5572 = vmatpush2.msra.mxu0 0.0
      %5573 = vmatprep.subr.mxu0 0.0
      %5574 = vmatpush2.msra.mxu0 0.0
      %5575 = vmatprep.subr.mxu0 0.0
      %5576 = vmatpush2.msra.mxu0 0.0
      %5577 = vmatprep.subr.mxu0 0.0
      %5578 = vmatpush2.msra.mxu0 0.0
      %5579 = vmatprep.subr.mxu0 0.0
      %5580 = vmatpush2.msra.mxu0 0.0
      %5581 = vmatprep.subr.mxu0 0.0
      %5582 = vmatpush2.msra.mxu0 0.0
      %5583 = vmatprep.subr.mxu0 0.0
      %5584 = vmatpush2.msra.mxu0 0.0
      %5585 = vmatprep.subr.mxu0 0.0
      %5586 = vmatpush2.msra.mxu0 0.0
      %5587 = vmatprep.subr.mxu0 0.0
      %5588 = vmatpush2.msra.mxu0 0.0
      %5589 = vmatprep.subr.mxu0 0.0
      %5590 = vmatpush2.msra.mxu0 0.0
      %5591 = vmatprep.subr.mxu0 0.0
      %5592 = vmatpush2.msra.mxu0 0.0
      %5593 = vmatprep.mubr.f32.mxu0 0.0
      %5594 = vmatmul.mubr.f32.gmra.mxu0 %v5500
      %v5595 = vpop.f32.mrf.mxu0
      %v5596 = vadd.f32 %v5497, %v5595
      %v5597 = vpop.f32.mrf.mxu0
      %5598 = vmatprep.mubr.f32.mxu0 0.0
      %5599 = vmatmul.mubr.f32.gmra.mxu0 %v5503
      %v5600 = vpop.f32.mrf.mxu0
      %v5601 = vadd.f32 %v5497, %v5600
      %v5602 = vpop.f32.mrf.mxu0
      %5603 = vmatprep.mubr.f32.mxu0 0.0
      %5604 = vmatmul.mubr.f32.gmra.mxu0 %v5506
      %v5605 = vpop.f32.mrf.mxu0
      %v5606 = vadd.f32 %v5497, %v5605
      %v5607 = vpop.f32.mrf.mxu0
      %5608 = vmatprep.mubr.f32.mxu0 0.0
      %5609 = vmatmul.mubr.f32.gmra.mxu0 %v5509
      %v5610 = vpop.f32.mrf.mxu0
      %v5611 = vadd.f32 %v5497, %v5610
      %v5612 = vpop.f32.mrf.mxu0
      %5613 = vmatprep.mubr.f32.mxu0 0.0
      %5614 = vmatmul.mubr.f32.gmra.mxu0 %v5512
      %v5615 = vpop.f32.mrf.mxu0
      %v5616 = vadd.f32 %v5497, %v5615
      %v5617 = vpop.f32.mrf.mxu0
      %5618 = vmatprep.mubr.f32.mxu0 0.0
      %5619 = vmatmul.mubr.f32.gmra.mxu0 %v5515
      %v5620 = vpop.f32.mrf.mxu0
      %v5621 = vadd.f32 %v5497, %v5620
      %v5622 = vpop.f32.mrf.mxu0
      %5623 = vmatprep.mubr.f32.mxu0 0.0
      %5624 = vmatmul.mubr.f32.gmra.mxu0 %v5518
      %v5625 = vpop.f32.mrf.mxu0
      %v5626 = vadd.f32 %v5497, %v5625
      %v5627 = vpop.f32.mrf.mxu0
      %5628 = vmatprep.mubr.f32.mxu0 0.0
      %5629 = vmatmul.mubr.f32.gmra.mxu0 %v5521
      %v5630 = vpop.f32.mrf.mxu0
      %v5631 = vadd.f32 %v5497, %v5630
      %v5632 = vpop.f32.mrf.mxu0
      %5633 = vmatprep.mubr.f32.mxu0 0.0
      %5634 = vmatmul.mubr.f32.gmra.mxu0 %v5524
      %v5635 = vpop.f32.mrf.mxu0
      %v5636 = vadd.f32 %v5497, %v5635
      %v5637 = vpop.f32.mrf.mxu0
      %5638 = vmatprep.mubr.f32.mxu0 0.0
      %5639 = vmatmul.mubr.f32.gmra.mxu0 %v5527
      %v5640 = vpop.f32.mrf.mxu0
      %v5641 = vadd.f32 %v5497, %v5640
      %v5642 = vpop.f32.mrf.mxu0
      %5643 = vdwg.mxu0
      %v5644 = vadd.f32 %v5430, %v5596
      %v5645 = vadd.f32 %v5435, %v5601
      %v5646 = vadd.f32 %v5440, %v5606
      %v5647 = vadd.f32 %v5445, %v5611
      %v5648 = vadd.f32 %v5450, %v5616
      %v5649 = vadd.f32 %v5455, %v5621
      %v5650 = vadd.f32 %v5460, %v5626
      %v5651 = vadd.f32 %v5465, %v5631
      %v5652 = vadd.f32 %v5470, %v5636
      %v5653 = vadd.f32 %v5475, %v5641
      %v5654 = vmax.f32 %v5644, 0.0
      %v5655 = vmax.f32 %v5645, 0.0
      %v5656 = vmax.f32 %v5646, 0.0
      %v5657 = vmax.f32 %v5647, 0.0
      %v5658 = vmax.f32 %v5648, 0.0
      %v5659 = vmax.f32 %v5649, 0.0
      %v5660 = vmax.f32 %v5650, 0.0
      %v5661 = vmax.f32 %v5651, 0.0
      %v5662 = vmax.f32 %v5652, 0.0
      %v5663 = vmax.f32 %v5653, 0.0
      %v5664 = vld [vmem:[%s47] sm:$0xff]
      %v5665 = vld [vmem:[%s47 + $0x8] sm:$0xff]
      %v5667 = vsel %vm4235, %v5664, 0
      %v5670 = vsel %vm4235, %v5665, 0
      %v5673 = vsel %vm4275, %v5663, 0
      %5675 = vmatprep.subr.mxu0 0.0
      %5676 = vmatpush1.msra.mxu0 0.0
      %5677 = vmatprep.subr.mxu0 0.0
      %5678 = vmatpush1.msra.mxu0 0.0
      %5679 = vmatprep.subr.mxu0 0.0
      %5680 = vmatpush1.msra.mxu0 0.0
      %5681 = vmatprep.subr.mxu0 0.0
      %5682 = vmatpush1.msra.mxu0 0.0
      %5683 = vmatprep.subr.mxu0 0.0
      %5684 = vmatpush1.msra.mxu0 0.0
      %5685 = vmatprep.subr.mxu0 0.0
      %5686 = vmatpush1.msra.mxu0 0.0
      %5687 = vmatprep.subr.mxu0 0.0
      %5688 = vmatpush1.msra.mxu0 %v5673
      %5689 = vmatprep.subr.mxu0 0.0
      %5690 = vmatpush1.msra.mxu0 %v5662
      %5691 = vmatprep.subr.mxu0 0.0
      %5692 = vmatpush1.msra.mxu0 %v5661
      %5693 = vmatprep.subr.mxu0 0.0
      %5694 = vmatpush1.msra.mxu0 %v5660
      %5695 = vmatprep.subr.mxu0 0.0
      %5696 = vmatpush1.msra.mxu0 %v5659
      %5697 = vmatprep.subr.mxu0 0.0
      %5698 = vmatpush1.msra.mxu0 %v5658
      %5699 = vmatprep.subr.mxu0 0.0
      %5700 = vmatpush1.msra.mxu0 %v5657
      %5701 = vmatprep.subr.mxu0 0.0
      %5702 = vmatpush1.msra.mxu0 %v5656
      %5703 = vmatprep.subr.mxu0 0.0
      %5704 = vmatpush1.msra.mxu0 %v5655
      %5705 = vmatprep.subr.mxu0 0.0
      %5706 = vmatpush1.msra.mxu0 %v5654
      %5707 = vmatprep.subr.mxu0 0.0
      %5708 = vmatpush2.msra.mxu0 0.0
      %5709 = vmatprep.subr.mxu0 0.0
      %5710 = vmatpush2.msra.mxu0 0.0
      %5711 = vmatprep.subr.mxu0 0.0
      %5712 = vmatpush2.msra.mxu0 0.0
      %5713 = vmatprep.subr.mxu0 0.0
      %5714 = vmatpush2.msra.mxu0 0.0
      %5715 = vmatprep.subr.mxu0 0.0
      %5716 = vmatpush2.msra.mxu0 0.0
      %5717 = vmatprep.subr.mxu0 0.0
      %5718 = vmatpush2.msra.mxu0 0.0
      %5719 = vmatprep.subr.mxu0 0.0
      %5720 = vmatpush2.msra.mxu0 0.0
      %5721 = vmatprep.subr.mxu0 0.0
      %5722 = vmatpush2.msra.mxu0 0.0
      %5723 = vmatprep.subr.mxu0 0.0
      %5724 = vmatpush2.msra.mxu0 0.0
      %5725 = vmatprep.subr.mxu0 0.0
      %5726 = vmatpush2.msra.mxu0 0.0
      %5727 = vmatprep.subr.mxu0 0.0
      %5728 = vmatpush2.msra.mxu0 0.0
      %5729 = vmatprep.subr.mxu0 0.0
      %5730 = vmatpush2.msra.mxu0 0.0
      %5731 = vmatprep.subr.mxu0 0.0
      %5732 = vmatpush2.msra.mxu0 0.0
      %5733 = vmatprep.subr.mxu0 0.0
      %5734 = vmatpush2.msra.mxu0 0.0
      %5735 = vmatprep.subr.mxu0 0.0
      %5736 = vmatpush2.msra.mxu0 0.0
      %5737 = vmatprep.subr.mxu0 0.0
      %5738 = vmatpush2.msra.mxu0 0.0
      %5739 = vmatprep.mubr.f32.mxu0 0.0
      %5740 = vmatmul.mubr.f32.gmra.mxu0 %v5667
      %v5741 = vpop.f32.mrf.mxu0
      %v5742 = vadd.f32 0.0, %v5741
      %v5743 = vpop.f32.mrf.mxu0
      %5744 = vmatprep.mubr.f32.mxu0 0.0
      %5745 = vmatmul.mubr.f32.gmra.mxu0 %v5670
      %v5746 = vpop.f32.mrf.mxu0
      %v5747 = vadd.f32 0.0, %v5746
      %v5748 = vpop.f32.mrf.mxu0
      %5749 = vdwg.mxu0
      %v5750 = vld [vmem:[%s49] sm:$0xff]
      %v5751 = vld [vmem:[%s49 + $0x8] sm:$0xff]
      %v5752 = vld [vmem:[%s49 + $0x10] sm:$0xff]
      %v5753 = vld [vmem:[%s49 + $0x18] sm:$0xff]
      %v5754 = vld [vmem:[%s49 + $0x20] sm:$0xff]
      %v5755 = vld [vmem:[%s49 + $0x28] sm:$0xff]
      %v5756 = vld [vmem:[%s49 + $0x30] sm:$0xff]
      %v5757 = vld [vmem:[%s49 + $0x38] sm:$0xff]
      %v5758 = vld [vmem:[%s51] sm:$0x1]
      %v5760 = vlaneseq
      %v5761 = vshrl.u32 %v5760, 7
      %v5762 = vsub.s32 0, %v5761
      %v5763 = vrot.slane %v5758, %v5762
      %v5766 = vsel %vm3702, %v5742, 0
      %v5769 = vsel %vm3702, %v5747, 0
      %5771 = vmatprep.subr.mxu0 0.0
      %5772 = vmatpush1.msra.mxu0 0.0
      %5773 = vmatprep.subr.mxu0 0.0
      %5774 = vmatpush1.msra.mxu0 0.0
      %5775 = vmatprep.subr.mxu0 0.0
      %5776 = vmatpush1.msra.mxu0 0.0
      %5777 = vmatprep.subr.mxu0 0.0
      %5778 = vmatpush1.msra.mxu0 0.0
      %5779 = vmatprep.subr.mxu0 0.0
      %5780 = vmatpush1.msra.mxu0 0.0
      %5781 = vmatprep.subr.mxu0 0.0
      %5782 = vmatpush1.msra.mxu0 0.0
      %5783 = vmatprep.subr.mxu0 0.0
      %5784 = vmatpush1.msra.mxu0 0.0
      %5785 = vmatprep.subr.mxu0 0.0
      %5786 = vmatpush1.msra.mxu0 0.0
      %5787 = vmatprep.subr.mxu0 0.0
      %5788 = vmatpush1.msra.mxu0 %v5757
      %5789 = vmatprep.subr.mxu0 0.0
      %5790 = vmatpush1.msra.mxu0 %v5756
      %5791 = vmatprep.subr.mxu0 0.0
      %5792 = vmatpush1.msra.mxu0 %v5755
      %5793 = vmatprep.subr.mxu0 0.0
      %5794 = vmatpush1.msra.mxu0 %v5754
      %5795 = vmatprep.subr.mxu0 0.0
      %5796 = vmatpush1.msra.mxu0 %v5753
      %5797 = vmatprep.subr.mxu0 0.0
      %5798 = vmatpush1.msra.mxu0 %v5752
      %5799 = vmatprep.subr.mxu0 0.0
      %5800 = vmatpush1.msra.mxu0 %v5751
      %5801 = vmatprep.subr.mxu0 0.0
      %5802 = vmatpush1.msra.mxu0 %v5750
      %5803 = vmatprep.subr.mxu0 0.0
      %5804 = vmatpush2.msra.mxu0 0.0
      %5805 = vmatprep.subr.mxu0 0.0
      %5806 = vmatpush2.msra.mxu0 0.0
      %5807 = vmatprep.subr.mxu0 0.0
      %5808 = vmatpush2.msra.mxu0 0.0
      %5809 = vmatprep.subr.mxu0 0.0
      %5810 = vmatpush2.msra.mxu0 0.0
      %5811 = vmatprep.subr.mxu0 0.0
      %5812 = vmatpush2.msra.mxu0 0.0
      %5813 = vmatprep.subr.mxu0 0.0
      %5814 = vmatpush2.msra.mxu0 0.0
      %5815 = vmatprep.subr.mxu0 0.0
      %5816 = vmatpush2.msra.mxu0 0.0
      %5817 = vmatprep.subr.mxu0 0.0
      %5818 = vmatpush2.msra.mxu0 0.0
      %5819 = vmatprep.subr.mxu0 0.0
      %5820 = vmatpush2.msra.mxu0 0.0
      %5821 = vmatprep.subr.mxu0 0.0
      %5822 = vmatpush2.msra.mxu0 0.0
      %5823 = vmatprep.subr.mxu0 0.0
      %5824 = vmatpush2.msra.mxu0 0.0
      %5825 = vmatprep.subr.mxu0 0.0
      %5826 = vmatpush2.msra.mxu0 0.0
      %5827 = vmatprep.subr.mxu0 0.0
      %5828 = vmatpush2.msra.mxu0 0.0
      %5829 = vmatprep.subr.mxu0 0.0
      %5830 = vmatpush2.msra.mxu0 0.0
      %5831 = vmatprep.subr.mxu0 0.0
      %5832 = vmatpush2.msra.mxu0 0.0
      %5833 = vmatprep.subr.mxu0 0.0
      %5834 = vmatpush2.msra.mxu0 0.0
      %5835 = vmatprep.mubr.f32.mxu0 0.0
      %5836 = vmatmul.mubr.f32.gmra.mxu0 %v5766
      %v5837 = vpop.f32.mrf.mxu0
      %v5838 = vadd.f32 %v5763, %v5837
      %v5839 = vpop.f32.mrf.mxu0
      %5840 = vmatprep.mubr.f32.mxu0 0.0
      %5841 = vmatmul.mubr.f32.gmra.mxu0 %v5769
      %v5842 = vpop.f32.mrf.mxu0
      %v5843 = vadd.f32 %v5763, %v5842
      %v5844 = vpop.f32.mrf.mxu0
      %5845 = vdwg.mxu0
      %v5846 = vmax.f32 %v5838, 0.0
      %v5847 = vmax.f32 %v5843, 0.0
      %v5848 = vld [vmem:[%s53] sm:$0x1]
      %v5850 = vsel %vm2025, %v5848, 0
      %5852 = vmatprep.subr.mxu0 0.0
      %5853 = vmatpush1.msra.mxu0 0.0
      %5854 = vmatprep.subr.mxu0 0.0
      %5855 = vmatpush1.msra.mxu0 0.0
      %5856 = vmatprep.subr.mxu0 0.0
      %5857 = vmatpush1.msra.mxu0 0.0
      %5858 = vmatprep.subr.mxu0 0.0
      %5859 = vmatpush1.msra.mxu0 0.0
      %5860 = vmatprep.subr.mxu0 0.0
      %5861 = vmatpush1.msra.mxu0 0.0
      %5862 = vmatprep.subr.mxu0 0.0
      %5863 = vmatpush1.msra.mxu0 0.0
      %5864 = vmatprep.subr.mxu0 0.0
      %5865 = vmatpush1.msra.mxu0 0.0
      %5866 = vmatprep.subr.mxu0 0.0
      %5867 = vmatpush1.msra.mxu0 0.0
      %5868 = vmatprep.subr.mxu0 0.0
      %5869 = vmatpush1.msra.mxu0 0.0
      %5870 = vmatprep.subr.mxu0 0.0
      %5871 = vmatpush1.msra.mxu0 0.0
      %5872 = vmatprep.subr.mxu0 0.0
      %5873 = vmatpush1.msra.mxu0 0.0
      %5874 = vmatprep.subr.mxu0 0.0
      %5875 = vmatpush1.msra.mxu0 0.0
      %5876 = vmatprep.subr.mxu0 0.0
      %5877 = vmatpush1.msra.mxu0 0.0
      %5878 = vmatprep.subr.mxu0 0.0
      %5879 = vmatpush1.msra.mxu0 0.0
      %5880 = vmatprep.subr.mxu0 0.0
      %5881 = vmatpush1.msra.mxu0 %v5747
      %5882 = vmatprep.subr.mxu0 0.0
      %5883 = vmatpush1.msra.mxu0 %v5742
      %5884 = vmatprep.subr.mxu0 0.0
      %5885 = vmatpush2.msra.mxu0 0.0
      %5886 = vmatprep.subr.mxu0 0.0
      %5887 = vmatpush2.msra.mxu0 0.0
      %5888 = vmatprep.subr.mxu0 0.0
      %5889 = vmatpush2.msra.mxu0 0.0
      %5890 = vmatprep.subr.mxu0 0.0
      %5891 = vmatpush2.msra.mxu0 0.0
      %5892 = vmatprep.subr.mxu0 0.0
      %5893 = vmatpush2.msra.mxu0 0.0
      %5894 = vmatprep.subr.mxu0 0.0
      %5895 = vmatpush2.msra.mxu0 0.0
      %5896 = vmatprep.subr.mxu0 0.0
      %5897 = vmatpush2.msra.mxu0 0.0
      %5898 = vmatprep.subr.mxu0 0.0
      %5899 = vmatpush2.msra.mxu0 0.0
      %5900 = vmatprep.subr.mxu0 0.0
      %5901 = vmatpush2.msra.mxu0 0.0
      %5902 = vmatprep.subr.mxu0 0.0
      %5903 = vmatpush2.msra.mxu0 0.0
      %5904 = vmatprep.subr.mxu0 0.0
      %5905 = vmatpush2.msra.mxu0 0.0
      %5906 = vmatprep.subr.mxu0 0.0
      %5907 = vmatpush2.msra.mxu0 0.0
      %5908 = vmatprep.subr.mxu0 0.0
      %5909 = vmatpush2.msra.mxu0 0.0
      %5910 = vmatprep.subr.mxu0 0.0
      %5911 = vmatpush2.msra.mxu0 0.0
      %5912 = vmatprep.subr.mxu0 0.0
      %5913 = vmatpush2.msra.mxu0 0.0
      %5914 = vmatprep.subr.mxu0 0.0
      %5915 = vmatpush2.msra.mxu0 0.0
      %5916 = vmatprep.mubr.f32.mxu0 0.0
      %5917 = vmatmul.mubr.f32.gmra.mxu0 %v5850
      %v5918 = vpop.f32.mrf.mxu0
      %v5919 = vadd.f32 0.0, %v5918
      %v5920 = vpop.f32.mrf.mxu0
      %5921 = vdwg.mxu0
      %v5922 = vld [vmem:[%s55] sm:$0xff]
      %v5923 = vld [vmem:[%s55 + $0x8] sm:$0xff]
      %v5924 = vld [vmem:[%s55 + $0x10] sm:$0xff]
      %v5925 = vld [vmem:[%s55 + $0x18] sm:$0xff]
      %v5926 = vld [vmem:[%s55 + $0x20] sm:$0xff]
      %v5927 = vld [vmem:[%s55 + $0x28] sm:$0xff]
      %v5928 = vld [vmem:[%s55 + $0x30] sm:$0xff]
      %v5929 = vld [vmem:[%s55 + $0x38] sm:$0xff]
      %v5930 = vld [vmem:[%s57] sm:$0x1]
      %v5932 = vsel %vm3702, %v5919, 0
      %5934 = vmatprep.subr.mxu0 0.0
      %5935 = vmatpush1.msra.mxu0 0.0
      %5936 = vmatprep.subr.mxu0 0.0
      %5937 = vmatpush1.msra.mxu0 0.0
      %5938 = vmatprep.subr.mxu0 0.0
      %5939 = vmatpush1.msra.mxu0 0.0
      %5940 = vmatprep.subr.mxu0 0.0
      %5941 = vmatpush1.msra.mxu0 0.0
      %5942 = vmatprep.subr.mxu0 0.0
      %5943 = vmatpush1.msra.mxu0 0.0
      %5944 = vmatprep.subr.mxu0 0.0
      %5945 = vmatpush1.msra.mxu0 0.0
      %5946 = vmatprep.subr.mxu0 0.0
      %5947 = vmatpush1.msra.mxu0 0.0
      %5948 = vmatprep.subr.mxu0 0.0
      %5949 = vmatpush1.msra.mxu0 0.0
      %5950 = vmatprep.subr.mxu0 0.0
      %5951 = vmatpush1.msra.mxu0 %v5929
      %5952 = vmatprep.subr.mxu0 0.0
      %5953 = vmatpush1.msra.mxu0 %v5928
      %5954 = vmatprep.subr.mxu0 0.0
      %5955 = vmatpush1.msra.mxu0 %v5927
      %5956 = vmatprep.subr.mxu0 0.0
      %5957 = vmatpush1.msra.mxu0 %v5926
      %5958 = vmatprep.subr.mxu0 0.0
      %5959 = vmatpush1.msra.mxu0 %v5925
      %5960 = vmatprep.subr.mxu0 0.0
      %5961 = vmatpush1.msra.mxu0 %v5924
      %5962 = vmatprep.subr.mxu0 0.0
      %5963 = vmatpush1.msra.mxu0 %v5923
      %5964 = vmatprep.subr.mxu0 0.0
      %5965 = vmatpush1.msra.mxu0 %v5922
      %5966 = vmatprep.subr.mxu0 0.0
      %5967 = vmatpush2.msra.mxu0 0.0
      %5968 = vmatprep.subr.mxu0 0.0
      %5969 = vmatpush2.msra.mxu0 0.0
      %5970 = vmatprep.subr.mxu0 0.0
      %5971 = vmatpush2.msra.mxu0 0.0
      %5972 = vmatprep.subr.mxu0 0.0
      %5973 = vmatpush2.msra.mxu0 0.0
      %5974 = vmatprep.subr.mxu0 0.0
      %5975 = vmatpush2.msra.mxu0 0.0
      %5976 = vmatprep.subr.mxu0 0.0
      %5977 = vmatpush2.msra.mxu0 0.0
      %5978 = vmatprep.subr.mxu0 0.0
      %5979 = vmatpush2.msra.mxu0 0.0
      %5980 = vmatprep.subr.mxu0 0.0
      %5981 = vmatpush2.msra.mxu0 0.0
      %5982 = vmatprep.subr.mxu0 0.0
      %5983 = vmatpush2.msra.mxu0 0.0
      %5984 = vmatprep.subr.mxu0 0.0
      %5985 = vmatpush2.msra.mxu0 0.0
      %5986 = vmatprep.subr.mxu0 0.0
      %5987 = vmatpush2.msra.mxu0 0.0
      %5988 = vmatprep.subr.mxu0 0.0
      %5989 = vmatpush2.msra.mxu0 0.0
      %5990 = vmatprep.subr.mxu0 0.0
      %5991 = vmatpush2.msra.mxu0 0.0
      %5992 = vmatprep.subr.mxu0 0.0
      %5993 = vmatpush2.msra.mxu0 0.0
      %5994 = vmatprep.subr.mxu0 0.0
      %5995 = vmatpush2.msra.mxu0 0.0
      %5996 = vmatprep.subr.mxu0 0.0
      %5997 = vmatpush2.msra.mxu0 0.0
      %5998 = vmatprep.mubr.f32.mxu0 0.0
      %5999 = vmatmul.mubr.f32.gmra.mxu0 %v5932
      %v6000 = vpop.f32.mrf.mxu0
      %v6001 = vadd.f32 %v5930, %v6000
      %v6002 = vpop.f32.mrf.mxu0
      %6003 = vdwg.mxu0
      %v6004 = vmax.f32 %v6001, 0.0
      %v6005 = vld [vmem:[%s59] sm:$0xff]
      %v6006 = vld [vmem:[%s59 + $0x8] sm:$0xff]
      %v6007 = vld [vmem:[%s59 + $0x10] sm:$0xff]
      %v6008 = vld [vmem:[%s59 + $0x18] sm:$0xff]
      %v6009 = vld [vmem:[%s59 + $0x20] sm:$0xff]
      %v6010 = vld [vmem:[%s59 + $0x28] sm:$0xff]
      %v6011 = vld [vmem:[%s59 + $0x30] sm:$0xff]
      %v6012 = vld [vmem:[%s59 + $0x38] sm:$0xff]
      %v6013 = vld [vmem:[%s59 + $0x40] sm:$0xff]
      %v6014 = vld [vmem:[%s59 + $0x48] sm:$0xff]
      %v6015 = vld [vmem:[%s59 + $0x50] sm:$0xff]
      %v6016 = vld [vmem:[%s59 + $0x58] sm:$0xff]
      %v6017 = vld [vmem:[%s59 + $0x60] sm:$0xff]
      %v6018 = vld [vmem:[%s59 + $0x68] sm:$0xff]
      %v6019 = vld [vmem:[%s59 + $0x70] sm:$0xff]
      %v6020 = vld [vmem:[%s59 + $0x78] sm:$0xff]
      %v6021 = vld [vmem:[%s59 + $0x80] sm:$0xff]
      %v6022 = vld [vmem:[%s59 + $0x88] sm:$0xff]
      %v6023 = vld [vmem:[%s59 + $0x90] sm:$0xff]
      %v6024 = vld [vmem:[%s59 + $0x98] sm:$0xff]
      %v6026 = vsel %vm3658, %v6004, 0
      %6028 = vmatprep.subr.mxu0 0.0
      %6029 = vmatpush1.msra.mxu0 0.0
      %6030 = vmatprep.subr.mxu0 0.0
      %6031 = vmatpush1.msra.mxu0 0.0
      %6032 = vmatprep.subr.mxu0 0.0
      %6033 = vmatpush1.msra.mxu0 0.0
      %6034 = vmatprep.subr.mxu0 0.0
      %6035 = vmatpush1.msra.mxu0 0.0
      %6036 = vmatprep.subr.mxu0 0.0
      %6037 = vmatpush1.msra.mxu0 0.0
      %6038 = vmatprep.subr.mxu0 0.0
      %6039 = vmatpush1.msra.mxu0 0.0
      %6040 = vmatprep.subr.mxu0 0.0
      %6041 = vmatpush1.msra.mxu0 0.0
      %6042 = vmatprep.subr.mxu0 0.0
      %6043 = vmatpush1.msra.mxu0 0.0
      %6044 = vmatprep.subr.mxu0 0.0
      %6045 = vmatpush1.msra.mxu0 0.0
      %6046 = vmatprep.subr.mxu0 0.0
      %6047 = vmatpush1.msra.mxu0 0.0
      %6048 = vmatprep.subr.mxu0 0.0
      %6049 = vmatpush1.msra.mxu0 0.0
      %6050 = vmatprep.subr.mxu0 0.0
      %6051 = vmatpush1.msra.mxu0 0.0
      %6052 = vmatprep.subr.mxu0 0.0
      %6053 = vmatpush1.msra.mxu0 %v6024
      %6054 = vmatprep.subr.mxu0 0.0
      %6055 = vmatpush1.msra.mxu0 %v6023
      %6056 = vmatprep.subr.mxu0 0.0
      %6057 = vmatpush1.msra.mxu0 %v6022
      %6058 = vmatprep.subr.mxu0 0.0
      %6059 = vmatpush1.msra.mxu0 %v6021
      %6060 = vmatprep.subr.mxu0 0.0
      %6061 = vmatpush2.msra.mxu0 0.0
      %6062 = vmatprep.subr.mxu0 0.0
      %6063 = vmatpush2.msra.mxu0 0.0
      %6064 = vmatprep.subr.mxu0 0.0
      %6065 = vmatpush2.msra.mxu0 0.0
      %6066 = vmatprep.subr.mxu0 0.0
      %6067 = vmatpush2.msra.mxu0 0.0
      %6068 = vmatprep.subr.mxu0 0.0
      %6069 = vmatpush2.msra.mxu0 0.0
      %6070 = vmatprep.subr.mxu0 0.0
      %6071 = vmatpush2.msra.mxu0 0.0
      %6072 = vmatprep.subr.mxu0 0.0
      %6073 = vmatpush2.msra.mxu0 0.0
      %6074 = vmatprep.subr.mxu0 0.0
      %6075 = vmatpush2.msra.mxu0 0.0
      %6076 = vmatprep.subr.mxu0 0.0
      %6077 = vmatpush2.msra.mxu0 0.0
      %6078 = vmatprep.subr.mxu0 0.0
      %6079 = vmatpush2.msra.mxu0 0.0
      %6080 = vmatprep.subr.mxu0 0.0
      %6081 = vmatpush2.msra.mxu0 0.0
      %6082 = vmatprep.subr.mxu0 0.0
      %6083 = vmatpush2.msra.mxu0 0.0
      %6084 = vmatprep.subr.mxu0 0.0
      %6085 = vmatpush2.msra.mxu0 0.0
      %6086 = vmatprep.subr.mxu0 0.0
      %6087 = vmatpush2.msra.mxu0 0.0
      %6088 = vmatprep.subr.mxu0 0.0
      %6089 = vmatpush2.msra.mxu0 0.0
      %6090 = vmatprep.subr.mxu0 0.0
      %6091 = vmatpush2.msra.mxu0 0.0
      %6092 = vmatprep.mubr.f32.mxu0 0.0
      %6093 = vmatmul.mubr.f32.gmra.mxu0 %v6026
      %v6094 = vpop.f32.mrf.mxu0
      %v6095 = vadd.f32 0.0, %v6094
      %v6096 = vpop.f32.mrf.mxu0
      %6097 = vdwg.mxu0
      %v6098 = vlaneseq
      %v6099 = vshrl.u32 %v6098, 7
      %v6100 = vsub.s32 0, %v6099
      %v6101 = vrot.slane %v6095, %v6100
      %6102 = vmatprep.subr.mxu0 0.0
      %6103 = vmatpush1.msra.mxu0 %v6020
      %6104 = vmatprep.subr.mxu0 0.0
      %6105 = vmatpush1.msra.mxu0 %v6019
      %6106 = vmatprep.subr.mxu0 0.0
      %6107 = vmatpush1.msra.mxu0 %v6018
      %6108 = vmatprep.subr.mxu0 0.0
      %6109 = vmatpush1.msra.mxu0 %v6017
      %6110 = vmatprep.subr.mxu0 0.0
      %6111 = vmatpush1.msra.mxu0 %v6016
      %6112 = vmatprep.subr.mxu0 0.0
      %6113 = vmatpush1.msra.mxu0 %v6015
      %6114 = vmatprep.subr.mxu0 0.0
      %6115 = vmatpush1.msra.mxu0 %v6014
      %6116 = vmatprep.subr.mxu0 0.0
      %6117 = vmatpush1.msra.mxu0 %v6013
      %6118 = vmatprep.subr.mxu0 0.0
      %6119 = vmatpush1.msra.mxu0 %v6012
      %6120 = vmatprep.subr.mxu0 0.0
      %6121 = vmatpush1.msra.mxu0 %v6011
      %6122 = vmatprep.subr.mxu0 0.0
      %6123 = vmatpush1.msra.mxu0 %v6010
      %6124 = vmatprep.subr.mxu0 0.0
      %6125 = vmatpush1.msra.mxu0 %v6009
      %6126 = vmatprep.subr.mxu0 0.0
      %6127 = vmatpush1.msra.mxu0 %v6008
      %6128 = vmatprep.subr.mxu0 0.0
      %6129 = vmatpush1.msra.mxu0 %v6007
      %6130 = vmatprep.subr.mxu0 0.0
      %6131 = vmatpush1.msra.mxu0 %v6006
      %6132 = vmatprep.subr.mxu0 0.0
      %6133 = vmatpush1.msra.mxu0 %v6005
      %6134 = vmatprep.subr.mxu0 0.0
      %6135 = vmatpush2.msra.mxu0 0.0
      %6136 = vmatprep.subr.mxu0 0.0
      %6137 = vmatpush2.msra.mxu0 0.0
      %6138 = vmatprep.subr.mxu0 0.0
      %6139 = vmatpush2.msra.mxu0 0.0
      %6140 = vmatprep.subr.mxu0 0.0
      %6141 = vmatpush2.msra.mxu0 0.0
      %6142 = vmatprep.subr.mxu0 0.0
      %6143 = vmatpush2.msra.mxu0 0.0
      %6144 = vmatprep.subr.mxu0 0.0
      %6145 = vmatpush2.msra.mxu0 0.0
      %6146 = vmatprep.subr.mxu0 0.0
      %6147 = vmatpush2.msra.mxu0 0.0
      %6148 = vmatprep.subr.mxu0 0.0
      %6149 = vmatpush2.msra.mxu0 0.0
      %6150 = vmatprep.subr.mxu0 0.0
      %6151 = vmatpush2.msra.mxu0 0.0
      %6152 = vmatprep.subr.mxu0 0.0
      %6153 = vmatpush2.msra.mxu0 0.0
      %6154 = vmatprep.subr.mxu0 0.0
      %6155 = vmatpush2.msra.mxu0 0.0
      %6156 = vmatprep.subr.mxu0 0.0
      %6157 = vmatpush2.msra.mxu0 0.0
      %6158 = vmatprep.subr.mxu0 0.0
      %6159 = vmatpush2.msra.mxu0 0.0
      %6160 = vmatprep.subr.mxu0 0.0
      %6161 = vmatpush2.msra.mxu0 0.0
      %6162 = vmatprep.subr.mxu0 0.0
      %6163 = vmatpush2.msra.mxu0 0.0
      %6164 = vmatprep.subr.mxu0 0.0
      %6165 = vmatpush2.msra.mxu0 0.0
      %6166 = vmatprep.mubr.f32.mxu0 0.0
      %6167 = vmatmul.mubr.f32.gmra.mxu0 %v5846
      %v6168 = vpop.f32.mrf.mxu0
      %v6169 = vadd.f32 %v6101, %v6168
      %v6170 = vpop.f32.mrf.mxu0
      %6171 = vmatprep.mubr.f32.mxu0 0.0
      %6172 = vmatmul.mubr.f32.gmra.mxu0 %v5847
      %v6173 = vpop.f32.mrf.mxu0
      %v6174 = vadd.f32 %v6101, %v6173
      %v6175 = vpop.f32.mrf.mxu0
      %6176 = vdwg.mxu0
      %v6177 = vld [vmem:[%s61] sm:$0x1]
      %v6179 = vlaneseq
      %v6180 = vshrl.u32 %v6179, 7
      %v6181 = vsub.s32 0, %v6180
      %v6182 = vrot.slane %v6177, %v6181
      %v6184 = vadd.f32 %v6169, %v6182
      %v6185 = vadd.f32 %v6174, %v6182
      %v6186 = vmax.f32 %v6184, 0.0
      %v6187 = vmax.f32 %v6185, 0.0
      %v6188 = vld [vmem:[%s63] sm:$0xff]
      %v6189 = vld [vmem:[%s63 + $0x8] sm:$0xff]
      %v6190 = vld [vmem:[%s63 + $0x10] sm:$0xff]
      %v6191 = vld [vmem:[%s63 + $0x18] sm:$0xff]
      %v6192 = vld [vmem:[%s63 + $0x20] sm:$0xf]
      %v6194 = vsel %vm2025, %v6188, 0
      %v6197 = vsel %vm2025, %v6189, 0
      %v6200 = vsel %vm2025, %v6190, 0
      %v6203 = vsel %vm2025, %v6191, 0
      %v6206 = vsel %vm2025, %v6192, 0
      %6208 = vmatprep.subr.mxu0 0.0
      %6209 = vmatpush1.msra.mxu0 0.0
      %6210 = vmatprep.subr.mxu0 0.0
      %6211 = vmatpush1.msra.mxu0 0.0
      %6212 = vmatprep.subr.mxu0 0.0
      %6213 = vmatpush1.msra.mxu0 0.0
      %6214 = vmatprep.subr.mxu0 0.0
      %6215 = vmatpush1.msra.mxu0 0.0
      %6216 = vmatprep.subr.mxu0 0.0
      %6217 = vmatpush1.msra.mxu0 0.0
      %6218 = vmatprep.subr.mxu0 0.0
      %6219 = vmatpush1.msra.mxu0 0.0
      %6220 = vmatprep.subr.mxu0 0.0
      %6221 = vmatpush1.msra.mxu0 0.0
      %6222 = vmatprep.subr.mxu0 0.0
      %6223 = vmatpush1.msra.mxu0 0.0
      %6224 = vmatprep.subr.mxu0 0.0
      %6225 = vmatpush1.msra.mxu0 0.0
      %6226 = vmatprep.subr.mxu0 0.0
      %6227 = vmatpush1.msra.mxu0 0.0
      %6228 = vmatprep.subr.mxu0 0.0
      %6229 = vmatpush1.msra.mxu0 0.0
      %6230 = vmatprep.subr.mxu0 0.0
      %6231 = vmatpush1.msra.mxu0 0.0
      %6232 = vmatprep.subr.mxu0 0.0
      %6233 = vmatpush1.msra.mxu0 0.0
      %6234 = vmatprep.subr.mxu0 0.0
      %6235 = vmatpush1.msra.mxu0 0.0
      %6236 = vmatprep.subr.mxu0 0.0
      %6237 = vmatpush1.msra.mxu0 %v6187
      %6238 = vmatprep.subr.mxu0 0.0
      %6239 = vmatpush1.msra.mxu0 %v6186
      %6240 = vmatprep.subr.mxu0 0.0
      %6241 = vmatpush2.msra.mxu0 0.0
      %6242 = vmatprep.subr.mxu0 0.0
      %6243 = vmatpush2.msra.mxu0 0.0
      %6244 = vmatprep.subr.mxu0 0.0
      %6245 = vmatpush2.msra.mxu0 0.0
      %6246 = vmatprep.subr.mxu0 0.0
      %6247 = vmatpush2.msra.mxu0 0.0
      %6248 = vmatprep.subr.mxu0 0.0
      %6249 = vmatpush2.msra.mxu0 0.0
      %6250 = vmatprep.subr.mxu0 0.0
      %6251 = vmatpush2.msra.mxu0 0.0
      %6252 = vmatprep.subr.mxu0 0.0
      %6253 = vmatpush2.msra.mxu0 0.0
      %6254 = vmatprep.subr.mxu0 0.0
      %6255 = vmatpush2.msra.mxu0 0.0
      %6256 = vmatprep.subr.mxu0 0.0
      %6257 = vmatpush2.msra.mxu0 0.0
      %6258 = vmatprep.subr.mxu0 0.0
      %6259 = vmatpush2.msra.mxu0 0.0
      %6260 = vmatprep.subr.mxu0 0.0
      %6261 = vmatpush2.msra.mxu0 0.0
      %6262 = vmatprep.subr.mxu0 0.0
      %6263 = vmatpush2.msra.mxu0 0.0
      %6264 = vmatprep.subr.mxu0 0.0
      %6265 = vmatpush2.msra.mxu0 0.0
      %6266 = vmatprep.subr.mxu0 0.0
      %6267 = vmatpush2.msra.mxu0 0.0
      %6268 = vmatprep.subr.mxu0 0.0
      %6269 = vmatpush2.msra.mxu0 0.0
      %6270 = vmatprep.subr.mxu0 0.0
      %6271 = vmatpush2.msra.mxu0 0.0
      %6272 = vmatprep.mubr.f32.mxu0 0.0
      %6273 = vmatmul.mubr.f32.gmra.mxu0 %v6194
      %v6274 = vpop.f32.mrf.mxu0
      %v6275 = vadd.f32 0.0, %v6274
      %v6276 = vpop.f32.mrf.mxu0
      %6277 = vmatprep.mubr.f32.mxu0 0.0
      %6278 = vmatmul.mubr.f32.gmra.mxu0 %v6197
      %v6279 = vpop.f32.mrf.mxu0
      %v6280 = vadd.f32 0.0, %v6279
      %v6281 = vpop.f32.mrf.mxu0
      %6282 = vmatprep.mubr.f32.mxu0 0.0
      %6283 = vmatmul.mubr.f32.gmra.mxu0 %v6200
      %v6284 = vpop.f32.mrf.mxu0
      %v6285 = vadd.f32 0.0, %v6284
      %v6286 = vpop.f32.mrf.mxu0
      %6287 = vmatprep.mubr.f32.mxu0 0.0
      %6288 = vmatmul.mubr.f32.gmra.mxu0 %v6203
      %v6289 = vpop.f32.mrf.mxu0
      %v6290 = vadd.f32 0.0, %v6289
      %v6291 = vpop.f32.mrf.mxu0
      %6292 = vmatprep.mubr.f32.mxu0 0.0
      %6293 = vmatmul.mubr.f32.gmra.mxu0 %v6206
      %v6294 = vpop.f32.mrf.mxu0
      %v6295 = vadd.f32 0.0, %v6294
      %v6296 = vpop.f32.mrf.mxu0
      %6297 = vdwg.mxu0
      %6298 = vst.msk [vmem:[#allocation7] sm:$0xff] %vm3658, %v6275
      %6299 = vst.msk [vmem:[#allocation7 + $0x8] sm:$0xff] %vm3658, %v6280
      %6300 = vst.msk [vmem:[#allocation7 + $0x10] sm:$0xff] %vm3658, %v6285
      %6301 = vst.msk [vmem:[#allocation7 + $0x18] sm:$0xff] %vm3658, %v6290
      %6302 = vst.msk [vmem:[#allocation7 + $0x20] sm:$0xf] %vm4421, %v6295
      %v6303 = vld [vmem:[#allocation7] sm:$0xff]
      %v6304 = vld [vmem:[#allocation7 + $0x8] sm:$0xff]
      %v6305 = vld [vmem:[#allocation7 + $0x10] sm:$0x3f]
      %v6306 = vld [vmem:[#allocation7 + $0x1] sm:$0xff]
      %v6307 = vld [vmem:[#allocation7 + $0x9] sm:$0xff]
      %v6308 = vld [vmem:[#allocation7 + $0x11] sm:$0x3f]
      %v6309 = vld [vmem:[#allocation7 + $0x2] sm:$0xff]
      %v6310 = vld [vmem:[#allocation7 + $0xa] sm:$0xff]
      %v6311 = vld [vmem:[#allocation7 + $0x12] sm:$0x3f]
      %v6312 = vld [vmem:[#allocation7 + $0x6] sm:$0xff]
      %v6313 = vld [vmem:[#allocation7 + $0xe] sm:$0xff]
      %v6314 = vld [vmem:[#allocation7 + $0x16] sm:$0x3f]
      %v6315 = vld [vmem:[#allocation7 + $0x7] sm:$0xff]
      %v6316 = vld [vmem:[#allocation7 + $0xf] sm:$0xff]
      %v6317 = vld [vmem:[#allocation7 + $0x17] sm:$0x3f]
      %v6318 = vld [vmem:[#allocation7 + $0x10] sm:$0xff]
      %v6319 = vld [vmem:[#allocation7 + $0x18] sm:$0x3f]
      %v6320 = vld [vmem:[#allocation7 + $0xc] sm:$0xff]
      %v6321 = vld [vmem:[#allocation7 + $0x14] sm:$0xff]
      %v6322 = vld [vmem:[#allocation7 + $0x1c] sm:$0x3f]
      %v6323 = vld [vmem:[#allocation7 + $0xd] sm:$0xff]
      %v6324 = vld [vmem:[#allocation7 + $0x15] sm:$0xff]
      %v6325 = vld [vmem:[#allocation7 + $0x1d] sm:$0x3f]
      %v6326 = vld [vmem:[#allocation7 + $0x16] sm:$0xff]
      %v6327 = vld [vmem:[#allocation7 + $0x1e] sm:$0x3f]
      %6331 = vrot.lane.b32.xlu0 %v6306, 32
      %v6332 = vpop.permute.xlu0 %6331
      %6333 = vrot.lane.b32.xlu0 %v6307, 32
      %v6334 = vpop.permute.xlu0 %6333
      %6335 = vrot.lane.b32.xlu0 %v6308, 32
      %v6336 = vpop.permute.xlu0 %6335
      %6343 = vrot.lane.b32.xlu0 %v6309, 64
      %v6344 = vpop.permute.xlu0 %6343
      %6345 = vrot.lane.b32.xlu0 %v6310, 64
      %v6346 = vpop.permute.xlu0 %6345
      %6347 = vrot.lane.b32.xlu0 %v6311, 64
      %v6348 = vpop.permute.xlu0 %6347
      %6355 = vrot.lane.b32.xlu0 %v6312, 96
      %v6356 = vpop.permute.xlu0 %6355
      %6357 = vrot.lane.b32.xlu0 %v6313, 96
      %v6358 = vpop.permute.xlu0 %6357
      %6359 = vrot.lane.b32.xlu0 %v6314, 96
      %v6360 = vpop.permute.xlu0 %6359
      %6367 = vrot.lane.b32.xlu0 %v6304, 32
      %v6368 = vpop.permute.xlu0 %6367
      %6369 = vrot.lane.b32.xlu0 %v6318, 32
      %v6370 = vpop.permute.xlu0 %6369
      %6371 = vrot.lane.b32.xlu0 %v6319, 32
      %v6372 = vpop.permute.xlu0 %6371
      %6379 = vrot.lane.b32.xlu0 %v6320, 64
      %v6380 = vpop.permute.xlu0 %6379
      %6381 = vrot.lane.b32.xlu0 %v6321, 64
      %v6382 = vpop.permute.xlu0 %6381
      %6383 = vrot.lane.b32.xlu0 %v6322, 64
      %v6384 = vpop.permute.xlu0 %6383
      %6391 = vrot.lane.b32.xlu0 %v6323, 96
      %v6392 = vpop.permute.xlu0 %6391
      %6393 = vrot.lane.b32.xlu0 %v6324, 96
      %v6394 = vpop.permute.xlu0 %6393
      %6395 = vrot.lane.b32.xlu0 %v6325, 96
      %v6396 = vpop.permute.xlu0 %6395
      %v6400 = vsel %vm3658, %v6303, %v6332
      %v6401 = vsel %vm3658, %v6304, %v6334
      %v6402 = vsel %vm3658, %v6305, %v6336
      %v6403 = vsel %vm3702, %v6400, %v6344
      %v6404 = vsel %vm3702, %v6401, %v6346
      %v6405 = vsel %vm3702, %v6402, %v6348
      %v6406 = vsel %vm5122, %v6403, %v6356
      %v6407 = vsel %vm5122, %v6404, %v6358
      %v6408 = vsel %vm5122, %v6405, %v6360
      %v6409 = vsel %vm3658, %v6315, %v6368
      %v6410 = vsel %vm3658, %v6316, %v6370
      %v6411 = vsel %vm3658, %v6317, %v6372
      %v6412 = vsel %vm3702, %v6409, %v6380
      %v6413 = vsel %vm3702, %v6410, %v6382
      %v6414 = vsel %vm3702, %v6411, %v6384
      %v6415 = vsel %vm5122, %v6412, %v6392
      %v6416 = vsel %vm5122, %v6413, %v6394
      %v6417 = vsel %vm5122, %v6414, %v6396
      %v6418 = vld [vmem:[%s65] sm:$0xff]
      %v6419 = vld [vmem:[%s65 + $0x8] sm:$0xff]
      %v6420 = vld [vmem:[%s65 + $0x10] sm:$0xff]
      %v6421 = vld [vmem:[%s65 + $0x18] sm:$0xff]
      %v6422 = vld [vmem:[%s65 + $0x20] sm:$0xff]
      %v6423 = vld [vmem:[%s65 + $0x28] sm:$0xff]
      %v6424 = vld [vmem:[%s65 + $0x30] sm:$0xff]
      %v6425 = vld [vmem:[%s65 + $0x38] sm:$0xff]
      %v6426 = vld [vmem:[%s65 + $0x40] sm:$0xff]
      %v6427 = vld [vmem:[%s65 + $0x48] sm:$0xff]
      %v6428 = vld [vmem:[%s65 + $0x50] sm:$0xff]
      %v6429 = vld [vmem:[%s65 + $0x58] sm:$0xff]
      %v6430 = vld [vmem:[%s65 + $0x60] sm:$0xff]
      %v6431 = vld [vmem:[%s65 + $0x68] sm:$0xff]
      %v6432 = vld [vmem:[%s65 + $0x70] sm:$0xff]
      %v6433 = vld [vmem:[%s65 + $0x78] sm:$0xff]
      %v6434 = vld [vmem:[%s65 + $0x80] sm:$0xff]
      %v6435 = vld [vmem:[%s65 + $0x88] sm:$0xff]
      %v6436 = vld [vmem:[%s65 + $0x90] sm:$0xff]
      %v6437 = vld [vmem:[%s65 + $0x98] sm:$0xff]
      %v6438 = vld [vmem:[%s65 + $0xa0] sm:$0xff]
      %v6439 = vld [vmem:[%s65 + $0xa8] sm:$0xff]
      %v6440 = vld [vmem:[%s65 + $0xb0] sm:$0xff]
      %v6441 = vld [vmem:[%s65 + $0xb8] sm:$0xff]
      %v6442 = vld [vmem:[%s65 + $0xc0] sm:$0xff]
      %v6443 = vld [vmem:[%s65 + $0xc8] sm:$0xff]
      %v6444 = vld [vmem:[%s65 + $0xd0] sm:$0xff]
      %v6445 = vld [vmem:[%s65 + $0xd8] sm:$0xff]
      %v6446 = vld [vmem:[%s65 + $0xe0] sm:$0xff]
      %v6447 = vld [vmem:[%s65 + $0xe8] sm:$0xff]
      %v6448 = vld [vmem:[%s65 + $0xf0] sm:$0xff]
      %v6449 = vld [vmem:[%s65 + $0xf8] sm:$0xff]
      %v6450 = vld [vmem:[%s65 + $0x100] sm:$0xff]
      %v6451 = vld [vmem:[%s65 + $0x108] sm:$0xff]
      %v6452 = vld [vmem:[%s65 + $0x110] sm:$0xff]
      %v6453 = vld [vmem:[%s65 + $0x118] sm:$0xff]
      %v6454 = vld [vmem:[%s67] sm:$0x1]
      %v6456 = vlaneseq
      %v6457 = vshrl.u32 %v6456, 7
      %v6458 = vsub.s32 0, %v6457
      %v6459 = vrot.slane %v6454, %v6458
      %v6461 = vsel %vm3658, %v6313, 0
      %v6464 = vsel %vm3658, %v6326, 0
      %v6467 = vsel %vm3658, %v6327, 0
      %6469 = vmatprep.subr.mxu0 0.0
      %6470 = vmatpush1.msra.mxu0 %v6433
      %6471 = vmatprep.subr.mxu0 0.0
      %6472 = vmatpush1.msra.mxu0 %v6432
      %6473 = vmatprep.subr.mxu0 0.0
      %6474 = vmatpush1.msra.mxu0 %v6431
      %6475 = vmatprep.subr.mxu0 0.0
      %6476 = vmatpush1.msra.mxu0 %v6430
      %6477 = vmatprep.subr.mxu0 0.0
      %6478 = vmatpush1.msra.mxu0 %v6429
      %6479 = vmatprep.subr.mxu0 0.0
      %6480 = vmatpush1.msra.mxu0 %v6428
      %6481 = vmatprep.subr.mxu0 0.0
      %6482 = vmatpush1.msra.mxu0 %v6427
      %6483 = vmatprep.subr.mxu0 0.0
      %6484 = vmatpush1.msra.mxu0 %v6426
      %6485 = vmatprep.subr.mxu0 0.0
      %6486 = vmatpush1.msra.mxu0 %v6425
      %6487 = vmatprep.subr.mxu0 0.0
      %6488 = vmatpush1.msra.mxu0 %v6424
      %6489 = vmatprep.subr.mxu0 0.0
      %6490 = vmatpush1.msra.mxu0 %v6423
      %6491 = vmatprep.subr.mxu0 0.0
      %6492 = vmatpush1.msra.mxu0 %v6422
      %6493 = vmatprep.subr.mxu0 0.0
      %6494 = vmatpush1.msra.mxu0 %v6421
      %6495 = vmatprep.subr.mxu0 0.0
      %6496 = vmatpush1.msra.mxu0 %v6420
      %6497 = vmatprep.subr.mxu0 0.0
      %6498 = vmatpush1.msra.mxu0 %v6419
      %6499 = vmatprep.subr.mxu0 0.0
      %6500 = vmatpush1.msra.mxu0 %v6418
      %6501 = vmatprep.subr.mxu0 0.0
      %6502 = vmatpush2.msra.mxu0 %v6449
      %6503 = vmatprep.subr.mxu0 0.0
      %6504 = vmatpush2.msra.mxu0 %v6448
      %6505 = vmatprep.subr.mxu0 0.0
      %6506 = vmatpush2.msra.mxu0 %v6447
      %6507 = vmatprep.subr.mxu0 0.0
      %6508 = vmatpush2.msra.mxu0 %v6446
      %6509 = vmatprep.subr.mxu0 0.0
      %6510 = vmatpush2.msra.mxu0 %v6445
      %6511 = vmatprep.subr.mxu0 0.0
      %6512 = vmatpush2.msra.mxu0 %v6444
      %6513 = vmatprep.subr.mxu0 0.0
      %6514 = vmatpush2.msra.mxu0 %v6443
      %6515 = vmatprep.subr.mxu0 0.0
      %6516 = vmatpush2.msra.mxu0 %v6442
      %6517 = vmatprep.subr.mxu0 0.0
      %6518 = vmatpush2.msra.mxu0 %v6441
      %6519 = vmatprep.subr.mxu0 0.0
      %6520 = vmatpush2.msra.mxu0 %v6440
      %6521 = vmatprep.subr.mxu0 0.0
      %6522 = vmatpush2.msra.mxu0 %v6439
      %6523 = vmatprep.subr.mxu0 0.0
      %6524 = vmatpush2.msra.mxu0 %v6438
      %6525 = vmatprep.subr.mxu0 0.0
      %6526 = vmatpush2.msra.mxu0 %v6437
      %6527 = vmatprep.subr.mxu0 0.0
      %6528 = vmatpush2.msra.mxu0 %v6436
      %6529 = vmatprep.subr.mxu0 0.0
      %6530 = vmatpush2.msra.mxu0 %v6435
      %6531 = vmatprep.subr.mxu0 0.0
      %6532 = vmatpush2.msra.mxu0 %v6434
      %6533 = vmatprep.mubr.f32.mxu0 %v6415
      %6534 = vmatmul.mubr.f32.gmra.mxu0 %v6406
      %v6535 = vpop.f32.mrf.mxu0
      %v6536 = vadd.f32 %v6459, %v6535
      %v6537 = vpop.f32.mrf.mxu0
      %6538 = vmatprep.mubr.f32.mxu0 %v6416
      %6539 = vmatmul.mubr.f32.gmra.mxu0 %v6407
      %v6540 = vpop.f32.mrf.mxu0
      %v6541 = vadd.f32 %v6459, %v6540
      %v6542 = vpop.f32.mrf.mxu0
      %6543 = vmatprep.mubr.f32.mxu0 %v6417
      %6544 = vmatmul.mubr.f32.gmra.mxu0 %v6408
      %v6545 = vpop.f32.mrf.mxu0
      %v6546 = vadd.f32 %v6459, %v6545
      %v6547 = vpop.f32.mrf.mxu0
      %6548 = vdwg.mxu0
      %6549 = vmatprep.subr.mxu0 0.0
      %6550 = vmatpush1.msra.mxu0 0.0
      %6551 = vmatprep.subr.mxu0 0.0
      %6552 = vmatpush1.msra.mxu0 0.0
      %6553 = vmatprep.subr.mxu0 0.0
      %6554 = vmatpush1.msra.mxu0 0.0
      %6555 = vmatprep.subr.mxu0 0.0
      %6556 = vmatpush1.msra.mxu0 0.0
      %6557 = vmatprep.subr.mxu0 0.0
      %6558 = vmatpush1.msra.mxu0 0.0
      %6559 = vmatprep.subr.mxu0 0.0
      %6560 = vmatpush1.msra.mxu0 0.0
      %6561 = vmatprep.subr.mxu0 0.0
      %6562 = vmatpush1.msra.mxu0 0.0
      %6563 = vmatprep.subr.mxu0 0.0
      %6564 = vmatpush1.msra.mxu0 0.0
      %6565 = vmatprep.subr.mxu0 0.0
      %6566 = vmatpush1.msra.mxu0 0.0
      %6567 = vmatprep.subr.mxu0 0.0
      %6568 = vmatpush1.msra.mxu0 0.0
      %6569 = vmatprep.subr.mxu0 0.0
      %6570 = vmatpush1.msra.mxu0 0.0
      %6571 = vmatprep.subr.mxu0 0.0
      %6572 = vmatpush1.msra.mxu0 0.0
      %6573 = vmatprep.subr.mxu0 0.0
      %6574 = vmatpush1.msra.mxu0 %v6453
      %6575 = vmatprep.subr.mxu0 0.0
      %6576 = vmatpush1.msra.mxu0 %v6452
      %6577 = vmatprep.subr.mxu0 0.0
      %6578 = vmatpush1.msra.mxu0 %v6451
      %6579 = vmatprep.subr.mxu0 0.0
      %6580 = vmatpush1.msra.mxu0 %v6450
      %6581 = vmatprep.subr.mxu0 0.0
      %6582 = vmatpush2.msra.mxu0 0.0
      %6583 = vmatprep.subr.mxu0 0.0
      %6584 = vmatpush2.msra.mxu0 0.0
      %6585 = vmatprep.subr.mxu0 0.0
      %6586 = vmatpush2.msra.mxu0 0.0
      %6587 = vmatprep.subr.mxu0 0.0
      %6588 = vmatpush2.msra.mxu0 0.0
      %6589 = vmatprep.subr.mxu0 0.0
      %6590 = vmatpush2.msra.mxu0 0.0
      %6591 = vmatprep.subr.mxu0 0.0
      %6592 = vmatpush2.msra.mxu0 0.0
      %6593 = vmatprep.subr.mxu0 0.0
      %6594 = vmatpush2.msra.mxu0 0.0
      %6595 = vmatprep.subr.mxu0 0.0
      %6596 = vmatpush2.msra.mxu0 0.0
      %6597 = vmatprep.subr.mxu0 0.0
      %6598 = vmatpush2.msra.mxu0 0.0
      %6599 = vmatprep.subr.mxu0 0.0
      %6600 = vmatpush2.msra.mxu0 0.0
      %6601 = vmatprep.subr.mxu0 0.0
      %6602 = vmatpush2.msra.mxu0 0.0
      %6603 = vmatprep.subr.mxu0 0.0
      %6604 = vmatpush2.msra.mxu0 0.0
      %6605 = vmatprep.subr.mxu0 0.0
      %6606 = vmatpush2.msra.mxu0 0.0
      %6607 = vmatprep.subr.mxu0 0.0
      %6608 = vmatpush2.msra.mxu0 0.0
      %6609 = vmatprep.subr.mxu0 0.0
      %6610 = vmatpush2.msra.mxu0 0.0
      %6611 = vmatprep.subr.mxu0 0.0
      %6612 = vmatpush2.msra.mxu0 0.0
      %6613 = vmatprep.mubr.f32.mxu0 0.0
      %6614 = vmatmul.mubr.f32.gmra.mxu0 %v6461
      %v6615 = vpop.f32.mrf.mxu0
      %v6616 = vadd.f32 %v6536, %v6615
      %v6617 = vpop.f32.mrf.mxu0
      %6618 = vmatprep.mubr.f32.mxu0 0.0
      %6619 = vmatmul.mubr.f32.gmra.mxu0 %v6464
      %v6620 = vpop.f32.mrf.mxu0
      %v6621 = vadd.f32 %v6541, %v6620
      %v6622 = vpop.f32.mrf.mxu0
      %6623 = vmatprep.mubr.f32.mxu0 0.0
      %6624 = vmatmul.mubr.f32.gmra.mxu0 %v6467
      %v6625 = vpop.f32.mrf.mxu0
      %v6626 = vadd.f32 %v6546, %v6625
      %v6627 = vpop.f32.mrf.mxu0
      %6628 = vdwg.mxu0
      %v6629 = vmax.f32 %v6616, 0.0
      %v6630 = vmax.f32 %v6621, 0.0
      %v6631 = vmax.f32 %v6626, 0.0
      %v6632 = vld [vmem:[%s69] sm:$0xff]
      %v6633 = vld [vmem:[%s69 + $0x8] sm:$0xff]
      %v6634 = vld [vmem:[%s69 + $0x10] sm:$0xff]
      %v6635 = vld [vmem:[%s69 + $0x18] sm:$0xff]
      %v6636 = vld [vmem:[%s71] sm:$0x1]
      %v6638 = vlaneseq
      %v6639 = vshrl.u32 %v6638, 7
      %v6640 = vsub.s32 0, %v6639
      %v6641 = vrot.slane %v6636, %v6640
      %v6644 = vsel %vm3658, %v6629, 0
      %v6647 = vsel %vm3658, %v6630, 0
      %v6650 = vsel %vm3658, %v6631, 0
      %6652 = vmatprep.subr.mxu0 0.0
      %6653 = vmatpush1.msra.mxu0 0.0
      %6654 = vmatprep.subr.mxu0 0.0
      %6655 = vmatpush1.msra.mxu0 0.0
      %6656 = vmatprep.subr.mxu0 0.0
      %6657 = vmatpush1.msra.mxu0 0.0
      %6658 = vmatprep.subr.mxu0 0.0
      %6659 = vmatpush1.msra.mxu0 0.0
      %6660 = vmatprep.subr.mxu0 0.0
      %6661 = vmatpush1.msra.mxu0 0.0
      %6662 = vmatprep.subr.mxu0 0.0
      %6663 = vmatpush1.msra.mxu0 0.0
      %6664 = vmatprep.subr.mxu0 0.0
      %6665 = vmatpush1.msra.mxu0 0.0
      %6666 = vmatprep.subr.mxu0 0.0
      %6667 = vmatpush1.msra.mxu0 0.0
      %6668 = vmatprep.subr.mxu0 0.0
      %6669 = vmatpush1.msra.mxu0 0.0
      %6670 = vmatprep.subr.mxu0 0.0
      %6671 = vmatpush1.msra.mxu0 0.0
      %6672 = vmatprep.subr.mxu0 0.0
      %6673 = vmatpush1.msra.mxu0 0.0
      %6674 = vmatprep.subr.mxu0 0.0
      %6675 = vmatpush1.msra.mxu0 0.0
      %6676 = vmatprep.subr.mxu0 0.0
      %6677 = vmatpush1.msra.mxu0 %v6635
      %6678 = vmatprep.subr.mxu0 0.0
      %6679 = vmatpush1.msra.mxu0 %v6634
      %6680 = vmatprep.subr.mxu0 0.0
      %6681 = vmatpush1.msra.mxu0 %v6633
      %6682 = vmatprep.subr.mxu0 0.0
      %6683 = vmatpush1.msra.mxu0 %v6632
      %6684 = vmatprep.subr.mxu0 0.0
      %6685 = vmatpush2.msra.mxu0 0.0
      %6686 = vmatprep.subr.mxu0 0.0
      %6687 = vmatpush2.msra.mxu0 0.0
      %6688 = vmatprep.subr.mxu0 0.0
      %6689 = vmatpush2.msra.mxu0 0.0
      %6690 = vmatprep.subr.mxu0 0.0
      %6691 = vmatpush2.msra.mxu0 0.0
      %6692 = vmatprep.subr.mxu0 0.0
      %6693 = vmatpush2.msra.mxu0 0.0
      %6694 = vmatprep.subr.mxu0 0.0
      %6695 = vmatpush2.msra.mxu0 0.0
      %6696 = vmatprep.subr.mxu0 0.0
      %6697 = vmatpush2.msra.mxu0 0.0
      %6698 = vmatprep.subr.mxu0 0.0
      %6699 = vmatpush2.msra.mxu0 0.0
      %6700 = vmatprep.subr.mxu0 0.0
      %6701 = vmatpush2.msra.mxu0 0.0
      %6702 = vmatprep.subr.mxu0 0.0
      %6703 = vmatpush2.msra.mxu0 0.0
      %6704 = vmatprep.subr.mxu0 0.0
      %6705 = vmatpush2.msra.mxu0 0.0
      %6706 = vmatprep.subr.mxu0 0.0
      %6707 = vmatpush2.msra.mxu0 0.0
      %6708 = vmatprep.subr.mxu0 0.0
      %6709 = vmatpush2.msra.mxu0 0.0
      %6710 = vmatprep.subr.mxu0 0.0
      %6711 = vmatpush2.msra.mxu0 0.0
      %6712 = vmatprep.subr.mxu0 0.0
      %6713 = vmatpush2.msra.mxu0 0.0
      %6714 = vmatprep.subr.mxu0 0.0
      %6715 = vmatpush2.msra.mxu0 0.0
      %6716 = vmatprep.mubr.f32.mxu0 0.0
      %6717 = vmatmul.mubr.f32.gmra.mxu0 %v6644
      %v6718 = vpop.f32.mrf.mxu0
      %v6719 = vadd.f32 %v6641, %v6718
      %v6720 = vpop.f32.mrf.mxu0
      %6721 = vmatprep.mubr.f32.mxu0 0.0
      %6722 = vmatmul.mubr.f32.gmra.mxu0 %v6647
      %v6723 = vpop.f32.mrf.mxu0
      %v6724 = vadd.f32 %v6641, %v6723
      %v6725 = vpop.f32.mrf.mxu0
      %6726 = vmatprep.mubr.f32.mxu0 0.0
      %6727 = vmatmul.mubr.f32.gmra.mxu0 %v6650
      %v6728 = vpop.f32.mrf.mxu0
      %v6729 = vadd.f32 %v6641, %v6728
      %v6730 = vpop.f32.mrf.mxu0
      %6731 = vdwg.mxu0
      %v6732 = vld [vmem:[%s73] sm:$0xf]
      %vm6733 = vcmask 179200
      %v6735 = vsel %vm6733, %v6732, 0
      %v6738 = vsel %vm4275, %v6729, 0
      %6740 = vmatprep.subr.mxu0 0.0
      %6741 = vmatpush1.msra.mxu0 0.0
      %6742 = vmatprep.subr.mxu0 0.0
      %6743 = vmatpush1.msra.mxu0 0.0
      %6744 = vmatprep.subr.mxu0 0.0
      %6745 = vmatpush1.msra.mxu0 0.0
      %6746 = vmatprep.subr.mxu0 0.0
      %6747 = vmatpush1.msra.mxu0 0.0
      %6748 = vmatprep.subr.mxu0 0.0
      %6749 = vmatpush1.msra.mxu0 0.0
      %6750 = vmatprep.subr.mxu0 0.0
      %6751 = vmatpush1.msra.mxu0 0.0
      %6752 = vmatprep.subr.mxu0 0.0
      %6753 = vmatpush1.msra.mxu0 0.0
      %6754 = vmatprep.subr.mxu0 0.0
      %6755 = vmatpush1.msra.mxu0 0.0
      %6756 = vmatprep.subr.mxu0 0.0
      %6757 = vmatpush1.msra.mxu0 0.0
      %6758 = vmatprep.subr.mxu0 0.0
      %6759 = vmatpush1.msra.mxu0 0.0
      %6760 = vmatprep.subr.mxu0 0.0
      %6761 = vmatpush1.msra.mxu0 0.0
      %6762 = vmatprep.subr.mxu0 0.0
      %6763 = vmatpush1.msra.mxu0 0.0
      %6764 = vmatprep.subr.mxu0 0.0
      %6765 = vmatpush1.msra.mxu0 0.0
      %6766 = vmatprep.subr.mxu0 0.0
      %6767 = vmatpush1.msra.mxu0 %v6738
      %6768 = vmatprep.subr.mxu0 0.0
      %6769 = vmatpush1.msra.mxu0 %v6724
      %6770 = vmatprep.subr.mxu0 0.0
      %6771 = vmatpush1.msra.mxu0 %v6719
      %6772 = vmatprep.subr.mxu0 0.0
      %6773 = vmatpush2.msra.mxu0 0.0
      %6774 = vmatprep.subr.mxu0 0.0
      %6775 = vmatpush2.msra.mxu0 0.0
      %6776 = vmatprep.subr.mxu0 0.0
      %6777 = vmatpush2.msra.mxu0 0.0
      %6778 = vmatprep.subr.mxu0 0.0
      %6779 = vmatpush2.msra.mxu0 0.0
      %6780 = vmatprep.subr.mxu0 0.0
      %6781 = vmatpush2.msra.mxu0 0.0
      %6782 = vmatprep.subr.mxu0 0.0
      %6783 = vmatpush2.msra.mxu0 0.0
      %6784 = vmatprep.subr.mxu0 0.0
      %6785 = vmatpush2.msra.mxu0 0.0
      %6786 = vmatprep.subr.mxu0 0.0
      %6787 = vmatpush2.msra.mxu0 0.0
      %6788 = vmatprep.subr.mxu0 0.0
      %6789 = vmatpush2.msra.mxu0 0.0
      %6790 = vmatprep.subr.mxu0 0.0
      %6791 = vmatpush2.msra.mxu0 0.0
      %6792 = vmatprep.subr.mxu0 0.0
      %6793 = vmatpush2.msra.mxu0 0.0
      %6794 = vmatprep.subr.mxu0 0.0
      %6795 = vmatpush2.msra.mxu0 0.0
      %6796 = vmatprep.subr.mxu0 0.0
      %6797 = vmatpush2.msra.mxu0 0.0
      %6798 = vmatprep.subr.mxu0 0.0
      %6799 = vmatpush2.msra.mxu0 0.0
      %6800 = vmatprep.subr.mxu0 0.0
      %6801 = vmatpush2.msra.mxu0 0.0
      %6802 = vmatprep.subr.mxu0 0.0
      %6803 = vmatpush2.msra.mxu0 0.0
      %6804 = vmatprep.mubr.f32.mxu0 0.0
      %6805 = vmatmul.mubr.f32.gmra.mxu0 %v6735
      %v6806 = vpop.f32.mrf.mxu0
      %v6807 = vadd.f32 0.0, %v6806
      %v6808 = vpop.f32.mrf.mxu0
      %6809 = vdwg.mxu0
      %s6810 = scalar_lea.vmem %s73, 4
      %v6811 = vld [vmem:[%s6810] sm:$0xf]
      %v6813 = vsel %vm6733, %v6811, 0
      %6815 = vmatprep.subr.mxu0 0.0
      %6816 = vmatpush1.msra.mxu0 0.0
      %6817 = vmatprep.subr.mxu0 0.0
      %6818 = vmatpush1.msra.mxu0 0.0
      %6819 = vmatprep.subr.mxu0 0.0
      %6820 = vmatpush1.msra.mxu0 0.0
      %6821 = vmatprep.subr.mxu0 0.0
      %6822 = vmatpush1.msra.mxu0 0.0
      %6823 = vmatprep.subr.mxu0 0.0
      %6824 = vmatpush1.msra.mxu0 0.0
      %6825 = vmatprep.subr.mxu0 0.0
      %6826 = vmatpush1.msra.mxu0 0.0
      %6827 = vmatprep.subr.mxu0 0.0
      %6828 = vmatpush1.msra.mxu0 0.0
      %6829 = vmatprep.subr.mxu0 0.0
      %6830 = vmatpush1.msra.mxu0 0.0
      %6831 = vmatprep.subr.mxu0 0.0
      %6832 = vmatpush1.msra.mxu0 0.0
      %6833 = vmatprep.subr.mxu0 0.0
      %6834 = vmatpush1.msra.mxu0 0.0
      %6835 = vmatprep.subr.mxu0 0.0
      %6836 = vmatpush1.msra.mxu0 0.0
      %6837 = vmatprep.subr.mxu0 0.0
      %6838 = vmatpush1.msra.mxu0 0.0
      %6839 = vmatprep.subr.mxu0 0.0
      %6840 = vmatpush1.msra.mxu0 0.0
      %6841 = vmatprep.subr.mxu0 0.0
      %6842 = vmatpush1.msra.mxu0 %v6738
      %6843 = vmatprep.subr.mxu0 0.0
      %6844 = vmatpush1.msra.mxu0 %v6724
      %6845 = vmatprep.subr.mxu0 0.0
      %6846 = vmatpush1.msra.mxu0 %v6719
      %6847 = vmatprep.subr.mxu0 0.0
      %6848 = vmatpush2.msra.mxu0 0.0
      %6849 = vmatprep.subr.mxu0 0.0
      %6850 = vmatpush2.msra.mxu0 0.0
      %6851 = vmatprep.subr.mxu0 0.0
      %6852 = vmatpush2.msra.mxu0 0.0
      %6853 = vmatprep.subr.mxu0 0.0
      %6854 = vmatpush2.msra.mxu0 0.0
      %6855 = vmatprep.subr.mxu0 0.0
      %6856 = vmatpush2.msra.mxu0 0.0
      %6857 = vmatprep.subr.mxu0 0.0
      %6858 = vmatpush2.msra.mxu0 0.0
      %6859 = vmatprep.subr.mxu0 0.0
      %6860 = vmatpush2.msra.mxu0 0.0
      %6861 = vmatprep.subr.mxu0 0.0
      %6862 = vmatpush2.msra.mxu0 0.0
      %6863 = vmatprep.subr.mxu0 0.0
      %6864 = vmatpush2.msra.mxu0 0.0
      %6865 = vmatprep.subr.mxu0 0.0
      %6866 = vmatpush2.msra.mxu0 0.0
      %6867 = vmatprep.subr.mxu0 0.0
      %6868 = vmatpush2.msra.mxu0 0.0
      %6869 = vmatprep.subr.mxu0 0.0
      %6870 = vmatpush2.msra.mxu0 0.0
      %6871 = vmatprep.subr.mxu0 0.0
      %6872 = vmatpush2.msra.mxu0 0.0
      %6873 = vmatprep.subr.mxu0 0.0
      %6874 = vmatpush2.msra.mxu0 0.0
      %6875 = vmatprep.subr.mxu0 0.0
      %6876 = vmatpush2.msra.mxu0 0.0
      %6877 = vmatprep.subr.mxu0 0.0
      %6878 = vmatpush2.msra.mxu0 0.0
      %6879 = vmatprep.mubr.f32.mxu0 0.0
      %6880 = vmatmul.mubr.f32.gmra.mxu0 %v6813
      %v6881 = vpop.f32.mrf.mxu0
      %v6882 = vadd.f32 0.0, %v6881
      %v6883 = vpop.f32.mrf.mxu0
      %6884 = vdwg.mxu0
      %s6885 = scalar_lea.vmem %s73, 8
      %v6886 = vld [vmem:[%s6885] sm:$0xf]
      %v6888 = vsel %vm6733, %v6886, 0
      %6890 = vmatprep.subr.mxu0 0.0
      %6891 = vmatpush1.msra.mxu0 0.0
      %6892 = vmatprep.subr.mxu0 0.0
      %6893 = vmatpush1.msra.mxu0 0.0
      %6894 = vmatprep.subr.mxu0 0.0
      %6895 = vmatpush1.msra.mxu0 0.0
      %6896 = vmatprep.subr.mxu0 0.0
      %6897 = vmatpush1.msra.mxu0 0.0
      %6898 = vmatprep.subr.mxu0 0.0
      %6899 = vmatpush1.msra.mxu0 0.0
      %6900 = vmatprep.subr.mxu0 0.0
      %6901 = vmatpush1.msra.mxu0 0.0
      %6902 = vmatprep.subr.mxu0 0.0
      %6903 = vmatpush1.msra.mxu0 0.0
      %6904 = vmatprep.subr.mxu0 0.0
      %6905 = vmatpush1.msra.mxu0 0.0
      %6906 = vmatprep.subr.mxu0 0.0
      %6907 = vmatpush1.msra.mxu0 0.0
      %6908 = vmatprep.subr.mxu0 0.0
      %6909 = vmatpush1.msra.mxu0 0.0
      %6910 = vmatprep.subr.mxu0 0.0
      %6911 = vmatpush1.msra.mxu0 0.0
      %6912 = vmatprep.subr.mxu0 0.0
      %6913 = vmatpush1.msra.mxu0 0.0
      %6914 = vmatprep.subr.mxu0 0.0
      %6915 = vmatpush1.msra.mxu0 0.0
      %6916 = vmatprep.subr.mxu0 0.0
      %6917 = vmatpush1.msra.mxu0 %v6738
      %6918 = vmatprep.subr.mxu0 0.0
      %6919 = vmatpush1.msra.mxu0 %v6724
      %6920 = vmatprep.subr.mxu0 0.0
      %6921 = vmatpush1.msra.mxu0 %v6719
      %6922 = vmatprep.subr.mxu0 0.0
      %6923 = vmatpush2.msra.mxu0 0.0
      %6924 = vmatprep.subr.mxu0 0.0
      %6925 = vmatpush2.msra.mxu0 0.0
      %6926 = vmatprep.subr.mxu0 0.0
      %6927 = vmatpush2.msra.mxu0 0.0
      %6928 = vmatprep.subr.mxu0 0.0
      %6929 = vmatpush2.msra.mxu0 0.0
      %6930 = vmatprep.subr.mxu0 0.0
      %6931 = vmatpush2.msra.mxu0 0.0
      %6932 = vmatprep.subr.mxu0 0.0
      %6933 = vmatpush2.msra.mxu0 0.0
      %6934 = vmatprep.subr.mxu0 0.0
      %6935 = vmatpush2.msra.mxu0 0.0
      %6936 = vmatprep.subr.mxu0 0.0
      %6937 = vmatpush2.msra.mxu0 0.0
      %6938 = vmatprep.subr.mxu0 0.0
      %6939 = vmatpush2.msra.mxu0 0.0
      %6940 = vmatprep.subr.mxu0 0.0
      %6941 = vmatpush2.msra.mxu0 0.0
      %6942 = vmatprep.subr.mxu0 0.0
      %6943 = vmatpush2.msra.mxu0 0.0
      %6944 = vmatprep.subr.mxu0 0.0
      %6945 = vmatpush2.msra.mxu0 0.0
      %6946 = vmatprep.subr.mxu0 0.0
      %6947 = vmatpush2.msra.mxu0 0.0
      %6948 = vmatprep.subr.mxu0 0.0
      %6949 = vmatpush2.msra.mxu0 0.0
      %6950 = vmatprep.subr.mxu0 0.0
      %6951 = vmatpush2.msra.mxu0 0.0
      %6952 = vmatprep.subr.mxu0 0.0
      %6953 = vmatpush2.msra.mxu0 0.0
      %6954 = vmatprep.mubr.f32.mxu0 0.0
      %6955 = vmatmul.mubr.f32.gmra.mxu0 %v6888
      %v6956 = vpop.f32.mrf.mxu0
      %v6957 = vadd.f32 0.0, %v6956
      %v6958 = vpop.f32.mrf.mxu0
      %6959 = vdwg.mxu0
      %s6960 = scalar_lea.vmem %s73, 12
      %v6961 = vld [vmem:[%s6960] sm:$0xf]
      %v6963 = vsel %vm6733, %v6961, 0
      %6965 = vmatprep.subr.mxu0 0.0
      %6966 = vmatpush1.msra.mxu0 0.0
      %6967 = vmatprep.subr.mxu0 0.0
      %6968 = vmatpush1.msra.mxu0 0.0
      %6969 = vmatprep.subr.mxu0 0.0
      %6970 = vmatpush1.msra.mxu0 0.0
      %6971 = vmatprep.subr.mxu0 0.0
      %6972 = vmatpush1.msra.mxu0 0.0
      %6973 = vmatprep.subr.mxu0 0.0
      %6974 = vmatpush1.msra.mxu0 0.0
      %6975 = vmatprep.subr.mxu0 0.0
      %6976 = vmatpush1.msra.mxu0 0.0
      %6977 = vmatprep.subr.mxu0 0.0
      %6978 = vmatpush1.msra.mxu0 0.0
      %6979 = vmatprep.subr.mxu0 0.0
      %6980 = vmatpush1.msra.mxu0 0.0
      %6981 = vmatprep.subr.mxu0 0.0
      %6982 = vmatpush1.msra.mxu0 0.0
      %6983 = vmatprep.subr.mxu0 0.0
      %6984 = vmatpush1.msra.mxu0 0.0
      %6985 = vmatprep.subr.mxu0 0.0
      %6986 = vmatpush1.msra.mxu0 0.0
      %6987 = vmatprep.subr.mxu0 0.0
      %6988 = vmatpush1.msra.mxu0 0.0
      %6989 = vmatprep.subr.mxu0 0.0
      %6990 = vmatpush1.msra.mxu0 0.0
      %6991 = vmatprep.subr.mxu0 0.0
      %6992 = vmatpush1.msra.mxu0 %v6738
      %6993 = vmatprep.subr.mxu0 0.0
      %6994 = vmatpush1.msra.mxu0 %v6724
      %6995 = vmatprep.subr.mxu0 0.0
      %6996 = vmatpush1.msra.mxu0 %v6719
      %6997 = vmatprep.subr.mxu0 0.0
      %6998 = vmatpush2.msra.mxu0 0.0
      %6999 = vmatprep.subr.mxu0 0.0
      %7000 = vmatpush2.msra.mxu0 0.0
      %7001 = vmatprep.subr.mxu0 0.0
      %7002 = vmatpush2.msra.mxu0 0.0
      %7003 = vmatprep.subr.mxu0 0.0
      %7004 = vmatpush2.msra.mxu0 0.0
      %7005 = vmatprep.subr.mxu0 0.0
      %7006 = vmatpush2.msra.mxu0 0.0
      %7007 = vmatprep.subr.mxu0 0.0
      %7008 = vmatpush2.msra.mxu0 0.0
      %7009 = vmatprep.subr.mxu0 0.0
      %7010 = vmatpush2.msra.mxu0 0.0
      %7011 = vmatprep.subr.mxu0 0.0
      %7012 = vmatpush2.msra.mxu0 0.0
      %7013 = vmatprep.subr.mxu0 0.0
      %7014 = vmatpush2.msra.mxu0 0.0
      %7015 = vmatprep.subr.mxu0 0.0
      %7016 = vmatpush2.msra.mxu0 0.0
      %7017 = vmatprep.subr.mxu0 0.0
      %7018 = vmatpush2.msra.mxu0 0.0
      %7019 = vmatprep.subr.mxu0 0.0
      %7020 = vmatpush2.msra.mxu0 0.0
      %7021 = vmatprep.subr.mxu0 0.0
      %7022 = vmatpush2.msra.mxu0 0.0
      %7023 = vmatprep.subr.mxu0 0.0
      %7024 = vmatpush2.msra.mxu0 0.0
      %7025 = vmatprep.subr.mxu0 0.0
      %7026 = vmatpush2.msra.mxu0 0.0
      %7027 = vmatprep.subr.mxu0 0.0
      %7028 = vmatpush2.msra.mxu0 0.0
      %7029 = vmatprep.mubr.f32.mxu0 0.0
      %7030 = vmatmul.mubr.f32.gmra.mxu0 %v6963
      %v7031 = vpop.f32.mrf.mxu0
      %v7032 = vadd.f32 0.0, %v7031
      %v7033 = vpop.f32.mrf.mxu0
      %7034 = vdwg.mxu0
      %7036 = vrot.lane.b32.xlu0 %v6882, 8
      %v7037 = vpop.permute.xlu0 %7036
      %7040 = vrot.lane.b32.xlu0 %v6957, 16
      %v7041 = vpop.permute.xlu0 %7040
      %7044 = vrot.lane.b32.xlu0 %v7032, 24
      %v7045 = vpop.permute.xlu0 %7044
      %v7047 = vsel %vm3234, %v6807, %v7037
      %v7048 = vsel %vm2025, %v7047, %v7041
      %v7049 = vsel %vm3647, %v7048, %v7045
      %v7050 = vld [vmem:[%s75] sm:$0xff]
      %v7051 = vld [vmem:[%s75 + $0x8] sm:$0xff]
      %v7052 = vld [vmem:[%s75 + $0x10] sm:$0xff]
      %v7053 = vld [vmem:[%s75 + $0x18] sm:$0xff]
      %vm7054 = vcmask 31744
      %v7056 = vsel %vm7054, %v7050, 0
      %v7059 = vsel %vm7054, %v7051, 0
      %v7062 = vsel %vm7054, %v7052, 0
      %v7065 = vsel %vm7054, %v7053, 0
      %vm7067 = vcmask 1043456
      %v7069 = vsel %vm7067, %v7049, 0
      %7071 = vmatprep.subr.mxu0 0.0
      %7072 = vmatpush1.msra.mxu0 0.0
      %7073 = vmatprep.subr.mxu0 0.0
      %7074 = vmatpush1.msra.mxu0 0.0
      %7075 = vmatprep.subr.mxu0 0.0
      %7076 = vmatpush1.msra.mxu0 0.0
      %7077 = vmatprep.subr.mxu0 0.0
      %7078 = vmatpush1.msra.mxu0 0.0
      %7079 = vmatprep.subr.mxu0 0.0
      %7080 = vmatpush1.msra.mxu0 0.0
      %7081 = vmatprep.subr.mxu0 0.0
      %7082 = vmatpush1.msra.mxu0 0.0
      %7083 = vmatprep.subr.mxu0 0.0
      %7084 = vmatpush1.msra.mxu0 0.0
      %7085 = vmatprep.subr.mxu0 0.0
      %7086 = vmatpush1.msra.mxu0 0.0
      %7087 = vmatprep.subr.mxu0 0.0
      %7088 = vmatpush1.msra.mxu0 0.0
      %7089 = vmatprep.subr.mxu0 0.0
      %7090 = vmatpush1.msra.mxu0 0.0
      %7091 = vmatprep.subr.mxu0 0.0
      %7092 = vmatpush1.msra.mxu0 0.0
      %7093 = vmatprep.subr.mxu0 0.0
      %7094 = vmatpush1.msra.mxu0 0.0
      %7095 = vmatprep.subr.mxu0 0.0
      %7096 = vmatpush1.msra.mxu0 0.0
      %7097 = vmatprep.subr.mxu0 0.0
      %7098 = vmatpush1.msra.mxu0 0.0
      %7099 = vmatprep.subr.mxu0 0.0
      %7100 = vmatpush1.msra.mxu0 0.0
      %7101 = vmatprep.subr.mxu0 0.0
      %7102 = vmatpush1.msra.mxu0 %v7069
      %7103 = vmatprep.subr.mxu0 0.0
      %7104 = vmatpush2.msra.mxu0 0.0
      %7105 = vmatprep.subr.mxu0 0.0
      %7106 = vmatpush2.msra.mxu0 0.0
      %7107 = vmatprep.subr.mxu0 0.0
      %7108 = vmatpush2.msra.mxu0 0.0
      %7109 = vmatprep.subr.mxu0 0.0
      %7110 = vmatpush2.msra.mxu0 0.0
      %7111 = vmatprep.subr.mxu0 0.0
      %7112 = vmatpush2.msra.mxu0 0.0
      %7113 = vmatprep.subr.mxu0 0.0
      %7114 = vmatpush2.msra.mxu0 0.0
      %7115 = vmatprep.subr.mxu0 0.0
      %7116 = vmatpush2.msra.mxu0 0.0
      %7117 = vmatprep.subr.mxu0 0.0
      %7118 = vmatpush2.msra.mxu0 0.0
      %7119 = vmatprep.subr.mxu0 0.0
      %7120 = vmatpush2.msra.mxu0 0.0
      %7121 = vmatprep.subr.mxu0 0.0
      %7122 = vmatpush2.msra.mxu0 0.0
      %7123 = vmatprep.subr.mxu0 0.0
      %7124 = vmatpush2.msra.mxu0 0.0
      %7125 = vmatprep.subr.mxu0 0.0
      %7126 = vmatpush2.msra.mxu0 0.0
      %7127 = vmatprep.subr.mxu0 0.0
      %7128 = vmatpush2.msra.mxu0 0.0
      %7129 = vmatprep.subr.mxu0 0.0
      %7130 = vmatpush2.msra.mxu0 0.0
      %7131 = vmatprep.subr.mxu0 0.0
      %7132 = vmatpush2.msra.mxu0 0.0
      %7133 = vmatprep.subr.mxu0 0.0
      %7134 = vmatpush2.msra.mxu0 0.0
      %7135 = vmatprep.mubr.f32.mxu0 0.0
      %7136 = vmatmul.mubr.f32.gmra.mxu0 %v7056
      %v7137 = vpop.f32.mrf.mxu0
      %v7138 = vadd.f32 0.0, %v7137
      %v7139 = vpop.f32.mrf.mxu0
      %7140 = vmatprep.mubr.f32.mxu0 0.0
      %7141 = vmatmul.mubr.f32.gmra.mxu0 %v7059
      %v7142 = vpop.f32.mrf.mxu0
      %v7143 = vadd.f32 0.0, %v7142
      %v7144 = vpop.f32.mrf.mxu0
      %7145 = vmatprep.mubr.f32.mxu0 0.0
      %7146 = vmatmul.mubr.f32.gmra.mxu0 %v7062
      %v7147 = vpop.f32.mrf.mxu0
      %v7148 = vadd.f32 0.0, %v7147
      %v7149 = vpop.f32.mrf.mxu0
      %7150 = vmatprep.mubr.f32.mxu0 0.0
      %7151 = vmatmul.mubr.f32.gmra.mxu0 %v7065
      %v7152 = vpop.f32.mrf.mxu0
      %v7153 = vadd.f32 0.0, %v7152
      %v7154 = vpop.f32.mrf.mxu0
      %7155 = vdwg.mxu0
      %v7156 = vld [vmem:[%s77] sm:$0xff]
      %v7157 = vld [vmem:[%s77 + $0x8] sm:$0xff]
      %v7158 = vld [vmem:[%s77 + $0x10] sm:$0xff]
      %v7159 = vld [vmem:[%s77 + $0x18] sm:$0xff]
      %v7160 = vld [vmem:[%s77 + $0x20] sm:$0xff]
      %v7161 = vld [vmem:[%s77 + $0x28] sm:$0xff]
      %v7162 = vld [vmem:[%s77 + $0x30] sm:$0xff]
      %v7163 = vld [vmem:[%s77 + $0x38] sm:$0xff]
      %v7165 = vsel %vm3658, %v7138, 0
      %v7168 = vsel %vm3658, %v7143, 0
      %v7171 = vsel %vm3658, %v7148, 0
      %v7174 = vsel %vm3658, %v7153, 0
      %7176 = vmatprep.subr.mxu0 0.0
      %7177 = vmatpush1.msra.mxu0 0.0
      %7178 = vmatprep.subr.mxu0 0.0
      %7179 = vmatpush1.msra.mxu0 0.0
      %7180 = vmatprep.subr.mxu0 0.0
      %7181 = vmatpush1.msra.mxu0 0.0
      %7182 = vmatprep.subr.mxu0 0.0
      %7183 = vmatpush1.msra.mxu0 0.0
      %7184 = vmatprep.subr.mxu0 0.0
      %7185 = vmatpush1.msra.mxu0 0.0
      %7186 = vmatprep.subr.mxu0 0.0
      %7187 = vmatpush1.msra.mxu0 0.0
      %7188 = vmatprep.subr.mxu0 0.0
      %7189 = vmatpush1.msra.mxu0 0.0
      %7190 = vmatprep.subr.mxu0 0.0
      %7191 = vmatpush1.msra.mxu0 0.0
      %7192 = vmatprep.subr.mxu0 0.0
      %7193 = vmatpush1.msra.mxu0 0.0
      %7194 = vmatprep.subr.mxu0 0.0
      %7195 = vmatpush1.msra.mxu0 0.0
      %7196 = vmatprep.subr.mxu0 0.0
      %7197 = vmatpush1.msra.mxu0 0.0
      %7198 = vmatprep.subr.mxu0 0.0
      %7199 = vmatpush1.msra.mxu0 0.0
      %7200 = vmatprep.subr.mxu0 %v7163
      %7201 = vmatpush1.msra.mxu0 %v7162
      %7202 = vmatprep.subr.mxu0 %v7161
      %7203 = vmatpush1.msra.mxu0 %v7160
      %7204 = vmatprep.subr.mxu0 %v7159
      %7205 = vmatpush1.msra.mxu0 %v7158
      %7206 = vmatprep.subr.mxu0 %v7157
      %7207 = vmatpush1.msra.mxu0 %v7156
      %7208 = vmatprep.subr.mxu0 0.0
      %7209 = vmatpush2.msra.mxu0 0.0
      %7210 = vmatprep.subr.mxu0 0.0
      %7211 = vmatpush2.msra.mxu0 0.0
      %7212 = vmatprep.subr.mxu0 0.0
      %7213 = vmatpush2.msra.mxu0 0.0
      %7214 = vmatprep.subr.mxu0 0.0
      %7215 = vmatpush2.msra.mxu0 0.0
      %7216 = vmatprep.subr.mxu0 0.0
      %7217 = vmatpush2.msra.mxu0 0.0
      %7218 = vmatprep.subr.mxu0 0.0
      %7219 = vmatpush2.msra.mxu0 0.0
      %7220 = vmatprep.subr.mxu0 0.0
      %7221 = vmatpush2.msra.mxu0 0.0
      %7222 = vmatprep.subr.mxu0 0.0
      %7223 = vmatpush2.msra.mxu0 0.0
      %7224 = vmatprep.subr.mxu0 0.0
      %7225 = vmatpush2.msra.mxu0 0.0
      %7226 = vmatprep.subr.mxu0 0.0
      %7227 = vmatpush2.msra.mxu0 0.0
      %7228 = vmatprep.subr.mxu0 0.0
      %7229 = vmatpush2.msra.mxu0 0.0
      %7230 = vmatprep.subr.mxu0 0.0
      %7231 = vmatpush2.msra.mxu0 0.0
      %7232 = vmatprep.subr.mxu0 0.0
      %7233 = vmatpush2.msra.mxu0 0.0
      %7234 = vmatprep.subr.mxu0 0.0
      %7235 = vmatpush2.msra.mxu0 0.0
      %7236 = vmatprep.subr.mxu0 0.0
      %7237 = vmatpush2.msra.mxu0 0.0
      %7238 = vmatprep.subr.mxu0 0.0
      %7239 = vmatpush2.msra.mxu0 0.0
      %7240 = vmatprep.mubr.f32.mxu0 0.0
      %7241 = vmatmul.mubr.f32.gmra.mxu0 %v7165
      %v7242 = vpop.f32.mrf.mxu0
      %v7243 = vadd.f32 0.0, %v7242
      %v7244 = vpop.f32.mrf.mxu0
      %v7245 = vadd.f32 0.0, %v7244
      %7246 = vmatprep.mubr.f32.mxu0 0.0
      %7247 = vmatmul.mubr.f32.gmra.mxu0 %v7168
      %v7248 = vpop.f32.mrf.mxu0
      %v7249 = vadd.f32 0.0, %v7248
      %v7250 = vpop.f32.mrf.mxu0
      %v7251 = vadd.f32 0.0, %v7250
      %7252 = vmatprep.mubr.f32.mxu0 0.0
      %7253 = vmatmul.mubr.f32.gmra.mxu0 %v7171
      %v7254 = vpop.f32.mrf.mxu0
      %v7255 = vadd.f32 0.0, %v7254
      %v7256 = vpop.f32.mrf.mxu0
      %v7257 = vadd.f32 0.0, %v7256
      %7258 = vmatprep.mubr.f32.mxu0 0.0
      %7259 = vmatmul.mubr.f32.gmra.mxu0 %v7174
      %v7260 = vpop.f32.mrf.mxu0
      %v7261 = vadd.f32 0.0, %v7260
      %v7262 = vpop.f32.mrf.mxu0
      %v7263 = vadd.f32 0.0, %v7262
      %7264 = vdwg.mxu0
      %7265 = vst [vmem:[%s1189] sm:$0xff] %v7243
      %7266 = vst [vmem:[%s1189 + $0x8] sm:$0xff] %v7245
      %7267 = vst [vmem:[%s1189 + $0x10] sm:$0xff] %v7249
      %7268 = vst [vmem:[%s1189 + $0x18] sm:$0xff] %v7251
      %7269 = vst [vmem:[%s1189 + $0x20] sm:$0xff] %v7255
      %7270 = vst [vmem:[%s1189 + $0x28] sm:$0xff] %v7257
      %7271 = vst [vmem:[%s1189 + $0x30] sm:$0xff] %v7261
      %7272 = vst [vmem:[%s1189 + $0x38] sm:$0xff] %v7263
      %s7273 = smul.u32 4, %s90
      %p7274 = scmp.lt.s32.totalorder %s7273, 7
      %s7275 = scalar_select %p7274, %s7273, 7
      %s7276 = smul.addr %s7275, 2
      %s7277 = smul.addr %s7276, 8
      %s7278 = scalar_lea.vmem %s79, %s7277
      // Predicated region
      $region177: #{forward.1} parent=175 // pred_check
        %p7279 = pneg %p932
      $region178: #{forward.1} parent=175 // pred_check_branch
        %7281 = sbr.rel (%p7279) target = $region180
      $region179: #{forward.1} parent=175 // pred_region
        %s7282 = smul.u32 4, %s90
      $region180: #{forward.1} parent=175 // pred_fallthru
        _
    $region176: #{forward.1} parent=5 // pred_fallthru
      _
    %p7283 = scmp.le.s32.totalorder 2, %s85
    // Predicated region
    $region181: #{forward.1} parent=5 // pred_check
      %p7284 = pneg %p7283
    $region182: #{forward.1} parent=5 // pred_check_branch
      %7286 = sbr.rel (%p7284) target = $region184
    $region183: #{forward.1} parent=5 // pred_region
      %s7287 = ssub.s32 %s85, 2
      // Predicated region
      $region185: #{forward.1} parent=183 // pred_check
        %p7288 = pneg %p938
      $region186: #{forward.1} parent=183 // pred_check_branch
        %7290 = sbr.rel (%p7288) target = $region188
      $region187: #{forward.1} parent=183 // pred_region
        %s7291 = smul.u32 4, %s91
        %p7292 = scmp.lt.s32.totalorder %s7291, 7
        %s7293 = scalar_select %p7292, %s7291, 7
        %s7294 = smul.addr %s7293, 2
        %s7295 = smul.addr %s7294, 8
        %s7296 = scalar_lea.vmem %s79, %s7295
      $region188: #{forward.1} parent=183 // pred_fallthru
        _
    $region184: #{forward.1} parent=5 // pred_fallthru
      _
  $region6: #{forward.1} parent=0 // loop_footer
    %s89 = sadd.s32 1, %s85
  $region7: #{forward.1} parent=0 // loop_footer_branch
    %84 = sbr.rel target = $region3
  $region8: #{forward.1} parent=0 // loop_exit
    _

</llo_original>
